<compile_context>
chip_gen: v5e
topology: v5e:2x2
jax: 0.10.0
libtpu: 0.0.40
codegen_flags: <defaults>
</compile_context>

<pallas_src>
import functools

import jax
import jax.numpy as jnp
from jax.experimental import pallas as pl
from jax.experimental.pallas import tpu as pltpu


# ----------------------------------------------------------------------------
# Kernel 0: learned probabilistic mask (LOUPE-style), computed once.
# Uses the standard two-branch sparsity rescale (review correctness item).
# ----------------------------------------------------------------------------
def compute_mask(mask_logits, desired_sparsity, sample_slope):
    H, W = mask_logits.shape

    def kernel(lg_ref, m_ref):
        prob = jax.nn.sigmoid(lg_ref[...])
        xbar = jnp.mean(prob)
        r = desired_sparsity / xbar
        beta = (1.0 - desired_sparsity) / (1.0 - xbar)
        le = (r <= 1.0).astype(jnp.float32)
        rescaled = le * (prob * r) + (1.0 - le) * (1.0 - (1.0 - prob) * beta)
        # TODO(synk): reference LOUPE thresholds against a uniform random
        # realization during training; a fixed 0.5 threshold is used here.
        m_ref[...] = jax.nn.sigmoid(sample_slope * (rescaled - 0.5))

    return pl.pallas_call(
        kernel,
        out_shape=jax.ShapeDtypeStruct((H, W), jnp.float32),
    )(mask_logits)


# ----------------------------------------------------------------------------
# Kernel 1: k-space front-end (DFT -> mask -> IDFT -> magnitude).
# Re/im parts fused via stacked DFT matrices: 4 MXU pushes per image.
# Also emits |IFFT| zero-padded to (H+2, W+2) -- the layout the conv net eats.
# ----------------------------------------------------------------------------
def recon_frontend(x, mask):
    """x: (N, H, W) f32, mask: (H, W) f32."""
    N, H, W = x.shape
    Hp, Wp = H + 2, W + 2

    kh = jnp.arange(H, dtype=jnp.float32)
    kw = jnp.arange(W, dtype=jnp.float32)
    ah = -2.0 * jnp.pi * jnp.outer(kh, kh) / H
    aw = -2.0 * jnp.pi * jnp.outer(kw, kw) / W
    fhr, fhi = jnp.cos(ah), jnp.sin(ah)            # forward DFT (rows)
    fwr, fwi = jnp.cos(aw), jnp.sin(aw)            # forward DFT (cols)
    ihr, ihi = jnp.cos(ah) / H, -jnp.sin(ah) / H   # inverse DFT (rows), 1/H
    iwr, iwi = jnp.cos(aw) / W, -jnp.sin(aw) / W   # inverse DFT (cols), 1/W

    FH2 = jnp.concatenate([fhr, fhi], axis=0)                       # (2H, H)
    FW2 = jnp.concatenate([fwr, fwi], axis=1)                       # (W, 2W)
    IH2 = jnp.concatenate(
        [jnp.concatenate([ihr, -ihi], axis=1),
         jnp.concatenate([ihi, ihr], axis=1)], axis=0)              # (2H, 2H)
    IW2 = jnp.concatenate([iwr, iwi], axis=1)                       # (W, 2W)

    def kernel(x_ref, m_ref, fh2_ref, fw2_ref, ih2_ref, iw2_ref,
               fft_ref, und_ref, uifft_ref, cabs_ref, cpad_ref):
        xi = x_ref[0]                                               # (H, W)

        # forward 2-D DFT of a real image: 2 fused matmuls.
        a = jnp.dot(fh2_ref[...], xi, preferred_element_type=jnp.float32)
        g = jnp.dot(a, fw2_ref[...], preferred_element_type=jnp.float32)
        fr = g[:H, :W] - g[H:, W:]
        fi = g[:H, W:] + g[H:, :W]

        # undersampled k-space (mask precomputed once outside this grid).
        m = m_ref[...]
        ur = fr * m
        ui = fi * m

        # inverse 2-D DFT: 2 fused matmuls.
        u2 = jnp.concatenate([ur, ui], axis=0)                      # (2H, W)
        b2 = jnp.dot(ih2_ref[...], u2, preferred_element_type=jnp.float32)
        e = jnp.dot(b2, iw2_ref[...], preferred_element_type=jnp.float32)
        uir = e[:H, :W] - e[H:, W:]
        uii = e[:H, W:] + e[H:, :W]

        cabs = jnp.sqrt(uir * uir + uii * uii)

        fft_ref[0, 0] = fr
        fft_ref[0, 1] = fi
        und_ref[0, 0] = ur
        und_ref[0, 1] = ui
        uifft_ref[0, 0] = uir
        uifft_ref[0, 1] = uii
        cabs_ref[0] = cabs
        # |IFFT| in the zero-padded layout consumed by the first conv kernel.
        cpad_ref[0, 0] = jnp.zeros((Hp, Wp), jnp.float32)
        cpad_ref[0, 0, 1:H + 1, 1:W + 1] = cabs

    const2d = lambda shape: pl.BlockSpec(shape, lambda n: (0, 0))

    return pl.pallas_call(
        kernel,
        out_shape=(
            jax.ShapeDtypeStruct((N, 2, H, W), jnp.float32),   # fft
            jax.ShapeDtypeStruct((N, 2, H, W), jnp.float32),   # undersample
            jax.ShapeDtypeStruct((N, 2, H, W), jnp.float32),   # uifft
            jax.ShapeDtypeStruct((N, H, W), jnp.float32),      # |uifft|
            jax.ShapeDtypeStruct((N, 1, Hp, Wp), jnp.float32), # |uifft|, padded
        ),
        grid=(N,),
        in_specs=[
            pl.BlockSpec((1, H, W), lambda n: (n, 0, 0)),      # x
            const2d((H, W)),                                   # mask
            const2d((2 * H, H)),                               # FH2
            const2d((W, 2 * W)),                               # FW2
            const2d((2 * H, 2 * H)),                           # IH2
            const2d((W, 2 * W)),                               # IW2
        ],
        out_specs=(
            pl.BlockSpec((1, 2, H, W), lambda n: (n, 0, 0, 0)),
            pl.BlockSpec((1, 2, H, W), lambda n: (n, 0, 0, 0)),
            pl.BlockSpec((1, 2, H, W), lambda n: (n, 0, 0, 0)),
            pl.BlockSpec((1, H, W), lambda n: (n, 0, 0)),
            pl.BlockSpec((1, 1, Hp, Wp), lambda n: (n, 0, 0, 0)),
        ),
        compiler_params=pltpu.CompilerParams(dimension_semantics=("parallel",)),
    )(x, mask, FH2, FW2, IH2, IW2)


# ----------------------------------------------------------------------------
# Kernel 2: fused chain of "same" 3x3 / 1x1 convs (+bias, optional ReLU) on
# padded-flat activations (C, (H+2)*(W+2)).  Tap-accumulated:
#   acc(Cout, L) += w_tap(Cout, Cin) @ shifted_view(Cin, L)
# where the shifted views are static slices of one guard-banded VMEM scratch.
# ----------------------------------------------------------------------------
def fused_conv_chain(acts, layers, H, W):
    """acts: list of (N, C_i, L) padded-flat activations (zero one-pixel ring);
    multiple inputs are concatenated along channels inside the kernel (fused
    skip concat).  layers: list of (w (Cout, Cin, k, k), b (Cout,), relu),
    k in {1, 3}; layer 0's Cin == sum_i C_i.  Returns (N, Cout_last, L),
    padded-flat with a zero ring (directly consumable by another chain)."""
    N = acts[0].shape[0]
    pitch = W + 2
    Hp = H + 2
    L = Hp * pitch
    G = pitch + 1                        # guard band >= max |tap offset|
    act_channels = [int(a.shape[1]) for a in acts]
    n_acts = len(acts)

    meta = []                            # (tap_offsets, cout, relu)
    flat_args = []
    cin = sum(act_channels)
    for (w, b, relu) in layers:
        cout, w_cin, khh, kww = w.shape
        assert w_cin == cin and khh == kww and khh in (1, 3)
        if khh == 3:
            offs = tuple((dh - 1) * pitch + (dw - 1)
                         for dh in range(3) for dw in range(3))
        else:
            offs = (0,)
        meta.append((offs, cout, relu))
        # tap-major weight layout: (k*k, Cout, Cin)
        flat_args.append(jnp.transpose(w, (2, 3, 0, 1)).reshape(khh * kww, cout, cin))
        flat_args.append(b.reshape(cout, 1))
        cin = cout
    n_layers = len(meta)
    cout_last = meta[-1][1]
    cin_list = [sum(act_channels)] + [m[1] for m in meta[:-1]]
    cmax = max(cin_list)

    # Interior (non-pad) positions of the padded-flat layout (1 at interior).
    ii = jnp.arange(L, dtype=jnp.int32)
    h_idx = ii // pitch
    w_idx = ii % pitch
    interior = (((h_idx >= 1) & (h_idx <= H) & (w_idx >= 1) & (w_idx <= W))
                .astype(jnp.float32).reshape(1, L))

    def kernel(*refs):
        msk_ref = refs[0]
        act_refs = refs[1:1 + n_acts]
        wb_refs = refs[1 + n_acts:1 + n_acts + 2 * n_layers]
        out_ref = refs[1 + n_acts + 2 * n_layers]
        scr = refs[-1]

        # Guard bands must hold finite data (zeros).  Zeroed every grid step
        # (only 2*G columns) so "parallel" megacore sharding stays safe; the
        # full padded interior is never cleared (review item).
        scr[:, 0:G] = jnp.zeros((cmax, G), jnp.float32)
        scr[:, G + L:G + L + G] = jnp.zeros((cmax, G), jnp.float32)

        # Stage the input activation(s); multiple inputs are concatenated along
        # channels directly in the scratch (fused skip concat).
        c0 = 0
        for a_ref, ca in zip(act_refs, act_channels):
            scr[c0:c0 + ca, G:G + L] = a_ref[0]
            c0 += ca

        msk = msk_ref[...]                               # (1, L)
        cur = None
        for li, (offs, cout, relu) in enumerate(meta):
            cin_l = cin_list[li]
            if cur is not None:                          # layers > 0
                scr[0:cin_l, G:G + L] = cur
            w_ref = wb_refs[2 * li]
            b_ref = wb_refs[2 * li + 1]
            acc = None
            for t, off in enumerate(offs):
                tap = scr[0:cin_l, G + off:G + off + L]  # (Cin, L) shifted view
                if cin_l == 1:
                    # K = 1: skip the MXU, broadcast multiply on the VPU.
                    d = w_ref[t] * tap                   # (Cout,1)*(1,L)
                else:
                    d = jnp.dot(w_ref[t], tap,
                                preferred_element_type=jnp.float32)
                acc = d if acc is None else acc + d
            y = acc + b_ref[...]                         # (Cout, L) + (Cout, 1)
            if relu:
                y = jnp.maximum(y, 0.0)
            cur = y * msk                                # re-zero the pad ring
        out_ref[0] = cur

    in_specs = [pl.BlockSpec((1, L), lambda n: (0, 0))]
    for c in act_channels:
        in_specs.append(pl.BlockSpec((1, c, L), lambda n: (n, 0, 0)))
    for li, (offs, cout, _) in enumerate(meta):
        in_specs.append(pl.BlockSpec((len(offs), cout, cin_list[li]),
                                     lambda n: (0, 0, 0)))
        in_specs.append(pl.BlockSpec((cout, 1), lambda n: (0, 0)))

    return pl.pallas_call(
        kernel,
        out_shape=jax.ShapeDtypeStruct((N, cout_last, L), jnp.float32),
        grid=(N,),
        in_specs=in_specs,
        out_specs=pl.BlockSpec((1, cout_last, L), lambda n: (n, 0, 0)),
        scratch_shapes=[pltpu.VMEM((cmax, L + 2 * G), jnp.float32)],
        compiler_params=pltpu.CompilerParams(dimension_semantics=("parallel",)),
    )(interior, *acts, *flat_args)


# ----------------------------------------------------------------------------
# U-Net glue (small XLA ops on channels-first tensors) + tiny 2-level U-Net.
# ----------------------------------------------------------------------------
def unpad_flat(x_flat, H, W):
    N, C, _ = x_flat.shape
    return x_flat.reshape(N, C, H + 2, W + 2)[:, :, 1:H + 1, 1:W + 1]


def pad_flat(x_nchw):
    N, C, H, W = x_nchw.shape
    xp = jnp.pad(x_nchw, ((0, 0), (0, 0), (1, 1), (1, 1)))
    return xp.reshape(N, C, (H + 2) * (W + 2))


def maxpool_flat(x_flat, H, W):
    # TODO(synk): at production sizes fuse this 2x2 pool into the tail of the
    # producing conv kernel instead of an XLA round trip.
    x = unpad_flat(x_flat, H, W)
    N, C = x.shape[:2]
    xp = x.reshape(N, C, H // 2, 2, W // 2, 2).max(axis=(3, 5))
    return pad_flat(xp)


def upsample_flat(x_flat, H2, W2):
    # TODO(synk): at production sizes fuse this 2x nearest upsample into the
    # head of the consuming conv kernel.
    x = unpad_flat(x_flat, H2, W2)
    xu = jnp.repeat(jnp.repeat(x, 2, axis=2), 2, axis=3)
    return pad_flat(xu)


def tiny_unet(x_flat, p, H, W):
    """2-level U-Net on padded-flat activations.  x_flat: (N, Cin, (H+2)(W+2))."""
    e1 = fused_conv_chain([x_flat], [(*p["e1a"], True), (*p["e1b"], True)], H, W)
    pool = maxpool_flat(e1, H, W)
    bn = fused_conv_chain([pool], [(*p["b1"], True), (*p["b2"], True)],
                          H // 2, W // 2)
    up = upsample_flat(bn, H // 2, W // 2)
    # Skip concat ([up, e1] along channels) is fused inside the decoder kernel.
    return fused_conv_chain(
        [up, e1], [(*p["d1"], True), (*p["d2"], True), (*p["out"], False)], H, W)


def init_conv(key, cout, cin, k):
    w = jax.random.normal(key, (cout, cin, k, k), jnp.float32) * jnp.sqrt(
        2.0 / (k * k * cin))
    b = jnp.zeros((cout,), jnp.float32)
    return (w, b)


def init_unet(key, cin, cbase, cout):
    ks = jax.random.split(key, 7)
    return {
        "e1a": init_conv(ks[0], cbase, cin, 3),
        "e1b": init_conv(ks[1], cbase, cbase, 3),
        "b1": init_conv(ks[2], 2 * cbase, cbase, 3),
        "b2": init_conv(ks[3], 2 * cbase, 2 * cbase, 3),
        "d1": init_conv(ks[4], cbase, 3 * cbase, 3),  # cin = up(2cb) + skip(cb)
        "d2": init_conv(ks[5], cbase, cbase, 3),
        "out": init_conv(ks[6], cout, cbase, 1),
    }


# ----------------------------------------------------------------------------
# Comb_Net forward
# ----------------------------------------------------------------------------
def comb_net_forward(x_nchw, params, desired_sparsity, sample_slope):
    N, _, H, W = x_nchw.shape            # channel dim is 1 (single-channel MRI)
    xi = x_nchw[:, 0, :, :]

    mask = compute_mask(params["mask_logits"], desired_sparsity, sample_slope)
    fft, undersample, uifft, cabs, cabs_pad = recon_frontend(xi, mask)

    L = (H + 2) * (W + 2)
    cabs_flat = cabs_pad.reshape(N, 1, L)          # row-major metadata reshape

    out_recon_flat = tiny_unet(cabs_flat, params["recon_unet"], H, W)
    # TODO(synk): exact ReconUnetforComb internals (residual / isDC
    # data-consistency) are not in the reference source; the recon U-Net
    # output is used directly.
    out_seg_flat = tiny_unet(out_recon_flat, params["seg_unet"], H, W)

    out_recon = unpad_flat(out_recon_flat, H, W)   # (N, 1, H, W)
    out_seg = unpad_flat(out_seg_flat, H, W)       # (N, nclasses, H, W)
    complex_abs = cabs[:, None, :, :]              # (N, 1, H, W)
    return (out_recon, out_seg, uifft, complex_abs, mask, fft, undersample)


if __name__ == "__main__":
    N, H, W = 2, 16, 16
    NCLASSES = 4
    CBASE = 8
    DESIRED_SPARSITY = 0.25
    SAMPLE_SLOPE = 10.0

    key = jax.random.PRNGKey(0)
    k_x, k_m, k_r, k_s = jax.random.split(key, 4)

    x = jax.random.normal(k_x, (N, 1, H, W), jnp.float32)
    params = {
        "mask_logits": jax.random.normal(k_m, (H, W), jnp.float32),
        "recon_unet": init_unet(k_r, 1, CBASE, 1),
        "seg_unet": init_unet(k_s, 1, CBASE, NCLASSES),
    }

    fwd = jax.jit(functools.partial(
        comb_net_forward, desired_sparsity=DESIRED_SPARSITY,
        sample_slope=SAMPLE_SLOPE))
    outs = fwd(x, params)
    jax.block_until_ready(outs)

    out_recon, out_seg, uifft, complex_abs, mask, fft, undersample = outs
    assert out_recon.shape == (N, 1, H, W)
    assert out_seg.shape == (N, NCLASSES, H, W)
    assert uifft.shape == (N, 2, H, W)
    assert complex_abs.shape == (N, 1, H, W)
    assert mask.shape == (H, W)
    assert fft.shape == (N, 2, H, W)
    assert undersample.shape == (N, 2, H, W)
    for t in outs:
        assert bool(jnp.all(jnp.isfinite(t)))
    print("KERNEL_OK")
</pallas_src>

<mosaic_0001>
module attributes {stable_mosaic.version = 11 : i64} {
  func.func @kernel(%arg0: memref<16x16xf32, #tpu.memory_space<vmem>>, %arg1: memref<16x16xf32, #tpu.memory_space<vmem>>) attributes {dimension_semantics = [], scalar_prefetch = 0 : i64, scratch_operands = 0 : i64, tpu.core_type = #tpu.core_type<tc>} {
    %c0 = arith.constant 0 : index
    %c0_0 = arith.constant 0 : index
    %0 = vector.load %arg0[%c0, %c0_0] : memref<16x16xf32, #tpu.memory_space<vmem>>, vector<16x16xf32>
    %1 = arith.negf %0 : vector<16x16xf32>
    %2 = math.exp %1 : vector<16x16xf32>
    %cst = arith.constant 1.000000e+00 : f32
    %3 = vector.broadcast %cst : f32 to vector<16x16xf32>
    %4 = arith.addf %3, %2 : vector<16x16xf32>
    %5 = arith.divf %3, %4 : vector<16x16xf32>
    %6 = vector.shape_cast %5 : vector<16x16xf32> to vector<1x16x16xf32>
    %cst_1 = arith.constant dense<0.000000e+00> : vector<1xf32>
    %7 = vector.multi_reduction <add>, %6, %cst_1 [1, 2] : vector<1x16x16xf32> to vector<1xf32>
    %8 = vector.shape_cast %7 : vector<1xf32> to vector<1x1x1xf32>
    %9 = vector.extract %8[0, 0, 0] : f32 from vector<1x1x1xf32>
    %cst_2 = arith.constant 2.560000e+02 : f32
    %10 = arith.divf %9, %cst_2 : f32
    %cst_3 = arith.constant 2.500000e-01 : f32
    %11 = arith.divf %cst_3, %10 : f32
    %cst_4 = arith.constant 1.000000e+00 : f32
    %12 = arith.subf %cst_4, %10 : f32
    %cst_5 = arith.constant 7.500000e-01 : f32
    %13 = arith.divf %cst_5, %12 : f32
    %cst_6 = arith.constant 1.000000e+00 : f32
    %14 = arith.cmpf ole, %11, %cst_6 : f32
    %15 = arith.extui %14 : i1 to i32
    %16 = arith.sitofp %15 : i32 to f32
    %17 = vector.broadcast %11 : f32 to vector<16x16xf32>
    %18 = arith.mulf %5, %17 : vector<16x16xf32>
    %19 = vector.broadcast %16 : f32 to vector<16x16xf32>
    %20 = arith.mulf %19, %18 : vector<16x16xf32>
    %cst_7 = arith.constant 1.000000e+00 : f32
    %21 = arith.subf %cst_7, %16 : f32
    %cst_8 = arith.constant 1.000000e+00 : f32
    %22 = vector.broadcast %cst_8 : f32 to vector<16x16xf32>
    %23 = arith.subf %22, %5 : vector<16x16xf32>
    %24 = vector.broadcast %13 : f32 to vector<16x16xf32>
    %25 = arith.mulf %23, %24 : vector<16x16xf32>
    %cst_9 = arith.constant 1.000000e+00 : f32
    %26 = vector.broadcast %cst_9 : f32 to vector<16x16xf32>
    %27 = arith.subf %26, %25 : vector<16x16xf32>
    %28 = vector.broadcast %21 : f32 to vector<16x16xf32>
    %29 = arith.mulf %28, %27 : vector<16x16xf32>
    %30 = arith.addf %20, %29 : vector<16x16xf32>
    %cst_10 = arith.constant 5.000000e-01 : f32
    %31 = vector.broadcast %cst_10 : f32 to vector<16x16xf32>
    %32 = arith.subf %30, %31 : vector<16x16xf32>
    %cst_11 = arith.constant 1.000000e+01 : f32
    %33 = vector.broadcast %cst_11 : f32 to vector<16x16xf32>
    %34 = arith.mulf %33, %32 : vector<16x16xf32>
    %35 = arith.negf %34 : vector<16x16xf32>
    %36 = math.exp %35 : vector<16x16xf32>
    %cst_12 = arith.constant 1.000000e+00 : f32
    %37 = vector.broadcast %cst_12 : f32 to vector<16x16xf32>
    %38 = arith.addf %37, %36 : vector<16x16xf32>
    %39 = arith.divf %37, %38 : vector<16x16xf32>
    %c0_13 = arith.constant 0 : index
    %c0_14 = arith.constant 0 : index
    %40 = vector.load %arg1[%c0_13, %c0_14] : memref<16x16xf32, #tpu.memory_space<vmem>>, vector<16x16xf32>
    tpu.vector_store %arg1[%c0_13, %c0_14], %39 {strides = array<i32>} : memref<16x16xf32, #tpu.memory_space<vmem>>, vector<16x16xf32>,
    return
  }
}

module attributes {stable_mosaic.version = 11 : i64} {
  func.func @kernel(%arg0: i32, %arg1: memref<1x16x16xf32, #tpu.memory_space<vmem>>, %arg2: memref<16x16xf32, #tpu.memory_space<vmem>>, %arg3: memref<32x16xf32, #tpu.memory_space<vmem>>, %arg4: memref<16x32xf32, #tpu.memory_space<vmem>>, %arg5: memref<32x32xf32, #tpu.memory_space<vmem>>, %arg6: memref<16x32xf32, #tpu.memory_space<vmem>>, %arg7: memref<1x2x16x16xf32, #tpu.memory_space<vmem>>, %arg8: memref<1x2x16x16xf32, #tpu.memory_space<vmem>>, %arg9: memref<1x2x16x16xf32, #tpu.memory_space<vmem>>, %arg10: memref<1x16x16xf32, #tpu.memory_space<vmem>>, %arg11: memref<1x1x18x18xf32, #tpu.memory_space<vmem>>) attributes {dimension_semantics = [#tpu.dimension_semantics<parallel>], iteration_bounds = array<i64: 2>, scalar_prefetch = 0 : i64, scratch_operands = 0 : i64, tpu.core_type = #tpu.core_type<tc>, window_params = [{transform_indices = @transform_0, window_bounds = array<i64: 1, 16, 16>}, {pipeline_mode = #tpu.pipeline_mode<synchronous>, transform_indices = @transform_1, window_bounds = array<i64: 16, 16>}, {pipeline_mode = #tpu.pipeline_mode<synchronous>, transform_indices = @transform_2, window_bounds = array<i64: 32, 16>}, {pipeline_mode = #tpu.pipeline_mode<synchronous>, transform_indices = @transform_3, window_bounds = array<i64: 16, 32>}, {pipeline_mode = #tpu.pipeline_mode<synchronous>, transform_indices = @transform_4, window_bounds = array<i64: 32, 32>}, {pipeline_mode = #tpu.pipeline_mode<synchronous>, transform_indices = @transform_5, window_bounds = array<i64: 16, 32>}, {transform_indices = @transform_6, window_bounds = array<i64: 1, 2, 16, 16>}, {transform_indices = @transform_7, window_bounds = array<i64: 1, 2, 16, 16>}, {transform_indices = @transform_8, window_bounds = array<i64: 1, 2, 16, 16>}, {transform_indices = @transform_9, window_bounds = array<i64: 1, 16, 16>}, {transform_indices = @transform_10, window_bounds = array<i64: 1, 1, 18, 18>}]} {
    %c0 = arith.constant 0 : index
    %c0_0 = arith.constant 0 : index
    %c0_1 = arith.constant 0 : index
    %0 = vector.load %arg1[%c0, %c0_0, %c0_1] : memref<1x16x16xf32, #tpu.memory_space<vmem>>, vector<1x16x16xf32>
    %1 = vector.shape_cast %0 : vector<1x16x16xf32> to vector<16x16xf32>
    %c0_2 = arith.constant 0 : index
    %c0_3 = arith.constant 0 : index
    %2 = vector.load %arg3[%c0_2, %c0_3] : memref<32x16xf32, #tpu.memory_space<vmem>>, vector<32x16xf32>
    %cst = arith.constant dense<0.000000e+00> : vector<32x16xf32>
    %3 = tpu.matmul %2, %1, %cst {dimension_numbers = #tpu.dot_dimension_numbers<[1], [0], [0], [1], [0, 0, 1, 1], [], []>} : vector<32x16xf32>, vector<16x16xf32>, vector<32x16xf32> -> vector<32x16xf32>
    %c0_4 = arith.constant 0 : index
    %c0_5 = arith.constant 0 : index
    %4 = vector.load %arg4[%c0_4, %c0_5] : memref<16x32xf32, #tpu.memory_space<vmem>>, vector<16x32xf32>
    %cst_6 = arith.constant dense<0.000000e+00> : vector<32x32xf32>
    %5 = tpu.matmul %3, %4, %cst_6 {dimension_numbers = #tpu.dot_dimension_numbers<[1], [0], [0], [1], [0, 0, 1, 1], [], []>} : vector<32x16xf32>, vector<16x32xf32>, vector<32x32xf32> -> vector<32x32xf32>
    %6 = vector.extract_strided_slice %5 {offsets = [0, 0], sizes = [16, 16], strides = [1, 1]} : vector<32x32xf32> to vector<16x16xf32>
    %7 = vector.extract_strided_slice %5 {offsets = [16, 16], sizes = [16, 16], strides = [1, 1]} : vector<32x32xf32> to vector<16x16xf32>
    %8 = arith.subf %6, %7 : vector<16x16xf32>
    %9 = vector.extract_strided_slice %5 {offsets = [0, 16], sizes = [16, 16], strides = [1, 1]} : vector<32x32xf32> to vector<16x16xf32>
    %10 = vector.extract_strided_slice %5 {offsets = [16, 0], sizes = [16, 16], strides = [1, 1]} : vector<32x32xf32> to vector<16x16xf32>
    %11 = arith.addf %9, %10 : vector<16x16xf32>
    %c0_7 = arith.constant 0 : index
    %c0_8 = arith.constant 0 : index
    %12 = vector.load %arg2[%c0_7, %c0_8] : memref<16x16xf32, #tpu.memory_space<vmem>>, vector<16x16xf32>
    %13 = arith.mulf %8, %12 : vector<16x16xf32>
    %14 = arith.mulf %11, %12 : vector<16x16xf32>
    %15 = tpu.concatenate %13, %14 in 0 : vector<16x16xf32>, vector<16x16xf32> -> vector<32x16xf32>
    %c0_9 = arith.constant 0 : index
    %c0_10 = arith.constant 0 : index
    %16 = vector.load %arg5[%c0_9, %c0_10] : memref<32x32xf32, #tpu.memory_space<vmem>>, vector<32x32xf32>
    %cst_11 = arith.constant dense<0.000000e+00> : vector<32x16xf32>
    %17 = tpu.matmul %16, %15, %cst_11 {dimension_numbers = #tpu.dot_dimension_numbers<[1], [0], [0], [1], [0, 0, 1, 1], [], []>} : vector<32x32xf32>, vector<32x16xf32>, vector<32x16xf32> -> vector<32x16xf32>
    %c0_12 = arith.constant 0 : index
    %c0_13 = arith.constant 0 : index
    %18 = vector.load %arg6[%c0_12, %c0_13] : memref<16x32xf32, #tpu.memory_space<vmem>>, vector<16x32xf32>
    %cst_14 = arith.constant dense<0.000000e+00> : vector<32x32xf32>
    %19 = tpu.matmul %17, %18, %cst_14 {dimension_numbers = #tpu.dot_dimension_numbers<[1], [0], [0], [1], [0, 0, 1, 1], [], []>} : vector<32x16xf32>, vector<16x32xf32>, vector<32x32xf32> -> vector<32x32xf32>
    %20 = vector.extract_strided_slice %19 {offsets = [0, 0], sizes = [16, 16], strides = [1, 1]} : vector<32x32xf32> to vector<16x16xf32>
    %21 = vector.extract_strided_slice %19 {offsets = [16, 16], sizes = [16, 16], strides = [1, 1]} : vector<32x32xf32> to vector<16x16xf32>
    %22 = arith.subf %20, %21 : vector<16x16xf32>
    %23 = vector.extract_strided_slice %19 {offsets = [0, 16], sizes = [16, 16], strides = [1, 1]} : vector<32x32xf32> to vector<16x16xf32>
    %24 = vector.extract_strided_slice %19 {offsets = [16, 0], sizes = [16, 16], strides = [1, 1]} : vector<32x32xf32> to vector<16x16xf32>
    %25 = arith.addf %23, %24 : vector<16x16xf32>
    %26 = arith.mulf %22, %22 : vector<16x16xf32>
    %27 = arith.mulf %25, %25 : vector<16x16xf32>
    %28 = arith.addf %26, %27 : vector<16x16xf32>
    %29 = math.sqrt %28 : vector<16x16xf32>
    %c0_15 = arith.constant 0 : index
    %c0_16 = arith.constant 0 : index
    %c0_17 = arith.constant 0 : index
    %c0_18 = arith.constant 0 : index
    %30 = vector.load %arg7[%c0_15, %c0_16, %c0_17, %c0_18] : memref<1x2x16x16xf32, #tpu.memory_space<vmem>>, vector<1x1x16x16xf32>
    %31 = vector.shape_cast %30 : vector<1x1x16x16xf32> to vector<16x16xf32>
    %32 = vector.shape_cast %8 : vector<16x16xf32> to vector<1x1x16x16xf32>
    tpu.vector_store %arg7[%c0_15, %c0_16, %c0_17, %c0_18], %32 {strides = array<i32>} : memref<1x2x16x16xf32, #tpu.memory_space<vmem>>, vector<1x1x16x16xf32>,
    %c0_19 = arith.constant 0 : index
    %c1 = arith.constant 1 : index
    %c0_20 = arith.constant 0 : index
    %c0_21 = arith.constant 0 : index
    %33 = vector.load %arg7[%c0_19, %c1, %c0_20, %c0_21] : memref<1x2x16x16xf32, #tpu.memory_space<vmem>>, vector<1x1x16x16xf32>
    %34 = vector.shape_cast %33 : vector<1x1x16x16xf32> to vector<16x16xf32>
    %35 = vector.shape_cast %11 : vector<16x16xf32> to vector<1x1x16x16xf32>
    tpu.vector_store %arg7[%c0_19, %c1, %c0_20, %c0_21], %35 {strides = array<i32>} : memref<1x2x16x16xf32, #tpu.memory_space<vmem>>, vector<1x1x16x16xf32>,
    %c0_22 = arith.constant 0 : index
    %c0_23 = arith.constant 0 : index
    %c0_24 = arith.constant 0 : index
    %c0_25 = arith.constant 0 : index
    %36 = vector.load %arg8[%c0_22, %c0_23, %c0_24, %c0_25] : memref<1x2x16x16xf32, #tpu.memory_space<vmem>>, vector<1x1x16x16xf32>
    %37 = vector.shape_cast %36 : vector<1x1x16x16xf32> to vector<16x16xf32>
    %38 = vector.shape_cast %13 : vector<16x16xf32> to vector<1x1x16x16xf32>
    tpu.vector_store %arg8[%c0_22, %c0_23, %c0_24, %c0_25], %38 {strides = array<i32>} : memref<1x2x16x16xf32, #tpu.memory_space<vmem>>, vector<1x1x16x16xf32>,
    %c0_26 = arith.constant 0 : index
    %c1_27 = arith.constant 1 : index
    %c0_28 = arith.constant 0 : index
    %c0_29 = arith.constant 0 : index
    %39 = vector.load %arg8[%c0_26, %c1_27, %c0_28, %c0_29] : memref<1x2x16x16xf32, #tpu.memory_space<vmem>>, vector<1x1x16x16xf32>
    %40 = vector.shape_cast %39 : vector<1x1x16x16xf32> to vector<16x16xf32>
    %41 = vector.shape_cast %14 : vector<16x16xf32> to vector<1x1x16x16xf32>
    tpu.vector_store %arg8[%c0_26, %c1_27, %c0_28, %c0_29], %41 {strides = array<i32>} : memref<1x2x16x16xf32, #tpu.memory_space<vmem>>, vector<1x1x16x16xf32>,
    %c0_30 = arith.constant 0 : index
    %c0_31 = arith.constant 0 : index
    %c0_32 = arith.constant 0 : index
    %c0_33 = arith.constant 0 : index
    %42 = vector.load %arg9[%c0_30, %c0_31, %c0_32, %c0_33] : memref<1x2x16x16xf32, #tpu.memory_space<vmem>>, vector<1x1x16x16xf32>
    %43 = vector.shape_cast %42 : vector<1x1x16x16xf32> to vector<16x16xf32>
    %44 = vector.shape_cast %22 : vector<16x16xf32> to vector<1x1x16x16xf32>
    tpu.vector_store %arg9[%c0_30, %c0_31, %c0_32, %c0_33], %44 {strides = array<i32>} : memref<1x2x16x16xf32, #tpu.memory_space<vmem>>, vector<1x1x16x16xf32>,
    %c0_34 = arith.constant 0 : index
    %c1_35 = arith.constant 1 : index
    %c0_36 = arith.constant 0 : index
    %c0_37 = arith.constant 0 : index
    %45 = vector.load %arg9[%c0_34, %c1_35, %c0_36, %c0_37] : memref<1x2x16x16xf32, #tpu.memory_space<vmem>>, vector<1x1x16x16xf32>
    %46 = vector.shape_cast %45 : vector<1x1x16x16xf32> to vector<16x16xf32>
    %47 = vector.shape_cast %25 : vector<16x16xf32> to vector<1x1x16x16xf32>
    tpu.vector_store %arg9[%c0_34, %c1_35, %c0_36, %c0_37], %47 {strides = array<i32>} : memref<1x2x16x16xf32, #tpu.memory_space<vmem>>, vector<1x1x16x16xf32>,
    %c0_38 = arith.constant 0 : index
    %c0_39 = arith.constant 0 : index
    %c0_40 = arith.constant 0 : index
    %48 = vector.load %arg10[%c0_38, %c0_39, %c0_40] : memref<1x16x16xf32, #tpu.memory_space<vmem>>, vector<1x16x16xf32>
    %49 = vector.shape_cast %48 : vector<1x16x16xf32> to vector<16x16xf32>
    %50 = vector.shape_cast %29 : vector<16x16xf32> to vector<1x16x16xf32>
    tpu.vector_store %arg10[%c0_38, %c0_39, %c0_40], %50 {strides = array<i32>} : memref<1x16x16xf32, #tpu.memory_space<vmem>>, vector<1x16x16xf32>,
    %cst_41 = arith.constant 0.000000e+00 : f32
    %51 = vector.broadcast %cst_41 : f32 to vector<18x18xf32>
    %c0_42 = arith.constant 0 : index
    %c0_43 = arith.constant 0 : index
    %c0_44 = arith.constant 0 : index
    %c0_45 = arith.constant 0 : index
    %52 = vector.load %arg11[%c0_42, %c0_43, %c0_44, %c0_45] : memref<1x1x18x18xf32, #tpu.memory_space<vmem>>, vector<1x1x18x18xf32>
    %53 = vector.shape_cast %52 : vector<1x1x18x18xf32> to vector<18x18xf32>
    %54 = vector.shape_cast %51 : vector<18x18xf32> to vector<1x1x18x18xf32>
    tpu.vector_store %arg11[%c0_42, %c0_43, %c0_44, %c0_45], %54 {strides = array<i32>} : memref<1x1x18x18xf32, #tpu.memory_space<vmem>>, vector<1x1x18x18xf32>,
    %c0_46 = arith.constant 0 : index
    %c0_47 = arith.constant 0 : index
    %c1_48 = arith.constant 1 : index
    %c1_49 = arith.constant 1 : index
    %55 = vector.load %arg11[%c0_46, %c0_47, %c1_48, %c1_49] : memref<1x1x18x18xf32, #tpu.memory_space<vmem>>, vector<1x1x16x16xf32>
    %56 = vector.shape_cast %55 : vector<1x1x16x16xf32> to vector<16x16xf32>
    %57 = vector.shape_cast %29 : vector<16x16xf32> to vector<1x1x16x16xf32>
    tpu.vector_store %arg11[%c0_46, %c0_47, %c1_48, %c1_49], %57 {strides = array<i32>} : memref<1x1x18x18xf32, #tpu.memory_space<vmem>>, vector<1x1x16x16xf32>,
    return
  }
  func.func @transform_0(%arg0: i32) -> (i32, i32, i32) {
    %c0_i32 = arith.constant 0 : i32
    %c0_i32_0 = arith.constant 0 : i32
    %c0_i32_1 = arith.constant 0 : i32
    return %arg0, %c0_i32, %c0_i32_0 : i32, i32, i32
  }
  func.func @transform_1(%arg0: i32) -> (i32, i32) {
    %c0_i32 = arith.constant 0 : i32
    %c0_i32_0 = arith.constant 0 : i32
    %c0_i32_1 = arith.constant 0 : i32
    return %c0_i32, %c0_i32_0 : i32, i32
  }
  func.func @transform_2(%arg0: i32) -> (i32, i32) {
    %c0_i32 = arith.constant 0 : i32
    %c0_i32_0 = arith.constant 0 : i32
    %c0_i32_1 = arith.constant 0 : i32
    return %c0_i32, %c0_i32_0 : i32, i32
  }
  func.func @transform_3(%arg0: i32) -> (i32, i32) {
    %c0_i32 = arith.constant 0 : i32
    %c0_i32_0 = arith.constant 0 : i32
    %c0_i32_1 = arith.constant 0 : i32
    return %c0_i32, %c0_i32_0 : i32, i32
  }
  func.func @transform_4(%arg0: i32) -> (i32, i32) {
    %c0_i32 = arith.constant 0 : i32
    %c0_i32_0 = arith.constant 0 : i32
    %c0_i32_1 = arith.constant 0 : i32
    return %c0_i32, %c0_i32_0 : i32, i32
  }
  func.func @transform_5(%arg0: i32) -> (i32, i32) {
    %c0_i32 = arith.constant 0 : i32
    %c0_i32_0 = arith.constant 0 : i32
    %c0_i32_1 = arith.constant 0 : i32
    return %c0_i32, %c0_i32_0 : i32, i32
  }
  func.func @transform_6(%arg0: i32) -> (i32, i32, i32, i32) {
    %c0_i32 = arith.constant 0 : i32
    %c0_i32_0 = arith.constant 0 : i32
    %c0_i32_1 = arith.constant 0 : i32
    %c0_i32_2 = arith.constant 0 : i32
    return %arg0, %c0_i32, %c0_i32_0, %c0_i32_1 : i32, i32, i32, i32
  }
  func.func @transform_7(%arg0: i32) -> (i32, i32, i32, i32) {
    %c0_i32 = arith.constant 0 : i32
    %c0_i32_0 = arith.constant 0 : i32
    %c0_i32_1 = arith.constant 0 : i32
    %c0_i32_2 = arith.constant 0 : i32
    return %arg0, %c0_i32, %c0_i32_0, %c0_i32_1 : i32, i32, i32, i32
  }
  func.func @transform_8(%arg0: i32) -> (i32, i32, i32, i32) {
    %c0_i32 = arith.constant 0 : i32
    %c0_i32_0 = arith.constant 0 : i32
    %c0_i32_1 = arith.constant 0 : i32
    %c0_i32_2 = arith.constant 0 : i32
    return %arg0, %c0_i32, %c0_i32_0, %c0_i32_1 : i32, i32, i32, i32
  }
  func.func @transform_9(%arg0: i32) -> (i32, i32, i32) {
    %c0_i32 = arith.constant 0 : i32
    %c0_i32_0 = arith.constant 0 : i32
    %c0_i32_1 = arith.constant 0 : i32
    return %arg0, %c0_i32, %c0_i32_0 : i32, i32, i32
  }
  func.func @transform_10(%arg0: i32) -> (i32, i32, i32, i32) {
    %c0_i32 = arith.constant 0 : i32
    %c0_i32_0 = arith.constant 0 : i32
    %c0_i32_1 = arith.constant 0 : i32
    %c0_i32_2 = arith.constant 0 : i32
    return %arg0, %c0_i32, %c0_i32_0, %c0_i32_1 : i32, i32, i32, i32
  }
}

module attributes {stable_mosaic.version = 11 : i64} {
  func.func @kernel(%arg0: i32, %arg1: memref<1x324xf32, #tpu.memory_space<vmem>>, %arg2: memref<1x1x324xf32, #tpu.memory_space<vmem>>, %arg3: memref<9x8x1xf32, #tpu.memory_space<vmem>>, %arg4: memref<8x1xf32, #tpu.memory_space<vmem>>, %arg5: memref<9x8x8xf32, #tpu.memory_space<vmem>>, %arg6: memref<8x1xf32, #tpu.memory_space<vmem>>, %arg7: memref<1x8x324xf32, #tpu.memory_space<vmem>>, %arg8: memref<8x362xf32, #tpu.memory_space<vmem>>) attributes {dimension_semantics = [#tpu.dimension_semantics<parallel>], iteration_bounds = array<i64: 2>, scalar_prefetch = 0 : i64, scratch_operands = 1 : i64, tpu.core_type = #tpu.core_type<tc>, window_params = [{pipeline_mode = #tpu.pipeline_mode<synchronous>, transform_indices = @transform_0, window_bounds = array<i64: 1, 324>}, {transform_indices = @transform_1, window_bounds = array<i64: 1, 1, 324>}, {pipeline_mode = #tpu.pipeline_mode<synchronous>, transform_indices = @transform_2, window_bounds = array<i64: 9, 8, 1>}, {pipeline_mode = #tpu.pipeline_mode<synchronous>, transform_indices = @transform_3, window_bounds = array<i64: 8, 1>}, {pipeline_mode = #tpu.pipeline_mode<synchronous>, transform_indices = @transform_4, window_bounds = array<i64: 9, 8, 8>}, {pipeline_mode = #tpu.pipeline_mode<synchronous>, transform_indices = @transform_5, window_bounds = array<i64: 8, 1>}, {transform_indices = @transform_6, window_bounds = array<i64: 1, 8, 324>}]} {
    %cst = arith.constant 0.000000e+00 : f32
    %0 = vector.broadcast %cst : f32 to vector<8x19xf32>
    %c0 = arith.constant 0 : index
    %c0_0 = arith.constant 0 : index
    %1 = vector.load %arg8[%c0, %c0_0] : memref<8x362xf32, #tpu.memory_space<vmem>>, vector<8x19xf32>
    tpu.vector_store %arg8[%c0, %c0_0], %0 {strides = array<i32>} : memref<8x362xf32, #tpu.memory_space<vmem>>, vector<8x19xf32>,
    %cst_1 = arith.constant 0.000000e+00 : f32
    %2 = vector.broadcast %cst_1 : f32 to vector<8x19xf32>
    %c0_2 = arith.constant 0 : index
    %c343 = arith.constant 343 : index
    %3 = vector.load %arg8[%c0_2, %c343] : memref<8x362xf32, #tpu.memory_space<vmem>>, vector<8x19xf32>
    tpu.vector_store %arg8[%c0_2, %c343], %2 {strides = array<i32>} : memref<8x362xf32, #tpu.memory_space<vmem>>, vector<8x19xf32>,
    %c0_3 = arith.constant 0 : index
    %c0_4 = arith.constant 0 : index
    %c0_5 = arith.constant 0 : index
    %4 = vector.load %arg2[%c0_3, %c0_4, %c0_5] : memref<1x1x324xf32, #tpu.memory_space<vmem>>, vector<1x1x324xf32>
    %5 = vector.shape_cast %4 : vector<1x1x324xf32> to vector<1x324xf32>
    %c0_6 = arith.constant 0 : index
    %c19 = arith.constant 19 : index
    %6 = vector.load %arg8[%c0_6, %c19] : memref<8x362xf32, #tpu.memory_space<vmem>>, vector<1x324xf32>
    tpu.vector_store %arg8[%c0_6, %c19], %5 {strides = array<i32>} : memref<8x362xf32, #tpu.memory_space<vmem>>, vector<1x324xf32>,
    %c0_7 = arith.constant 0 : index
    %c0_8 = arith.constant 0 : index
    %7 = vector.load %arg1[%c0_7, %c0_8] : memref<1x324xf32, #tpu.memory_space<vmem>>, vector<1x324xf32>
    %c0_9 = arith.constant 0 : index
    %c0_10 = arith.constant 0 : index
    %8 = vector.load %arg8[%c0_9, %c0_10] : memref<8x362xf32, #tpu.memory_space<vmem>>, vector<1x324xf32>
    %c0_11 = arith.constant 0 : index
    %c0_12 = arith.constant 0 : index
    %c0_13 = arith.constant 0 : index
    %9 = vector.load %arg3[%c0_11, %c0_12, %c0_13] : memref<9x8x1xf32, #tpu.memory_space<vmem>>, vector<1x8x1xf32>
    %10 = vector.shape_cast %9 : vector<1x8x1xf32> to vector<8x1xf32>
    %11 = vector.broadcast %10 : vector<8x1xf32> to vector<8x324xf32>
    %12 = vector.broadcast %8 : vector<1x324xf32> to vector<8x324xf32>
    %13 = arith.mulf %11, %12 : vector<8x324xf32>
    %c0_14 = arith.constant 0 : index
    %c1 = arith.constant 1 : index
    %14 = vector.load %arg8[%c0_14, %c1] : memref<8x362xf32, #tpu.memory_space<vmem>>, vector<1x324xf32>
    %c1_15 = arith.constant 1 : index
    %c0_16 = arith.constant 0 : index
    %c0_17 = arith.constant 0 : index
    %15 = vector.load %arg3[%c1_15, %c0_16, %c0_17] : memref<9x8x1xf32, #tpu.memory_space<vmem>>, vector<1x8x1xf32>
    %16 = vector.shape_cast %15 : vector<1x8x1xf32> to vector<8x1xf32>
    %17 = vector.broadcast %16 : vector<8x1xf32> to vector<8x324xf32>
    %18 = vector.broadcast %14 : vector<1x324xf32> to vector<8x324xf32>
    %19 = arith.mulf %17, %18 : vector<8x324xf32>
    %20 = arith.addf %13, %19 : vector<8x324xf32>
    %c0_18 = arith.constant 0 : index
    %c2 = arith.constant 2 : index
    %21 = vector.load %arg8[%c0_18, %c2] : memref<8x362xf32, #tpu.memory_space<vmem>>, vector<1x324xf32>
    %c2_19 = arith.constant 2 : index
    %c0_20 = arith.constant 0 : index
    %c0_21 = arith.constant 0 : index
    %22 = vector.load %arg3[%c2_19, %c0_20, %c0_21] : memref<9x8x1xf32, #tpu.memory_space<vmem>>, vector<1x8x1xf32>
    %23 = vector.shape_cast %22 : vector<1x8x1xf32> to vector<8x1xf32>
    %24 = vector.broadcast %23 : vector<8x1xf32> to vector<8x324xf32>
    %25 = vector.broadcast %21 : vector<1x324xf32> to vector<8x324xf32>
    %26 = arith.mulf %24, %25 : vector<8x324xf32>
    %27 = arith.addf %20, %26 : vector<8x324xf32>
    %c0_22 = arith.constant 0 : index
    %c18 = arith.constant 18 : index
    %28 = vector.load %arg8[%c0_22, %c18] : memref<8x362xf32, #tpu.memory_space<vmem>>, vector<1x324xf32>
    %c3 = arith.constant 3 : index
    %c0_23 = arith.constant 0 : index
    %c0_24 = arith.constant 0 : index
    %29 = vector.load %arg3[%c3, %c0_23, %c0_24] : memref<9x8x1xf32, #tpu.memory_space<vmem>>, vector<1x8x1xf32>
    %30 = vector.shape_cast %29 : vector<1x8x1xf32> to vector<8x1xf32>
    %31 = vector.broadcast %30 : vector<8x1xf32> to vector<8x324xf32>
    %32 = vector.broadcast %28 : vector<1x324xf32> to vector<8x324xf32>
    %33 = arith.mulf %31, %32 : vector<8x324xf32>
    %34 = arith.addf %27, %33 : vector<8x324xf32>
    %c0_25 = arith.constant 0 : index
    %c19_26 = arith.constant 19 : index
    %35 = vector.load %arg8[%c0_25, %c19_26] : memref<8x362xf32, #tpu.memory_space<vmem>>, vector<1x324xf32>
    %c4 = arith.constant 4 : index
    %c0_27 = arith.constant 0 : index
    %c0_28 = arith.constant 0 : index
    %36 = vector.load %arg3[%c4, %c0_27, %c0_28] : memref<9x8x1xf32, #tpu.memory_space<vmem>>, vector<1x8x1xf32>
    %37 = vector.shape_cast %36 : vector<1x8x1xf32> to vector<8x1xf32>
    %38 = vector.broadcast %37 : vector<8x1xf32> to vector<8x324xf32>
    %39 = vector.broadcast %35 : vector<1x324xf32> to vector<8x324xf32>
    %40 = arith.mulf %38, %39 : vector<8x324xf32>
    %41 = arith.addf %34, %40 : vector<8x324xf32>
    %c0_29 = arith.constant 0 : index
    %c20 = arith.constant 20 : index
    %42 = vector.load %arg8[%c0_29, %c20] : memref<8x362xf32, #tpu.memory_space<vmem>>, vector<1x324xf32>
    %c5 = arith.constant 5 : index
    %c0_30 = arith.constant 0 : index
    %c0_31 = arith.constant 0 : index
    %43 = vector.load %arg3[%c5, %c0_30, %c0_31] : memref<9x8x1xf32, #tpu.memory_space<vmem>>, vector<1x8x1xf32>
    %44 = vector.shape_cast %43 : vector<1x8x1xf32> to vector<8x1xf32>
    %45 = vector.broadcast %44 : vector<8x1xf32> to vector<8x324xf32>
    %46 = vector.broadcast %42 : vector<1x324xf32> to vector<8x324xf32>
    %47 = arith.mulf %45, %46 : vector<8x324xf32>
    %48 = arith.addf %41, %47 : vector<8x324xf32>
    %c0_32 = arith.constant 0 : index
    %c36 = arith.constant 36 : index
    %49 = vector.load %arg8[%c0_32, %c36] : memref<8x362xf32, #tpu.memory_space<vmem>>, vector<1x324xf32>
    %c6 = arith.constant 6 : index
    %c0_33 = arith.constant 0 : index
    %c0_34 = arith.constant 0 : index
    %50 = vector.load %arg3[%c6, %c0_33, %c0_34] : memref<9x8x1xf32, #tpu.memory_space<vmem>>, vector<1x8x1xf32>
    %51 = vector.shape_cast %50 : vector<1x8x1xf32> to vector<8x1xf32>
    %52 = vector.broadcast %51 : vector<8x1xf32> to vector<8x324xf32>
    %53 = vector.broadcast %49 : vector<1x324xf32> to vector<8x324xf32>
    %54 = arith.mulf %52, %53 : vector<8x324xf32>
    %55 = arith.addf %48, %54 : vector<8x324xf32>
    %c0_35 = arith.constant 0 : index
    %c37 = arith.constant 37 : index
    %56 = vector.load %arg8[%c0_35, %c37] : memref<8x362xf32, #tpu.memory_space<vmem>>, vector<1x324xf32>
    %c7 = arith.constant 7 : index
    %c0_36 = arith.constant 0 : index
    %c0_37 = arith.constant 0 : index
    %57 = vector.load %arg3[%c7, %c0_36, %c0_37] : memref<9x8x1xf32, #tpu.memory_space<vmem>>, vector<1x8x1xf32>
    %58 = vector.shape_cast %57 : vector<1x8x1xf32> to vector<8x1xf32>
    %59 = vector.broadcast %58 : vector<8x1xf32> to vector<8x324xf32>
    %60 = vector.broadcast %56 : vector<1x324xf32> to vector<8x324xf32>
    %61 = arith.mulf %59, %60 : vector<8x324xf32>
    %62 = arith.addf %55, %61 : vector<8x324xf32>
    %c0_38 = arith.constant 0 : index
    %c38 = arith.constant 38 : index
    %63 = vector.load %arg8[%c0_38, %c38] : memref<8x362xf32, #tpu.memory_space<vmem>>, vector<1x324xf32>
    %c8 = arith.constant 8 : index
    %c0_39 = arith.constant 0 : index
    %c0_40 = arith.constant 0 : index
    %64 = vector.load %arg3[%c8, %c0_39, %c0_40] : memref<9x8x1xf32, #tpu.memory_space<vmem>>, vector<1x8x1xf32>
    %65 = vector.shape_cast %64 : vector<1x8x1xf32> to vector<8x1xf32>
    %66 = vector.broadcast %65 : vector<8x1xf32> to vector<8x324xf32>
    %67 = vector.broadcast %63 : vector<1x324xf32> to vector<8x324xf32>
    %68 = arith.mulf %66, %67 : vector<8x324xf32>
    %69 = arith.addf %62, %68 : vector<8x324xf32>
    %c0_41 = arith.constant 0 : index
    %c0_42 = arith.constant 0 : index
    %70 = vector.load %arg4[%c0_41, %c0_42] : memref<8x1xf32, #tpu.memory_space<vmem>>, vector<8x1xf32>
    %71 = vector.broadcast %70 : vector<8x1xf32> to vector<8x324xf32>
    %72 = arith.addf %69, %71 : vector<8x324xf32>
    %cst_43 = arith.constant 0.000000e+00 : f32
    %73 = vector.broadcast %cst_43 : f32 to vector<8x324xf32>
    %74 = arith.maximumf %72, %73 : vector<8x324xf32>
    %75 = vector.broadcast %7 : vector<1x324xf32> to vector<8x324xf32>
    %76 = arith.mulf %74, %75 : vector<8x324xf32>
    %c0_44 = arith.constant 0 : index
    %c19_45 = arith.constant 19 : index
    %77 = vector.load %arg8[%c0_44, %c19_45] : memref<8x362xf32, #tpu.memory_space<vmem>>, vector<8x324xf32>
    tpu.vector_store %arg8[%c0_44, %c19_45], %76 {strides = array<i32>} : memref<8x362xf32, #tpu.memory_space<vmem>>, vector<8x324xf32>,
    %c0_46 = arith.constant 0 : index
    %c0_47 = arith.constant 0 : index
    %78 = vector.load %arg8[%c0_46, %c0_47] : memref<8x362xf32, #tpu.memory_space<vmem>>, vector<8x324xf32>
    %c0_48 = arith.constant 0 : index
    %c0_49 = arith.constant 0 : index
    %c0_50 = arith.constant 0 : index
    %79 = vector.load %arg5[%c0_48, %c0_49, %c0_50] : memref<9x8x8xf32, #tpu.memory_space<vmem>>, vector<1x8x8xf32>
    %80 = vector.shape_cast %79 : vector<1x8x8xf32> to vector<8x8xf32>
    %cst_51 = arith.constant dense<0.000000e+00> : vector<8x324xf32>
    %81 = tpu.matmul %80, %78, %cst_51 {dimension_numbers = #tpu.dot_dimension_numbers<[1], [0], [0], [1], [0, 0, 1, 1], [], []>} : vector<8x8xf32>, vector<8x324xf32>, vector<8x324xf32> -> vector<8x324xf32>
    %c0_52 = arith.constant 0 : index
    %c1_53 = arith.constant 1 : index
    %82 = vector.load %arg8[%c0_52, %c1_53] : memref<8x362xf32, #tpu.memory_space<vmem>>, vector<8x324xf32>
    %c1_54 = arith.constant 1 : index
    %c0_55 = arith.constant 0 : index
    %c0_56 = arith.constant 0 : index
    %83 = vector.load %arg5[%c1_54, %c0_55, %c0_56] : memref<9x8x8xf32, #tpu.memory_space<vmem>>, vector<1x8x8xf32>
    %84 = vector.shape_cast %83 : vector<1x8x8xf32> to vector<8x8xf32>
    %cst_57 = arith.constant dense<0.000000e+00> : vector<8x324xf32>
    %85 = tpu.matmul %84, %82, %cst_57 {dimension_numbers = #tpu.dot_dimension_numbers<[1], [0], [0], [1], [0, 0, 1, 1], [], []>} : vector<8x8xf32>, vector<8x324xf32>, vector<8x324xf32> -> vector<8x324xf32>
    %86 = arith.addf %81, %85 : vector<8x324xf32>
    %c0_58 = arith.constant 0 : index
    %c2_59 = arith.constant 2 : index
    %87 = vector.load %arg8[%c0_58, %c2_59] : memref<8x362xf32, #tpu.memory_space<vmem>>, vector<8x324xf32>
    %c2_60 = arith.constant 2 : index
    %c0_61 = arith.constant 0 : index
    %c0_62 = arith.constant 0 : index
    %88 = vector.load %arg5[%c2_60, %c0_61, %c0_62] : memref<9x8x8xf32, #tpu.memory_space<vmem>>, vector<1x8x8xf32>
    %89 = vector.shape_cast %88 : vector<1x8x8xf32> to vector<8x8xf32>
    %cst_63 = arith.constant dense<0.000000e+00> : vector<8x324xf32>
    %90 = tpu.matmul %89, %87, %cst_63 {dimension_numbers = #tpu.dot_dimension_numbers<[1], [0], [0], [1], [0, 0, 1, 1], [], []>} : vector<8x8xf32>, vector<8x324xf32>, vector<8x324xf32> -> vector<8x324xf32>
    %91 = arith.addf %86, %90 : vector<8x324xf32>
    %c0_64 = arith.constant 0 : index
    %c18_65 = arith.constant 18 : index
    %92 = vector.load %arg8[%c0_64, %c18_65] : memref<8x362xf32, #tpu.memory_space<vmem>>, vector<8x324xf32>
    %c3_66 = arith.constant 3 : index
    %c0_67 = arith.constant 0 : index
    %c0_68 = arith.constant 0 : index
    %93 = vector.load %arg5[%c3_66, %c0_67, %c0_68] : memref<9x8x8xf32, #tpu.memory_space<vmem>>, vector<1x8x8xf32>
    %94 = vector.shape_cast %93 : vector<1x8x8xf32> to vector<8x8xf32>
    %cst_69 = arith.constant dense<0.000000e+00> : vector<8x324xf32>
    %95 = tpu.matmul %94, %92, %cst_69 {dimension_numbers = #tpu.dot_dimension_numbers<[1], [0], [0], [1], [0, 0, 1, 1], [], []>} : vector<8x8xf32>, vector<8x324xf32>, vector<8x324xf32> -> vector<8x324xf32>
    %96 = arith.addf %91, %95 : vector<8x324xf32>
    %c0_70 = arith.constant 0 : index
    %c19_71 = arith.constant 19 : index
    %97 = vector.load %arg8[%c0_70, %c19_71] : memref<8x362xf32, #tpu.memory_space<vmem>>, vector<8x324xf32>
    %c4_72 = arith.constant 4 : index
    %c0_73 = arith.constant 0 : index
    %c0_74 = arith.constant 0 : index
    %98 = vector.load %arg5[%c4_72, %c0_73, %c0_74] : memref<9x8x8xf32, #tpu.memory_space<vmem>>, vector<1x8x8xf32>
    %99 = vector.shape_cast %98 : vector<1x8x8xf32> to vector<8x8xf32>
    %cst_75 = arith.constant dense<0.000000e+00> : vector<8x324xf32>
    %100 = tpu.matmul %99, %97, %cst_75 {dimension_numbers = #tpu.dot_dimension_numbers<[1], [0], [0], [1], [0, 0, 1, 1], [], []>} : vector<8x8xf32>, vector<8x324xf32>, vector<8x324xf32> -> vector<8x324xf32>
    %101 = arith.addf %96, %100 : vector<8x324xf32>
    %c0_76 = arith.constant 0 : index
    %c20_77 = arith.constant 20 : index
    %102 = vector.load %arg8[%c0_76, %c20_77] : memref<8x362xf32, #tpu.memory_space<vmem>>, vector<8x324xf32>
    %c5_78 = arith.constant 5 : index
    %c0_79 = arith.constant 0 : index
    %c0_80 = arith.constant 0 : index
    %103 = vector.load %arg5[%c5_78, %c0_79, %c0_80] : memref<9x8x8xf32, #tpu.memory_space<vmem>>, vector<1x8x8xf32>
    %104 = vector.shape_cast %103 : vector<1x8x8xf32> to vector<8x8xf32>
    %cst_81 = arith.constant dense<0.000000e+00> : vector<8x324xf32>
    %105 = tpu.matmul %104, %102, %cst_81 {dimension_numbers = #tpu.dot_dimension_numbers<[1], [0], [0], [1], [0, 0, 1, 1], [], []>} : vector<8x8xf32>, vector<8x324xf32>, vector<8x324xf32> -> vector<8x324xf32>
    %106 = arith.addf %101, %105 : vector<8x324xf32>
    %c0_82 = arith.constant 0 : index
    %c36_83 = arith.constant 36 : index
    %107 = vector.load %arg8[%c0_82, %c36_83] : memref<8x362xf32, #tpu.memory_space<vmem>>, vector<8x324xf32>
    %c6_84 = arith.constant 6 : index
    %c0_85 = arith.constant 0 : index
    %c0_86 = arith.constant 0 : index
    %108 = vector.load %arg5[%c6_84, %c0_85, %c0_86] : memref<9x8x8xf32, #tpu.memory_space<vmem>>, vector<1x8x8xf32>
    %109 = vector.shape_cast %108 : vector<1x8x8xf32> to vector<8x8xf32>
    %cst_87 = arith.constant dense<0.000000e+00> : vector<8x324xf32>
    %110 = tpu.matmul %109, %107, %cst_87 {dimension_numbers = #tpu.dot_dimension_numbers<[1], [0], [0], [1], [0, 0, 1, 1], [], []>} : vector<8x8xf32>, vector<8x324xf32>, vector<8x324xf32> -> vector<8x324xf32>
    %111 = arith.addf %106, %110 : vector<8x324xf32>
    %c0_88 = arith.constant 0 : index
    %c37_89 = arith.constant 37 : index
    %112 = vector.load %arg8[%c0_88, %c37_89] : memref<8x362xf32, #tpu.memory_space<vmem>>, vector<8x324xf32>
    %c7_90 = arith.constant 7 : index
    %c0_91 = arith.constant 0 : index
    %c0_92 = arith.constant 0 : index
    %113 = vector.load %arg5[%c7_90, %c0_91, %c0_92] : memref<9x8x8xf32, #tpu.memory_space<vmem>>, vector<1x8x8xf32>
    %114 = vector.shape_cast %113 : vector<1x8x8xf32> to vector<8x8xf32>
    %cst_93 = arith.constant dense<0.000000e+00> : vector<8x324xf32>
    %115 = tpu.matmul %114, %112, %cst_93 {dimension_numbers = #tpu.dot_dimension_numbers<[1], [0], [0], [1], [0, 0, 1, 1], [], []>} : vector<8x8xf32>, vector<8x324xf32>, vector<8x324xf32> -> vector<8x324xf32>
    %116 = arith.addf %111, %115 : vector<8x324xf32>
    %c0_94 = arith.constant 0 : index
    %c38_95 = arith.constant 38 : index
    %117 = vector.load %arg8[%c0_94, %c38_95] : memref<8x362xf32, #tpu.memory_space<vmem>>, vector<8x324xf32>
    %c8_96 = arith.constant 8 : index
    %c0_97 = arith.constant 0 : index
    %c0_98 = arith.constant 0 : index
    %118 = vector.load %arg5[%c8_96, %c0_97, %c0_98] : memref<9x8x8xf32, #tpu.memory_space<vmem>>, vector<1x8x8xf32>
    %119 = vector.shape_cast %118 : vector<1x8x8xf32> to vector<8x8xf32>
    %cst_99 = arith.constant dense<0.000000e+00> : vector<8x324xf32>
    %120 = tpu.matmul %119, %117, %cst_99 {dimension_numbers = #tpu.dot_dimension_numbers<[1], [0], [0], [1], [0, 0, 1, 1], [], []>} : vector<8x8xf32>, vector<8x324xf32>, vector<8x324xf32> -> vector<8x324xf32>
    %121 = arith.addf %116, %120 : vector<8x324xf32>
    %c0_100 = arith.constant 0 : index
    %c0_101 = arith.constant 0 : index
    %122 = vector.load %arg6[%c0_100, %c0_101] : memref<8x1xf32, #tpu.memory_space<vmem>>, vector<8x1xf32>
    %123 = vector.broadcast %122 : vector<8x1xf32> to vector<8x324xf32>
    %124 = arith.addf %121, %123 : vector<8x324xf32>
    %cst_102 = arith.constant 0.000000e+00 : f32
    %125 = vector.broadcast %cst_102 : f32 to vector<8x324xf32>
    %126 = arith.maximumf %124, %125 : vector<8x324xf32>
    %127 = vector.broadcast %7 : vector<1x324xf32> to vector<8x324xf32>
    %128 = arith.mulf %126, %127 : vector<8x324xf32>
    %c0_103 = arith.constant 0 : index
    %c0_104 = arith.constant 0 : index
    %c0_105 = arith.constant 0 : index
    %129 = vector.load %arg7[%c0_103, %c0_104, %c0_105] : memref<1x8x324xf32, #tpu.memory_space<vmem>>, vector<1x8x324xf32>
    %130 = vector.shape_cast %129 : vector<1x8x324xf32> to vector<8x324xf32>
    %131 = vector.shape_cast %128 : vector<8x324xf32> to vector<1x8x324xf32>
    tpu.vector_store %arg7[%c0_103, %c0_104, %c0_105], %131 {strides = array<i32>} : memref<1x8x324xf32, #tpu.memory_space<vmem>>, vector<1x8x324xf32>,
    return
  }
  func.func @transform_0(%arg0: i32) -> (i32, i32) {
    %c0_i32 = arith.constant 0 : i32
    %c0_i32_0 = arith.constant 0 : i32
    %c0_i32_1 = arith.constant 0 : i32
    return %c0_i32, %c0_i32_0 : i32, i32
  }
  func.func @transform_1(%arg0: i32) -> (i32, i32, i32) {
    %c0_i32 = arith.constant 0 : i32
    %c0_i32_0 = arith.constant 0 : i32
    %c0_i32_1 = arith.constant 0 : i32
    return %arg0, %c0_i32, %c0_i32_0 : i32, i32, i32
  }
  func.func @transform_2(%arg0: i32) -> (i32, i32, i32) {
    %c0_i32 = arith.constant 0 : i32
    %c0_i32_0 = arith.constant 0 : i32
    %c0_i32_1 = arith.constant 0 : i32
    %c0_i32_2 = arith.constant 0 : i32
    return %c0_i32, %c0_i32_0, %c0_i32_1 : i32, i32, i32
  }
  func.func @transform_3(%arg0: i32) -> (i32, i32) {
    %c0_i32 = arith.constant 0 : i32
    %c0_i32_0 = arith.constant 0 : i32
    %c0_i32_1 = arith.constant 0 : i32
    return %c0_i32, %c0_i32_0 : i32, i32
  }
  func.func @transform_4(%arg0: i32) -> (i32, i32, i32) {
    %c0_i32 = arith.constant 0 : i32
    %c0_i32_0 = arith.constant 0 : i32
    %c0_i32_1 = arith.constant 0 : i32
    %c0_i32_2 = arith.constant 0 : i32
    return %c0_i32, %c0_i32_0, %c0_i32_1 : i32, i32, i32
  }
  func.func @transform_5(%arg0: i32) -> (i32, i32) {
    %c0_i32 = arith.constant 0 : i32
    %c0_i32_0 = arith.constant 0 : i32
    %c0_i32_1 = arith.constant 0 : i32
    return %c0_i32, %c0_i32_0 : i32, i32
  }
  func.func @transform_6(%arg0: i32) -> (i32, i32, i32) {
    %c0_i32 = arith.constant 0 : i32
    %c0_i32_0 = arith.constant 0 : i32
    %c0_i32_1 = arith.constant 0 : i32
    return %arg0, %c0_i32, %c0_i32_0 : i32, i32, i32
  }
}

module attributes {stable_mosaic.version = 11 : i64} {
  func.func @kernel(%arg0: i32, %arg1: memref<1x100xf32, #tpu.memory_space<vmem>>, %arg2: memref<1x8x100xf32, #tpu.memory_space<vmem>>, %arg3: memref<9x16x8xf32, #tpu.memory_space<vmem>>, %arg4: memref<16x1xf32, #tpu.memory_space<vmem>>, %arg5: memref<9x16x16xf32, #tpu.memory_space<vmem>>, %arg6: memref<16x1xf32, #tpu.memory_space<vmem>>, %arg7: memref<1x16x100xf32, #tpu.memory_space<vmem>>, %arg8: memref<16x122xf32, #tpu.memory_space<vmem>>) attributes {dimension_semantics = [#tpu.dimension_semantics<parallel>], iteration_bounds = array<i64: 2>, scalar_prefetch = 0 : i64, scratch_operands = 1 : i64, tpu.core_type = #tpu.core_type<tc>, window_params = [{pipeline_mode = #tpu.pipeline_mode<synchronous>, transform_indices = @transform_0, window_bounds = array<i64: 1, 100>}, {transform_indices = @transform_1, window_bounds = array<i64: 1, 8, 100>}, {pipeline_mode = #tpu.pipeline_mode<synchronous>, transform_indices = @transform_2, window_bounds = array<i64: 9, 16, 8>}, {pipeline_mode = #tpu.pipeline_mode<synchronous>, transform_indices = @transform_3, window_bounds = array<i64: 16, 1>}, {pipeline_mode = #tpu.pipeline_mode<synchronous>, transform_indices = @transform_4, window_bounds = array<i64: 9, 16, 16>}, {pipeline_mode = #tpu.pipeline_mode<synchronous>, transform_indices = @transform_5, window_bounds = array<i64: 16, 1>}, {transform_indices = @transform_6, window_bounds = array<i64: 1, 16, 100>}]} {
    %cst = arith.constant 0.000000e+00 : f32
    %0 = vector.broadcast %cst : f32 to vector<16x11xf32>
    %c0 = arith.constant 0 : index
    %c0_0 = arith.constant 0 : index
    %1 = vector.load %arg8[%c0, %c0_0] : memref<16x122xf32, #tpu.memory_space<vmem>>, vector<16x11xf32>
    tpu.vector_store %arg8[%c0, %c0_0], %0 {strides = array<i32>} : memref<16x122xf32, #tpu.memory_space<vmem>>, vector<16x11xf32>,
    %cst_1 = arith.constant 0.000000e+00 : f32
    %2 = vector.broadcast %cst_1 : f32 to vector<16x11xf32>
    %c0_2 = arith.constant 0 : index
    %c111 = arith.constant 111 : index
    %3 = vector.load %arg8[%c0_2, %c111] : memref<16x122xf32, #tpu.memory_space<vmem>>, vector<16x11xf32>
    tpu.vector_store %arg8[%c0_2, %c111], %2 {strides = array<i32>} : memref<16x122xf32, #tpu.memory_space<vmem>>, vector<16x11xf32>,
    %c0_3 = arith.constant 0 : index
    %c0_4 = arith.constant 0 : index
    %c0_5 = arith.constant 0 : index
    %4 = vector.load %arg2[%c0_3, %c0_4, %c0_5] : memref<1x8x100xf32, #tpu.memory_space<vmem>>, vector<1x8x100xf32>
    %5 = vector.shape_cast %4 : vector<1x8x100xf32> to vector<8x100xf32>
    %c0_6 = arith.constant 0 : index
    %c11 = arith.constant 11 : index
    %6 = vector.load %arg8[%c0_6, %c11] : memref<16x122xf32, #tpu.memory_space<vmem>>, vector<8x100xf32>
    tpu.vector_store %arg8[%c0_6, %c11], %5 {strides = array<i32>} : memref<16x122xf32, #tpu.memory_space<vmem>>, vector<8x100xf32>,
    %c0_7 = arith.constant 0 : index
    %c0_8 = arith.constant 0 : index
    %7 = vector.load %arg1[%c0_7, %c0_8] : memref<1x100xf32, #tpu.memory_space<vmem>>, vector<1x100xf32>
    %c0_9 = arith.constant 0 : index
    %c0_10 = arith.constant 0 : index
    %8 = vector.load %arg8[%c0_9, %c0_10] : memref<16x122xf32, #tpu.memory_space<vmem>>, vector<8x100xf32>
    %c0_11 = arith.constant 0 : index
    %c0_12 = arith.constant 0 : index
    %c0_13 = arith.constant 0 : index
    %9 = vector.load %arg3[%c0_11, %c0_12, %c0_13] : memref<9x16x8xf32, #tpu.memory_space<vmem>>, vector<1x16x8xf32>
    %10 = vector.shape_cast %9 : vector<1x16x8xf32> to vector<16x8xf32>
    %cst_14 = arith.constant dense<0.000000e+00> : vector<16x100xf32>
    %11 = tpu.matmul %10, %8, %cst_14 {dimension_numbers = #tpu.dot_dimension_numbers<[1], [0], [0], [1], [0, 0, 1, 1], [], []>} : vector<16x8xf32>, vector<8x100xf32>, vector<16x100xf32> -> vector<16x100xf32>
    %c0_15 = arith.constant 0 : index
    %c1 = arith.constant 1 : index
    %12 = vector.load %arg8[%c0_15, %c1] : memref<16x122xf32, #tpu.memory_space<vmem>>, vector<8x100xf32>
    %c1_16 = arith.constant 1 : index
    %c0_17 = arith.constant 0 : index
    %c0_18 = arith.constant 0 : index
    %13 = vector.load %arg3[%c1_16, %c0_17, %c0_18] : memref<9x16x8xf32, #tpu.memory_space<vmem>>, vector<1x16x8xf32>
    %14 = vector.shape_cast %13 : vector<1x16x8xf32> to vector<16x8xf32>
    %cst_19 = arith.constant dense<0.000000e+00> : vector<16x100xf32>
    %15 = tpu.matmul %14, %12, %cst_19 {dimension_numbers = #tpu.dot_dimension_numbers<[1], [0], [0], [1], [0, 0, 1, 1], [], []>} : vector<16x8xf32>, vector<8x100xf32>, vector<16x100xf32> -> vector<16x100xf32>
    %16 = arith.addf %11, %15 : vector<16x100xf32>
    %c0_20 = arith.constant 0 : index
    %c2 = arith.constant 2 : index
    %17 = vector.load %arg8[%c0_20, %c2] : memref<16x122xf32, #tpu.memory_space<vmem>>, vector<8x100xf32>
    %c2_21 = arith.constant 2 : index
    %c0_22 = arith.constant 0 : index
    %c0_23 = arith.constant 0 : index
    %18 = vector.load %arg3[%c2_21, %c0_22, %c0_23] : memref<9x16x8xf32, #tpu.memory_space<vmem>>, vector<1x16x8xf32>
    %19 = vector.shape_cast %18 : vector<1x16x8xf32> to vector<16x8xf32>
    %cst_24 = arith.constant dense<0.000000e+00> : vector<16x100xf32>
    %20 = tpu.matmul %19, %17, %cst_24 {dimension_numbers = #tpu.dot_dimension_numbers<[1], [0], [0], [1], [0, 0, 1, 1], [], []>} : vector<16x8xf32>, vector<8x100xf32>, vector<16x100xf32> -> vector<16x100xf32>
    %21 = arith.addf %16, %20 : vector<16x100xf32>
    %c0_25 = arith.constant 0 : index
    %c10 = arith.constant 10 : index
    %22 = vector.load %arg8[%c0_25, %c10] : memref<16x122xf32, #tpu.memory_space<vmem>>, vector<8x100xf32>
    %c3 = arith.constant 3 : index
    %c0_26 = arith.constant 0 : index
    %c0_27 = arith.constant 0 : index
    %23 = vector.load %arg3[%c3, %c0_26, %c0_27] : memref<9x16x8xf32, #tpu.memory_space<vmem>>, vector<1x16x8xf32>
    %24 = vector.shape_cast %23 : vector<1x16x8xf32> to vector<16x8xf32>
    %cst_28 = arith.constant dense<0.000000e+00> : vector<16x100xf32>
    %25 = tpu.matmul %24, %22, %cst_28 {dimension_numbers = #tpu.dot_dimension_numbers<[1], [0], [0], [1], [0, 0, 1, 1], [], []>} : vector<16x8xf32>, vector<8x100xf32>, vector<16x100xf32> -> vector<16x100xf32>
    %26 = arith.addf %21, %25 : vector<16x100xf32>
    %c0_29 = arith.constant 0 : index
    %c11_30 = arith.constant 11 : index
    %27 = vector.load %arg8[%c0_29, %c11_30] : memref<16x122xf32, #tpu.memory_space<vmem>>, vector<8x100xf32>
    %c4 = arith.constant 4 : index
    %c0_31 = arith.constant 0 : index
    %c0_32 = arith.constant 0 : index
    %28 = vector.load %arg3[%c4, %c0_31, %c0_32] : memref<9x16x8xf32, #tpu.memory_space<vmem>>, vector<1x16x8xf32>
    %29 = vector.shape_cast %28 : vector<1x16x8xf32> to vector<16x8xf32>
    %cst_33 = arith.constant dense<0.000000e+00> : vector<16x100xf32>
    %30 = tpu.matmul %29, %27, %cst_33 {dimension_numbers = #tpu.dot_dimension_numbers<[1], [0], [0], [1], [0, 0, 1, 1], [], []>} : vector<16x8xf32>, vector<8x100xf32>, vector<16x100xf32> -> vector<16x100xf32>
    %31 = arith.addf %26, %30 : vector<16x100xf32>
    %c0_34 = arith.constant 0 : index
    %c12 = arith.constant 12 : index
    %32 = vector.load %arg8[%c0_34, %c12] : memref<16x122xf32, #tpu.memory_space<vmem>>, vector<8x100xf32>
    %c5 = arith.constant 5 : index
    %c0_35 = arith.constant 0 : index
    %c0_36 = arith.constant 0 : index
    %33 = vector.load %arg3[%c5, %c0_35, %c0_36] : memref<9x16x8xf32, #tpu.memory_space<vmem>>, vector<1x16x8xf32>
    %34 = vector.shape_cast %33 : vector<1x16x8xf32> to vector<16x8xf32>
    %cst_37 = arith.constant dense<0.000000e+00> : vector<16x100xf32>
    %35 = tpu.matmul %34, %32, %cst_37 {dimension_numbers = #tpu.dot_dimension_numbers<[1], [0], [0], [1], [0, 0, 1, 1], [], []>} : vector<16x8xf32>, vector<8x100xf32>, vector<16x100xf32> -> vector<16x100xf32>
    %36 = arith.addf %31, %35 : vector<16x100xf32>
    %c0_38 = arith.constant 0 : index
    %c20 = arith.constant 20 : index
    %37 = vector.load %arg8[%c0_38, %c20] : memref<16x122xf32, #tpu.memory_space<vmem>>, vector<8x100xf32>
    %c6 = arith.constant 6 : index
    %c0_39 = arith.constant 0 : index
    %c0_40 = arith.constant 0 : index
    %38 = vector.load %arg3[%c6, %c0_39, %c0_40] : memref<9x16x8xf32, #tpu.memory_space<vmem>>, vector<1x16x8xf32>
    %39 = vector.shape_cast %38 : vector<1x16x8xf32> to vector<16x8xf32>
    %cst_41 = arith.constant dense<0.000000e+00> : vector<16x100xf32>
    %40 = tpu.matmul %39, %37, %cst_41 {dimension_numbers = #tpu.dot_dimension_numbers<[1], [0], [0], [1], [0, 0, 1, 1], [], []>} : vector<16x8xf32>, vector<8x100xf32>, vector<16x100xf32> -> vector<16x100xf32>
    %41 = arith.addf %36, %40 : vector<16x100xf32>
    %c0_42 = arith.constant 0 : index
    %c21 = arith.constant 21 : index
    %42 = vector.load %arg8[%c0_42, %c21] : memref<16x122xf32, #tpu.memory_space<vmem>>, vector<8x100xf32>
    %c7 = arith.constant 7 : index
    %c0_43 = arith.constant 0 : index
    %c0_44 = arith.constant 0 : index
    %43 = vector.load %arg3[%c7, %c0_43, %c0_44] : memref<9x16x8xf32, #tpu.memory_space<vmem>>, vector<1x16x8xf32>
    %44 = vector.shape_cast %43 : vector<1x16x8xf32> to vector<16x8xf32>
    %cst_45 = arith.constant dense<0.000000e+00> : vector<16x100xf32>
    %45 = tpu.matmul %44, %42, %cst_45 {dimension_numbers = #tpu.dot_dimension_numbers<[1], [0], [0], [1], [0, 0, 1, 1], [], []>} : vector<16x8xf32>, vector<8x100xf32>, vector<16x100xf32> -> vector<16x100xf32>
    %46 = arith.addf %41, %45 : vector<16x100xf32>
    %c0_46 = arith.constant 0 : index
    %c22 = arith.constant 22 : index
    %47 = vector.load %arg8[%c0_46, %c22] : memref<16x122xf32, #tpu.memory_space<vmem>>, vector<8x100xf32>
    %c8 = arith.constant 8 : index
    %c0_47 = arith.constant 0 : index
    %c0_48 = arith.constant 0 : index
    %48 = vector.load %arg3[%c8, %c0_47, %c0_48] : memref<9x16x8xf32, #tpu.memory_space<vmem>>, vector<1x16x8xf32>
    %49 = vector.shape_cast %48 : vector<1x16x8xf32> to vector<16x8xf32>
    %cst_49 = arith.constant dense<0.000000e+00> : vector<16x100xf32>
    %50 = tpu.matmul %49, %47, %cst_49 {dimension_numbers = #tpu.dot_dimension_numbers<[1], [0], [0], [1], [0, 0, 1, 1], [], []>} : vector<16x8xf32>, vector<8x100xf32>, vector<16x100xf32> -> vector<16x100xf32>
    %51 = arith.addf %46, %50 : vector<16x100xf32>
    %c0_50 = arith.constant 0 : index
    %c0_51 = arith.constant 0 : index
    %52 = vector.load %arg4[%c0_50, %c0_51] : memref<16x1xf32, #tpu.memory_space<vmem>>, vector<16x1xf32>
    %53 = vector.broadcast %52 : vector<16x1xf32> to vector<16x100xf32>
    %54 = arith.addf %51, %53 : vector<16x100xf32>
    %cst_52 = arith.constant 0.000000e+00 : f32
    %55 = vector.broadcast %cst_52 : f32 to vector<16x100xf32>
    %56 = arith.maximumf %54, %55 : vector<16x100xf32>
    %57 = vector.broadcast %7 : vector<1x100xf32> to vector<16x100xf32>
    %58 = arith.mulf %56, %57 : vector<16x100xf32>
    %c0_53 = arith.constant 0 : index
    %c11_54 = arith.constant 11 : index
    %59 = vector.load %arg8[%c0_53, %c11_54] : memref<16x122xf32, #tpu.memory_space<vmem>>, vector<16x100xf32>
    tpu.vector_store %arg8[%c0_53, %c11_54], %58 {strides = array<i32>} : memref<16x122xf32, #tpu.memory_space<vmem>>, vector<16x100xf32>,
    %c0_55 = arith.constant 0 : index
    %c0_56 = arith.constant 0 : index
    %60 = vector.load %arg8[%c0_55, %c0_56] : memref<16x122xf32, #tpu.memory_space<vmem>>, vector<16x100xf32>
    %c0_57 = arith.constant 0 : index
    %c0_58 = arith.constant 0 : index
    %c0_59 = arith.constant 0 : index
    %61 = vector.load %arg5[%c0_57, %c0_58, %c0_59] : memref<9x16x16xf32, #tpu.memory_space<vmem>>, vector<1x16x16xf32>
    %62 = vector.shape_cast %61 : vector<1x16x16xf32> to vector<16x16xf32>
    %cst_60 = arith.constant dense<0.000000e+00> : vector<16x100xf32>
    %63 = tpu.matmul %62, %60, %cst_60 {dimension_numbers = #tpu.dot_dimension_numbers<[1], [0], [0], [1], [0, 0, 1, 1], [], []>} : vector<16x16xf32>, vector<16x100xf32>, vector<16x100xf32> -> vector<16x100xf32>
    %c0_61 = arith.constant 0 : index
    %c1_62 = arith.constant 1 : index
    %64 = vector.load %arg8[%c0_61, %c1_62] : memref<16x122xf32, #tpu.memory_space<vmem>>, vector<16x100xf32>
    %c1_63 = arith.constant 1 : index
    %c0_64 = arith.constant 0 : index
    %c0_65 = arith.constant 0 : index
    %65 = vector.load %arg5[%c1_63, %c0_64, %c0_65] : memref<9x16x16xf32, #tpu.memory_space<vmem>>, vector<1x16x16xf32>
    %66 = vector.shape_cast %65 : vector<1x16x16xf32> to vector<16x16xf32>
    %cst_66 = arith.constant dense<0.000000e+00> : vector<16x100xf32>
    %67 = tpu.matmul %66, %64, %cst_66 {dimension_numbers = #tpu.dot_dimension_numbers<[1], [0], [0], [1], [0, 0, 1, 1], [], []>} : vector<16x16xf32>, vector<16x100xf32>, vector<16x100xf32> -> vector<16x100xf32>
    %68 = arith.addf %63, %67 : vector<16x100xf32>
    %c0_67 = arith.constant 0 : index
    %c2_68 = arith.constant 2 : index
    %69 = vector.load %arg8[%c0_67, %c2_68] : memref<16x122xf32, #tpu.memory_space<vmem>>, vector<16x100xf32>
    %c2_69 = arith.constant 2 : index
    %c0_70 = arith.constant 0 : index
    %c0_71 = arith.constant 0 : index
    %70 = vector.load %arg5[%c2_69, %c0_70, %c0_71] : memref<9x16x16xf32, #tpu.memory_space<vmem>>, vector<1x16x16xf32>
    %71 = vector.shape_cast %70 : vector<1x16x16xf32> to vector<16x16xf32>
    %cst_72 = arith.constant dense<0.000000e+00> : vector<16x100xf32>
    %72 = tpu.matmul %71, %69, %cst_72 {dimension_numbers = #tpu.dot_dimension_numbers<[1], [0], [0], [1], [0, 0, 1, 1], [], []>} : vector<16x16xf32>, vector<16x100xf32>, vector<16x100xf32> -> vector<16x100xf32>
    %73 = arith.addf %68, %72 : vector<16x100xf32>
    %c0_73 = arith.constant 0 : index
    %c10_74 = arith.constant 10 : index
    %74 = vector.load %arg8[%c0_73, %c10_74] : memref<16x122xf32, #tpu.memory_space<vmem>>, vector<16x100xf32>
    %c3_75 = arith.constant 3 : index
    %c0_76 = arith.constant 0 : index
    %c0_77 = arith.constant 0 : index
    %75 = vector.load %arg5[%c3_75, %c0_76, %c0_77] : memref<9x16x16xf32, #tpu.memory_space<vmem>>, vector<1x16x16xf32>
    %76 = vector.shape_cast %75 : vector<1x16x16xf32> to vector<16x16xf32>
    %cst_78 = arith.constant dense<0.000000e+00> : vector<16x100xf32>
    %77 = tpu.matmul %76, %74, %cst_78 {dimension_numbers = #tpu.dot_dimension_numbers<[1], [0], [0], [1], [0, 0, 1, 1], [], []>} : vector<16x16xf32>, vector<16x100xf32>, vector<16x100xf32> -> vector<16x100xf32>
    %78 = arith.addf %73, %77 : vector<16x100xf32>
    %c0_79 = arith.constant 0 : index
    %c11_80 = arith.constant 11 : index
    %79 = vector.load %arg8[%c0_79, %c11_80] : memref<16x122xf32, #tpu.memory_space<vmem>>, vector<16x100xf32>
    %c4_81 = arith.constant 4 : index
    %c0_82 = arith.constant 0 : index
    %c0_83 = arith.constant 0 : index
    %80 = vector.load %arg5[%c4_81, %c0_82, %c0_83] : memref<9x16x16xf32, #tpu.memory_space<vmem>>, vector<1x16x16xf32>
    %81 = vector.shape_cast %80 : vector<1x16x16xf32> to vector<16x16xf32>
    %cst_84 = arith.constant dense<0.000000e+00> : vector<16x100xf32>
    %82 = tpu.matmul %81, %79, %cst_84 {dimension_numbers = #tpu.dot_dimension_numbers<[1], [0], [0], [1], [0, 0, 1, 1], [], []>} : vector<16x16xf32>, vector<16x100xf32>, vector<16x100xf32> -> vector<16x100xf32>
    %83 = arith.addf %78, %82 : vector<16x100xf32>
    %c0_85 = arith.constant 0 : index
    %c12_86 = arith.constant 12 : index
    %84 = vector.load %arg8[%c0_85, %c12_86] : memref<16x122xf32, #tpu.memory_space<vmem>>, vector<16x100xf32>
    %c5_87 = arith.constant 5 : index
    %c0_88 = arith.constant 0 : index
    %c0_89 = arith.constant 0 : index
    %85 = vector.load %arg5[%c5_87, %c0_88, %c0_89] : memref<9x16x16xf32, #tpu.memory_space<vmem>>, vector<1x16x16xf32>
    %86 = vector.shape_cast %85 : vector<1x16x16xf32> to vector<16x16xf32>
    %cst_90 = arith.constant dense<0.000000e+00> : vector<16x100xf32>
    %87 = tpu.matmul %86, %84, %cst_90 {dimension_numbers = #tpu.dot_dimension_numbers<[1], [0], [0], [1], [0, 0, 1, 1], [], []>} : vector<16x16xf32>, vector<16x100xf32>, vector<16x100xf32> -> vector<16x100xf32>
    %88 = arith.addf %83, %87 : vector<16x100xf32>
    %c0_91 = arith.constant 0 : index
    %c20_92 = arith.constant 20 : index
    %89 = vector.load %arg8[%c0_91, %c20_92] : memref<16x122xf32, #tpu.memory_space<vmem>>, vector<16x100xf32>
    %c6_93 = arith.constant 6 : index
    %c0_94 = arith.constant 0 : index
    %c0_95 = arith.constant 0 : index
    %90 = vector.load %arg5[%c6_93, %c0_94, %c0_95] : memref<9x16x16xf32, #tpu.memory_space<vmem>>, vector<1x16x16xf32>
    %91 = vector.shape_cast %90 : vector<1x16x16xf32> to vector<16x16xf32>
    %cst_96 = arith.constant dense<0.000000e+00> : vector<16x100xf32>
    %92 = tpu.matmul %91, %89, %cst_96 {dimension_numbers = #tpu.dot_dimension_numbers<[1], [0], [0], [1], [0, 0, 1, 1], [], []>} : vector<16x16xf32>, vector<16x100xf32>, vector<16x100xf32> -> vector<16x100xf32>
    %93 = arith.addf %88, %92 : vector<16x100xf32>
    %c0_97 = arith.constant 0 : index
    %c21_98 = arith.constant 21 : index
    %94 = vector.load %arg8[%c0_97, %c21_98] : memref<16x122xf32, #tpu.memory_space<vmem>>, vector<16x100xf32>
    %c7_99 = arith.constant 7 : index
    %c0_100 = arith.constant 0 : index
    %c0_101 = arith.constant 0 : index
    %95 = vector.load %arg5[%c7_99, %c0_100, %c0_101] : memref<9x16x16xf32, #tpu.memory_space<vmem>>, vector<1x16x16xf32>
    %96 = vector.shape_cast %95 : vector<1x16x16xf32> to vector<16x16xf32>
    %cst_102 = arith.constant dense<0.000000e+00> : vector<16x100xf32>
    %97 = tpu.matmul %96, %94, %cst_102 {dimension_numbers = #tpu.dot_dimension_numbers<[1], [0], [0], [1], [0, 0, 1, 1], [], []>} : vector<16x16xf32>, vector<16x100xf32>, vector<16x100xf32> -> vector<16x100xf32>
    %98 = arith.addf %93, %97 : vector<16x100xf32>
    %c0_103 = arith.constant 0 : index
    %c22_104 = arith.constant 22 : index
    %99 = vector.load %arg8[%c0_103, %c22_104] : memref<16x122xf32, #tpu.memory_space<vmem>>, vector<16x100xf32>
    %c8_105 = arith.constant 8 : index
    %c0_106 = arith.constant 0 : index
    %c0_107 = arith.constant 0 : index
    %100 = vector.load %arg5[%c8_105, %c0_106, %c0_107] : memref<9x16x16xf32, #tpu.memory_space<vmem>>, vector<1x16x16xf32>
    %101 = vector.shape_cast %100 : vector<1x16x16xf32> to vector<16x16xf32>
    %cst_108 = arith.constant dense<0.000000e+00> : vector<16x100xf32>
    %102 = tpu.matmul %101, %99, %cst_108 {dimension_numbers = #tpu.dot_dimension_numbers<[1], [0], [0], [1], [0, 0, 1, 1], [], []>} : vector<16x16xf32>, vector<16x100xf32>, vector<16x100xf32> -> vector<16x100xf32>
    %103 = arith.addf %98, %102 : vector<16x100xf32>
    %c0_109 = arith.constant 0 : index
    %c0_110 = arith.constant 0 : index
    %104 = vector.load %arg6[%c0_109, %c0_110] : memref<16x1xf32, #tpu.memory_space<vmem>>, vector<16x1xf32>
    %105 = vector.broadcast %104 : vector<16x1xf32> to vector<16x100xf32>
    %106 = arith.addf %103, %105 : vector<16x100xf32>
    %cst_111 = arith.constant 0.000000e+00 : f32
    %107 = vector.broadcast %cst_111 : f32 to vector<16x100xf32>
    %108 = arith.maximumf %106, %107 : vector<16x100xf32>
    %109 = vector.broadcast %7 : vector<1x100xf32> to vector<16x100xf32>
    %110 = arith.mulf %108, %109 : vector<16x100xf32>
    %c0_112 = arith.constant 0 : index
    %c0_113 = arith.constant 0 : index
    %c0_114 = arith.constant 0 : index
    %111 = vector.load %arg7[%c0_112, %c0_113, %c0_114] : memref<1x16x100xf32, #tpu.memory_space<vmem>>, vector<1x16x100xf32>
    %112 = vector.shape_cast %111 : vector<1x16x100xf32> to vector<16x100xf32>
    %113 = vector.shape_cast %110 : vector<16x100xf32> to vector<1x16x100xf32>
    tpu.vector_store %arg7[%c0_112, %c0_113, %c0_114], %113 {strides = array<i32>} : memref<1x16x100xf32, #tpu.memory_space<vmem>>, vector<1x16x100xf32>,
    return
  }
  func.func @transform_0(%arg0: i32) -> (i32, i32) {
    %c0_i32 = arith.constant 0 : i32
    %c0_i32_0 = arith.constant 0 : i32
    %c0_i32_1 = arith.constant 0 : i32
    return %c0_i32, %c0_i32_0 : i32, i32
  }
  func.func @transform_1(%arg0: i32) -> (i32, i32, i32) {
    %c0_i32 = arith.constant 0 : i32
    %c0_i32_0 = arith.constant 0 : i32
    %c0_i32_1 = arith.constant 0 : i32
    return %arg0, %c0_i32, %c0_i32_0 : i32, i32, i32
  }
  func.func @transform_2(%arg0: i32) -> (i32, i32, i32) {
    %c0_i32 = arith.constant 0 : i32
    %c0_i32_0 = arith.constant 0 : i32
    %c0_i32_1 = arith.constant 0 : i32
    %c0_i32_2 = arith.constant 0 : i32
    return %c0_i32, %c0_i32_0, %c0_i32_1 : i32, i32, i32
  }
  func.func @transform_3(%arg0: i32) -> (i32, i32) {
    %c0_i32 = arith.constant 0 : i32
    %c0_i32_0 = arith.constant 0 : i32
    %c0_i32_1 = arith.constant 0 : i32
    return %c0_i32, %c0_i32_0 : i32, i32
  }
  func.func @transform_4(%arg0: i32) -> (i32, i32, i32) {
    %c0_i32 = arith.constant 0 : i32
    %c0_i32_0 = arith.constant 0 : i32
    %c0_i32_1 = arith.constant 0 : i32
    %c0_i32_2 = arith.constant 0 : i32
    return %c0_i32, %c0_i32_0, %c0_i32_1 : i32, i32, i32
  }
  func.func @transform_5(%arg0: i32) -> (i32, i32) {
    %c0_i32 = arith.constant 0 : i32
    %c0_i32_0 = arith.constant 0 : i32
    %c0_i32_1 = arith.constant 0 : i32
    return %c0_i32, %c0_i32_0 : i32, i32
  }
  func.func @transform_6(%arg0: i32) -> (i32, i32, i32) {
    %c0_i32 = arith.constant 0 : i32
    %c0_i32_0 = arith.constant 0 : i32
    %c0_i32_1 = arith.constant 0 : i32
    return %arg0, %c0_i32, %c0_i32_0 : i32, i32, i32
  }
}

module attributes {stable_mosaic.version = 11 : i64} {
  func.func @kernel(%arg0: i32, %arg1: memref<1x324xf32, #tpu.memory_space<vmem>>, %arg2: memref<1x16x324xf32, #tpu.memory_space<vmem>>, %arg3: memref<1x8x324xf32, #tpu.memory_space<vmem>>, %arg4: memref<9x8x24xf32, #tpu.memory_space<vmem>>, %arg5: memref<8x1xf32, #tpu.memory_space<vmem>>, %arg6: memref<9x8x8xf32, #tpu.memory_space<vmem>>, %arg7: memref<8x1xf32, #tpu.memory_space<vmem>>, %arg8: memref<1x1x8xf32, #tpu.memory_space<vmem>>, %arg9: memref<1x1xf32, #tpu.memory_space<vmem>>, %arg10: memref<1x1x324xf32, #tpu.memory_space<vmem>>, %arg11: memref<24x362xf32, #tpu.memory_space<vmem>>) attributes {dimension_semantics = [#tpu.dimension_semantics<parallel>], iteration_bounds = array<i64: 2>, scalar_prefetch = 0 : i64, scratch_operands = 1 : i64, tpu.core_type = #tpu.core_type<tc>, window_params = [{pipeline_mode = #tpu.pipeline_mode<synchronous>, transform_indices = @transform_0, window_bounds = array<i64: 1, 324>}, {transform_indices = @transform_1, window_bounds = array<i64: 1, 16, 324>}, {transform_indices = @transform_2, window_bounds = array<i64: 1, 8, 324>}, {pipeline_mode = #tpu.pipeline_mode<synchronous>, transform_indices = @transform_3, window_bounds = array<i64: 9, 8, 24>}, {pipeline_mode = #tpu.pipeline_mode<synchronous>, transform_indices = @transform_4, window_bounds = array<i64: 8, 1>}, {pipeline_mode = #tpu.pipeline_mode<synchronous>, transform_indices = @transform_5, window_bounds = array<i64: 9, 8, 8>}, {pipeline_mode = #tpu.pipeline_mode<synchronous>, transform_indices = @transform_6, window_bounds = array<i64: 8, 1>}, {pipeline_mode = #tpu.pipeline_mode<synchronous>, transform_indices = @transform_7, window_bounds = array<i64: 1, 1, 8>}, {pipeline_mode = #tpu.pipeline_mode<synchronous>, transform_indices = @transform_8, window_bounds = array<i64: 1, 1>}, {transform_indices = @transform_9, window_bounds = array<i64: 1, 1, 324>}]} {
    %cst = arith.constant 0.000000e+00 : f32
    %0 = vector.broadcast %cst : f32 to vector<24x19xf32>
    %c0 = arith.constant 0 : index
    %c0_0 = arith.constant 0 : index
    %1 = vector.load %arg11[%c0, %c0_0] : memref<24x362xf32, #tpu.memory_space<vmem>>, vector<24x19xf32>
    tpu.vector_store %arg11[%c0, %c0_0], %0 {strides = array<i32>} : memref<24x362xf32, #tpu.memory_space<vmem>>, vector<24x19xf32>,
    %cst_1 = arith.constant 0.000000e+00 : f32
    %2 = vector.broadcast %cst_1 : f32 to vector<24x19xf32>
    %c0_2 = arith.constant 0 : index
    %c343 = arith.constant 343 : index
    %3 = vector.load %arg11[%c0_2, %c343] : memref<24x362xf32, #tpu.memory_space<vmem>>, vector<24x19xf32>
    tpu.vector_store %arg11[%c0_2, %c343], %2 {strides = array<i32>} : memref<24x362xf32, #tpu.memory_space<vmem>>, vector<24x19xf32>,
    %c0_3 = arith.constant 0 : index
    %c0_4 = arith.constant 0 : index
    %c0_5 = arith.constant 0 : index
    %4 = vector.load %arg2[%c0_3, %c0_4, %c0_5] : memref<1x16x324xf32, #tpu.memory_space<vmem>>, vector<1x16x324xf32>
    %5 = vector.shape_cast %4 : vector<1x16x324xf32> to vector<16x324xf32>
    %c0_6 = arith.constant 0 : index
    %c19 = arith.constant 19 : index
    %6 = vector.load %arg11[%c0_6, %c19] : memref<24x362xf32, #tpu.memory_space<vmem>>, vector<16x324xf32>
    tpu.vector_store %arg11[%c0_6, %c19], %5 {strides = array<i32>} : memref<24x362xf32, #tpu.memory_space<vmem>>, vector<16x324xf32>,
    %c0_7 = arith.constant 0 : index
    %c0_8 = arith.constant 0 : index
    %c0_9 = arith.constant 0 : index
    %7 = vector.load %arg3[%c0_7, %c0_8, %c0_9] : memref<1x8x324xf32, #tpu.memory_space<vmem>>, vector<1x8x324xf32>
    %8 = vector.shape_cast %7 : vector<1x8x324xf32> to vector<8x324xf32>
    %c16 = arith.constant 16 : index
    %c19_10 = arith.constant 19 : index
    %9 = vector.load %arg11[%c16, %c19_10] : memref<24x362xf32, #tpu.memory_space<vmem>>, vector<8x324xf32>
    tpu.vector_store %arg11[%c16, %c19_10], %8 {strides = array<i32>} : memref<24x362xf32, #tpu.memory_space<vmem>>, vector<8x324xf32>,
    %c0_11 = arith.constant 0 : index
    %c0_12 = arith.constant 0 : index
    %10 = vector.load %arg1[%c0_11, %c0_12] : memref<1x324xf32, #tpu.memory_space<vmem>>, vector<1x324xf32>
    %c0_13 = arith.constant 0 : index
    %c0_14 = arith.constant 0 : index
    %11 = vector.load %arg11[%c0_13, %c0_14] : memref<24x362xf32, #tpu.memory_space<vmem>>, vector<24x324xf32>
    %c0_15 = arith.constant 0 : index
    %c0_16 = arith.constant 0 : index
    %c0_17 = arith.constant 0 : index
    %12 = vector.load %arg4[%c0_15, %c0_16, %c0_17] : memref<9x8x24xf32, #tpu.memory_space<vmem>>, vector<1x8x24xf32>
    %13 = vector.shape_cast %12 : vector<1x8x24xf32> to vector<8x24xf32>
    %cst_18 = arith.constant dense<0.000000e+00> : vector<8x324xf32>
    %14 = tpu.matmul %13, %11, %cst_18 {dimension_numbers = #tpu.dot_dimension_numbers<[1], [0], [0], [1], [0, 0, 1, 1], [], []>} : vector<8x24xf32>, vector<24x324xf32>, vector<8x324xf32> -> vector<8x324xf32>
    %c0_19 = arith.constant 0 : index
    %c1 = arith.constant 1 : index
    %15 = vector.load %arg11[%c0_19, %c1] : memref<24x362xf32, #tpu.memory_space<vmem>>, vector<24x324xf32>
    %c1_20 = arith.constant 1 : index
    %c0_21 = arith.constant 0 : index
    %c0_22 = arith.constant 0 : index
    %16 = vector.load %arg4[%c1_20, %c0_21, %c0_22] : memref<9x8x24xf32, #tpu.memory_space<vmem>>, vector<1x8x24xf32>
    %17 = vector.shape_cast %16 : vector<1x8x24xf32> to vector<8x24xf32>
    %cst_23 = arith.constant dense<0.000000e+00> : vector<8x324xf32>
    %18 = tpu.matmul %17, %15, %cst_23 {dimension_numbers = #tpu.dot_dimension_numbers<[1], [0], [0], [1], [0, 0, 1, 1], [], []>} : vector<8x24xf32>, vector<24x324xf32>, vector<8x324xf32> -> vector<8x324xf32>
    %19 = arith.addf %14, %18 : vector<8x324xf32>
    %c0_24 = arith.constant 0 : index
    %c2 = arith.constant 2 : index
    %20 = vector.load %arg11[%c0_24, %c2] : memref<24x362xf32, #tpu.memory_space<vmem>>, vector<24x324xf32>
    %c2_25 = arith.constant 2 : index
    %c0_26 = arith.constant 0 : index
    %c0_27 = arith.constant 0 : index
    %21 = vector.load %arg4[%c2_25, %c0_26, %c0_27] : memref<9x8x24xf32, #tpu.memory_space<vmem>>, vector<1x8x24xf32>
    %22 = vector.shape_cast %21 : vector<1x8x24xf32> to vector<8x24xf32>
    %cst_28 = arith.constant dense<0.000000e+00> : vector<8x324xf32>
    %23 = tpu.matmul %22, %20, %cst_28 {dimension_numbers = #tpu.dot_dimension_numbers<[1], [0], [0], [1], [0, 0, 1, 1], [], []>} : vector<8x24xf32>, vector<24x324xf32>, vector<8x324xf32> -> vector<8x324xf32>
    %24 = arith.addf %19, %23 : vector<8x324xf32>
    %c0_29 = arith.constant 0 : index
    %c18 = arith.constant 18 : index
    %25 = vector.load %arg11[%c0_29, %c18] : memref<24x362xf32, #tpu.memory_space<vmem>>, vector<24x324xf32>
    %c3 = arith.constant 3 : index
    %c0_30 = arith.constant 0 : index
    %c0_31 = arith.constant 0 : index
    %26 = vector.load %arg4[%c3, %c0_30, %c0_31] : memref<9x8x24xf32, #tpu.memory_space<vmem>>, vector<1x8x24xf32>
    %27 = vector.shape_cast %26 : vector<1x8x24xf32> to vector<8x24xf32>
    %cst_32 = arith.constant dense<0.000000e+00> : vector<8x324xf32>
    %28 = tpu.matmul %27, %25, %cst_32 {dimension_numbers = #tpu.dot_dimension_numbers<[1], [0], [0], [1], [0, 0, 1, 1], [], []>} : vector<8x24xf32>, vector<24x324xf32>, vector<8x324xf32> -> vector<8x324xf32>
    %29 = arith.addf %24, %28 : vector<8x324xf32>
    %c0_33 = arith.constant 0 : index
    %c19_34 = arith.constant 19 : index
    %30 = vector.load %arg11[%c0_33, %c19_34] : memref<24x362xf32, #tpu.memory_space<vmem>>, vector<24x324xf32>
    %c4 = arith.constant 4 : index
    %c0_35 = arith.constant 0 : index
    %c0_36 = arith.constant 0 : index
    %31 = vector.load %arg4[%c4, %c0_35, %c0_36] : memref<9x8x24xf32, #tpu.memory_space<vmem>>, vector<1x8x24xf32>
    %32 = vector.shape_cast %31 : vector<1x8x24xf32> to vector<8x24xf32>
    %cst_37 = arith.constant dense<0.000000e+00> : vector<8x324xf32>
    %33 = tpu.matmul %32, %30, %cst_37 {dimension_numbers = #tpu.dot_dimension_numbers<[1], [0], [0], [1], [0, 0, 1, 1], [], []>} : vector<8x24xf32>, vector<24x324xf32>, vector<8x324xf32> -> vector<8x324xf32>
    %34 = arith.addf %29, %33 : vector<8x324xf32>
    %c0_38 = arith.constant 0 : index
    %c20 = arith.constant 20 : index
    %35 = vector.load %arg11[%c0_38, %c20] : memref<24x362xf32, #tpu.memory_space<vmem>>, vector<24x324xf32>
    %c5 = arith.constant 5 : index
    %c0_39 = arith.constant 0 : index
    %c0_40 = arith.constant 0 : index
    %36 = vector.load %arg4[%c5, %c0_39, %c0_40] : memref<9x8x24xf32, #tpu.memory_space<vmem>>, vector<1x8x24xf32>
    %37 = vector.shape_cast %36 : vector<1x8x24xf32> to vector<8x24xf32>
    %cst_41 = arith.constant dense<0.000000e+00> : vector<8x324xf32>
    %38 = tpu.matmul %37, %35, %cst_41 {dimension_numbers = #tpu.dot_dimension_numbers<[1], [0], [0], [1], [0, 0, 1, 1], [], []>} : vector<8x24xf32>, vector<24x324xf32>, vector<8x324xf32> -> vector<8x324xf32>
    %39 = arith.addf %34, %38 : vector<8x324xf32>
    %c0_42 = arith.constant 0 : index
    %c36 = arith.constant 36 : index
    %40 = vector.load %arg11[%c0_42, %c36] : memref<24x362xf32, #tpu.memory_space<vmem>>, vector<24x324xf32>
    %c6 = arith.constant 6 : index
    %c0_43 = arith.constant 0 : index
    %c0_44 = arith.constant 0 : index
    %41 = vector.load %arg4[%c6, %c0_43, %c0_44] : memref<9x8x24xf32, #tpu.memory_space<vmem>>, vector<1x8x24xf32>
    %42 = vector.shape_cast %41 : vector<1x8x24xf32> to vector<8x24xf32>
    %cst_45 = arith.constant dense<0.000000e+00> : vector<8x324xf32>
    %43 = tpu.matmul %42, %40, %cst_45 {dimension_numbers = #tpu.dot_dimension_numbers<[1], [0], [0], [1], [0, 0, 1, 1], [], []>} : vector<8x24xf32>, vector<24x324xf32>, vector<8x324xf32> -> vector<8x324xf32>
    %44 = arith.addf %39, %43 : vector<8x324xf32>
    %c0_46 = arith.constant 0 : index
    %c37 = arith.constant 37 : index
    %45 = vector.load %arg11[%c0_46, %c37] : memref<24x362xf32, #tpu.memory_space<vmem>>, vector<24x324xf32>
    %c7 = arith.constant 7 : index
    %c0_47 = arith.constant 0 : index
    %c0_48 = arith.constant 0 : index
    %46 = vector.load %arg4[%c7, %c0_47, %c0_48] : memref<9x8x24xf32, #tpu.memory_space<vmem>>, vector<1x8x24xf32>
    %47 = vector.shape_cast %46 : vector<1x8x24xf32> to vector<8x24xf32>
    %cst_49 = arith.constant dense<0.000000e+00> : vector<8x324xf32>
    %48 = tpu.matmul %47, %45, %cst_49 {dimension_numbers = #tpu.dot_dimension_numbers<[1], [0], [0], [1], [0, 0, 1, 1], [], []>} : vector<8x24xf32>, vector<24x324xf32>, vector<8x324xf32> -> vector<8x324xf32>
    %49 = arith.addf %44, %48 : vector<8x324xf32>
    %c0_50 = arith.constant 0 : index
    %c38 = arith.constant 38 : index
    %50 = vector.load %arg11[%c0_50, %c38] : memref<24x362xf32, #tpu.memory_space<vmem>>, vector<24x324xf32>
    %c8 = arith.constant 8 : index
    %c0_51 = arith.constant 0 : index
    %c0_52 = arith.constant 0 : index
    %51 = vector.load %arg4[%c8, %c0_51, %c0_52] : memref<9x8x24xf32, #tpu.memory_space<vmem>>, vector<1x8x24xf32>
    %52 = vector.shape_cast %51 : vector<1x8x24xf32> to vector<8x24xf32>
    %cst_53 = arith.constant dense<0.000000e+00> : vector<8x324xf32>
    %53 = tpu.matmul %52, %50, %cst_53 {dimension_numbers = #tpu.dot_dimension_numbers<[1], [0], [0], [1], [0, 0, 1, 1], [], []>} : vector<8x24xf32>, vector<24x324xf32>, vector<8x324xf32> -> vector<8x324xf32>
    %54 = arith.addf %49, %53 : vector<8x324xf32>
    %c0_54 = arith.constant 0 : index
    %c0_55 = arith.constant 0 : index
    %55 = vector.load %arg5[%c0_54, %c0_55] : memref<8x1xf32, #tpu.memory_space<vmem>>, vector<8x1xf32>
    %56 = vector.broadcast %55 : vector<8x1xf32> to vector<8x324xf32>
    %57 = arith.addf %54, %56 : vector<8x324xf32>
    %cst_56 = arith.constant 0.000000e+00 : f32
    %58 = vector.broadcast %cst_56 : f32 to vector<8x324xf32>
    %59 = arith.maximumf %57, %58 : vector<8x324xf32>
    %60 = vector.broadcast %10 : vector<1x324xf32> to vector<8x324xf32>
    %61 = arith.mulf %59, %60 : vector<8x324xf32>
    %c0_57 = arith.constant 0 : index
    %c19_58 = arith.constant 19 : index
    %62 = vector.load %arg11[%c0_57, %c19_58] : memref<24x362xf32, #tpu.memory_space<vmem>>, vector<8x324xf32>
    tpu.vector_store %arg11[%c0_57, %c19_58], %61 {strides = array<i32>} : memref<24x362xf32, #tpu.memory_space<vmem>>, vector<8x324xf32>,
    %c0_59 = arith.constant 0 : index
    %c0_60 = arith.constant 0 : index
    %63 = vector.load %arg11[%c0_59, %c0_60] : memref<24x362xf32, #tpu.memory_space<vmem>>, vector<8x324xf32>
    %c0_61 = arith.constant 0 : index
    %c0_62 = arith.constant 0 : index
    %c0_63 = arith.constant 0 : index
    %64 = vector.load %arg6[%c0_61, %c0_62, %c0_63] : memref<9x8x8xf32, #tpu.memory_space<vmem>>, vector<1x8x8xf32>
    %65 = vector.shape_cast %64 : vector<1x8x8xf32> to vector<8x8xf32>
    %cst_64 = arith.constant dense<0.000000e+00> : vector<8x324xf32>
    %66 = tpu.matmul %65, %63, %cst_64 {dimension_numbers = #tpu.dot_dimension_numbers<[1], [0], [0], [1], [0, 0, 1, 1], [], []>} : vector<8x8xf32>, vector<8x324xf32>, vector<8x324xf32> -> vector<8x324xf32>
    %c0_65 = arith.constant 0 : index
    %c1_66 = arith.constant 1 : index
    %67 = vector.load %arg11[%c0_65, %c1_66] : memref<24x362xf32, #tpu.memory_space<vmem>>, vector<8x324xf32>
    %c1_67 = arith.constant 1 : index
    %c0_68 = arith.constant 0 : index
    %c0_69 = arith.constant 0 : index
    %68 = vector.load %arg6[%c1_67, %c0_68, %c0_69] : memref<9x8x8xf32, #tpu.memory_space<vmem>>, vector<1x8x8xf32>
    %69 = vector.shape_cast %68 : vector<1x8x8xf32> to vector<8x8xf32>
    %cst_70 = arith.constant dense<0.000000e+00> : vector<8x324xf32>
    %70 = tpu.matmul %69, %67, %cst_70 {dimension_numbers = #tpu.dot_dimension_numbers<[1], [0], [0], [1], [0, 0, 1, 1], [], []>} : vector<8x8xf32>, vector<8x324xf32>, vector<8x324xf32> -> vector<8x324xf32>
    %71 = arith.addf %66, %70 : vector<8x324xf32>
    %c0_71 = arith.constant 0 : index
    %c2_72 = arith.constant 2 : index
    %72 = vector.load %arg11[%c0_71, %c2_72] : memref<24x362xf32, #tpu.memory_space<vmem>>, vector<8x324xf32>
    %c2_73 = arith.constant 2 : index
    %c0_74 = arith.constant 0 : index
    %c0_75 = arith.constant 0 : index
    %73 = vector.load %arg6[%c2_73, %c0_74, %c0_75] : memref<9x8x8xf32, #tpu.memory_space<vmem>>, vector<1x8x8xf32>
    %74 = vector.shape_cast %73 : vector<1x8x8xf32> to vector<8x8xf32>
    %cst_76 = arith.constant dense<0.000000e+00> : vector<8x324xf32>
    %75 = tpu.matmul %74, %72, %cst_76 {dimension_numbers = #tpu.dot_dimension_numbers<[1], [0], [0], [1], [0, 0, 1, 1], [], []>} : vector<8x8xf32>, vector<8x324xf32>, vector<8x324xf32> -> vector<8x324xf32>
    %76 = arith.addf %71, %75 : vector<8x324xf32>
    %c0_77 = arith.constant 0 : index
    %c18_78 = arith.constant 18 : index
    %77 = vector.load %arg11[%c0_77, %c18_78] : memref<24x362xf32, #tpu.memory_space<vmem>>, vector<8x324xf32>
    %c3_79 = arith.constant 3 : index
    %c0_80 = arith.constant 0 : index
    %c0_81 = arith.constant 0 : index
    %78 = vector.load %arg6[%c3_79, %c0_80, %c0_81] : memref<9x8x8xf32, #tpu.memory_space<vmem>>, vector<1x8x8xf32>
    %79 = vector.shape_cast %78 : vector<1x8x8xf32> to vector<8x8xf32>
    %cst_82 = arith.constant dense<0.000000e+00> : vector<8x324xf32>
    %80 = tpu.matmul %79, %77, %cst_82 {dimension_numbers = #tpu.dot_dimension_numbers<[1], [0], [0], [1], [0, 0, 1, 1], [], []>} : vector<8x8xf32>, vector<8x324xf32>, vector<8x324xf32> -> vector<8x324xf32>
    %81 = arith.addf %76, %80 : vector<8x324xf32>
    %c0_83 = arith.constant 0 : index
    %c19_84 = arith.constant 19 : index
    %82 = vector.load %arg11[%c0_83, %c19_84] : memref<24x362xf32, #tpu.memory_space<vmem>>, vector<8x324xf32>
    %c4_85 = arith.constant 4 : index
    %c0_86 = arith.constant 0 : index
    %c0_87 = arith.constant 0 : index
    %83 = vector.load %arg6[%c4_85, %c0_86, %c0_87] : memref<9x8x8xf32, #tpu.memory_space<vmem>>, vector<1x8x8xf32>
    %84 = vector.shape_cast %83 : vector<1x8x8xf32> to vector<8x8xf32>
    %cst_88 = arith.constant dense<0.000000e+00> : vector<8x324xf32>
    %85 = tpu.matmul %84, %82, %cst_88 {dimension_numbers = #tpu.dot_dimension_numbers<[1], [0], [0], [1], [0, 0, 1, 1], [], []>} : vector<8x8xf32>, vector<8x324xf32>, vector<8x324xf32> -> vector<8x324xf32>
    %86 = arith.addf %81, %85 : vector<8x324xf32>
    %c0_89 = arith.constant 0 : index
    %c20_90 = arith.constant 20 : index
    %87 = vector.load %arg11[%c0_89, %c20_90] : memref<24x362xf32, #tpu.memory_space<vmem>>, vector<8x324xf32>
    %c5_91 = arith.constant 5 : index
    %c0_92 = arith.constant 0 : index
    %c0_93 = arith.constant 0 : index
    %88 = vector.load %arg6[%c5_91, %c0_92, %c0_93] : memref<9x8x8xf32, #tpu.memory_space<vmem>>, vector<1x8x8xf32>
    %89 = vector.shape_cast %88 : vector<1x8x8xf32> to vector<8x8xf32>
    %cst_94 = arith.constant dense<0.000000e+00> : vector<8x324xf32>
    %90 = tpu.matmul %89, %87, %cst_94 {dimension_numbers = #tpu.dot_dimension_numbers<[1], [0], [0], [1], [0, 0, 1, 1], [], []>} : vector<8x8xf32>, vector<8x324xf32>, vector<8x324xf32> -> vector<8x324xf32>
    %91 = arith.addf %86, %90 : vector<8x324xf32>
    %c0_95 = arith.constant 0 : index
    %c36_96 = arith.constant 36 : index
    %92 = vector.load %arg11[%c0_95, %c36_96] : memref<24x362xf32, #tpu.memory_space<vmem>>, vector<8x324xf32>
    %c6_97 = arith.constant 6 : index
    %c0_98 = arith.constant 0 : index
    %c0_99 = arith.constant 0 : index
    %93 = vector.load %arg6[%c6_97, %c0_98, %c0_99] : memref<9x8x8xf32, #tpu.memory_space<vmem>>, vector<1x8x8xf32>
    %94 = vector.shape_cast %93 : vector<1x8x8xf32> to vector<8x8xf32>
    %cst_100 = arith.constant dense<0.000000e+00> : vector<8x324xf32>
    %95 = tpu.matmul %94, %92, %cst_100 {dimension_numbers = #tpu.dot_dimension_numbers<[1], [0], [0], [1], [0, 0, 1, 1], [], []>} : vector<8x8xf32>, vector<8x324xf32>, vector<8x324xf32> -> vector<8x324xf32>
    %96 = arith.addf %91, %95 : vector<8x324xf32>
    %c0_101 = arith.constant 0 : index
    %c37_102 = arith.constant 37 : index
    %97 = vector.load %arg11[%c0_101, %c37_102] : memref<24x362xf32, #tpu.memory_space<vmem>>, vector<8x324xf32>
    %c7_103 = arith.constant 7 : index
    %c0_104 = arith.constant 0 : index
    %c0_105 = arith.constant 0 : index
    %98 = vector.load %arg6[%c7_103, %c0_104, %c0_105] : memref<9x8x8xf32, #tpu.memory_space<vmem>>, vector<1x8x8xf32>
    %99 = vector.shape_cast %98 : vector<1x8x8xf32> to vector<8x8xf32>
    %cst_106 = arith.constant dense<0.000000e+00> : vector<8x324xf32>
    %100 = tpu.matmul %99, %97, %cst_106 {dimension_numbers = #tpu.dot_dimension_numbers<[1], [0], [0], [1], [0, 0, 1, 1], [], []>} : vector<8x8xf32>, vector<8x324xf32>, vector<8x324xf32> -> vector<8x324xf32>
    %101 = arith.addf %96, %100 : vector<8x324xf32>
    %c0_107 = arith.constant 0 : index
    %c38_108 = arith.constant 38 : index
    %102 = vector.load %arg11[%c0_107, %c38_108] : memref<24x362xf32, #tpu.memory_space<vmem>>, vector<8x324xf32>
    %c8_109 = arith.constant 8 : index
    %c0_110 = arith.constant 0 : index
    %c0_111 = arith.constant 0 : index
    %103 = vector.load %arg6[%c8_109, %c0_110, %c0_111] : memref<9x8x8xf32, #tpu.memory_space<vmem>>, vector<1x8x8xf32>
    %104 = vector.shape_cast %103 : vector<1x8x8xf32> to vector<8x8xf32>
    %cst_112 = arith.constant dense<0.000000e+00> : vector<8x324xf32>
    %105 = tpu.matmul %104, %102, %cst_112 {dimension_numbers = #tpu.dot_dimension_numbers<[1], [0], [0], [1], [0, 0, 1, 1], [], []>} : vector<8x8xf32>, vector<8x324xf32>, vector<8x324xf32> -> vector<8x324xf32>
    %106 = arith.addf %101, %105 : vector<8x324xf32>
    %c0_113 = arith.constant 0 : index
    %c0_114 = arith.constant 0 : index
    %107 = vector.load %arg7[%c0_113, %c0_114] : memref<8x1xf32, #tpu.memory_space<vmem>>, vector<8x1xf32>
    %108 = vector.broadcast %107 : vector<8x1xf32> to vector<8x324xf32>
    %109 = arith.addf %106, %108 : vector<8x324xf32>
    %cst_115 = arith.constant 0.000000e+00 : f32
    %110 = vector.broadcast %cst_115 : f32 to vector<8x324xf32>
    %111 = arith.maximumf %109, %110 : vector<8x324xf32>
    %112 = vector.broadcast %10 : vector<1x324xf32> to vector<8x324xf32>
    %113 = arith.mulf %111, %112 : vector<8x324xf32>
    %c0_116 = arith.constant 0 : index
    %c19_117 = arith.constant 19 : index
    %114 = vector.load %arg11[%c0_116, %c19_117] : memref<24x362xf32, #tpu.memory_space<vmem>>, vector<8x324xf32>
    tpu.vector_store %arg11[%c0_116, %c19_117], %113 {strides = array<i32>} : memref<24x362xf32, #tpu.memory_space<vmem>>, vector<8x324xf32>,
    %c0_118 = arith.constant 0 : index
    %c19_119 = arith.constant 19 : index
    %115 = vector.load %arg11[%c0_118, %c19_119] : memref<24x362xf32, #tpu.memory_space<vmem>>, vector<8x324xf32>
    %c0_120 = arith.constant 0 : index
    %c0_121 = arith.constant 0 : index
    %c0_122 = arith.constant 0 : index
    %116 = vector.load %arg8[%c0_120, %c0_121, %c0_122] : memref<1x1x8xf32, #tpu.memory_space<vmem>>, vector<1x1x8xf32>
    %117 = vector.shape_cast %116 : vector<1x1x8xf32> to vector<1x8xf32>
    %cst_123 = arith.constant dense<0.000000e+00> : vector<1x324xf32>
    %118 = tpu.matmul %117, %115, %cst_123 {dimension_numbers = #tpu.dot_dimension_numbers<[1], [0], [0], [1], [0, 0, 1, 1], [], []>} : vector<1x8xf32>, vector<8x324xf32>, vector<1x324xf32> -> vector<1x324xf32>
    %c0_124 = arith.constant 0 : index
    %c0_125 = arith.constant 0 : index
    %119 = vector.load %arg9[%c0_124, %c0_125] : memref<1x1xf32, #tpu.memory_space<vmem>>, vector<1x1xf32>
    %120 = vector.broadcast %119 : vector<1x1xf32> to vector<1x324xf32>
    %121 = arith.addf %118, %120 : vector<1x324xf32>
    %122 = arith.mulf %121, %10 : vector<1x324xf32>
    %c0_126 = arith.constant 0 : index
    %c0_127 = arith.constant 0 : index
    %c0_128 = arith.constant 0 : index
    %123 = vector.load %arg10[%c0_126, %c0_127, %c0_128] : memref<1x1x324xf32, #tpu.memory_space<vmem>>, vector<1x1x324xf32>
    %124 = vector.shape_cast %123 : vector<1x1x324xf32> to vector<1x324xf32>
    %125 = vector.shape_cast %122 : vector<1x324xf32> to vector<1x1x324xf32>
    tpu.vector_store %arg10[%c0_126, %c0_127, %c0_128], %125 {strides = array<i32>} : memref<1x1x324xf32, #tpu.memory_space<vmem>>, vector<1x1x324xf32>,
    return
  }
  func.func @transform_0(%arg0: i32) -> (i32, i32) {
    %c0_i32 = arith.constant 0 : i32
    %c0_i32_0 = arith.constant 0 : i32
    %c0_i32_1 = arith.constant 0 : i32
    return %c0_i32, %c0_i32_0 : i32, i32
  }
  func.func @transform_1(%arg0: i32) -> (i32, i32, i32) {
    %c0_i32 = arith.constant 0 : i32
    %c0_i32_0 = arith.constant 0 : i32
    %c0_i32_1 = arith.constant 0 : i32
    return %arg0, %c0_i32, %c0_i32_0 : i32, i32, i32
  }
  func.func @transform_2(%arg0: i32) -> (i32, i32, i32) {
    %c0_i32 = arith.constant 0 : i32
    %c0_i32_0 = arith.constant 0 : i32
    %c0_i32_1 = arith.constant 0 : i32
    return %arg0, %c0_i32, %c0_i32_0 : i32, i32, i32
  }
  func.func @transform_3(%arg0: i32) -> (i32, i32, i32) {
    %c0_i32 = arith.constant 0 : i32
    %c0_i32_0 = arith.constant 0 : i32
    %c0_i32_1 = arith.constant 0 : i32
    %c0_i32_2 = arith.constant 0 : i32
    return %c0_i32, %c0_i32_0, %c0_i32_1 : i32, i32, i32
  }
  func.func @transform_4(%arg0: i32) -> (i32, i32) {
    %c0_i32 = arith.constant 0 : i32
    %c0_i32_0 = arith.constant 0 : i32
    %c0_i32_1 = arith.constant 0 : i32
    return %c0_i32, %c0_i32_0 : i32, i32
  }
  func.func @transform_5(%arg0: i32) -> (i32, i32, i32) {
    %c0_i32 = arith.constant 0 : i32
    %c0_i32_0 = arith.constant 0 : i32
    %c0_i32_1 = arith.constant 0 : i32
    %c0_i32_2 = arith.constant 0 : i32
    return %c0_i32, %c0_i32_0, %c0_i32_1 : i32, i32, i32
  }
  func.func @transform_6(%arg0: i32) -> (i32, i32) {
    %c0_i32 = arith.constant 0 : i32
    %c0_i32_0 = arith.constant 0 : i32
    %c0_i32_1 = arith.constant 0 : i32
    return %c0_i32, %c0_i32_0 : i32, i32
  }
  func.func @transform_7(%arg0: i32) -> (i32, i32, i32) {
    %c0_i32 = arith.constant 0 : i32
    %c0_i32_0 = arith.constant 0 : i32
    %c0_i32_1 = arith.constant 0 : i32
    %c0_i32_2 = arith.constant 0 : i32
    return %c0_i32, %c0_i32_0, %c0_i32_1 : i32, i32, i32
  }
  func.func @transform_8(%arg0: i32) -> (i32, i32) {
    %c0_i32 = arith.constant 0 : i32
    %c0_i32_0 = arith.constant 0 : i32
    %c0_i32_1 = arith.constant 0 : i32
    return %c0_i32, %c0_i32_0 : i32, i32
  }
  func.func @transform_9(%arg0: i32) -> (i32, i32, i32) {
    %c0_i32 = arith.constant 0 : i32
    %c0_i32_0 = arith.constant 0 : i32
    %c0_i32_1 = arith.constant 0 : i32
    return %arg0, %c0_i32, %c0_i32_0 : i32, i32, i32
  }
}

module attributes {stable_mosaic.version = 11 : i64} {
  func.func @kernel(%arg0: i32, %arg1: memref<1x324xf32, #tpu.memory_space<vmem>>, %arg2: memref<1x16x324xf32, #tpu.memory_space<vmem>>, %arg3: memref<1x8x324xf32, #tpu.memory_space<vmem>>, %arg4: memref<9x8x24xf32, #tpu.memory_space<vmem>>, %arg5: memref<8x1xf32, #tpu.memory_space<vmem>>, %arg6: memref<9x8x8xf32, #tpu.memory_space<vmem>>, %arg7: memref<8x1xf32, #tpu.memory_space<vmem>>, %arg8: memref<1x4x8xf32, #tpu.memory_space<vmem>>, %arg9: memref<4x1xf32, #tpu.memory_space<vmem>>, %arg10: memref<1x4x324xf32, #tpu.memory_space<vmem>>, %arg11: memref<24x362xf32, #tpu.memory_space<vmem>>) attributes {dimension_semantics = [#tpu.dimension_semantics<parallel>], iteration_bounds = array<i64: 2>, scalar_prefetch = 0 : i64, scratch_operands = 1 : i64, tpu.core_type = #tpu.core_type<tc>, window_params = [{pipeline_mode = #tpu.pipeline_mode<synchronous>, transform_indices = @transform_0, window_bounds = array<i64: 1, 324>}, {transform_indices = @transform_1, window_bounds = array<i64: 1, 16, 324>}, {transform_indices = @transform_2, window_bounds = array<i64: 1, 8, 324>}, {pipeline_mode = #tpu.pipeline_mode<synchronous>, transform_indices = @transform_3, window_bounds = array<i64: 9, 8, 24>}, {pipeline_mode = #tpu.pipeline_mode<synchronous>, transform_indices = @transform_4, window_bounds = array<i64: 8, 1>}, {pipeline_mode = #tpu.pipeline_mode<synchronous>, transform_indices = @transform_5, window_bounds = array<i64: 9, 8, 8>}, {pipeline_mode = #tpu.pipeline_mode<synchronous>, transform_indices = @transform_6, window_bounds = array<i64: 8, 1>}, {pipeline_mode = #tpu.pipeline_mode<synchronous>, transform_indices = @transform_7, window_bounds = array<i64: 1, 4, 8>}, {pipeline_mode = #tpu.pipeline_mode<synchronous>, transform_indices = @transform_8, window_bounds = array<i64: 4, 1>}, {transform_indices = @transform_9, window_bounds = array<i64: 1, 4, 324>}]} {
    %cst = arith.constant 0.000000e+00 : f32
    %0 = vector.broadcast %cst : f32 to vector<24x19xf32>
    %c0 = arith.constant 0 : index
    %c0_0 = arith.constant 0 : index
    %1 = vector.load %arg11[%c0, %c0_0] : memref<24x362xf32, #tpu.memory_space<vmem>>, vector<24x19xf32>
    tpu.vector_store %arg11[%c0, %c0_0], %0 {strides = array<i32>} : memref<24x362xf32, #tpu.memory_space<vmem>>, vector<24x19xf32>,
    %cst_1 = arith.constant 0.000000e+00 : f32
    %2 = vector.broadcast %cst_1 : f32 to vector<24x19xf32>
    %c0_2 = arith.constant 0 : index
    %c343 = arith.constant 343 : index
    %3 = vector.load %arg11[%c0_2, %c343] : memref<24x362xf32, #tpu.memory_space<vmem>>, vector<24x19xf32>
    tpu.vector_store %arg11[%c0_2, %c343], %2 {strides = array<i32>} : memref<24x362xf32, #tpu.memory_space<vmem>>, vector<24x19xf32>,
    %c0_3 = arith.constant 0 : index
    %c0_4 = arith.constant 0 : index
    %c0_5 = arith.constant 0 : index
    %4 = vector.load %arg2[%c0_3, %c0_4, %c0_5] : memref<1x16x324xf32, #tpu.memory_space<vmem>>, vector<1x16x324xf32>
    %5 = vector.shape_cast %4 : vector<1x16x324xf32> to vector<16x324xf32>
    %c0_6 = arith.constant 0 : index
    %c19 = arith.constant 19 : index
    %6 = vector.load %arg11[%c0_6, %c19] : memref<24x362xf32, #tpu.memory_space<vmem>>, vector<16x324xf32>
    tpu.vector_store %arg11[%c0_6, %c19], %5 {strides = array<i32>} : memref<24x362xf32, #tpu.memory_space<vmem>>, vector<16x324xf32>,
    %c0_7 = arith.constant 0 : index
    %c0_8 = arith.constant 0 : index
    %c0_9 = arith.constant 0 : index
    %7 = vector.load %arg3[%c0_7, %c0_8, %c0_9] : memref<1x8x324xf32, #tpu.memory_space<vmem>>, vector<1x8x324xf32>
    %8 = vector.shape_cast %7 : vector<1x8x324xf32> to vector<8x324xf32>
    %c16 = arith.constant 16 : index
    %c19_10 = arith.constant 19 : index
    %9 = vector.load %arg11[%c16, %c19_10] : memref<24x362xf32, #tpu.memory_space<vmem>>, vector<8x324xf32>
    tpu.vector_store %arg11[%c16, %c19_10], %8 {strides = array<i32>} : memref<24x362xf32, #tpu.memory_space<vmem>>, vector<8x324xf32>,
    %c0_11 = arith.constant 0 : index
    %c0_12 = arith.constant 0 : index
    %10 = vector.load %arg1[%c0_11, %c0_12] : memref<1x324xf32, #tpu.memory_space<vmem>>, vector<1x324xf32>
    %c0_13 = arith.constant 0 : index
    %c0_14 = arith.constant 0 : index
    %11 = vector.load %arg11[%c0_13, %c0_14] : memref<24x362xf32, #tpu.memory_space<vmem>>, vector<24x324xf32>
    %c0_15 = arith.constant 0 : index
    %c0_16 = arith.constant 0 : index
    %c0_17 = arith.constant 0 : index
    %12 = vector.load %arg4[%c0_15, %c0_16, %c0_17] : memref<9x8x24xf32, #tpu.memory_space<vmem>>, vector<1x8x24xf32>
    %13 = vector.shape_cast %12 : vector<1x8x24xf32> to vector<8x24xf32>
    %cst_18 = arith.constant dense<0.000000e+00> : vector<8x324xf32>
    %14 = tpu.matmul %13, %11, %cst_18 {dimension_numbers = #tpu.dot_dimension_numbers<[1], [0], [0], [1], [0, 0, 1, 1], [], []>} : vector<8x24xf32>, vector<24x324xf32>, vector<8x324xf32> -> vector<8x324xf32>
    %c0_19 = arith.constant 0 : index
    %c1 = arith.constant 1 : index
    %15 = vector.load %arg11[%c0_19, %c1] : memref<24x362xf32, #tpu.memory_space<vmem>>, vector<24x324xf32>
    %c1_20 = arith.constant 1 : index
    %c0_21 = arith.constant 0 : index
    %c0_22 = arith.constant 0 : index
    %16 = vector.load %arg4[%c1_20, %c0_21, %c0_22] : memref<9x8x24xf32, #tpu.memory_space<vmem>>, vector<1x8x24xf32>
    %17 = vector.shape_cast %16 : vector<1x8x24xf32> to vector<8x24xf32>
    %cst_23 = arith.constant dense<0.000000e+00> : vector<8x324xf32>
    %18 = tpu.matmul %17, %15, %cst_23 {dimension_numbers = #tpu.dot_dimension_numbers<[1], [0], [0], [1], [0, 0, 1, 1], [], []>} : vector<8x24xf32>, vector<24x324xf32>, vector<8x324xf32> -> vector<8x324xf32>
    %19 = arith.addf %14, %18 : vector<8x324xf32>
    %c0_24 = arith.constant 0 : index
    %c2 = arith.constant 2 : index
    %20 = vector.load %arg11[%c0_24, %c2] : memref<24x362xf32, #tpu.memory_space<vmem>>, vector<24x324xf32>
    %c2_25 = arith.constant 2 : index
    %c0_26 = arith.constant 0 : index
    %c0_27 = arith.constant 0 : index
    %21 = vector.load %arg4[%c2_25, %c0_26, %c0_27] : memref<9x8x24xf32, #tpu.memory_space<vmem>>, vector<1x8x24xf32>
    %22 = vector.shape_cast %21 : vector<1x8x24xf32> to vector<8x24xf32>
    %cst_28 = arith.constant dense<0.000000e+00> : vector<8x324xf32>
    %23 = tpu.matmul %22, %20, %cst_28 {dimension_numbers = #tpu.dot_dimension_numbers<[1], [0], [0], [1], [0, 0, 1, 1], [], []>} : vector<8x24xf32>, vector<24x324xf32>, vector<8x324xf32> -> vector<8x324xf32>
    %24 = arith.addf %19, %23 : vector<8x324xf32>
    %c0_29 = arith.constant 0 : index
    %c18 = arith.constant 18 : index
    %25 = vector.load %arg11[%c0_29, %c18] : memref<24x362xf32, #tpu.memory_space<vmem>>, vector<24x324xf32>
    %c3 = arith.constant 3 : index
    %c0_30 = arith.constant 0 : index
    %c0_31 = arith.constant 0 : index
    %26 = vector.load %arg4[%c3, %c0_30, %c0_31] : memref<9x8x24xf32, #tpu.memory_space<vmem>>, vector<1x8x24xf32>
    %27 = vector.shape_cast %26 : vector<1x8x24xf32> to vector<8x24xf32>
    %cst_32 = arith.constant dense<0.000000e+00> : vector<8x324xf32>
    %28 = tpu.matmul %27, %25, %cst_32 {dimension_numbers = #tpu.dot_dimension_numbers<[1], [0], [0], [1], [0, 0, 1, 1], [], []>} : vector<8x24xf32>, vector<24x324xf32>, vector<8x324xf32> -> vector<8x324xf32>
    %29 = arith.addf %24, %28 : vector<8x324xf32>
    %c0_33 = arith.constant 0 : index
    %c19_34 = arith.constant 19 : index
    %30 = vector.load %arg11[%c0_33, %c19_34] : memref<24x362xf32, #tpu.memory_space<vmem>>, vector<24x324xf32>
    %c4 = arith.constant 4 : index
    %c0_35 = arith.constant 0 : index
    %c0_36 = arith.constant 0 : index
    %31 = vector.load %arg4[%c4, %c0_35, %c0_36] : memref<9x8x24xf32, #tpu.memory_space<vmem>>, vector<1x8x24xf32>
    %32 = vector.shape_cast %31 : vector<1x8x24xf32> to vector<8x24xf32>
    %cst_37 = arith.constant dense<0.000000e+00> : vector<8x324xf32>
    %33 = tpu.matmul %32, %30, %cst_37 {dimension_numbers = #tpu.dot_dimension_numbers<[1], [0], [0], [1], [0, 0, 1, 1], [], []>} : vector<8x24xf32>, vector<24x324xf32>, vector<8x324xf32> -> vector<8x324xf32>
    %34 = arith.addf %29, %33 : vector<8x324xf32>
    %c0_38 = arith.constant 0 : index
    %c20 = arith.constant 20 : index
    %35 = vector.load %arg11[%c0_38, %c20] : memref<24x362xf32, #tpu.memory_space<vmem>>, vector<24x324xf32>
    %c5 = arith.constant 5 : index
    %c0_39 = arith.constant 0 : index
    %c0_40 = arith.constant 0 : index
    %36 = vector.load %arg4[%c5, %c0_39, %c0_40] : memref<9x8x24xf32, #tpu.memory_space<vmem>>, vector<1x8x24xf32>
    %37 = vector.shape_cast %36 : vector<1x8x24xf32> to vector<8x24xf32>
    %cst_41 = arith.constant dense<0.000000e+00> : vector<8x324xf32>
    %38 = tpu.matmul %37, %35, %cst_41 {dimension_numbers = #tpu.dot_dimension_numbers<[1], [0], [0], [1], [0, 0, 1, 1], [], []>} : vector<8x24xf32>, vector<24x324xf32>, vector<8x324xf32> -> vector<8x324xf32>
    %39 = arith.addf %34, %38 : vector<8x324xf32>
    %c0_42 = arith.constant 0 : index
    %c36 = arith.constant 36 : index
    %40 = vector.load %arg11[%c0_42, %c36] : memref<24x362xf32, #tpu.memory_space<vmem>>, vector<24x324xf32>
    %c6 = arith.constant 6 : index
    %c0_43 = arith.constant 0 : index
    %c0_44 = arith.constant 0 : index
    %41 = vector.load %arg4[%c6, %c0_43, %c0_44] : memref<9x8x24xf32, #tpu.memory_space<vmem>>, vector<1x8x24xf32>
    %42 = vector.shape_cast %41 : vector<1x8x24xf32> to vector<8x24xf32>
    %cst_45 = arith.constant dense<0.000000e+00> : vector<8x324xf32>
    %43 = tpu.matmul %42, %40, %cst_45 {dimension_numbers = #tpu.dot_dimension_numbers<[1], [0], [0], [1], [0, 0, 1, 1], [], []>} : vector<8x24xf32>, vector<24x324xf32>, vector<8x324xf32> -> vector<8x324xf32>
    %44 = arith.addf %39, %43 : vector<8x324xf32>
    %c0_46 = arith.constant 0 : index
    %c37 = arith.constant 37 : index
    %45 = vector.load %arg11[%c0_46, %c37] : memref<24x362xf32, #tpu.memory_space<vmem>>, vector<24x324xf32>
    %c7 = arith.constant 7 : index
    %c0_47 = arith.constant 0 : index
    %c0_48 = arith.constant 0 : index
    %46 = vector.load %arg4[%c7, %c0_47, %c0_48] : memref<9x8x24xf32, #tpu.memory_space<vmem>>, vector<1x8x24xf32>
    %47 = vector.shape_cast %46 : vector<1x8x24xf32> to vector<8x24xf32>
    %cst_49 = arith.constant dense<0.000000e+00> : vector<8x324xf32>
    %48 = tpu.matmul %47, %45, %cst_49 {dimension_numbers = #tpu.dot_dimension_numbers<[1], [0], [0], [1], [0, 0, 1, 1], [], []>} : vector<8x24xf32>, vector<24x324xf32>, vector<8x324xf32> -> vector<8x324xf32>
    %49 = arith.addf %44, %48 : vector<8x324xf32>
    %c0_50 = arith.constant 0 : index
    %c38 = arith.constant 38 : index
    %50 = vector.load %arg11[%c0_50, %c38] : memref<24x362xf32, #tpu.memory_space<vmem>>, vector<24x324xf32>
    %c8 = arith.constant 8 : index
    %c0_51 = arith.constant 0 : index
    %c0_52 = arith.constant 0 : index
    %51 = vector.load %arg4[%c8, %c0_51, %c0_52] : memref<9x8x24xf32, #tpu.memory_space<vmem>>, vector<1x8x24xf32>
    %52 = vector.shape_cast %51 : vector<1x8x24xf32> to vector<8x24xf32>
    %cst_53 = arith.constant dense<0.000000e+00> : vector<8x324xf32>
    %53 = tpu.matmul %52, %50, %cst_53 {dimension_numbers = #tpu.dot_dimension_numbers<[1], [0], [0], [1], [0, 0, 1, 1], [], []>} : vector<8x24xf32>, vector<24x324xf32>, vector<8x324xf32> -> vector<8x324xf32>
    %54 = arith.addf %49, %53 : vector<8x324xf32>
    %c0_54 = arith.constant 0 : index
    %c0_55 = arith.constant 0 : index
    %55 = vector.load %arg5[%c0_54, %c0_55] : memref<8x1xf32, #tpu.memory_space<vmem>>, vector<8x1xf32>
    %56 = vector.broadcast %55 : vector<8x1xf32> to vector<8x324xf32>
    %57 = arith.addf %54, %56 : vector<8x324xf32>
    %cst_56 = arith.constant 0.000000e+00 : f32
    %58 = vector.broadcast %cst_56 : f32 to vector<8x324xf32>
    %59 = arith.maximumf %57, %58 : vector<8x324xf32>
    %60 = vector.broadcast %10 : vector<1x324xf32> to vector<8x324xf32>
    %61 = arith.mulf %59, %60 : vector<8x324xf32>
    %c0_57 = arith.constant 0 : index
    %c19_58 = arith.constant 19 : index
    %62 = vector.load %arg11[%c0_57, %c19_58] : memref<24x362xf32, #tpu.memory_space<vmem>>, vector<8x324xf32>
    tpu.vector_store %arg11[%c0_57, %c19_58], %61 {strides = array<i32>} : memref<24x362xf32, #tpu.memory_space<vmem>>, vector<8x324xf32>,
    %c0_59 = arith.constant 0 : index
    %c0_60 = arith.constant 0 : index
    %63 = vector.load %arg11[%c0_59, %c0_60] : memref<24x362xf32, #tpu.memory_space<vmem>>, vector<8x324xf32>
    %c0_61 = arith.constant 0 : index
    %c0_62 = arith.constant 0 : index
    %c0_63 = arith.constant 0 : index
    %64 = vector.load %arg6[%c0_61, %c0_62, %c0_63] : memref<9x8x8xf32, #tpu.memory_space<vmem>>, vector<1x8x8xf32>
    %65 = vector.shape_cast %64 : vector<1x8x8xf32> to vector<8x8xf32>
    %cst_64 = arith.constant dense<0.000000e+00> : vector<8x324xf32>
    %66 = tpu.matmul %65, %63, %cst_64 {dimension_numbers = #tpu.dot_dimension_numbers<[1], [0], [0], [1], [0, 0, 1, 1], [], []>} : vector<8x8xf32>, vector<8x324xf32>, vector<8x324xf32> -> vector<8x324xf32>
    %c0_65 = arith.constant 0 : index
    %c1_66 = arith.constant 1 : index
    %67 = vector.load %arg11[%c0_65, %c1_66] : memref<24x362xf32, #tpu.memory_space<vmem>>, vector<8x324xf32>
    %c1_67 = arith.constant 1 : index
    %c0_68 = arith.constant 0 : index
    %c0_69 = arith.constant 0 : index
    %68 = vector.load %arg6[%c1_67, %c0_68, %c0_69] : memref<9x8x8xf32, #tpu.memory_space<vmem>>, vector<1x8x8xf32>
    %69 = vector.shape_cast %68 : vector<1x8x8xf32> to vector<8x8xf32>
    %cst_70 = arith.constant dense<0.000000e+00> : vector<8x324xf32>
    %70 = tpu.matmul %69, %67, %cst_70 {dimension_numbers = #tpu.dot_dimension_numbers<[1], [0], [0], [1], [0, 0, 1, 1], [], []>} : vector<8x8xf32>, vector<8x324xf32>, vector<8x324xf32> -> vector<8x324xf32>
    %71 = arith.addf %66, %70 : vector<8x324xf32>
    %c0_71 = arith.constant 0 : index
    %c2_72 = arith.constant 2 : index
    %72 = vector.load %arg11[%c0_71, %c2_72] : memref<24x362xf32, #tpu.memory_space<vmem>>, vector<8x324xf32>
    %c2_73 = arith.constant 2 : index
    %c0_74 = arith.constant 0 : index
    %c0_75 = arith.constant 0 : index
    %73 = vector.load %arg6[%c2_73, %c0_74, %c0_75] : memref<9x8x8xf32, #tpu.memory_space<vmem>>, vector<1x8x8xf32>
    %74 = vector.shape_cast %73 : vector<1x8x8xf32> to vector<8x8xf32>
    %cst_76 = arith.constant dense<0.000000e+00> : vector<8x324xf32>
    %75 = tpu.matmul %74, %72, %cst_76 {dimension_numbers = #tpu.dot_dimension_numbers<[1], [0], [0], [1], [0, 0, 1, 1], [], []>} : vector<8x8xf32>, vector<8x324xf32>, vector<8x324xf32> -> vector<8x324xf32>
    %76 = arith.addf %71, %75 : vector<8x324xf32>
    %c0_77 = arith.constant 0 : index
    %c18_78 = arith.constant 18 : index
    %77 = vector.load %arg11[%c0_77, %c18_78] : memref<24x362xf32, #tpu.memory_space<vmem>>, vector<8x324xf32>
    %c3_79 = arith.constant 3 : index
    %c0_80 = arith.constant 0 : index
    %c0_81 = arith.constant 0 : index
    %78 = vector.load %arg6[%c3_79, %c0_80, %c0_81] : memref<9x8x8xf32, #tpu.memory_space<vmem>>, vector<1x8x8xf32>
    %79 = vector.shape_cast %78 : vector<1x8x8xf32> to vector<8x8xf32>
    %cst_82 = arith.constant dense<0.000000e+00> : vector<8x324xf32>
    %80 = tpu.matmul %79, %77, %cst_82 {dimension_numbers = #tpu.dot_dimension_numbers<[1], [0], [0], [1], [0, 0, 1, 1], [], []>} : vector<8x8xf32>, vector<8x324xf32>, vector<8x324xf32> -> vector<8x324xf32>
    %81 = arith.addf %76, %80 : vector<8x324xf32>
    %c0_83 = arith.constant 0 : index
    %c19_84 = arith.constant 19 : index
    %82 = vector.load %arg11[%c0_83, %c19_84] : memref<24x362xf32, #tpu.memory_space<vmem>>, vector<8x324xf32>
    %c4_85 = arith.constant 4 : index
    %c0_86 = arith.constant 0 : index
    %c0_87 = arith.constant 0 : index
    %83 = vector.load %arg6[%c4_85, %c0_86, %c0_87] : memref<9x8x8xf32, #tpu.memory_space<vmem>>, vector<1x8x8xf32>
    %84 = vector.shape_cast %83 : vector<1x8x8xf32> to vector<8x8xf32>
    %cst_88 = arith.constant dense<0.000000e+00> : vector<8x324xf32>
    %85 = tpu.matmul %84, %82, %cst_88 {dimension_numbers = #tpu.dot_dimension_numbers<[1], [0], [0], [1], [0, 0, 1, 1], [], []>} : vector<8x8xf32>, vector<8x324xf32>, vector<8x324xf32> -> vector<8x324xf32>
    %86 = arith.addf %81, %85 : vector<8x324xf32>
    %c0_89 = arith.constant 0 : index
    %c20_90 = arith.constant 20 : index
    %87 = vector.load %arg11[%c0_89, %c20_90] : memref<24x362xf32, #tpu.memory_space<vmem>>, vector<8x324xf32>
    %c5_91 = arith.constant 5 : index
    %c0_92 = arith.constant 0 : index
    %c0_93 = arith.constant 0 : index
    %88 = vector.load %arg6[%c5_91, %c0_92, %c0_93] : memref<9x8x8xf32, #tpu.memory_space<vmem>>, vector<1x8x8xf32>
    %89 = vector.shape_cast %88 : vector<1x8x8xf32> to vector<8x8xf32>
    %cst_94 = arith.constant dense<0.000000e+00> : vector<8x324xf32>
    %90 = tpu.matmul %89, %87, %cst_94 {dimension_numbers = #tpu.dot_dimension_numbers<[1], [0], [0], [1], [0, 0, 1, 1], [], []>} : vector<8x8xf32>, vector<8x324xf32>, vector<8x324xf32> -> vector<8x324xf32>
    %91 = arith.addf %86, %90 : vector<8x324xf32>
    %c0_95 = arith.constant 0 : index
    %c36_96 = arith.constant 36 : index
    %92 = vector.load %arg11[%c0_95, %c36_96] : memref<24x362xf32, #tpu.memory_space<vmem>>, vector<8x324xf32>
    %c6_97 = arith.constant 6 : index
    %c0_98 = arith.constant 0 : index
    %c0_99 = arith.constant 0 : index
    %93 = vector.load %arg6[%c6_97, %c0_98, %c0_99] : memref<9x8x8xf32, #tpu.memory_space<vmem>>, vector<1x8x8xf32>
    %94 = vector.shape_cast %93 : vector<1x8x8xf32> to vector<8x8xf32>
    %cst_100 = arith.constant dense<0.000000e+00> : vector<8x324xf32>
    %95 = tpu.matmul %94, %92, %cst_100 {dimension_numbers = #tpu.dot_dimension_numbers<[1], [0], [0], [1], [0, 0, 1, 1], [], []>} : vector<8x8xf32>, vector<8x324xf32>, vector<8x324xf32> -> vector<8x324xf32>
    %96 = arith.addf %91, %95 : vector<8x324xf32>
    %c0_101 = arith.constant 0 : index
    %c37_102 = arith.constant 37 : index
    %97 = vector.load %arg11[%c0_101, %c37_102] : memref<24x362xf32, #tpu.memory_space<vmem>>, vector<8x324xf32>
    %c7_103 = arith.constant 7 : index
    %c0_104 = arith.constant 0 : index
    %c0_105 = arith.constant 0 : index
    %98 = vector.load %arg6[%c7_103, %c0_104, %c0_105] : memref<9x8x8xf32, #tpu.memory_space<vmem>>, vector<1x8x8xf32>
    %99 = vector.shape_cast %98 : vector<1x8x8xf32> to vector<8x8xf32>
    %cst_106 = arith.constant dense<0.000000e+00> : vector<8x324xf32>
    %100 = tpu.matmul %99, %97, %cst_106 {dimension_numbers = #tpu.dot_dimension_numbers<[1], [0], [0], [1], [0, 0, 1, 1], [], []>} : vector<8x8xf32>, vector<8x324xf32>, vector<8x324xf32> -> vector<8x324xf32>
    %101 = arith.addf %96, %100 : vector<8x324xf32>
    %c0_107 = arith.constant 0 : index
    %c38_108 = arith.constant 38 : index
    %102 = vector.load %arg11[%c0_107, %c38_108] : memref<24x362xf32, #tpu.memory_space<vmem>>, vector<8x324xf32>
    %c8_109 = arith.constant 8 : index
    %c0_110 = arith.constant 0 : index
    %c0_111 = arith.constant 0 : index
    %103 = vector.load %arg6[%c8_109, %c0_110, %c0_111] : memref<9x8x8xf32, #tpu.memory_space<vmem>>, vector<1x8x8xf32>
    %104 = vector.shape_cast %103 : vector<1x8x8xf32> to vector<8x8xf32>
    %cst_112 = arith.constant dense<0.000000e+00> : vector<8x324xf32>
    %105 = tpu.matmul %104, %102, %cst_112 {dimension_numbers = #tpu.dot_dimension_numbers<[1], [0], [0], [1], [0, 0, 1, 1], [], []>} : vector<8x8xf32>, vector<8x324xf32>, vector<8x324xf32> -> vector<8x324xf32>
    %106 = arith.addf %101, %105 : vector<8x324xf32>
    %c0_113 = arith.constant 0 : index
    %c0_114 = arith.constant 0 : index
    %107 = vector.load %arg7[%c0_113, %c0_114] : memref<8x1xf32, #tpu.memory_space<vmem>>, vector<8x1xf32>
    %108 = vector.broadcast %107 : vector<8x1xf32> to vector<8x324xf32>
    %109 = arith.addf %106, %108 : vector<8x324xf32>
    %cst_115 = arith.constant 0.000000e+00 : f32
    %110 = vector.broadcast %cst_115 : f32 to vector<8x324xf32>
    %111 = arith.maximumf %109, %110 : vector<8x324xf32>
    %112 = vector.broadcast %10 : vector<1x324xf32> to vector<8x324xf32>
    %113 = arith.mulf %111, %112 : vector<8x324xf32>
    %c0_116 = arith.constant 0 : index
    %c19_117 = arith.constant 19 : index
    %114 = vector.load %arg11[%c0_116, %c19_117] : memref<24x362xf32, #tpu.memory_space<vmem>>, vector<8x324xf32>
    tpu.vector_store %arg11[%c0_116, %c19_117], %113 {strides = array<i32>} : memref<24x362xf32, #tpu.memory_space<vmem>>, vector<8x324xf32>,
    %c0_118 = arith.constant 0 : index
    %c19_119 = arith.constant 19 : index
    %115 = vector.load %arg11[%c0_118, %c19_119] : memref<24x362xf32, #tpu.memory_space<vmem>>, vector<8x324xf32>
    %c0_120 = arith.constant 0 : index
    %c0_121 = arith.constant 0 : index
    %c0_122 = arith.constant 0 : index
    %116 = vector.load %arg8[%c0_120, %c0_121, %c0_122] : memref<1x4x8xf32, #tpu.memory_space<vmem>>, vector<1x4x8xf32>
    %117 = vector.shape_cast %116 : vector<1x4x8xf32> to vector<4x8xf32>
    %cst_123 = arith.constant dense<0.000000e+00> : vector<4x324xf32>
    %118 = tpu.matmul %117, %115, %cst_123 {dimension_numbers = #tpu.dot_dimension_numbers<[1], [0], [0], [1], [0, 0, 1, 1], [], []>} : vector<4x8xf32>, vector<8x324xf32>, vector<4x324xf32> -> vector<4x324xf32>
    %c0_124 = arith.constant 0 : index
    %c0_125 = arith.constant 0 : index
    %119 = vector.load %arg9[%c0_124, %c0_125] : memref<4x1xf32, #tpu.memory_space<vmem>>, vector<4x1xf32>
    %120 = vector.broadcast %119 : vector<4x1xf32> to vector<4x324xf32>
    %121 = arith.addf %118, %120 : vector<4x324xf32>
    %122 = vector.broadcast %10 : vector<1x324xf32> to vector<4x324xf32>
    %123 = arith.mulf %121, %122 : vector<4x324xf32>
    %c0_126 = arith.constant 0 : index
    %c0_127 = arith.constant 0 : index
    %c0_128 = arith.constant 0 : index
    %124 = vector.load %arg10[%c0_126, %c0_127, %c0_128] : memref<1x4x324xf32, #tpu.memory_space<vmem>>, vector<1x4x324xf32>
    %125 = vector.shape_cast %124 : vector<1x4x324xf32> to vector<4x324xf32>
    %126 = vector.shape_cast %123 : vector<4x324xf32> to vector<1x4x324xf32>
    tpu.vector_store %arg10[%c0_126, %c0_127, %c0_128], %126 {strides = array<i32>} : memref<1x4x324xf32, #tpu.memory_space<vmem>>, vector<1x4x324xf32>,
    return
  }
  func.func @transform_0(%arg0: i32) -> (i32, i32) {
    %c0_i32 = arith.constant 0 : i32
    %c0_i32_0 = arith.constant 0 : i32
    %c0_i32_1 = arith.constant 0 : i32
    return %c0_i32, %c0_i32_0 : i32, i32
  }
  func.func @transform_1(%arg0: i32) -> (i32, i32, i32) {
    %c0_i32 = arith.constant 0 : i32
    %c0_i32_0 = arith.constant 0 : i32
    %c0_i32_1 = arith.constant 0 : i32
    return %arg0, %c0_i32, %c0_i32_0 : i32, i32, i32
  }
  func.func @transform_2(%arg0: i32) -> (i32, i32, i32) {
    %c0_i32 = arith.constant 0 : i32
    %c0_i32_0 = arith.constant 0 : i32
    %c0_i32_1 = arith.constant 0 : i32
    return %arg0, %c0_i32, %c0_i32_0 : i32, i32, i32
  }
  func.func @transform_3(%arg0: i32) -> (i32, i32, i32) {
    %c0_i32 = arith.constant 0 : i32
    %c0_i32_0 = arith.constant 0 : i32
    %c0_i32_1 = arith.constant 0 : i32
    %c0_i32_2 = arith.constant 0 : i32
    return %c0_i32, %c0_i32_0, %c0_i32_1 : i32, i32, i32
  }
  func.func @transform_4(%arg0: i32) -> (i32, i32) {
    %c0_i32 = arith.constant 0 : i32
    %c0_i32_0 = arith.constant 0 : i32
    %c0_i32_1 = arith.constant 0 : i32
    return %c0_i32, %c0_i32_0 : i32, i32
  }
  func.func @transform_5(%arg0: i32) -> (i32, i32, i32) {
    %c0_i32 = arith.constant 0 : i32
    %c0_i32_0 = arith.constant 0 : i32
    %c0_i32_1 = arith.constant 0 : i32
    %c0_i32_2 = arith.constant 0 : i32
    return %c0_i32, %c0_i32_0, %c0_i32_1 : i32, i32, i32
  }
  func.func @transform_6(%arg0: i32) -> (i32, i32) {
    %c0_i32 = arith.constant 0 : i32
    %c0_i32_0 = arith.constant 0 : i32
    %c0_i32_1 = arith.constant 0 : i32
    return %c0_i32, %c0_i32_0 : i32, i32
  }
  func.func @transform_7(%arg0: i32) -> (i32, i32, i32) {
    %c0_i32 = arith.constant 0 : i32
    %c0_i32_0 = arith.constant 0 : i32
    %c0_i32_1 = arith.constant 0 : i32
    %c0_i32_2 = arith.constant 0 : i32
    return %c0_i32, %c0_i32_0, %c0_i32_1 : i32, i32, i32
  }
  func.func @transform_8(%arg0: i32) -> (i32, i32) {
    %c0_i32 = arith.constant 0 : i32
    %c0_i32_0 = arith.constant 0 : i32
    %c0_i32_1 = arith.constant 0 : i32
    return %c0_i32, %c0_i32_0 : i32, i32
  }
  func.func @transform_9(%arg0: i32) -> (i32, i32, i32) {
    %c0_i32 = arith.constant 0 : i32
    %c0_i32_0 = arith.constant 0 : i32
    %c0_i32_1 = arith.constant 0 : i32
    return %arg0, %c0_i32, %c0_i32_0 : i32, i32, i32
  }
}

</mosaic_0001>

<llo_original>
// kernel: comb_net_forward.8
$region0: #{comb_net_forward.8}
  #allocation0 [shape = 'u32[]', space=smem, size = 0x4, offset = 0x4, fixed_abs, tag = 'smem constant byte address 0x4 - core index']
  #allocation1 [shape = 'u32[72,128]{1,0:T(1,128)}', space=vmem, size = 0x9000, scoped, tag = 'internal scratch']
  %s0 = inlined_call_operand.vmem [shape: f32[16,16], index: 0, kind: input, shape index: {}]
  %s1 = inlined_call_operand.vmem [shape: f32[16,16], index: 1, kind: output, shape index: {}]
  %s2 = sld [smem:[#allocation0]]
  $region14: #{comb_net_forward.8} parent=0
    _
  %s4 = ssub.s32 1, %s2
  %s5 = scalar_select 0, %s4, %s2
  // Predicated region
  $region2: #{comb_net_forward.8} parent=0 // pred_check
    _
  $region3: #{comb_net_forward.8} parent=0 // pred_check_branch
    %7 = sbr.rel (0) target = $region5
  $region4: #{comb_net_forward.8} parent=0 // pred_region
    _
  $region5: #{comb_net_forward.8} parent=0 // pred_fallthru
    _
  %v8 = vld [vmem:[%s0] sm:$0xff]
  %v9 = vld [vmem:[%s0 + $0x8] sm:$0xff]
  %v10 = vxor.u32 %v8, 2147483648
  %v11 = vxor.u32 %v9, 2147483648
  %v12 = vmul.f32 %v10, 1.442695
  %v13 = vpow.pop %v12
  %v14 = vmul.f32 %v11, 1.442695
  %v15 = vpow.pop %v14
  %v16 = vadd.f32 %v13, 1.0
  %v17 = vadd.f32 %v15, 1.0
  %v18 = vrcp.pop %v16
  %v19 = vmul.f32 %v16, %v18
  %v20 = vsub.f32 1.0, %v19
  %v21 = vmul.f32 %v18, %v20
  %v22 = vadd.f32 %v18, %v21
  %vm23 = vweird.f32 %v16
  %vm24 = vweird.f32 %v18
  %vm25 = vmor %vm23, %vm24
  %v26 = vsel %vm25, %v18, %v22
  %v27 = vand.u32 2147483647, %v16
  %vm28 = vcmp.eq.f32.partialorder %v27, 8.507059e+37
  %v29 = vand.u32 %v16, 2147483648
  %v30 = vor.u32 1.1754944e-38, %v29
  %v31 = vsel %vm28, %v30, %v26
  %v32 = vmul.f32 1.0, %v31
  %v33 = vrcp.pop %v17
  %v34 = vmul.f32 %v17, %v33
  %v35 = vsub.f32 1.0, %v34
  %v36 = vmul.f32 %v33, %v35
  %v37 = vadd.f32 %v33, %v36
  %vm38 = vweird.f32 %v17
  %vm39 = vweird.f32 %v33
  %vm40 = vmor %vm38, %vm39
  %v41 = vsel %vm40, %v33, %v37
  %v42 = vand.u32 2147483647, %v17
  %vm43 = vcmp.eq.f32.partialorder %v42, 8.507059e+37
  %v44 = vand.u32 %v17, 2147483648
  %v45 = vor.u32 1.1754944e-38, %v44
  %v46 = vsel %vm43, %v45, %v41
  %v47 = vmul.f32 1.0, %v46
  %vm48 = vcmask 130048
  %v49 = vsel %vm48, %v32, 0.0
  %v50 = vsel %vm48, %v47, 0.0
  %v51 = vadd.f32 %v49, %v50
  %52 = vadd.xlane.f32.xlu0 %v51
  %v53 = vpop.xlane.xlu0 %52
  %v54 = vrot.slane %v53, 4
  %v55 = vadd.f32 %v53, %v54
  %v56 = vrot.slane %v55, 2
  %v57 = vadd.f32 %v55, %v56
  %v58 = vrot.slane %v57, 1
  %v59 = vadd.f32 %v57, %v58
  %s60 = vtos %v59
  %v61 = vrcp.pop 256.0
  %v62 = vmul.f32 256.0, %v61
  %v63 = vsub.f32 1.0, %v62
  %v64 = vmul.f32 %v61, %v63
  %v65 = vadd.f32 %v61, %v64
  %vm66 = vweird.f32 %v61
  %v67 = vsel %vm66, %v61, %v65
  %s68 = vtos %v67
  %s69 = smul.f32 %s60, %s68
  %v70 = vstv %s69
  %v71 = vrcp.pop %v70
  %v72 = vmul.f32 %v70, %v71
  %v73 = vsub.f32 1.0, %v72
  %v74 = vmul.f32 %v71, %v73
  %v75 = vadd.f32 %v71, %v74
  %vm76 = vweird.f32 %v70
  %vm77 = vweird.f32 %v71
  %vm78 = vmor %vm76, %vm77
  %v79 = vsel %vm78, %v71, %v75
  %v80 = vand.u32 2147483647, %v70
  %vm81 = vcmp.eq.f32.partialorder %v80, 8.507059e+37
  %v82 = vand.u32 %v70, 2147483648
  %v83 = vor.u32 1.1754944e-38, %v82
  %v84 = vsel %vm81, %v83, %v79
  %s85 = vtos %v84
  %s86 = smul.f32 0.25, %s85
  %s87 = ssub.f32 1.0, %s69
  %v88 = vstv %s87
  %v89 = vrcp.pop %v88
  %v90 = vmul.f32 %v88, %v89
  %v91 = vsub.f32 1.0, %v90
  %v92 = vmul.f32 %v89, %v91
  %v93 = vadd.f32 %v89, %v92
  %vm94 = vweird.f32 %v88
  %vm95 = vweird.f32 %v89
  %vm96 = vmor %vm94, %vm95
  %v97 = vsel %vm96, %v89, %v93
  %v98 = vand.u32 2147483647, %v88
  %vm99 = vcmp.eq.f32.partialorder %v98, 8.507059e+37
  %v100 = vand.u32 %v88, 2147483648
  %v101 = vor.u32 1.1754944e-38, %v100
  %v102 = vsel %vm99, %v101, %v97
  %s103 = vtos %v102
  %s104 = smul.f32 0.75, %s103
  %p105 = scmp.le.f32.partialorder %s86, 1.0
  %s106 = scalar_select %p105, 1, 0
  %s107 = scvt.s32.f32 %s106
  %v108 = vstv %s86
  %v109 = vmul.f32 %v32, %v108
  %v110 = vmul.f32 %v47, %v108
  %v111 = vstv %s107
  %v112 = vmul.f32 %v111, %v109
  %v113 = vmul.f32 %v111, %v110
  %s114 = ssub.f32 1.0, %s107
  %v115 = vsub.f32 1.0, %v32
  %v116 = vsub.f32 1.0, %v47
  %v117 = vstv %s104
  %v118 = vmul.f32 %v115, %v117
  %v119 = vmul.f32 %v116, %v117
  %v120 = vsub.f32 1.0, %v118
  %v121 = vsub.f32 1.0, %v119
  %v122 = vstv %s114
  %v123 = vmul.f32 %v122, %v120
  %v124 = vmul.f32 %v122, %v121
  %v125 = vadd.f32 %v112, %v123
  %v126 = vadd.f32 %v113, %v124
  %v127 = vsub.f32 %v125, 0.5
  %v128 = vsub.f32 %v126, 0.5
  %v129 = vmul.f32 %v127, 10.0
  %v130 = vmul.f32 %v128, 10.0
  %v131 = vxor.u32 %v129, 2147483648
  %v132 = vxor.u32 %v130, 2147483648
  %v133 = vmul.f32 %v131, 1.442695
  %v134 = vpow.pop %v133
  %v135 = vmul.f32 %v132, 1.442695
  %v136 = vpow.pop %v135
  %v137 = vadd.f32 %v134, 1.0
  %v138 = vadd.f32 %v136, 1.0
  %v139 = vrcp.pop %v137
  %v140 = vmul.f32 %v137, %v139
  %v141 = vsub.f32 1.0, %v140
  %v142 = vmul.f32 %v139, %v141
  %v143 = vadd.f32 %v139, %v142
  %vm144 = vweird.f32 %v137
  %vm145 = vweird.f32 %v139
  %vm146 = vmor %vm144, %vm145
  %v147 = vsel %vm146, %v139, %v143
  %v148 = vand.u32 2147483647, %v137
  %vm149 = vcmp.eq.f32.partialorder %v148, 8.507059e+37
  %v150 = vand.u32 %v137, 2147483648
  %v151 = vor.u32 1.1754944e-38, %v150
  %v152 = vsel %vm149, %v151, %v147
  %v153 = vmul.f32 1.0, %v152
  %v154 = vrcp.pop %v138
  %v155 = vmul.f32 %v138, %v154
  %v156 = vsub.f32 1.0, %v155
  %v157 = vmul.f32 %v154, %v156
  %v158 = vadd.f32 %v154, %v157
  %vm159 = vweird.f32 %v138
  %vm160 = vweird.f32 %v154
  %vm161 = vmor %vm159, %vm160
  %v162 = vsel %vm161, %v154, %v158
  %v163 = vand.u32 2147483647, %v138
  %vm164 = vcmp.eq.f32.partialorder %v163, 8.507059e+37
  %v165 = vand.u32 %v138, 2147483648
  %v166 = vor.u32 1.1754944e-38, %v165
  %v167 = vsel %vm164, %v166, %v162
  %v168 = vmul.f32 1.0, %v167
  %169 = vst.msk [vmem:[%s1] sm:$0xff] %vm48, %v153
  %170 = vst.msk [vmem:[%s1 + $0x8] sm:$0xff] %vm48, %v168
  // Predicated region
  $region6: #{comb_net_forward.8} parent=0 // pred_check
    _
  $region7: #{comb_net_forward.8} parent=0 // pred_check_branch
    %172 = sbr.rel (0) target = $region9
  $region8: #{comb_net_forward.8} parent=0 // pred_region
    _
  $region9: #{comb_net_forward.8} parent=0 // pred_fallthru
    _
  // Predicated region
  $region10: #{comb_net_forward.8} parent=0 // pred_check
    _
  $region11: #{comb_net_forward.8} parent=0 // pred_check_branch
    %174 = sbr.rel (0) target = $region13
  $region12: #{comb_net_forward.8} parent=0 // pred_region
    _
  $region13: #{comb_net_forward.8} parent=0 // pred_fallthru
    _

// kernel: comb_net_forward.9
$region0: #{comb_net_forward.9}
  #allocation0 [shape = 'u32[]', space=smem, size = 0x4, offset = 0x4, fixed_abs, tag = 'smem constant byte address 0x4 - core index']
  #allocation1 [shape = 'u32[72,128]{1,0:T(1,128)}', space=vmem, size = 0x9000, scoped, tag = 'internal scratch']
  %s0 = inlined_call_operand.vmem [shape: f32[2,16,16], index: 0, kind: input, shape index: {}]
  %s1 = inlined_call_operand.vmem [shape: f32[16,16], index: 1, kind: input, shape index: {}]
  %s2 = inlined_call_operand.vmem [shape: f32[32,16], index: 2, kind: input, shape index: {}]
  %s3 = inlined_call_operand.vmem [shape: f32[16,32], index: 3, kind: input, shape index: {}]
  %s4 = inlined_call_operand.vmem [shape: f32[32,32], index: 4, kind: input, shape index: {}]
  %s5 = inlined_call_operand.vmem [shape: f32[16,32], index: 5, kind: input, shape index: {}]
  %s6 = inlined_call_operand.hbm [shape: f32[2,2,16,16], index: 6, kind: output, shape index: {0}]
  %s7 = inlined_call_operand.hbm [shape: f32[2,2,16,16], index: 7, kind: output, shape index: {1}]
  %s8 = inlined_call_operand.hbm [shape: f32[2,2,16,16], index: 8, kind: output, shape index: {2}]
  %s9 = inlined_call_operand.hbm [shape: f32[2,16,16], index: 9, kind: output, shape index: {3}]
  %s10 = inlined_call_operand.vmem [shape: f32[2,1,18,18], index: 10, kind: output, shape index: {4}]
  %11 = xla_tuple %s6, %s7, %s8, %s9, %s10
  %s12 = sld [smem:[#allocation0]]
  $region89: #{comb_net_forward.9} parent=0
    _
  %s14 = ssub.s32 1, %s12
  %s15 = scalar_select 0, %s14, %s12
  $region1: #{comb_net_forward.9} parent=0
    #allocation2 [shape = 'u8[32768]{0}', space=vmem, size = 0x8000, scoped, tag = 'output window, operand 0']
    #allocation3 [shape = 's32[2]{0}', space=sflag, size = 0x8, scoped, tag = 'scoped memory for comb_net_forward.9']
    #allocation4 [shape = 'u8[32768]{0}', space=vmem, size = 0x8000, scoped, tag = 'output window, operand 1']
    #allocation5 [shape = 's32[2]{0}', space=sflag, size = 0x8, scoped, tag = 'scoped memory for comb_net_forward.9']
    #allocation6 [shape = 'u8[32768]{0}', space=vmem, size = 0x8000, scoped, tag = 'output window, operand 2']
    #allocation7 [shape = 'u8[16384]{0}', space=vmem, size = 0x4000, scoped, tag = 'output window, operand 3']
    #allocation8 [shape = 's32[2]{0}', space=sflag, size = 0x8, scoped, tag = 'scoped memory for comb_net_forward.9']
    %16 = vsyncpa [#allocation3], 0
    %s17 = scalar_lea.sflag [#allocation3], 1
    %18 = vsyncpa %s17, 0
    %19 = vsyncpa [#allocation5], 0
    %s20 = scalar_lea.sflag [#allocation5], 1
    %21 = vsyncpa %s20, 0
    %22 = vsyncpa [#allocation8], 0
    %s23 = scalar_lea.sflag [#allocation8], 1
    %24 = vsyncpa %s23, 0
    loop: start=0, step=1, limit=4
    $region2: #{comb_net_forward.9} parent=1 // loop_pre_header
      _
    $region3: #{comb_net_forward.9} parent=1 // loop_header
      %s26 = sphi 0, %s30
      %p27 = scmp.ge.s32.totalorder %s26, 4
      %s36 = sphi 0, %s38
      %s39 = sphi 0, %s36
      %s40 = sphi 0, %s39
      %s56 = sphi 0, %s40
      %s60 = sphi 0, %s60
      %s62 = sphi 0, %s60
      %s63 = sphi 0, %s62
      %s77 = sphi 0, %s63
      %s81 = sphi 0, %s81
      %s83 = sphi 0, %s81
      %s84 = sphi 0, %s83
      %s98 = sphi 0, %s84
      %s102 = sphi 0, %s102
      %s104 = sphi 0, %s102
      %s105 = sphi 0, %s104
      %s119 = sphi 0, %s105
      %s123 = sphi 0, %s123
      %s125 = sphi 0, %s123
      %s126 = sphi 0, %s125
      %s140 = sphi 0, %s126
      %s144 = sphi 0, %s144
      %s146 = sphi 0, %s144
      %s147 = sphi 0, %s146
      %s161 = sphi 0, %s147
      %s167 = sphi 0, %s169
      %s170 = sphi 0, %s167
      %s171 = sphi 0, %s170
      %s187 = sphi 0, %s171
      %s193 = sphi 0, %s195
      %s196 = sphi 0, %s193
      %s197 = sphi 0, %s196
      %s213 = sphi 0, %s197
      %s219 = sphi 0, %s221
      %s222 = sphi 0, %s219
      %s223 = sphi 0, %s222
      %s239 = sphi 0, %s223
      %s245 = sphi 0, %s247
      %s248 = sphi 0, %s245
      %s249 = sphi 0, %s248
      %s265 = sphi 0, %s249
      %s271 = sphi 0, %s273
      %s274 = sphi 0, %s271
      %s275 = sphi 0, %s274
      %s291 = sphi 0, %s275
    $region4: #{comb_net_forward.9} parent=1 // loop_header_branch
      %29 = sbr.rel (%p27) target = $region8
    $region5: #{comb_net_forward.9} parent=1 // loop_body
      %s31 = ssub.s32 %s26, 1
      %s32 = ssub.s32 %s26, 2
      %s33 = sadd.s32 %s26, 1
      %s34 = ssub.s32 %s26, %s33
      %p35 = scmp.eq.s32.totalorder %s34, 0
      %s37 = sadd.s32 %s36, 1
      %s38 = scalar_select %p35, %s36, %s37
      %p41 = pneg %p35
      %p42 = scmp.eq.s32.totalorder %s26, 1
      %p43 = por %p41, %p42
      %p44 = scmp.ne.s32.totalorder %s36, %s39
      %p45 = scmp.eq.s32.totalorder %s26, 0
      %p46 = por %p44, %p45
      %p47 = scmp.ne.s32.totalorder %s36, %s39
      %p48 = scmp.eq.s32.totalorder %s31, 1
      %p49 = por %p47, %p48
      %p50 = scmp.ne.s32.totalorder %s39, %s40
      %p51 = scmp.eq.s32.totalorder %s31, 0
      %p52 = por %p50, %p51
      %p53 = scmp.ne.s32.totalorder %s39, %s40
      %p54 = scmp.eq.s32.totalorder %s32, 1
      %p55 = por %p53, %p54
      %p57 = scmp.ne.s32.totalorder %s40, %s56
      %p58 = scmp.eq.s32.totalorder %s32, 0
      %p59 = por %p57, %p58
      %s61 = sadd.s32 %s60, 1
      %p64 = scmp.eq.s32.totalorder %s26, 1
      %p65 = scmp.ne.s32.totalorder %s60, %s62
      %p66 = scmp.eq.s32.totalorder %s26, 0
      %p67 = por %p65, %p66
      %p68 = scmp.ne.s32.totalorder %s60, %s62
      %p69 = scmp.eq.s32.totalorder %s31, 1
      %p70 = por %p68, %p69
      %p71 = scmp.ne.s32.totalorder %s62, %s63
      %p72 = scmp.eq.s32.totalorder %s31, 0
      %p73 = por %p71, %p72
      %p74 = scmp.ne.s32.totalorder %s62, %s63
      %p75 = scmp.eq.s32.totalorder %s32, 1
      %p76 = por %p74, %p75
      %p78 = scmp.ne.s32.totalorder %s63, %s77
      %p79 = scmp.eq.s32.totalorder %s32, 0
      %p80 = por %p78, %p79
      %s82 = sadd.s32 %s81, 1
      %p85 = scmp.eq.s32.totalorder %s26, 1
      %p86 = scmp.ne.s32.totalorder %s81, %s83
      %p87 = scmp.eq.s32.totalorder %s26, 0
      %p88 = por %p86, %p87
      %p89 = scmp.ne.s32.totalorder %s81, %s83
      %p90 = scmp.eq.s32.totalorder %s31, 1
      %p91 = por %p89, %p90
      %p92 = scmp.ne.s32.totalorder %s83, %s84
      %p93 = scmp.eq.s32.totalorder %s31, 0
      %p94 = por %p92, %p93
      %p95 = scmp.ne.s32.totalorder %s83, %s84
      %p96 = scmp.eq.s32.totalorder %s32, 1
      %p97 = por %p95, %p96
      %p99 = scmp.ne.s32.totalorder %s84, %s98
      %p100 = scmp.eq.s32.totalorder %s32, 0
      %p101 = por %p99, %p100
      %s103 = sadd.s32 %s102, 1
      %p106 = scmp.eq.s32.totalorder %s26, 1
      %p107 = scmp.ne.s32.totalorder %s102, %s104
      %p108 = scmp.eq.s32.totalorder %s26, 0
      %p109 = por %p107, %p108
      %p110 = scmp.ne.s32.totalorder %s102, %s104
      %p111 = scmp.eq.s32.totalorder %s31, 1
      %p112 = por %p110, %p111
      %p113 = scmp.ne.s32.totalorder %s104, %s105
      %p114 = scmp.eq.s32.totalorder %s31, 0
      %p115 = por %p113, %p114
      %p116 = scmp.ne.s32.totalorder %s104, %s105
      %p117 = scmp.eq.s32.totalorder %s32, 1
      %p118 = por %p116, %p117
      %p120 = scmp.ne.s32.totalorder %s105, %s119
      %p121 = scmp.eq.s32.totalorder %s32, 0
      %p122 = por %p120, %p121
      %s124 = sadd.s32 %s123, 1
      %p127 = scmp.eq.s32.totalorder %s26, 1
      %p128 = scmp.ne.s32.totalorder %s123, %s125
      %p129 = scmp.eq.s32.totalorder %s26, 0
      %p130 = por %p128, %p129
      %p131 = scmp.ne.s32.totalorder %s123, %s125
      %p132 = scmp.eq.s32.totalorder %s31, 1
      %p133 = por %p131, %p132
      %p134 = scmp.ne.s32.totalorder %s125, %s126
      %p135 = scmp.eq.s32.totalorder %s31, 0
      %p136 = por %p134, %p135
      %p137 = scmp.ne.s32.totalorder %s125, %s126
      %p138 = scmp.eq.s32.totalorder %s32, 1
      %p139 = por %p137, %p138
      %p141 = scmp.ne.s32.totalorder %s126, %s140
      %p142 = scmp.eq.s32.totalorder %s32, 0
      %p143 = por %p141, %p142
      %s145 = sadd.s32 %s144, 1
      %p148 = scmp.eq.s32.totalorder %s26, 1
      %p149 = scmp.ne.s32.totalorder %s144, %s146
      %p150 = scmp.eq.s32.totalorder %s26, 0
      %p151 = por %p149, %p150
      %p152 = scmp.ne.s32.totalorder %s144, %s146
      %p153 = scmp.eq.s32.totalorder %s31, 1
      %p154 = por %p152, %p153
      %p155 = scmp.ne.s32.totalorder %s146, %s147
      %p156 = scmp.eq.s32.totalorder %s31, 0
      %p157 = por %p155, %p156
      %p158 = scmp.ne.s32.totalorder %s146, %s147
      %p159 = scmp.eq.s32.totalorder %s32, 1
      %p160 = por %p158, %p159
      %p162 = scmp.ne.s32.totalorder %s147, %s161
      %p163 = scmp.eq.s32.totalorder %s32, 0
      %p164 = por %p162, %p163
      %s165 = ssub.s32 %s26, %s33
      %p166 = scmp.eq.s32.totalorder %s165, 0
      %s168 = sadd.s32 %s167, 1
      %s169 = scalar_select %p166, %s167, %s168
      %p172 = pneg %p166
      %p173 = scmp.eq.s32.totalorder %s26, 1
      %p174 = por %p172, %p173
      %p175 = scmp.ne.s32.totalorder %s167, %s170
      %p176 = scmp.eq.s32.totalorder %s26, 0
      %p177 = por %p175, %p176
      %p178 = scmp.ne.s32.totalorder %s167, %s170
      %p179 = scmp.eq.s32.totalorder %s31, 1
      %p180 = por %p178, %p179
      %p181 = scmp.ne.s32.totalorder %s170, %s171
      %p182 = scmp.eq.s32.totalorder %s31, 0
      %p183 = por %p181, %p182
      %p184 = scmp.ne.s32.totalorder %s170, %s171
      %p185 = scmp.eq.s32.totalorder %s32, 1
      %p186 = por %p184, %p185
      %p188 = scmp.ne.s32.totalorder %s171, %s187
      %p189 = scmp.eq.s32.totalorder %s32, 0
      %p190 = por %p188, %p189
      %s191 = ssub.s32 %s26, %s33
      %p192 = scmp.eq.s32.totalorder %s191, 0
      %s194 = sadd.s32 %s193, 1
      %s195 = scalar_select %p192, %s193, %s194
      %p198 = pneg %p192
      %p199 = scmp.eq.s32.totalorder %s26, 1
      %p200 = por %p198, %p199
      %p201 = scmp.ne.s32.totalorder %s193, %s196
      %p202 = scmp.eq.s32.totalorder %s26, 0
      %p203 = por %p201, %p202
      %p204 = scmp.ne.s32.totalorder %s193, %s196
      %p205 = scmp.eq.s32.totalorder %s31, 1
      %p206 = por %p204, %p205
      %p207 = scmp.ne.s32.totalorder %s196, %s197
      %p208 = scmp.eq.s32.totalorder %s31, 0
      %p209 = por %p207, %p208
      %p210 = scmp.ne.s32.totalorder %s196, %s197
      %p211 = scmp.eq.s32.totalorder %s32, 1
      %p212 = por %p210, %p211
      %p214 = scmp.ne.s32.totalorder %s197, %s213
      %p215 = scmp.eq.s32.totalorder %s32, 0
      %p216 = por %p214, %p215
      %s217 = ssub.s32 %s26, %s33
      %p218 = scmp.eq.s32.totalorder %s217, 0
      %s220 = sadd.s32 %s219, 1
      %s221 = scalar_select %p218, %s219, %s220
      %p224 = pneg %p218
      %p225 = scmp.eq.s32.totalorder %s26, 1
      %p226 = por %p224, %p225
      %p227 = scmp.ne.s32.totalorder %s219, %s222
      %p228 = scmp.eq.s32.totalorder %s26, 0
      %p229 = por %p227, %p228
      %p230 = scmp.ne.s32.totalorder %s219, %s222
      %p231 = scmp.eq.s32.totalorder %s31, 1
      %p232 = por %p230, %p231
      %p233 = scmp.ne.s32.totalorder %s222, %s223
      %p234 = scmp.eq.s32.totalorder %s31, 0
      %p235 = por %p233, %p234
      %p236 = scmp.ne.s32.totalorder %s222, %s223
      %p237 = scmp.eq.s32.totalorder %s32, 1
      %p238 = por %p236, %p237
      %p240 = scmp.ne.s32.totalorder %s223, %s239
      %p241 = scmp.eq.s32.totalorder %s32, 0
      %p242 = por %p240, %p241
      %s243 = ssub.s32 %s26, %s33
      %p244 = scmp.eq.s32.totalorder %s243, 0
      %s246 = sadd.s32 %s245, 1
      %s247 = scalar_select %p244, %s245, %s246
      %p250 = pneg %p244
      %p251 = scmp.eq.s32.totalorder %s26, 1
      %p252 = por %p250, %p251
      %p253 = scmp.ne.s32.totalorder %s245, %s248
      %p254 = scmp.eq.s32.totalorder %s26, 0
      %p255 = por %p253, %p254
      %p256 = scmp.ne.s32.totalorder %s245, %s248
      %p257 = scmp.eq.s32.totalorder %s31, 1
      %p258 = por %p256, %p257
      %p259 = scmp.ne.s32.totalorder %s248, %s249
      %p260 = scmp.eq.s32.totalorder %s31, 0
      %p261 = por %p259, %p260
      %p262 = scmp.ne.s32.totalorder %s248, %s249
      %p263 = scmp.eq.s32.totalorder %s32, 1
      %p264 = por %p262, %p263
      %p266 = scmp.ne.s32.totalorder %s249, %s265
      %p267 = scmp.eq.s32.totalorder %s32, 0
      %p268 = por %p266, %p267
      %s269 = ssub.s32 %s26, %s33
      %p270 = scmp.eq.s32.totalorder %s269, 0
      %s272 = sadd.s32 %s271, 1
      %s273 = scalar_select %p270, %s271, %s272
      %p276 = pneg %p270
      %p277 = scmp.eq.s32.totalorder %s26, 1
      %p278 = por %p276, %p277
      %p279 = scmp.ne.s32.totalorder %s271, %s274
      %p280 = scmp.eq.s32.totalorder %s26, 0
      %p281 = por %p279, %p280
      %p282 = scmp.ne.s32.totalorder %s271, %s274
      %p283 = scmp.eq.s32.totalorder %s31, 1
      %p284 = por %p282, %p283
      %p285 = scmp.ne.s32.totalorder %s274, %s275
      %p286 = scmp.eq.s32.totalorder %s31, 0
      %p287 = por %p285, %p286
      %p288 = scmp.ne.s32.totalorder %s274, %s275
      %p289 = scmp.eq.s32.totalorder %s32, 1
      %p290 = por %p288, %p289
      %p292 = scmp.ne.s32.totalorder %s275, %s291
      %p293 = scmp.eq.s32.totalorder %s32, 0
      %p294 = por %p292, %p293
      %p295 = scmp.le.s32.totalorder 1, %s26
      %p296 = scmp.lt.s32.totalorder %s26, 3
      %p297 = pnand %p295, %p296
      %p298 = pneg %p297
      // Predicated region
      $region9: #{comb_net_forward.9} parent=5 // pred_check
        _
      $region10: #{comb_net_forward.9} parent=5 // pred_check_branch
        %300 = sbr.rel (%p297) target = $region12
      $region11: #{comb_net_forward.9} parent=5 // pred_region
        %s301 = ssub.s32 %s26, 1
        // Predicated region
        $region13: #{comb_net_forward.9} parent=11 // pred_check
          %p302 = pneg %p73
        $region14: #{comb_net_forward.9} parent=11 // pred_check_branch
          %304 = sbr.rel (%p302) target = $region16
        $region15: #{comb_net_forward.9} parent=11 // pred_region
          _
        $region16: #{comb_net_forward.9} parent=11 // pred_fallthru
          _
        // Predicated region
        $region17: #{comb_net_forward.9} parent=11 // pred_check
          %p305 = pneg %p94
        $region18: #{comb_net_forward.9} parent=11 // pred_check_branch
          %307 = sbr.rel (%p305) target = $region20
        $region19: #{comb_net_forward.9} parent=11 // pred_region
          _
        $region20: #{comb_net_forward.9} parent=11 // pred_fallthru
          _
        // Predicated region
        $region21: #{comb_net_forward.9} parent=11 // pred_check
          %p308 = pneg %p115
        $region22: #{comb_net_forward.9} parent=11 // pred_check_branch
          %310 = sbr.rel (%p308) target = $region24
        $region23: #{comb_net_forward.9} parent=11 // pred_region
          _
        $region24: #{comb_net_forward.9} parent=11 // pred_fallthru
          _
        // Predicated region
        $region25: #{comb_net_forward.9} parent=11 // pred_check
          %p311 = pneg %p136
        $region26: #{comb_net_forward.9} parent=11 // pred_check_branch
          %313 = sbr.rel (%p311) target = $region28
        $region27: #{comb_net_forward.9} parent=11 // pred_region
          _
        $region28: #{comb_net_forward.9} parent=11 // pred_fallthru
          _
        // Predicated region
        $region29: #{comb_net_forward.9} parent=11 // pred_check
          %p314 = pneg %p157
        $region30: #{comb_net_forward.9} parent=11 // pred_check_branch
          %316 = sbr.rel (%p314) target = $region32
        $region31: #{comb_net_forward.9} parent=11 // pred_region
          _
        $region32: #{comb_net_forward.9} parent=11 // pred_fallthru
          _
      $region12: #{comb_net_forward.9} parent=5 // pred_fallthru
        _
      %p317 = scmp.lt.s32.totalorder %s26, 2
      // Predicated region
      $region33: #{comb_net_forward.9} parent=5 // pred_check
        %p318 = pneg %p317
      $region34: #{comb_net_forward.9} parent=5 // pred_check_branch
        %320 = sbr.rel (%p318) target = $region36
      $region35: #{comb_net_forward.9} parent=5 // pred_region
        // Predicated region
        $region37: #{comb_net_forward.9} parent=35 // pred_check
          %p321 = pneg %p46
        $region38: #{comb_net_forward.9} parent=35 // pred_check_branch
          %323 = sbr.rel (%p321) target = $region40
        $region39: #{comb_net_forward.9} parent=35 // pred_region
          %p324 = scmp.lt.s32.totalorder %s26, 1
          %s325 = scalar_select %p324, %s26, 1
          %s326 = smul.addr %s325, 2
          %s327 = smul.addr %s326, 8
          %s328 = scalar_lea.vmem %s0, %s327
        $region40: #{comb_net_forward.9} parent=35 // pred_fallthru
          _
      $region36: #{comb_net_forward.9} parent=5 // pred_fallthru
        _
      %p329 = scmp.le.s32.totalorder 1, %s26
      %p330 = scmp.lt.s32.totalorder %s26, 3
      %p331 = pnand %p329, %p330
      %p332 = pneg %p331
      // Predicated region
      $region41: #{comb_net_forward.9} parent=5 // pred_check
        _
      $region42: #{comb_net_forward.9} parent=5 // pred_check_branch
        %334 = sbr.rel (%p331) target = $region44
      $region43: #{comb_net_forward.9} parent=5 // pred_region
        %s335 = ssub.s32 %s26, 1
        %p336 = scmp.lt.s32.totalorder %s31, 1
        %s337 = scalar_select %p336, %s31, 1
        %s338 = smul.addr %s337, 2
        %s339 = smul.addr %s338, 8
        %s340 = scalar_lea.vmem %s0, %s339
        %p341 = pneg %p52
        %p342 = pneg %p49
        %p343 = pneg %p73
        %p344 = pneg %p70
        %p345 = pneg %p94
        %p346 = pneg %p91
        %p347 = pneg %p115
        %p348 = pneg %p112
        %p349 = pneg %p136
        %p350 = pneg %p133
        %p351 = pneg %p157
        %p352 = pneg %p154
        %p353 = pneg %p183
        %p354 = pneg %p180
        %s355 = sand.u32 %s170, 1
        %s356 = scalar_lea.sflag [#allocation3], %s355
        %s357 = sand.u32 %s170, 1
        %s358 = smul.addr %s357, 32
        %s359 = scalar_lea.vmem [#allocation2], %s358
        %p360 = pneg %p209
        %p361 = pneg %p206
        %s362 = sand.u32 %s31, 1
        %s363 = scalar_lea.sflag [#allocation5], %s362
        %s364 = sand.u32 %s196, 1
        %s365 = smul.addr %s364, 32
        %s366 = scalar_lea.vmem [#allocation4], %s365
        %p367 = pneg %p235
        %p368 = pneg %p232
        %s369 = sand.u32 %s31, 1
        %s370 = scalar_lea.sflag [#allocation5], %s369
        %s371 = sand.u32 %s222, 1
        %s372 = smul.addr %s371, 32
        %s373 = scalar_lea.vmem [#allocation6], %s372
        %p374 = pneg %p261
        %p375 = pneg %p258
        %s376 = sand.u32 %s248, 1
        %s377 = scalar_lea.sflag [#allocation8], %s376
        %s378 = sand.u32 %s248, 1
        %s379 = smul.addr %s378, 16
        %s380 = scalar_lea.vmem [#allocation7], %s379
        %p381 = pneg %p287
        %p382 = pneg %p284
        %p383 = scmp.lt.s32.totalorder %s31, 1
        %s384 = scalar_select %p383, %s31, 1
        %s385 = smul.addr %s384, 3
        %s386 = smul.addr %s385, 8
        %s387 = scalar_lea.vmem %s10, %s386
        %p388 = scmp.lt.s32.totalorder %s31, 1
        %s389 = scalar_select %p388, %s31, 1
        %s390 = smul.addr %s389, 2
        %s391 = smul.addr %s390, 8
        %s392 = scalar_lea.vmem %s0, %s391
        %p393 = scmp.lt.s32.totalorder %s31, 1
        %s394 = scalar_select %p393, %s31, 1
        %s395 = smul.addr %s394, 3
        %s396 = smul.addr %s395, 8
        %s397 = scalar_lea.vmem %s10, %s396
        %v398 = vld [vmem:[%s392] sm:$0xff]
        %v399 = vld [vmem:[%s392 + $0x8] sm:$0xff]
        %v400 = vld [vmem:[%s2] sm:$0xff]
        %v401 = vld [vmem:[%s2 + $0x8] sm:$0xff]
        %v402 = vld [vmem:[%s2 + $0x10] sm:$0xff]
        %v403 = vld [vmem:[%s2 + $0x18] sm:$0xff]
        %vm404 = vcmask 130048
        %v406 = vsel %vm404, %v400, 0
        %v409 = vsel %vm404, %v401, 0
        %v412 = vsel %vm404, %v402, 0
        %v415 = vsel %vm404, %v403, 0
        %417 = vmatpush.msra.mxu0 0.0
        %418 = vmatpush.msra.mxu0 0.0
        %419 = vmatpush.msra.mxu0 0.0
        %420 = vmatpush.msra.mxu0 0.0
        %421 = vmatpush.msra.mxu0 0.0
        %422 = vmatpush.msra.mxu0 0.0
        %423 = vmatpush.msra.mxu0 0.0
        %424 = vmatpush.msra.mxu0 0.0
        %425 = vmatpush.msra.mxu0 0.0
        %426 = vmatpush.msra.mxu0 0.0
        %427 = vmatpush.msra.mxu0 0.0
        %428 = vmatpush.msra.mxu0 0.0
        %429 = vmatpush.msra.mxu0 0.0
        %430 = vmatpush.msra.mxu0 0.0
        %431 = vmatpush.msra.mxu0 %v399
        %432 = vmatpush.msra.mxu0 %v398
        %433 = vmatmul.f32.gmra.mxu0 %v406
        %v434 = vpop.f32.mrf.mxu0
        %v435 = vadd.f32 0.0, %v434
        %436 = vmatmul.f32.gmra.mxu0 %v409
        %v437 = vpop.f32.mrf.mxu0
        %v438 = vadd.f32 0.0, %v437
        %439 = vmatmul.f32.gmra.mxu0 %v412
        %v440 = vpop.f32.mrf.mxu0
        %v441 = vadd.f32 0.0, %v440
        %442 = vmatmul.f32.gmra.mxu0 %v415
        %v443 = vpop.f32.mrf.mxu0
        %v444 = vadd.f32 0.0, %v443
        %445 = vdwg.mxu0
        %v446 = vld [vmem:[%s3] sm:$0xff]
        %v447 = vld [vmem:[%s3 + $0x8] sm:$0xff]
        %v449 = vsel %vm404, %v435, 0
        %v452 = vsel %vm404, %v438, 0
        %v455 = vsel %vm404, %v441, 0
        %v458 = vsel %vm404, %v444, 0
        %460 = vmatpush.msra.mxu0 0.0
        %461 = vmatpush.msra.mxu0 0.0
        %462 = vmatpush.msra.mxu0 0.0
        %463 = vmatpush.msra.mxu0 0.0
        %464 = vmatpush.msra.mxu0 0.0
        %465 = vmatpush.msra.mxu0 0.0
        %466 = vmatpush.msra.mxu0 0.0
        %467 = vmatpush.msra.mxu0 0.0
        %468 = vmatpush.msra.mxu0 0.0
        %469 = vmatpush.msra.mxu0 0.0
        %470 = vmatpush.msra.mxu0 0.0
        %471 = vmatpush.msra.mxu0 0.0
        %472 = vmatpush.msra.mxu0 0.0
        %473 = vmatpush.msra.mxu0 0.0
        %474 = vmatpush.msra.mxu0 %v447
        %475 = vmatpush.msra.mxu0 %v446
        %476 = vmatmul.f32.gmra.mxu0 %v449
        %v477 = vpop.f32.mrf.mxu0
        %v478 = vadd.f32 0.0, %v477
        %479 = vmatmul.f32.gmra.mxu0 %v452
        %v480 = vpop.f32.mrf.mxu0
        %v481 = vadd.f32 0.0, %v480
        %482 = vmatmul.f32.gmra.mxu0 %v455
        %v483 = vpop.f32.mrf.mxu0
        %v484 = vadd.f32 0.0, %v483
        %485 = vmatmul.f32.gmra.mxu0 %v458
        %v486 = vpop.f32.mrf.mxu0
        %v487 = vadd.f32 0.0, %v486
        %488 = vdwg.mxu0
        %491 = vrot.lane.b32.xlu0 %v484, 112
        %v492 = vpop.permute.xlu0 %491
        %493 = vrot.lane.b32.xlu0 %v487, 112
        %v494 = vpop.permute.xlu0 %493
        %v497 = vsub.f32 %v478, %v492
        %v498 = vsub.f32 %v481, %v494
        %499 = vrot.lane.b32.xlu0 %v484, 16
        %v500 = vpop.permute.xlu0 %499
        %501 = vrot.lane.b32.xlu0 %v487, 16
        %v502 = vpop.permute.xlu0 %501
        %v505 = vadd.f32 %v478, %v500
        %v506 = vadd.f32 %v481, %v502
        %v507 = vld [vmem:[%s1] sm:$0xff]
        %v508 = vld [vmem:[%s1 + $0x8] sm:$0xff]
        %v509 = vmul.f32 %v497, %v507
        %v510 = vmul.f32 %v498, %v508
        %513 = vrot.lane.b32.xlu0 %v507, 16
        %v514 = vpop.permute.xlu0 %513
        %515 = vrot.lane.b32.xlu0 %v508, 16
        %v516 = vpop.permute.xlu0 %515
        %v519 = vmul.f32 %v505, %v514
        %v520 = vmul.f32 %v506, %v516
        %523 = vrot.lane.b32.xlu0 %v519, 112
        %v524 = vpop.permute.xlu0 %523
        %525 = vrot.lane.b32.xlu0 %v520, 112
        %v526 = vpop.permute.xlu0 %525
        %v529 = vld [vmem:[%s4] sm:$0xff]
        %v530 = vld [vmem:[%s4 + $0x8] sm:$0xff]
        %v531 = vld [vmem:[%s4 + $0x10] sm:$0xff]
        %v532 = vld [vmem:[%s4 + $0x18] sm:$0xff]
        %vm533 = vcmask 261120
        %v535 = vsel %vm533, %v529, 0
        %v538 = vsel %vm533, %v530, 0
        %v541 = vsel %vm533, %v531, 0
        %v544 = vsel %vm533, %v532, 0
        %546 = vmatpush.msra.mxu0 0.0
        %547 = vmatpush.msra.mxu0 0.0
        %548 = vmatpush.msra.mxu0 0.0
        %549 = vmatpush.msra.mxu0 0.0
        %550 = vmatpush.msra.mxu0 0.0
        %551 = vmatpush.msra.mxu0 0.0
        %552 = vmatpush.msra.mxu0 0.0
        %553 = vmatpush.msra.mxu0 0.0
        %554 = vmatpush.msra.mxu0 0.0
        %555 = vmatpush.msra.mxu0 0.0
        %556 = vmatpush.msra.mxu0 0.0
        %557 = vmatpush.msra.mxu0 0.0
        %558 = vmatpush.msra.mxu0 %v526
        %559 = vmatpush.msra.mxu0 %v524
        %560 = vmatpush.msra.mxu0 %v510
        %561 = vmatpush.msra.mxu0 %v509
        %562 = vmatmul.f32.gmra.mxu0 %v535
        %v563 = vpop.f32.mrf.mxu0
        %v564 = vadd.f32 0.0, %v563
        %565 = vmatmul.f32.gmra.mxu0 %v538
        %v566 = vpop.f32.mrf.mxu0
        %v567 = vadd.f32 0.0, %v566
        %568 = vmatmul.f32.gmra.mxu0 %v541
        %v569 = vpop.f32.mrf.mxu0
        %v570 = vadd.f32 0.0, %v569
        %571 = vmatmul.f32.gmra.mxu0 %v544
        %v572 = vpop.f32.mrf.mxu0
        %v573 = vadd.f32 0.0, %v572
        %574 = vdwg.mxu0
        %v575 = vld [vmem:[%s5] sm:$0xff]
        %v576 = vld [vmem:[%s5 + $0x8] sm:$0xff]
        %v578 = vsel %vm404, %v564, 0
        %v581 = vsel %vm404, %v567, 0
        %v584 = vsel %vm404, %v570, 0
        %v587 = vsel %vm404, %v573, 0
        %589 = vmatpush.msra.mxu0 0.0
        %590 = vmatpush.msra.mxu0 0.0
        %591 = vmatpush.msra.mxu0 0.0
        %592 = vmatpush.msra.mxu0 0.0
        %593 = vmatpush.msra.mxu0 0.0
        %594 = vmatpush.msra.mxu0 0.0
        %595 = vmatpush.msra.mxu0 0.0
        %596 = vmatpush.msra.mxu0 0.0
        %597 = vmatpush.msra.mxu0 0.0
        %598 = vmatpush.msra.mxu0 0.0
        %599 = vmatpush.msra.mxu0 0.0
        %600 = vmatpush.msra.mxu0 0.0
        %601 = vmatpush.msra.mxu0 0.0
        %602 = vmatpush.msra.mxu0 0.0
        %603 = vmatpush.msra.mxu0 %v576
        %604 = vmatpush.msra.mxu0 %v575
        %605 = vmatmul.f32.gmra.mxu0 %v578
        %v606 = vpop.f32.mrf.mxu0
        %v607 = vadd.f32 0.0, %v606
        %608 = vmatmul.f32.gmra.mxu0 %v581
        %v609 = vpop.f32.mrf.mxu0
        %v610 = vadd.f32 0.0, %v609
        %611 = vmatmul.f32.gmra.mxu0 %v584
        %v612 = vpop.f32.mrf.mxu0
        %v613 = vadd.f32 0.0, %v612
        %614 = vmatmul.f32.gmra.mxu0 %v587
        %v615 = vpop.f32.mrf.mxu0
        %v616 = vadd.f32 0.0, %v615
        %617 = vdwg.mxu0
        %620 = vrot.lane.b32.xlu0 %v613, 112
        %v621 = vpop.permute.xlu0 %620
        %622 = vrot.lane.b32.xlu0 %v616, 112
        %v623 = vpop.permute.xlu0 %622
        %v626 = vsub.f32 %v607, %v621
        %v627 = vsub.f32 %v610, %v623
        %628 = vrot.lane.b32.xlu0 %v613, 16
        %v629 = vpop.permute.xlu0 %628
        %630 = vrot.lane.b32.xlu0 %v616, 16
        %v631 = vpop.permute.xlu0 %630
        %v634 = vadd.f32 %v607, %v629
        %v635 = vadd.f32 %v610, %v631
        %v636 = vmul.f32 %v626, %v626
        %v637 = vmul.f32 %v627, %v627
        %v638 = vmul.f32 %v634, %v634
        %v639 = vmul.f32 %v635, %v635
        %642 = vrot.lane.b32.xlu0 %v638, 112
        %v643 = vpop.permute.xlu0 %642
        %644 = vrot.lane.b32.xlu0 %v639, 112
        %v645 = vpop.permute.xlu0 %644
        %v648 = vadd.f32 %v636, %v643
        %v649 = vadd.f32 %v637, %v645
        %v650 = vrsqrt.pop %v648
        %v651 = vmul.f32 %v650, %v648
        %v652 = vmul.f32 %v651, %v650
        %v653 = vmul.f32 0.5, %v652
        %v654 = vsub.f32 1.5, %v653
        %v655 = vmul.f32 %v650, %v654
        %v656 = vmul.f32 %v648, %v655
        %vm657 = vcmp.eq.f32.partialorder %v648, inf
        %v658 = vsel %vm657, %v648, %v656
        %vm659 = vcmp.eq.f32.partialorder %v648, 0.0
        %v660 = vand.u32 %v648, 2147483648
        %v661 = vsel %vm659, %v660, %v658
        %v662 = vrsqrt.pop %v649
        %v663 = vmul.f32 %v662, %v649
        %v664 = vmul.f32 %v663, %v662
        %v665 = vmul.f32 0.5, %v664
        %v666 = vsub.f32 1.5, %v665
        %v667 = vmul.f32 %v662, %v666
        %v668 = vmul.f32 %v649, %v667
        %vm669 = vcmp.eq.f32.partialorder %v649, inf
        %v670 = vsel %vm669, %v649, %v668
        %vm671 = vcmp.eq.f32.partialorder %v649, 0.0
        %v672 = vand.u32 %v649, 2147483648
        %v673 = vsel %vm671, %v672, %v670
        %674 = vst.msk [vmem:[%s359] sm:$0xff] %vm404, %v497
        %675 = vst.msk [vmem:[%s359 + $0x8] sm:$0xff] %vm404, %v498
        %678 = vrot.lane.b32.xlu0 %v505, 112
        %v679 = vpop.permute.xlu0 %678
        %680 = vrot.lane.b32.xlu0 %v506, 112
        %v681 = vpop.permute.xlu0 %680
        %s684 = scalar_lea.vmem %s359, 16 [#allocation2]
        %685 = vst.msk [vmem:[%s684] sm:$0xff] %vm404, %v679
        %686 = vst.msk [vmem:[%s684 + $0x8] sm:$0xff] %vm404, %v681
        %687 = vst.msk [vmem:[%s366] sm:$0xff] %vm404, %v509
        %688 = vst.msk [vmem:[%s366 + $0x8] sm:$0xff] %vm404, %v510
        %s689 = scalar_lea.vmem %s366, 16 [#allocation4]
        %690 = vst.msk [vmem:[%s689] sm:$0xff] %vm404, %v524
        %691 = vst.msk [vmem:[%s689 + $0x8] sm:$0xff] %vm404, %v526
        %692 = vst.msk [vmem:[%s373] sm:$0xff] %vm404, %v626
        %693 = vst.msk [vmem:[%s373 + $0x8] sm:$0xff] %vm404, %v627
        %696 = vrot.lane.b32.xlu0 %v634, 112
        %v697 = vpop.permute.xlu0 %696
        %698 = vrot.lane.b32.xlu0 %v635, 112
        %v699 = vpop.permute.xlu0 %698
        %s702 = scalar_lea.vmem %s373, 16 [#allocation6]
        %703 = vst.msk [vmem:[%s702] sm:$0xff] %vm404, %v697
        %704 = vst.msk [vmem:[%s702 + $0x8] sm:$0xff] %vm404, %v699
        %705 = vst.msk [vmem:[%s380] sm:$0xff] %vm404, %v661
        %706 = vst.msk [vmem:[%s380 + $0x8] sm:$0xff] %vm404, %v673
        %vm707 = vcmask 146432
        %708 = vst.msk [vmem:[%s397] sm:$0xff] %vm707, 0.0
        %709 = vst.msk [vmem:[%s397 + $0x8] sm:$0xff] %vm707, 0.0
        %vm710 = vcmask 140288
        %711 = vst.msk [vmem:[%s397 + $0x10] sm:$0x3] %vm710, 0.0
        %714 = vrot.lane.b32.xlu0 %v661, 1
        %v715 = vpop.permute.xlu0 %714
        %716 = vrot.lane.b32.xlu0 %v673, 1
        %v717 = vpop.permute.xlu0 %716
        %vm720 = vcmask 138248
        %721 = vst.msk [vmem:[%s397 + $0x1] sm:$0xff] %vm720, %v715
        %722 = vst.msk [vmem:[%s397 + $0x9] sm:$0xff] %vm720, %v717
        %s723 = sand.u32 %s170, 1
        %s724 = scalar_lea.sflag [#allocation3], %s723
        %s725 = sand.u32 %s170, 1
        %s726 = smul.addr %s725, 32
        %s727 = scalar_lea.vmem [#allocation2], %s726
        %s728 = sand.u32 %s31, 1
        %s729 = scalar_lea.sflag [#allocation5], %s728
        %s730 = sand.u32 %s196, 1
        %s731 = smul.addr %s730, 32
        %s732 = scalar_lea.vmem [#allocation4], %s731
        %s733 = sand.u32 %s31, 1
        %s734 = scalar_lea.sflag [#allocation5], %s733
        %s735 = sand.u32 %s222, 1
        %s736 = smul.addr %s735, 32
        %s737 = scalar_lea.vmem [#allocation6], %s736
        %s738 = sand.u32 %s248, 1
        %s739 = scalar_lea.sflag [#allocation8], %s738
        %s740 = sand.u32 %s248, 1
        %s741 = smul.addr %s740, 16
        %s742 = scalar_lea.vmem [#allocation7], %s741
        %p743 = scmp.lt.s32.totalorder %s31, 1
        %s744 = scalar_select %p743, %s31, 1
        %s745 = smul.addr %s744, 3
        %s746 = smul.addr %s745, 8
        %s747 = scalar_lea.vmem %s10, %s746
        // Predicated region
        $region45: #{comb_net_forward.9} parent=43 // pred_check
          %p748 = pneg %p180
        $region46: #{comb_net_forward.9} parent=43 // pred_check_branch
          %750 = sbr.rel (%p748) target = $region48
        $region47: #{comb_net_forward.9} parent=43 // pred_region
          %752 = vsyncadd %s724, 0
          %s753 = smul.addr %s31, 4
          %s754 = smul.addr %s753, 8
          %s755 = scalar_lea.hbm %s6, %s754
          %s756 = sshll.u32 %s727, 4
          %s757 = int_to_ptr.vmem [resolvable:$true] %s756
          %s758 = sshll.u32 %s755, 4
          %s759 = int_to_ptr.hbm [resolvable:$true] %s758
          %764 = dma.vmem_to_hbm [thread:$0]  %s757, 512, %s759, %s724, 128, 128, 8
        $region48: #{comb_net_forward.9} parent=43 // pred_fallthru
          _
        // Predicated region
        $region49: #{comb_net_forward.9} parent=43 // pred_check
          %p765 = pneg %p206
        $region50: #{comb_net_forward.9} parent=43 // pred_check_branch
          %767 = sbr.rel (%p765) target = $region52
        $region51: #{comb_net_forward.9} parent=43 // pred_region
          %769 = vsyncadd %s729, 0
          %s770 = smul.addr %s31, 4
          %s771 = smul.addr %s770, 8
          %s772 = scalar_lea.hbm %s7, %s771
          %s773 = sshll.u32 %s732, 4
          %s774 = int_to_ptr.vmem [resolvable:$true] %s773
          %s775 = sshll.u32 %s772, 4
          %s776 = int_to_ptr.hbm [resolvable:$true] %s775
          %781 = dma.vmem_to_hbm [thread:$0]  %s774, 512, %s776, %s729, 128, 128, 8
        $region52: #{comb_net_forward.9} parent=43 // pred_fallthru
          _
        // Predicated region
        $region53: #{comb_net_forward.9} parent=43 // pred_check
          %p782 = pneg %p232
        $region54: #{comb_net_forward.9} parent=43 // pred_check_branch
          %784 = sbr.rel (%p782) target = $region56
        $region55: #{comb_net_forward.9} parent=43 // pred_region
          %786 = vsyncadd %s734, 0
          %s787 = smul.addr %s31, 4
          %s788 = smul.addr %s787, 8
          %s789 = scalar_lea.hbm %s8, %s788
          %s790 = sshll.u32 %s737, 4
          %s791 = int_to_ptr.vmem [resolvable:$true] %s790
          %s792 = sshll.u32 %s789, 4
          %s793 = int_to_ptr.hbm [resolvable:$true] %s792
          %798 = dma.vmem_to_hbm [thread:$0]  %s791, 512, %s793, %s734, 128, 128, 8
        $region56: #{comb_net_forward.9} parent=43 // pred_fallthru
          _
        // Predicated region
        $region57: #{comb_net_forward.9} parent=43 // pred_check
          %p799 = pneg %p258
        $region58: #{comb_net_forward.9} parent=43 // pred_check_branch
          %801 = sbr.rel (%p799) target = $region60
        $region59: #{comb_net_forward.9} parent=43 // pred_region
          %803 = vsyncadd %s739, 0
          %s804 = smul.addr %s31, 2
          %s805 = smul.addr %s804, 8
          %s806 = scalar_lea.hbm %s9, %s805
          %s807 = sshll.u32 %s742, 4
          %s808 = int_to_ptr.vmem [resolvable:$true] %s807
          %s809 = sshll.u32 %s806, 4
          %s810 = int_to_ptr.hbm [resolvable:$true] %s809
          %815 = dma.vmem_to_hbm [thread:$0]  %s808, 256, %s810, %s739, 128, 128, 8
        $region60: #{comb_net_forward.9} parent=43 // pred_fallthru
          _
        // Predicated region
        $region61: #{comb_net_forward.9} parent=43 // pred_check
          %p816 = pneg %p284
        $region62: #{comb_net_forward.9} parent=43 // pred_check_branch
          %818 = sbr.rel (%p816) target = $region64
        $region63: #{comb_net_forward.9} parent=43 // pred_region
          _
        $region64: #{comb_net_forward.9} parent=43 // pred_fallthru
          _
      $region44: #{comb_net_forward.9} parent=5 // pred_fallthru
        _
      %p819 = scmp.le.s32.totalorder 2, %s26
      // Predicated region
      $region65: #{comb_net_forward.9} parent=5 // pred_check
        %p820 = pneg %p819
      $region66: #{comb_net_forward.9} parent=5 // pred_check_branch
        %822 = sbr.rel (%p820) target = $region68
      $region67: #{comb_net_forward.9} parent=5 // pred_region
        %s823 = ssub.s32 %s26, 2
        // Predicated region
        $region69: #{comb_net_forward.9} parent=67 // pred_check
          %p824 = pneg %p186
        $region70: #{comb_net_forward.9} parent=67 // pred_check_branch
          %826 = sbr.rel (%p824) target = $region72
        $region71: #{comb_net_forward.9} parent=67 // pred_region
          %s827 = sand.u32 %s171, 1
          %s828 = scalar_lea.sflag [#allocation3], %s827
          %s829 = sand.u32 %s171, 1
          %s830 = smul.addr %s829, 32
          %s831 = scalar_lea.vmem [#allocation2], %s830
          %833 = dma.done %s828, 512
        $region72: #{comb_net_forward.9} parent=67 // pred_fallthru
          _
        // Predicated region
        $region73: #{comb_net_forward.9} parent=67 // pred_check
          %p834 = pneg %p212
        $region74: #{comb_net_forward.9} parent=67 // pred_check_branch
          %836 = sbr.rel (%p834) target = $region76
        $region75: #{comb_net_forward.9} parent=67 // pred_region
          %s837 = sand.u32 %s32, 1
          %s838 = scalar_lea.sflag [#allocation5], %s837
          %s839 = sand.u32 %s197, 1
          %s840 = smul.addr %s839, 32
          %s841 = scalar_lea.vmem [#allocation4], %s840
          %843 = dma.done %s838, 512
        $region76: #{comb_net_forward.9} parent=67 // pred_fallthru
          _
        // Predicated region
        $region77: #{comb_net_forward.9} parent=67 // pred_check
          %p844 = pneg %p238
        $region78: #{comb_net_forward.9} parent=67 // pred_check_branch
          %846 = sbr.rel (%p844) target = $region80
        $region79: #{comb_net_forward.9} parent=67 // pred_region
          %s847 = sand.u32 %s32, 1
          %s848 = scalar_lea.sflag [#allocation5], %s847
          %s849 = sand.u32 %s223, 1
          %s850 = smul.addr %s849, 32
          %s851 = scalar_lea.vmem [#allocation6], %s850
          %853 = dma.done %s848, 512
        $region80: #{comb_net_forward.9} parent=67 // pred_fallthru
          _
        // Predicated region
        $region81: #{comb_net_forward.9} parent=67 // pred_check
          %p854 = pneg %p264
        $region82: #{comb_net_forward.9} parent=67 // pred_check_branch
          %856 = sbr.rel (%p854) target = $region84
        $region83: #{comb_net_forward.9} parent=67 // pred_region
          %s857 = sand.u32 %s249, 1
          %s858 = scalar_lea.sflag [#allocation8], %s857
          %s859 = sand.u32 %s249, 1
          %s860 = smul.addr %s859, 16
          %s861 = scalar_lea.vmem [#allocation7], %s860
          %863 = dma.done %s858, 256
        $region84: #{comb_net_forward.9} parent=67 // pred_fallthru
          _
        // Predicated region
        $region85: #{comb_net_forward.9} parent=67 // pred_check
          %p864 = pneg %p290
        $region86: #{comb_net_forward.9} parent=67 // pred_check_branch
          %866 = sbr.rel (%p864) target = $region88
        $region87: #{comb_net_forward.9} parent=67 // pred_region
          %p867 = scmp.lt.s32.totalorder %s32, 1
          %s868 = scalar_select %p867, %s32, 1
          %s869 = smul.addr %s868, 3
          %s870 = smul.addr %s869, 8
          %s871 = scalar_lea.vmem %s10, %s870
        $region88: #{comb_net_forward.9} parent=67 // pred_fallthru
          _
      $region68: #{comb_net_forward.9} parent=5 // pred_fallthru
        _
    $region6: #{comb_net_forward.9} parent=1 // loop_footer
      %s30 = sadd.s32 1, %s26
    $region7: #{comb_net_forward.9} parent=1 // loop_footer_branch
      %25 = sbr.rel target = $region3
    $region8: #{comb_net_forward.9} parent=1 // loop_exit
      _
    %872 = vsyncpa [#allocation3], 1
    %s873 = scalar_lea.sflag [#allocation3], 1
    %874 = vsyncpa %s873, 1
    %875 = vsyncpa [#allocation5], 1
    %s876 = scalar_lea.sflag [#allocation5], 1
    %877 = vsyncpa %s876, 1
    %878 = vsyncpa [#allocation8], 1
    %s879 = scalar_lea.sflag [#allocation8], 1
    %880 = vsyncpa %s879, 1

// kernel: comb_net_forward.10
$region0: #{comb_net_forward.10}
  #allocation0 [shape = 'u32[]', space=smem, size = 0x4, offset = 0x4, fixed_abs, tag = 'smem constant byte address 0x4 - core index']
  #allocation1 [shape = 'u32[72,128]{1,0:T(1,128)}', space=vmem, size = 0x9000, scoped, tag = 'internal scratch']
  #allocation2 [shape = 'f32[8,362]{1,0:T(8,128)}', space=vmem, size = 0x3000, scoped, tag = 'scratch operand']
  %s0 = inlined_call_operand.vmem [shape: f32[1,324], index: 0, kind: input, shape index: {}]
  %s1 = inlined_call_operand.vmem [shape: f32[2,1,324], index: 1, kind: input, shape index: {}]
  %s2 = inlined_call_operand.vmem [shape: f32[9,8,1], index: 2, kind: input, shape index: {}]
  %s3 = inlined_call_operand.vmem [shape: f32[8,1], index: 3, kind: input, shape index: {}]
  %s4 = inlined_call_operand.vmem [shape: f32[9,8,8], index: 4, kind: input, shape index: {}]
  %s5 = inlined_call_operand.vmem [shape: f32[8,1], index: 5, kind: input, shape index: {}]
  %s6 = inlined_call_operand.vmem [shape: f32[2,8,324], index: 6, kind: output, shape index: {}]
  %s7 = sld [smem:[#allocation0]]
  $region57: #{comb_net_forward.10} parent=0
    _
  %s9 = ssub.s32 1, %s7
  %s10 = scalar_select 0, %s9, %s7
  loop: start=0, step=1, limit=4
  $region2: #{comb_net_forward.10} parent=0 // loop_pre_header
    _
  $region3: #{comb_net_forward.10} parent=0 // loop_header
    %s12 = sphi 0, %s16
    %p13 = scmp.ge.s32.totalorder %s12, 4
    %s20 = sphi 0, %s20
    %s22 = sphi 0, %s20
    %s23 = sphi 0, %s22
    %s37 = sphi 0, %s23
    %s43 = sphi 0, %s45
    %s46 = sphi 0, %s43
    %s47 = sphi 0, %s46
    %s63 = sphi 0, %s47
    %s67 = sphi 0, %s67
    %s69 = sphi 0, %s67
    %s70 = sphi 0, %s69
    %s84 = sphi 0, %s70
    %s88 = sphi 0, %s88
    %s90 = sphi 0, %s88
    %s91 = sphi 0, %s90
    %s105 = sphi 0, %s91
    %s109 = sphi 0, %s109
    %s111 = sphi 0, %s109
    %s112 = sphi 0, %s111
    %s126 = sphi 0, %s112
    %s130 = sphi 0, %s130
    %s132 = sphi 0, %s130
    %s133 = sphi 0, %s132
    %s147 = sphi 0, %s133
    %s153 = sphi 0, %s155
    %s156 = sphi 0, %s153
    %s157 = sphi 0, %s156
    %s173 = sphi 0, %s157
  $region4: #{comb_net_forward.10} parent=0 // loop_header_branch
    %15 = sbr.rel (%p13) target = $region8
  $region5: #{comb_net_forward.10} parent=0 // loop_body
    %s17 = ssub.s32 %s12, 1
    %s18 = ssub.s32 %s12, 2
    %s19 = sadd.s32 %s12, 1
    %s21 = sadd.s32 %s20, 1
    %p24 = scmp.eq.s32.totalorder %s12, 1
    %p25 = scmp.ne.s32.totalorder %s20, %s22
    %p26 = scmp.eq.s32.totalorder %s12, 0
    %p27 = por %p25, %p26
    %p28 = scmp.ne.s32.totalorder %s20, %s22
    %p29 = scmp.eq.s32.totalorder %s17, 1
    %p30 = por %p28, %p29
    %p31 = scmp.ne.s32.totalorder %s22, %s23
    %p32 = scmp.eq.s32.totalorder %s17, 0
    %p33 = por %p31, %p32
    %p34 = scmp.ne.s32.totalorder %s22, %s23
    %p35 = scmp.eq.s32.totalorder %s18, 1
    %p36 = por %p34, %p35
    %p38 = scmp.ne.s32.totalorder %s23, %s37
    %p39 = scmp.eq.s32.totalorder %s18, 0
    %p40 = por %p38, %p39
    %s41 = ssub.s32 %s12, %s19
    %p42 = scmp.eq.s32.totalorder %s41, 0
    %s44 = sadd.s32 %s43, 1
    %s45 = scalar_select %p42, %s43, %s44
    %p48 = pneg %p42
    %p49 = scmp.eq.s32.totalorder %s12, 1
    %p50 = por %p48, %p49
    %p51 = scmp.ne.s32.totalorder %s43, %s46
    %p52 = scmp.eq.s32.totalorder %s12, 0
    %p53 = por %p51, %p52
    %p54 = scmp.ne.s32.totalorder %s43, %s46
    %p55 = scmp.eq.s32.totalorder %s17, 1
    %p56 = por %p54, %p55
    %p57 = scmp.ne.s32.totalorder %s46, %s47
    %p58 = scmp.eq.s32.totalorder %s17, 0
    %p59 = por %p57, %p58
    %p60 = scmp.ne.s32.totalorder %s46, %s47
    %p61 = scmp.eq.s32.totalorder %s18, 1
    %p62 = por %p60, %p61
    %p64 = scmp.ne.s32.totalorder %s47, %s63
    %p65 = scmp.eq.s32.totalorder %s18, 0
    %p66 = por %p64, %p65
    %s68 = sadd.s32 %s67, 1
    %p71 = scmp.eq.s32.totalorder %s12, 1
    %p72 = scmp.ne.s32.totalorder %s67, %s69
    %p73 = scmp.eq.s32.totalorder %s12, 0
    %p74 = por %p72, %p73
    %p75 = scmp.ne.s32.totalorder %s67, %s69
    %p76 = scmp.eq.s32.totalorder %s17, 1
    %p77 = por %p75, %p76
    %p78 = scmp.ne.s32.totalorder %s69, %s70
    %p79 = scmp.eq.s32.totalorder %s17, 0
    %p80 = por %p78, %p79
    %p81 = scmp.ne.s32.totalorder %s69, %s70
    %p82 = scmp.eq.s32.totalorder %s18, 1
    %p83 = por %p81, %p82
    %p85 = scmp.ne.s32.totalorder %s70, %s84
    %p86 = scmp.eq.s32.totalorder %s18, 0
    %p87 = por %p85, %p86
    %s89 = sadd.s32 %s88, 1
    %p92 = scmp.eq.s32.totalorder %s12, 1
    %p93 = scmp.ne.s32.totalorder %s88, %s90
    %p94 = scmp.eq.s32.totalorder %s12, 0
    %p95 = por %p93, %p94
    %p96 = scmp.ne.s32.totalorder %s88, %s90
    %p97 = scmp.eq.s32.totalorder %s17, 1
    %p98 = por %p96, %p97
    %p99 = scmp.ne.s32.totalorder %s90, %s91
    %p100 = scmp.eq.s32.totalorder %s17, 0
    %p101 = por %p99, %p100
    %p102 = scmp.ne.s32.totalorder %s90, %s91
    %p103 = scmp.eq.s32.totalorder %s18, 1
    %p104 = por %p102, %p103
    %p106 = scmp.ne.s32.totalorder %s91, %s105
    %p107 = scmp.eq.s32.totalorder %s18, 0
    %p108 = por %p106, %p107
    %s110 = sadd.s32 %s109, 1
    %p113 = scmp.eq.s32.totalorder %s12, 1
    %p114 = scmp.ne.s32.totalorder %s109, %s111
    %p115 = scmp.eq.s32.totalorder %s12, 0
    %p116 = por %p114, %p115
    %p117 = scmp.ne.s32.totalorder %s109, %s111
    %p118 = scmp.eq.s32.totalorder %s17, 1
    %p119 = por %p117, %p118
    %p120 = scmp.ne.s32.totalorder %s111, %s112
    %p121 = scmp.eq.s32.totalorder %s17, 0
    %p122 = por %p120, %p121
    %p123 = scmp.ne.s32.totalorder %s111, %s112
    %p124 = scmp.eq.s32.totalorder %s18, 1
    %p125 = por %p123, %p124
    %p127 = scmp.ne.s32.totalorder %s112, %s126
    %p128 = scmp.eq.s32.totalorder %s18, 0
    %p129 = por %p127, %p128
    %s131 = sadd.s32 %s130, 1
    %p134 = scmp.eq.s32.totalorder %s12, 1
    %p135 = scmp.ne.s32.totalorder %s130, %s132
    %p136 = scmp.eq.s32.totalorder %s12, 0
    %p137 = por %p135, %p136
    %p138 = scmp.ne.s32.totalorder %s130, %s132
    %p139 = scmp.eq.s32.totalorder %s17, 1
    %p140 = por %p138, %p139
    %p141 = scmp.ne.s32.totalorder %s132, %s133
    %p142 = scmp.eq.s32.totalorder %s17, 0
    %p143 = por %p141, %p142
    %p144 = scmp.ne.s32.totalorder %s132, %s133
    %p145 = scmp.eq.s32.totalorder %s18, 1
    %p146 = por %p144, %p145
    %p148 = scmp.ne.s32.totalorder %s133, %s147
    %p149 = scmp.eq.s32.totalorder %s18, 0
    %p150 = por %p148, %p149
    %s151 = ssub.s32 %s12, %s19
    %p152 = scmp.eq.s32.totalorder %s151, 0
    %s154 = sadd.s32 %s153, 1
    %s155 = scalar_select %p152, %s153, %s154
    %p158 = pneg %p152
    %p159 = scmp.eq.s32.totalorder %s12, 1
    %p160 = por %p158, %p159
    %p161 = scmp.ne.s32.totalorder %s153, %s156
    %p162 = scmp.eq.s32.totalorder %s12, 0
    %p163 = por %p161, %p162
    %p164 = scmp.ne.s32.totalorder %s153, %s156
    %p165 = scmp.eq.s32.totalorder %s17, 1
    %p166 = por %p164, %p165
    %p167 = scmp.ne.s32.totalorder %s156, %s157
    %p168 = scmp.eq.s32.totalorder %s17, 0
    %p169 = por %p167, %p168
    %p170 = scmp.ne.s32.totalorder %s156, %s157
    %p171 = scmp.eq.s32.totalorder %s18, 1
    %p172 = por %p170, %p171
    %p174 = scmp.ne.s32.totalorder %s157, %s173
    %p175 = scmp.eq.s32.totalorder %s18, 0
    %p176 = por %p174, %p175
    %p177 = scmp.le.s32.totalorder 1, %s12
    %p178 = scmp.lt.s32.totalorder %s12, 3
    %p179 = pnand %p177, %p178
    %p180 = pneg %p179
    // Predicated region
    $region9: #{comb_net_forward.10} parent=5 // pred_check
      _
    $region10: #{comb_net_forward.10} parent=5 // pred_check_branch
      %182 = sbr.rel (%p179) target = $region12
    $region11: #{comb_net_forward.10} parent=5 // pred_region
      %s183 = ssub.s32 %s12, 1
      // Predicated region
      $region13: #{comb_net_forward.10} parent=11 // pred_check
        %p184 = pneg %p33
      $region14: #{comb_net_forward.10} parent=11 // pred_check_branch
        %186 = sbr.rel (%p184) target = $region16
      $region15: #{comb_net_forward.10} parent=11 // pred_region
        _
      $region16: #{comb_net_forward.10} parent=11 // pred_fallthru
        _
      // Predicated region
      $region17: #{comb_net_forward.10} parent=11 // pred_check
        %p187 = pneg %p80
      $region18: #{comb_net_forward.10} parent=11 // pred_check_branch
        %189 = sbr.rel (%p187) target = $region20
      $region19: #{comb_net_forward.10} parent=11 // pred_region
        _
      $region20: #{comb_net_forward.10} parent=11 // pred_fallthru
        _
      // Predicated region
      $region21: #{comb_net_forward.10} parent=11 // pred_check
        %p190 = pneg %p101
      $region22: #{comb_net_forward.10} parent=11 // pred_check_branch
        %192 = sbr.rel (%p190) target = $region24
      $region23: #{comb_net_forward.10} parent=11 // pred_region
        _
      $region24: #{comb_net_forward.10} parent=11 // pred_fallthru
        _
      // Predicated region
      $region25: #{comb_net_forward.10} parent=11 // pred_check
        %p193 = pneg %p122
      $region26: #{comb_net_forward.10} parent=11 // pred_check_branch
        %195 = sbr.rel (%p193) target = $region28
      $region27: #{comb_net_forward.10} parent=11 // pred_region
        _
      $region28: #{comb_net_forward.10} parent=11 // pred_fallthru
        _
      // Predicated region
      $region29: #{comb_net_forward.10} parent=11 // pred_check
        %p196 = pneg %p143
      $region30: #{comb_net_forward.10} parent=11 // pred_check_branch
        %198 = sbr.rel (%p196) target = $region32
      $region31: #{comb_net_forward.10} parent=11 // pred_region
        _
      $region32: #{comb_net_forward.10} parent=11 // pred_fallthru
        _
    $region12: #{comb_net_forward.10} parent=5 // pred_fallthru
      _
    %p199 = scmp.lt.s32.totalorder %s12, 2
    // Predicated region
    $region33: #{comb_net_forward.10} parent=5 // pred_check
      %p200 = pneg %p199
    $region34: #{comb_net_forward.10} parent=5 // pred_check_branch
      %202 = sbr.rel (%p200) target = $region36
    $region35: #{comb_net_forward.10} parent=5 // pred_region
      // Predicated region
      $region37: #{comb_net_forward.10} parent=35 // pred_check
        %p203 = pneg %p53
      $region38: #{comb_net_forward.10} parent=35 // pred_check_branch
        %205 = sbr.rel (%p203) target = $region40
      $region39: #{comb_net_forward.10} parent=35 // pred_region
        %p206 = scmp.lt.s32.totalorder %s12, 1
        %s207 = scalar_select %p206, %s12, 1
        %s208 = smul.addr %s207, 3
        %s209 = scalar_lea.vmem %s1, %s208
      $region40: #{comb_net_forward.10} parent=35 // pred_fallthru
        _
    $region36: #{comb_net_forward.10} parent=5 // pred_fallthru
      _
    %p210 = scmp.le.s32.totalorder 1, %s12
    %p211 = scmp.lt.s32.totalorder %s12, 3
    %p212 = pnand %p210, %p211
    %p213 = pneg %p212
    // Predicated region
    $region41: #{comb_net_forward.10} parent=5 // pred_check
      _
    $region42: #{comb_net_forward.10} parent=5 // pred_check_branch
      %215 = sbr.rel (%p212) target = $region44
    $region43: #{comb_net_forward.10} parent=5 // pred_region
      %s216 = ssub.s32 %s12, 1
      %p217 = pneg %p33
      %p218 = pneg %p30
      %p219 = scmp.lt.s32.totalorder %s17, 1
      %s220 = scalar_select %p219, %s17, 1
      %s221 = smul.addr %s220, 3
      %s222 = scalar_lea.vmem %s1, %s221
      %p223 = pneg %p59
      %p224 = pneg %p56
      %p225 = pneg %p80
      %p226 = pneg %p77
      %p227 = pneg %p101
      %p228 = pneg %p98
      %p229 = pneg %p122
      %p230 = pneg %p119
      %p231 = pneg %p143
      %p232 = pneg %p140
      %p233 = pneg %p169
      %p234 = pneg %p166
      %p235 = scmp.lt.s32.totalorder %s17, 1
      %s236 = scalar_select %p235, %s17, 1
      %s237 = smul.addr %s236, 3
      %s238 = smul.addr %s237, 8
      %s239 = scalar_lea.vmem %s6, %s238
      %p240 = scmp.lt.s32.totalorder %s17, 1
      %s241 = scalar_select %p240, %s17, 1
      %s242 = smul.addr %s241, 3
      %s243 = scalar_lea.vmem %s1, %s242
      %p244 = scmp.lt.s32.totalorder %s17, 1
      %s245 = scalar_select %p244, %s17, 1
      %s246 = smul.addr %s245, 3
      %s247 = smul.addr %s246, 8
      %s248 = scalar_lea.vmem %s6, %s247
      %vm249 = vcmask 154624
      %250 = vst.msk [vmem:[#allocation2] sm:$0xff] %vm249, 0.0
      %vm251 = vcmask 868024
      %252 = vst.msk [vmem:[#allocation2 + $0x10] sm:$0xff] %vm251, 0.0
      %v253 = vld [vmem:[%s243] sm:$0x7]
      %255 = vrot.lane.b32.xlu0 %v253, 19
      %v256 = vpop.permute.xlu0 %255
      %v257 = vrot.slane %v256, 7
      %v258 = vsel %vm249, %v257, %v256
      %v260 = vlaneseq
      %vm261 = vcmp.ge.s32.totalorder %v260, 19
      %vm262 = vcmp.lt.s32.totalorder %v260, 343
      %vm263 = vmand %vm261, %vm262
      %264 = vst.msk [vmem:[#allocation2] ss:$8 sm:$0x7] %vm263, %v258
      %265 = vst.msk [vmem:[#allocation2] ss:$8 sm:$0x0] %vm263, %v258
      %v266 = vld [vmem:[%s0] sm:$0x7]
      %v267 = vld [vmem:[#allocation2] ss:$8 sm:$0x7]
      %v268 = vld [vmem:[%s2] sm:$0xff]
      %270 = vset.pattern.permute.xlu0 0
      %271 = vperm.xlu0 %270, %v268
      %v272 = vpop.permute.xlu0 %271
      %v275 = vperm.slane %v267, 0
      %v276 = vperm.slane %v267, 1
      %v277 = vperm.slane %v267, 2
      %v281 = vmul.f32 %v272, %v275
      %v282 = vmul.f32 %v272, %v276
      %v283 = vmul.f32 %v272, %v277
      %s284 = scalar_lea.vmem %s2, 8
      %v285 = vld [vmem:[%s284] sm:$0xff]
      %287 = vset.pattern.permute.xlu0 0
      %288 = vperm.xlu0 %287, %v285
      %v289 = vpop.permute.xlu0 %288
      %v291 = vmul.f32 %v289, %v275
      %v292 = vmul.f32 %v289, %v276
      %v293 = vmul.f32 %v289, %v277
      %297 = vrot.lane.b32.xlu0 %v291, 127
      %v298 = vpop.permute.xlu0 %297
      %299 = vrot.lane.b32.xlu0 %v292, 127
      %v300 = vpop.permute.xlu0 %299
      %301 = vrot.lane.b32.xlu0 %v293, 127
      %v302 = vpop.permute.xlu0 %301
      %vm303 = vcmask 1039360
      %v304 = vsel %vm303, %v298, %v300
      %v305 = vsel %vm303, %v300, %v302
      %v309 = vadd.f32 %v281, %v304
      %v310 = vadd.f32 %v282, %v305
      %v311 = vadd.f32 %v283, %v302
      %s312 = scalar_lea.vmem %s2, 16
      %v313 = vld [vmem:[%s312] sm:$0xff]
      %315 = vset.pattern.permute.xlu0 0
      %316 = vperm.xlu0 %315, %v313
      %v317 = vpop.permute.xlu0 %316
      %v319 = vmul.f32 %v317, %v275
      %v320 = vmul.f32 %v317, %v276
      %v321 = vmul.f32 %v317, %v277
      %325 = vrot.lane.b32.xlu0 %v319, 126
      %v326 = vpop.permute.xlu0 %325
      %327 = vrot.lane.b32.xlu0 %v320, 126
      %v328 = vpop.permute.xlu0 %327
      %329 = vrot.lane.b32.xlu0 %v321, 126
      %v330 = vpop.permute.xlu0 %329
      %vm331 = vcmask 1031168
      %v332 = vsel %vm331, %v326, %v328
      %v333 = vsel %vm331, %v328, %v330
      %v337 = vadd.f32 %v309, %v332
      %v338 = vadd.f32 %v310, %v333
      %v339 = vadd.f32 %v311, %v330
      %s340 = scalar_lea.vmem %s2, 24
      %v341 = vld [vmem:[%s340] sm:$0xff]
      %343 = vset.pattern.permute.xlu0 0
      %344 = vperm.xlu0 %343, %v341
      %v345 = vpop.permute.xlu0 %344
      %v347 = vmul.f32 %v345, %v275
      %v348 = vmul.f32 %v345, %v276
      %v349 = vmul.f32 %v345, %v277
      %353 = vrot.lane.b32.xlu0 %v347, 110
      %v354 = vpop.permute.xlu0 %353
      %355 = vrot.lane.b32.xlu0 %v348, 110
      %v356 = vpop.permute.xlu0 %355
      %357 = vrot.lane.b32.xlu0 %v349, 110
      %v358 = vpop.permute.xlu0 %357
      %vm359 = vcmask 900096
      %v360 = vsel %vm359, %v354, %v356
      %v361 = vsel %vm359, %v356, %v358
      %v365 = vadd.f32 %v337, %v360
      %v366 = vadd.f32 %v338, %v361
      %v367 = vadd.f32 %v339, %v358
      %s368 = scalar_lea.vmem %s2, 32
      %v369 = vld [vmem:[%s368] sm:$0xff]
      %371 = vset.pattern.permute.xlu0 0
      %372 = vperm.xlu0 %371, %v369
      %v373 = vpop.permute.xlu0 %372
      %v375 = vmul.f32 %v373, %v275
      %v376 = vmul.f32 %v373, %v276
      %v377 = vmul.f32 %v373, %v277
      %381 = vrot.lane.b32.xlu0 %v375, 109
      %v382 = vpop.permute.xlu0 %381
      %383 = vrot.lane.b32.xlu0 %v376, 109
      %v384 = vpop.permute.xlu0 %383
      %385 = vrot.lane.b32.xlu0 %v377, 109
      %v386 = vpop.permute.xlu0 %385
      %vm387 = vcmask 891904
      %v388 = vsel %vm387, %v382, %v384
      %v389 = vsel %vm387, %v384, %v386
      %v393 = vadd.f32 %v365, %v388
      %v394 = vadd.f32 %v366, %v389
      %v395 = vadd.f32 %v367, %v386
      %s396 = scalar_lea.vmem %s2, 40
      %v397 = vld [vmem:[%s396] sm:$0xff]
      %399 = vset.pattern.permute.xlu0 0
      %400 = vperm.xlu0 %399, %v397
      %v401 = vpop.permute.xlu0 %400
      %v403 = vmul.f32 %v401, %v275
      %v404 = vmul.f32 %v401, %v276
      %v405 = vmul.f32 %v401, %v277
      %409 = vrot.lane.b32.xlu0 %v403, 108
      %v410 = vpop.permute.xlu0 %409
      %411 = vrot.lane.b32.xlu0 %v404, 108
      %v412 = vpop.permute.xlu0 %411
      %413 = vrot.lane.b32.xlu0 %v405, 108
      %v414 = vpop.permute.xlu0 %413
      %vm415 = vcmask 883712
      %v416 = vsel %vm415, %v410, %v412
      %v417 = vsel %vm415, %v412, %v414
      %v421 = vadd.f32 %v393, %v416
      %v422 = vadd.f32 %v394, %v417
      %v423 = vadd.f32 %v395, %v414
      %s424 = scalar_lea.vmem %s2, 48
      %v425 = vld [vmem:[%s424] sm:$0xff]
      %427 = vset.pattern.permute.xlu0 0
      %428 = vperm.xlu0 %427, %v425
      %v429 = vpop.permute.xlu0 %428
      %v431 = vmul.f32 %v429, %v275
      %v432 = vmul.f32 %v429, %v276
      %v433 = vmul.f32 %v429, %v277
      %437 = vrot.lane.b32.xlu0 %v431, 92
      %v438 = vpop.permute.xlu0 %437
      %439 = vrot.lane.b32.xlu0 %v432, 92
      %v440 = vpop.permute.xlu0 %439
      %441 = vrot.lane.b32.xlu0 %v433, 92
      %v442 = vpop.permute.xlu0 %441
      %vm443 = vcmask 752640
      %v444 = vsel %vm443, %v438, %v440
      %v445 = vsel %vm443, %v440, %v442
      %v449 = vadd.f32 %v421, %v444
      %v450 = vadd.f32 %v422, %v445
      %v451 = vadd.f32 %v423, %v442
      %s452 = scalar_lea.vmem %s2, 56
      %v453 = vld [vmem:[%s452] sm:$0xff]
      %455 = vset.pattern.permute.xlu0 0
      %456 = vperm.xlu0 %455, %v453
      %v457 = vpop.permute.xlu0 %456
      %v459 = vmul.f32 %v457, %v275
      %v460 = vmul.f32 %v457, %v276
      %v461 = vmul.f32 %v457, %v277
      %465 = vrot.lane.b32.xlu0 %v459, 91
      %v466 = vpop.permute.xlu0 %465
      %467 = vrot.lane.b32.xlu0 %v460, 91
      %v468 = vpop.permute.xlu0 %467
      %469 = vrot.lane.b32.xlu0 %v461, 91
      %v470 = vpop.permute.xlu0 %469
      %vm471 = vcmask 744448
      %v472 = vsel %vm471, %v466, %v468
      %v473 = vsel %vm471, %v468, %v470
      %v477 = vadd.f32 %v449, %v472
      %v478 = vadd.f32 %v450, %v473
      %v479 = vadd.f32 %v451, %v470
      %s480 = scalar_lea.vmem %s2, 64
      %v481 = vld [vmem:[%s480] sm:$0xff]
      %483 = vset.pattern.permute.xlu0 0
      %484 = vperm.xlu0 %483, %v481
      %v485 = vpop.permute.xlu0 %484
      %v487 = vmul.f32 %v485, %v275
      %v488 = vmul.f32 %v485, %v276
      %v489 = vmul.f32 %v485, %v277
      %493 = vrot.lane.b32.xlu0 %v487, 90
      %v494 = vpop.permute.xlu0 %493
      %495 = vrot.lane.b32.xlu0 %v488, 90
      %v496 = vpop.permute.xlu0 %495
      %497 = vrot.lane.b32.xlu0 %v489, 90
      %v498 = vpop.permute.xlu0 %497
      %vm499 = vcmask 736256
      %v500 = vsel %vm499, %v494, %v496
      %v501 = vsel %vm499, %v496, %v498
      %v505 = vadd.f32 %v477, %v500
      %v506 = vadd.f32 %v478, %v501
      %v507 = vadd.f32 %v479, %v498
      %v508 = vld [vmem:[%s3] sm:$0xff]
      %510 = vset.pattern.permute.xlu0 0
      %511 = vperm.xlu0 %510, %v508
      %v512 = vpop.permute.xlu0 %511
      %v514 = vadd.f32 %v505, %v512
      %v515 = vadd.f32 %v506, %v512
      %v516 = vadd.f32 %v507, %v512
      %v517 = vmax.f32 %v514, 0.0
      %v518 = vmax.f32 %v515, 0.0
      %v519 = vmax.f32 %v516, 0.0
      %v521 = vperm.slane %v266, 0
      %v522 = vperm.slane %v266, 1
      %v523 = vperm.slane %v266, 2
      %v527 = vmul.f32 %v517, %v521
      %v528 = vmul.f32 %v518, %v522
      %v529 = vmul.f32 %v519, %v523
      %533 = vrot.lane.b32.xlu0 %v527, 19
      %v534 = vpop.permute.xlu0 %533
      %535 = vrot.lane.b32.xlu0 %v528, 19
      %v536 = vpop.permute.xlu0 %535
      %537 = vrot.lane.b32.xlu0 %v529, 19
      %v538 = vpop.permute.xlu0 %537
      %v539 = vsel %vm249, %v534, %v536
      %v540 = vsel %vm249, %v536, %v538
      %vm544 = vcmask 1047704
      %545 = vst.msk [vmem:[#allocation2] sm:$0xff] %vm544, %v534
      %546 = vst [vmem:[#allocation2 + $0x8] sm:$0xff] %v539
      %vm547 = vcmask 711680
      %548 = vst.msk [vmem:[#allocation2 + $0x10] sm:$0xff] %vm547, %v540
      %v549 = vld [vmem:[#allocation2] sm:$0xff]
      %v550 = vld [vmem:[#allocation2 + $0x8] sm:$0xff]
      %v551 = vld [vmem:[#allocation2 + $0x10] sm:$0xff]
      %v552 = vld [vmem:[%s4] sm:$0xff]
      %s553 = scalar_lea.vmem %s4, 8
      %v554 = vld [vmem:[%s553] sm:$0xff]
      %558 = vrot.lane.b32.xlu0 %v549, 127
      %v559 = vpop.permute.xlu0 %558
      %560 = vrot.lane.b32.xlu0 %v550, 127
      %v561 = vpop.permute.xlu0 %560
      %562 = vrot.lane.b32.xlu0 %v551, 127
      %v563 = vpop.permute.xlu0 %562
      %v564 = vsel %vm303, %v559, %v561
      %v565 = vsel %vm303, %v561, %v563
      %vm569 = vcmask 64512
      %v571 = vsel %vm569, %v554, 0
      %573 = vmatpush.msra.mxu0 0.0
      %574 = vmatpush.msra.mxu0 0.0
      %575 = vmatpush.msra.mxu0 0.0
      %576 = vmatpush.msra.mxu0 0.0
      %577 = vmatpush.msra.mxu0 0.0
      %578 = vmatpush.msra.mxu0 0.0
      %579 = vmatpush.msra.mxu0 0.0
      %580 = vmatpush.msra.mxu0 0.0
      %581 = vmatpush.msra.mxu0 0.0
      %582 = vmatpush.msra.mxu0 0.0
      %583 = vmatpush.msra.mxu0 0.0
      %584 = vmatpush.msra.mxu0 0.0
      %585 = vmatpush.msra.mxu0 0.0
      %586 = vmatpush.msra.mxu0 0.0
      %587 = vmatpush.msra.mxu0 0.0
      %588 = vmatpush.msra.mxu0 %v564
      %589 = vmatmul.f32.gmra.mxu0 %v571
      %v590 = vpop.f32.mrf.mxu0
      %v591 = vadd.f32 0.0, %v590
      %592 = vdwg.mxu0
      %593 = vmatpush.msra.mxu0 0.0
      %594 = vmatpush.msra.mxu0 0.0
      %595 = vmatpush.msra.mxu0 0.0
      %596 = vmatpush.msra.mxu0 0.0
      %597 = vmatpush.msra.mxu0 0.0
      %598 = vmatpush.msra.mxu0 0.0
      %599 = vmatpush.msra.mxu0 0.0
      %600 = vmatpush.msra.mxu0 0.0
      %601 = vmatpush.msra.mxu0 0.0
      %602 = vmatpush.msra.mxu0 0.0
      %603 = vmatpush.msra.mxu0 0.0
      %604 = vmatpush.msra.mxu0 0.0
      %605 = vmatpush.msra.mxu0 0.0
      %606 = vmatpush.msra.mxu0 0.0
      %607 = vmatpush.msra.mxu0 0.0
      %608 = vmatpush.msra.mxu0 %v565
      %609 = vmatmul.f32.gmra.mxu0 %v571
      %v610 = vpop.f32.mrf.mxu0
      %v611 = vadd.f32 0.0, %v610
      %612 = vdwg.mxu0
      %613 = vmatpush.msra.mxu0 0.0
      %614 = vmatpush.msra.mxu0 0.0
      %615 = vmatpush.msra.mxu0 0.0
      %616 = vmatpush.msra.mxu0 0.0
      %617 = vmatpush.msra.mxu0 0.0
      %618 = vmatpush.msra.mxu0 0.0
      %619 = vmatpush.msra.mxu0 0.0
      %620 = vmatpush.msra.mxu0 0.0
      %621 = vmatpush.msra.mxu0 0.0
      %622 = vmatpush.msra.mxu0 0.0
      %623 = vmatpush.msra.mxu0 0.0
      %624 = vmatpush.msra.mxu0 0.0
      %625 = vmatpush.msra.mxu0 0.0
      %626 = vmatpush.msra.mxu0 0.0
      %627 = vmatpush.msra.mxu0 0.0
      %628 = vmatpush.msra.mxu0 %v563
      %629 = vmatmul.f32.gmra.mxu0 %v571
      %v630 = vpop.f32.mrf.mxu0
      %v631 = vadd.f32 0.0, %v630
      %632 = vdwg.mxu0
      %v634 = vsel %vm569, %v552, 0
      %636 = vmatpush.msra.mxu0 0.0
      %637 = vmatpush.msra.mxu0 0.0
      %638 = vmatpush.msra.mxu0 0.0
      %639 = vmatpush.msra.mxu0 0.0
      %640 = vmatpush.msra.mxu0 0.0
      %641 = vmatpush.msra.mxu0 0.0
      %642 = vmatpush.msra.mxu0 0.0
      %643 = vmatpush.msra.mxu0 0.0
      %644 = vmatpush.msra.mxu0 0.0
      %645 = vmatpush.msra.mxu0 0.0
      %646 = vmatpush.msra.mxu0 0.0
      %647 = vmatpush.msra.mxu0 0.0
      %648 = vmatpush.msra.mxu0 0.0
      %649 = vmatpush.msra.mxu0 0.0
      %650 = vmatpush.msra.mxu0 0.0
      %651 = vmatpush.msra.mxu0 %v549
      %652 = vmatmul.f32.gmra.mxu0 %v634
      %v653 = vpop.f32.mrf.mxu0
      %v654 = vadd.f32 %v591, %v653
      %655 = vdwg.mxu0
      %656 = vmatpush.msra.mxu0 0.0
      %657 = vmatpush.msra.mxu0 0.0
      %658 = vmatpush.msra.mxu0 0.0
      %659 = vmatpush.msra.mxu0 0.0
      %660 = vmatpush.msra.mxu0 0.0
      %661 = vmatpush.msra.mxu0 0.0
      %662 = vmatpush.msra.mxu0 0.0
      %663 = vmatpush.msra.mxu0 0.0
      %664 = vmatpush.msra.mxu0 0.0
      %665 = vmatpush.msra.mxu0 0.0
      %666 = vmatpush.msra.mxu0 0.0
      %667 = vmatpush.msra.mxu0 0.0
      %668 = vmatpush.msra.mxu0 0.0
      %669 = vmatpush.msra.mxu0 0.0
      %670 = vmatpush.msra.mxu0 0.0
      %671 = vmatpush.msra.mxu0 %v550
      %672 = vmatmul.f32.gmra.mxu0 %v634
      %v673 = vpop.f32.mrf.mxu0
      %v674 = vadd.f32 %v611, %v673
      %675 = vdwg.mxu0
      %676 = vmatpush.msra.mxu0 0.0
      %677 = vmatpush.msra.mxu0 0.0
      %678 = vmatpush.msra.mxu0 0.0
      %679 = vmatpush.msra.mxu0 0.0
      %680 = vmatpush.msra.mxu0 0.0
      %681 = vmatpush.msra.mxu0 0.0
      %682 = vmatpush.msra.mxu0 0.0
      %683 = vmatpush.msra.mxu0 0.0
      %684 = vmatpush.msra.mxu0 0.0
      %685 = vmatpush.msra.mxu0 0.0
      %686 = vmatpush.msra.mxu0 0.0
      %687 = vmatpush.msra.mxu0 0.0
      %688 = vmatpush.msra.mxu0 0.0
      %689 = vmatpush.msra.mxu0 0.0
      %690 = vmatpush.msra.mxu0 0.0
      %691 = vmatpush.msra.mxu0 %v551
      %692 = vmatmul.f32.gmra.mxu0 %v634
      %v693 = vpop.f32.mrf.mxu0
      %v694 = vadd.f32 %v631, %v693
      %695 = vdwg.mxu0
      %s696 = scalar_lea.vmem %s4, 16
      %v697 = vld [vmem:[%s696] sm:$0xff]
      %698 = vrot.lane.b32.xlu0 %v549, 126
      %v699 = vpop.permute.xlu0 %698
      %700 = vrot.lane.b32.xlu0 %v550, 126
      %v701 = vpop.permute.xlu0 %700
      %702 = vrot.lane.b32.xlu0 %v551, 126
      %v703 = vpop.permute.xlu0 %702
      %v704 = vsel %vm331, %v699, %v701
      %v705 = vsel %vm331, %v701, %v703
      %v710 = vsel %vm569, %v697, 0
      %712 = vmatpush.msra.mxu0 0.0
      %713 = vmatpush.msra.mxu0 0.0
      %714 = vmatpush.msra.mxu0 0.0
      %715 = vmatpush.msra.mxu0 0.0
      %716 = vmatpush.msra.mxu0 0.0
      %717 = vmatpush.msra.mxu0 0.0
      %718 = vmatpush.msra.mxu0 0.0
      %719 = vmatpush.msra.mxu0 0.0
      %720 = vmatpush.msra.mxu0 0.0
      %721 = vmatpush.msra.mxu0 0.0
      %722 = vmatpush.msra.mxu0 0.0
      %723 = vmatpush.msra.mxu0 0.0
      %724 = vmatpush.msra.mxu0 0.0
      %725 = vmatpush.msra.mxu0 0.0
      %726 = vmatpush.msra.mxu0 0.0
      %727 = vmatpush.msra.mxu0 %v704
      %728 = vmatmul.f32.gmra.mxu0 %v710
      %v729 = vpop.f32.mrf.mxu0
      %v730 = vadd.f32 0.0, %v729
      %731 = vdwg.mxu0
      %732 = vmatpush.msra.mxu0 0.0
      %733 = vmatpush.msra.mxu0 0.0
      %734 = vmatpush.msra.mxu0 0.0
      %735 = vmatpush.msra.mxu0 0.0
      %736 = vmatpush.msra.mxu0 0.0
      %737 = vmatpush.msra.mxu0 0.0
      %738 = vmatpush.msra.mxu0 0.0
      %739 = vmatpush.msra.mxu0 0.0
      %740 = vmatpush.msra.mxu0 0.0
      %741 = vmatpush.msra.mxu0 0.0
      %742 = vmatpush.msra.mxu0 0.0
      %743 = vmatpush.msra.mxu0 0.0
      %744 = vmatpush.msra.mxu0 0.0
      %745 = vmatpush.msra.mxu0 0.0
      %746 = vmatpush.msra.mxu0 0.0
      %747 = vmatpush.msra.mxu0 %v705
      %748 = vmatmul.f32.gmra.mxu0 %v710
      %v749 = vpop.f32.mrf.mxu0
      %v750 = vadd.f32 0.0, %v749
      %751 = vdwg.mxu0
      %752 = vmatpush.msra.mxu0 0.0
      %753 = vmatpush.msra.mxu0 0.0
      %754 = vmatpush.msra.mxu0 0.0
      %755 = vmatpush.msra.mxu0 0.0
      %756 = vmatpush.msra.mxu0 0.0
      %757 = vmatpush.msra.mxu0 0.0
      %758 = vmatpush.msra.mxu0 0.0
      %759 = vmatpush.msra.mxu0 0.0
      %760 = vmatpush.msra.mxu0 0.0
      %761 = vmatpush.msra.mxu0 0.0
      %762 = vmatpush.msra.mxu0 0.0
      %763 = vmatpush.msra.mxu0 0.0
      %764 = vmatpush.msra.mxu0 0.0
      %765 = vmatpush.msra.mxu0 0.0
      %766 = vmatpush.msra.mxu0 0.0
      %767 = vmatpush.msra.mxu0 %v703
      %768 = vmatmul.f32.gmra.mxu0 %v710
      %v769 = vpop.f32.mrf.mxu0
      %v770 = vadd.f32 0.0, %v769
      %771 = vdwg.mxu0
      %v772 = vadd.f32 %v654, %v730
      %v773 = vadd.f32 %v674, %v750
      %v774 = vadd.f32 %v694, %v770
      %s775 = scalar_lea.vmem %s4, 24
      %v776 = vld [vmem:[%s775] sm:$0xff]
      %777 = vrot.lane.b32.xlu0 %v549, 110
      %v778 = vpop.permute.xlu0 %777
      %779 = vrot.lane.b32.xlu0 %v550, 110
      %v780 = vpop.permute.xlu0 %779
      %781 = vrot.lane.b32.xlu0 %v551, 110
      %v782 = vpop.permute.xlu0 %781
      %v783 = vsel %vm359, %v778, %v780
      %v784 = vsel %vm359, %v780, %v782
      %v789 = vsel %vm569, %v776, 0
      %791 = vmatpush.msra.mxu0 0.0
      %792 = vmatpush.msra.mxu0 0.0
      %793 = vmatpush.msra.mxu0 0.0
      %794 = vmatpush.msra.mxu0 0.0
      %795 = vmatpush.msra.mxu0 0.0
      %796 = vmatpush.msra.mxu0 0.0
      %797 = vmatpush.msra.mxu0 0.0
      %798 = vmatpush.msra.mxu0 0.0
      %799 = vmatpush.msra.mxu0 0.0
      %800 = vmatpush.msra.mxu0 0.0
      %801 = vmatpush.msra.mxu0 0.0
      %802 = vmatpush.msra.mxu0 0.0
      %803 = vmatpush.msra.mxu0 0.0
      %804 = vmatpush.msra.mxu0 0.0
      %805 = vmatpush.msra.mxu0 0.0
      %806 = vmatpush.msra.mxu0 %v783
      %807 = vmatmul.f32.gmra.mxu0 %v789
      %v808 = vpop.f32.mrf.mxu0
      %v809 = vadd.f32 0.0, %v808
      %810 = vdwg.mxu0
      %811 = vmatpush.msra.mxu0 0.0
      %812 = vmatpush.msra.mxu0 0.0
      %813 = vmatpush.msra.mxu0 0.0
      %814 = vmatpush.msra.mxu0 0.0
      %815 = vmatpush.msra.mxu0 0.0
      %816 = vmatpush.msra.mxu0 0.0
      %817 = vmatpush.msra.mxu0 0.0
      %818 = vmatpush.msra.mxu0 0.0
      %819 = vmatpush.msra.mxu0 0.0
      %820 = vmatpush.msra.mxu0 0.0
      %821 = vmatpush.msra.mxu0 0.0
      %822 = vmatpush.msra.mxu0 0.0
      %823 = vmatpush.msra.mxu0 0.0
      %824 = vmatpush.msra.mxu0 0.0
      %825 = vmatpush.msra.mxu0 0.0
      %826 = vmatpush.msra.mxu0 %v784
      %827 = vmatmul.f32.gmra.mxu0 %v789
      %v828 = vpop.f32.mrf.mxu0
      %v829 = vadd.f32 0.0, %v828
      %830 = vdwg.mxu0
      %831 = vmatpush.msra.mxu0 0.0
      %832 = vmatpush.msra.mxu0 0.0
      %833 = vmatpush.msra.mxu0 0.0
      %834 = vmatpush.msra.mxu0 0.0
      %835 = vmatpush.msra.mxu0 0.0
      %836 = vmatpush.msra.mxu0 0.0
      %837 = vmatpush.msra.mxu0 0.0
      %838 = vmatpush.msra.mxu0 0.0
      %839 = vmatpush.msra.mxu0 0.0
      %840 = vmatpush.msra.mxu0 0.0
      %841 = vmatpush.msra.mxu0 0.0
      %842 = vmatpush.msra.mxu0 0.0
      %843 = vmatpush.msra.mxu0 0.0
      %844 = vmatpush.msra.mxu0 0.0
      %845 = vmatpush.msra.mxu0 0.0
      %846 = vmatpush.msra.mxu0 %v782
      %847 = vmatmul.f32.gmra.mxu0 %v789
      %v848 = vpop.f32.mrf.mxu0
      %v849 = vadd.f32 0.0, %v848
      %850 = vdwg.mxu0
      %v851 = vadd.f32 %v772, %v809
      %v852 = vadd.f32 %v773, %v829
      %v853 = vadd.f32 %v774, %v849
      %s854 = scalar_lea.vmem %s4, 32
      %v855 = vld [vmem:[%s854] sm:$0xff]
      %856 = vrot.lane.b32.xlu0 %v549, 109
      %v857 = vpop.permute.xlu0 %856
      %858 = vrot.lane.b32.xlu0 %v550, 109
      %v859 = vpop.permute.xlu0 %858
      %860 = vrot.lane.b32.xlu0 %v551, 109
      %v861 = vpop.permute.xlu0 %860
      %v862 = vsel %vm387, %v857, %v859
      %v863 = vsel %vm387, %v859, %v861
      %v868 = vsel %vm569, %v855, 0
      %870 = vmatpush.msra.mxu0 0.0
      %871 = vmatpush.msra.mxu0 0.0
      %872 = vmatpush.msra.mxu0 0.0
      %873 = vmatpush.msra.mxu0 0.0
      %874 = vmatpush.msra.mxu0 0.0
      %875 = vmatpush.msra.mxu0 0.0
      %876 = vmatpush.msra.mxu0 0.0
      %877 = vmatpush.msra.mxu0 0.0
      %878 = vmatpush.msra.mxu0 0.0
      %879 = vmatpush.msra.mxu0 0.0
      %880 = vmatpush.msra.mxu0 0.0
      %881 = vmatpush.msra.mxu0 0.0
      %882 = vmatpush.msra.mxu0 0.0
      %883 = vmatpush.msra.mxu0 0.0
      %884 = vmatpush.msra.mxu0 0.0
      %885 = vmatpush.msra.mxu0 %v862
      %886 = vmatmul.f32.gmra.mxu0 %v868
      %v887 = vpop.f32.mrf.mxu0
      %v888 = vadd.f32 0.0, %v887
      %889 = vdwg.mxu0
      %890 = vmatpush.msra.mxu0 0.0
      %891 = vmatpush.msra.mxu0 0.0
      %892 = vmatpush.msra.mxu0 0.0
      %893 = vmatpush.msra.mxu0 0.0
      %894 = vmatpush.msra.mxu0 0.0
      %895 = vmatpush.msra.mxu0 0.0
      %896 = vmatpush.msra.mxu0 0.0
      %897 = vmatpush.msra.mxu0 0.0
      %898 = vmatpush.msra.mxu0 0.0
      %899 = vmatpush.msra.mxu0 0.0
      %900 = vmatpush.msra.mxu0 0.0
      %901 = vmatpush.msra.mxu0 0.0
      %902 = vmatpush.msra.mxu0 0.0
      %903 = vmatpush.msra.mxu0 0.0
      %904 = vmatpush.msra.mxu0 0.0
      %905 = vmatpush.msra.mxu0 %v863
      %906 = vmatmul.f32.gmra.mxu0 %v868
      %v907 = vpop.f32.mrf.mxu0
      %v908 = vadd.f32 0.0, %v907
      %909 = vdwg.mxu0
      %910 = vmatpush.msra.mxu0 0.0
      %911 = vmatpush.msra.mxu0 0.0
      %912 = vmatpush.msra.mxu0 0.0
      %913 = vmatpush.msra.mxu0 0.0
      %914 = vmatpush.msra.mxu0 0.0
      %915 = vmatpush.msra.mxu0 0.0
      %916 = vmatpush.msra.mxu0 0.0
      %917 = vmatpush.msra.mxu0 0.0
      %918 = vmatpush.msra.mxu0 0.0
      %919 = vmatpush.msra.mxu0 0.0
      %920 = vmatpush.msra.mxu0 0.0
      %921 = vmatpush.msra.mxu0 0.0
      %922 = vmatpush.msra.mxu0 0.0
      %923 = vmatpush.msra.mxu0 0.0
      %924 = vmatpush.msra.mxu0 0.0
      %925 = vmatpush.msra.mxu0 %v861
      %926 = vmatmul.f32.gmra.mxu0 %v868
      %v927 = vpop.f32.mrf.mxu0
      %v928 = vadd.f32 0.0, %v927
      %929 = vdwg.mxu0
      %v930 = vadd.f32 %v851, %v888
      %v931 = vadd.f32 %v852, %v908
      %v932 = vadd.f32 %v853, %v928
      %s933 = scalar_lea.vmem %s4, 40
      %v934 = vld [vmem:[%s933] sm:$0xff]
      %935 = vrot.lane.b32.xlu0 %v549, 108
      %v936 = vpop.permute.xlu0 %935
      %937 = vrot.lane.b32.xlu0 %v550, 108
      %v938 = vpop.permute.xlu0 %937
      %939 = vrot.lane.b32.xlu0 %v551, 108
      %v940 = vpop.permute.xlu0 %939
      %v941 = vsel %vm415, %v936, %v938
      %v942 = vsel %vm415, %v938, %v940
      %v947 = vsel %vm569, %v934, 0
      %949 = vmatpush.msra.mxu0 0.0
      %950 = vmatpush.msra.mxu0 0.0
      %951 = vmatpush.msra.mxu0 0.0
      %952 = vmatpush.msra.mxu0 0.0
      %953 = vmatpush.msra.mxu0 0.0
      %954 = vmatpush.msra.mxu0 0.0
      %955 = vmatpush.msra.mxu0 0.0
      %956 = vmatpush.msra.mxu0 0.0
      %957 = vmatpush.msra.mxu0 0.0
      %958 = vmatpush.msra.mxu0 0.0
      %959 = vmatpush.msra.mxu0 0.0
      %960 = vmatpush.msra.mxu0 0.0
      %961 = vmatpush.msra.mxu0 0.0
      %962 = vmatpush.msra.mxu0 0.0
      %963 = vmatpush.msra.mxu0 0.0
      %964 = vmatpush.msra.mxu0 %v941
      %965 = vmatmul.f32.gmra.mxu0 %v947
      %v966 = vpop.f32.mrf.mxu0
      %v967 = vadd.f32 0.0, %v966
      %968 = vdwg.mxu0
      %969 = vmatpush.msra.mxu0 0.0
      %970 = vmatpush.msra.mxu0 0.0
      %971 = vmatpush.msra.mxu0 0.0
      %972 = vmatpush.msra.mxu0 0.0
      %973 = vmatpush.msra.mxu0 0.0
      %974 = vmatpush.msra.mxu0 0.0
      %975 = vmatpush.msra.mxu0 0.0
      %976 = vmatpush.msra.mxu0 0.0
      %977 = vmatpush.msra.mxu0 0.0
      %978 = vmatpush.msra.mxu0 0.0
      %979 = vmatpush.msra.mxu0 0.0
      %980 = vmatpush.msra.mxu0 0.0
      %981 = vmatpush.msra.mxu0 0.0
      %982 = vmatpush.msra.mxu0 0.0
      %983 = vmatpush.msra.mxu0 0.0
      %984 = vmatpush.msra.mxu0 %v942
      %985 = vmatmul.f32.gmra.mxu0 %v947
      %v986 = vpop.f32.mrf.mxu0
      %v987 = vadd.f32 0.0, %v986
      %988 = vdwg.mxu0
      %989 = vmatpush.msra.mxu0 0.0
      %990 = vmatpush.msra.mxu0 0.0
      %991 = vmatpush.msra.mxu0 0.0
      %992 = vmatpush.msra.mxu0 0.0
      %993 = vmatpush.msra.mxu0 0.0
      %994 = vmatpush.msra.mxu0 0.0
      %995 = vmatpush.msra.mxu0 0.0
      %996 = vmatpush.msra.mxu0 0.0
      %997 = vmatpush.msra.mxu0 0.0
      %998 = vmatpush.msra.mxu0 0.0
      %999 = vmatpush.msra.mxu0 0.0
      %1000 = vmatpush.msra.mxu0 0.0
      %1001 = vmatpush.msra.mxu0 0.0
      %1002 = vmatpush.msra.mxu0 0.0
      %1003 = vmatpush.msra.mxu0 0.0
      %1004 = vmatpush.msra.mxu0 %v940
      %1005 = vmatmul.f32.gmra.mxu0 %v947
      %v1006 = vpop.f32.mrf.mxu0
      %v1007 = vadd.f32 0.0, %v1006
      %1008 = vdwg.mxu0
      %v1009 = vadd.f32 %v930, %v967
      %v1010 = vadd.f32 %v931, %v987
      %v1011 = vadd.f32 %v932, %v1007
      %s1012 = scalar_lea.vmem %s4, 48
      %v1013 = vld [vmem:[%s1012] sm:$0xff]
      %1014 = vrot.lane.b32.xlu0 %v549, 92
      %v1015 = vpop.permute.xlu0 %1014
      %1016 = vrot.lane.b32.xlu0 %v550, 92
      %v1017 = vpop.permute.xlu0 %1016
      %1018 = vrot.lane.b32.xlu0 %v551, 92
      %v1019 = vpop.permute.xlu0 %1018
      %v1020 = vsel %vm443, %v1015, %v1017
      %v1021 = vsel %vm443, %v1017, %v1019
      %v1026 = vsel %vm569, %v1013, 0
      %1028 = vmatpush.msra.mxu0 0.0
      %1029 = vmatpush.msra.mxu0 0.0
      %1030 = vmatpush.msra.mxu0 0.0
      %1031 = vmatpush.msra.mxu0 0.0
      %1032 = vmatpush.msra.mxu0 0.0
      %1033 = vmatpush.msra.mxu0 0.0
      %1034 = vmatpush.msra.mxu0 0.0
      %1035 = vmatpush.msra.mxu0 0.0
      %1036 = vmatpush.msra.mxu0 0.0
      %1037 = vmatpush.msra.mxu0 0.0
      %1038 = vmatpush.msra.mxu0 0.0
      %1039 = vmatpush.msra.mxu0 0.0
      %1040 = vmatpush.msra.mxu0 0.0
      %1041 = vmatpush.msra.mxu0 0.0
      %1042 = vmatpush.msra.mxu0 0.0
      %1043 = vmatpush.msra.mxu0 %v1020
      %1044 = vmatmul.f32.gmra.mxu0 %v1026
      %v1045 = vpop.f32.mrf.mxu0
      %v1046 = vadd.f32 0.0, %v1045
      %1047 = vdwg.mxu0
      %1048 = vmatpush.msra.mxu0 0.0
      %1049 = vmatpush.msra.mxu0 0.0
      %1050 = vmatpush.msra.mxu0 0.0
      %1051 = vmatpush.msra.mxu0 0.0
      %1052 = vmatpush.msra.mxu0 0.0
      %1053 = vmatpush.msra.mxu0 0.0
      %1054 = vmatpush.msra.mxu0 0.0
      %1055 = vmatpush.msra.mxu0 0.0
      %1056 = vmatpush.msra.mxu0 0.0
      %1057 = vmatpush.msra.mxu0 0.0
      %1058 = vmatpush.msra.mxu0 0.0
      %1059 = vmatpush.msra.mxu0 0.0
      %1060 = vmatpush.msra.mxu0 0.0
      %1061 = vmatpush.msra.mxu0 0.0
      %1062 = vmatpush.msra.mxu0 0.0
      %1063 = vmatpush.msra.mxu0 %v1021
      %1064 = vmatmul.f32.gmra.mxu0 %v1026
      %v1065 = vpop.f32.mrf.mxu0
      %v1066 = vadd.f32 0.0, %v1065
      %1067 = vdwg.mxu0
      %1068 = vmatpush.msra.mxu0 0.0
      %1069 = vmatpush.msra.mxu0 0.0
      %1070 = vmatpush.msra.mxu0 0.0
      %1071 = vmatpush.msra.mxu0 0.0
      %1072 = vmatpush.msra.mxu0 0.0
      %1073 = vmatpush.msra.mxu0 0.0
      %1074 = vmatpush.msra.mxu0 0.0
      %1075 = vmatpush.msra.mxu0 0.0
      %1076 = vmatpush.msra.mxu0 0.0
      %1077 = vmatpush.msra.mxu0 0.0
      %1078 = vmatpush.msra.mxu0 0.0
      %1079 = vmatpush.msra.mxu0 0.0
      %1080 = vmatpush.msra.mxu0 0.0
      %1081 = vmatpush.msra.mxu0 0.0
      %1082 = vmatpush.msra.mxu0 0.0
      %1083 = vmatpush.msra.mxu0 %v1019
      %1084 = vmatmul.f32.gmra.mxu0 %v1026
      %v1085 = vpop.f32.mrf.mxu0
      %v1086 = vadd.f32 0.0, %v1085
      %1087 = vdwg.mxu0
      %v1088 = vadd.f32 %v1009, %v1046
      %v1089 = vadd.f32 %v1010, %v1066
      %v1090 = vadd.f32 %v1011, %v1086
      %s1091 = scalar_lea.vmem %s4, 56
      %v1092 = vld [vmem:[%s1091] sm:$0xff]
      %1093 = vrot.lane.b32.xlu0 %v549, 91
      %v1094 = vpop.permute.xlu0 %1093
      %1095 = vrot.lane.b32.xlu0 %v550, 91
      %v1096 = vpop.permute.xlu0 %1095
      %1097 = vrot.lane.b32.xlu0 %v551, 91
      %v1098 = vpop.permute.xlu0 %1097
      %v1099 = vsel %vm471, %v1094, %v1096
      %v1100 = vsel %vm471, %v1096, %v1098
      %v1105 = vsel %vm569, %v1092, 0
      %1107 = vmatpush.msra.mxu0 0.0
      %1108 = vmatpush.msra.mxu0 0.0
      %1109 = vmatpush.msra.mxu0 0.0
      %1110 = vmatpush.msra.mxu0 0.0
      %1111 = vmatpush.msra.mxu0 0.0
      %1112 = vmatpush.msra.mxu0 0.0
      %1113 = vmatpush.msra.mxu0 0.0
      %1114 = vmatpush.msra.mxu0 0.0
      %1115 = vmatpush.msra.mxu0 0.0
      %1116 = vmatpush.msra.mxu0 0.0
      %1117 = vmatpush.msra.mxu0 0.0
      %1118 = vmatpush.msra.mxu0 0.0
      %1119 = vmatpush.msra.mxu0 0.0
      %1120 = vmatpush.msra.mxu0 0.0
      %1121 = vmatpush.msra.mxu0 0.0
      %1122 = vmatpush.msra.mxu0 %v1099
      %1123 = vmatmul.f32.gmra.mxu0 %v1105
      %v1124 = vpop.f32.mrf.mxu0
      %v1125 = vadd.f32 0.0, %v1124
      %1126 = vdwg.mxu0
      %1127 = vmatpush.msra.mxu0 0.0
      %1128 = vmatpush.msra.mxu0 0.0
      %1129 = vmatpush.msra.mxu0 0.0
      %1130 = vmatpush.msra.mxu0 0.0
      %1131 = vmatpush.msra.mxu0 0.0
      %1132 = vmatpush.msra.mxu0 0.0
      %1133 = vmatpush.msra.mxu0 0.0
      %1134 = vmatpush.msra.mxu0 0.0
      %1135 = vmatpush.msra.mxu0 0.0
      %1136 = vmatpush.msra.mxu0 0.0
      %1137 = vmatpush.msra.mxu0 0.0
      %1138 = vmatpush.msra.mxu0 0.0
      %1139 = vmatpush.msra.mxu0 0.0
      %1140 = vmatpush.msra.mxu0 0.0
      %1141 = vmatpush.msra.mxu0 0.0
      %1142 = vmatpush.msra.mxu0 %v1100
      %1143 = vmatmul.f32.gmra.mxu0 %v1105
      %v1144 = vpop.f32.mrf.mxu0
      %v1145 = vadd.f32 0.0, %v1144
      %1146 = vdwg.mxu0
      %1147 = vmatpush.msra.mxu0 0.0
      %1148 = vmatpush.msra.mxu0 0.0
      %1149 = vmatpush.msra.mxu0 0.0
      %1150 = vmatpush.msra.mxu0 0.0
      %1151 = vmatpush.msra.mxu0 0.0
      %1152 = vmatpush.msra.mxu0 0.0
      %1153 = vmatpush.msra.mxu0 0.0
      %1154 = vmatpush.msra.mxu0 0.0
      %1155 = vmatpush.msra.mxu0 0.0
      %1156 = vmatpush.msra.mxu0 0.0
      %1157 = vmatpush.msra.mxu0 0.0
      %1158 = vmatpush.msra.mxu0 0.0
      %1159 = vmatpush.msra.mxu0 0.0
      %1160 = vmatpush.msra.mxu0 0.0
      %1161 = vmatpush.msra.mxu0 0.0
      %1162 = vmatpush.msra.mxu0 %v1098
      %1163 = vmatmul.f32.gmra.mxu0 %v1105
      %v1164 = vpop.f32.mrf.mxu0
      %v1165 = vadd.f32 0.0, %v1164
      %1166 = vdwg.mxu0
      %v1167 = vadd.f32 %v1088, %v1125
      %v1168 = vadd.f32 %v1089, %v1145
      %v1169 = vadd.f32 %v1090, %v1165
      %s1170 = scalar_lea.vmem %s4, 64
      %v1171 = vld [vmem:[%s1170] sm:$0xff]
      %1172 = vrot.lane.b32.xlu0 %v549, 90
      %v1173 = vpop.permute.xlu0 %1172
      %1174 = vrot.lane.b32.xlu0 %v550, 90
      %v1175 = vpop.permute.xlu0 %1174
      %1176 = vrot.lane.b32.xlu0 %v551, 90
      %v1177 = vpop.permute.xlu0 %1176
      %v1178 = vsel %vm499, %v1173, %v1175
      %v1179 = vsel %vm499, %v1175, %v1177
      %v1184 = vsel %vm569, %v1171, 0
      %1186 = vmatpush.msra.mxu0 0.0
      %1187 = vmatpush.msra.mxu0 0.0
      %1188 = vmatpush.msra.mxu0 0.0
      %1189 = vmatpush.msra.mxu0 0.0
      %1190 = vmatpush.msra.mxu0 0.0
      %1191 = vmatpush.msra.mxu0 0.0
      %1192 = vmatpush.msra.mxu0 0.0
      %1193 = vmatpush.msra.mxu0 0.0
      %1194 = vmatpush.msra.mxu0 0.0
      %1195 = vmatpush.msra.mxu0 0.0
      %1196 = vmatpush.msra.mxu0 0.0
      %1197 = vmatpush.msra.mxu0 0.0
      %1198 = vmatpush.msra.mxu0 0.0
      %1199 = vmatpush.msra.mxu0 0.0
      %1200 = vmatpush.msra.mxu0 0.0
      %1201 = vmatpush.msra.mxu0 %v1178
      %1202 = vmatmul.f32.gmra.mxu0 %v1184
      %v1203 = vpop.f32.mrf.mxu0
      %v1204 = vadd.f32 0.0, %v1203
      %1205 = vdwg.mxu0
      %1206 = vmatpush.msra.mxu0 0.0
      %1207 = vmatpush.msra.mxu0 0.0
      %1208 = vmatpush.msra.mxu0 0.0
      %1209 = vmatpush.msra.mxu0 0.0
      %1210 = vmatpush.msra.mxu0 0.0
      %1211 = vmatpush.msra.mxu0 0.0
      %1212 = vmatpush.msra.mxu0 0.0
      %1213 = vmatpush.msra.mxu0 0.0
      %1214 = vmatpush.msra.mxu0 0.0
      %1215 = vmatpush.msra.mxu0 0.0
      %1216 = vmatpush.msra.mxu0 0.0
      %1217 = vmatpush.msra.mxu0 0.0
      %1218 = vmatpush.msra.mxu0 0.0
      %1219 = vmatpush.msra.mxu0 0.0
      %1220 = vmatpush.msra.mxu0 0.0
      %1221 = vmatpush.msra.mxu0 %v1179
      %1222 = vmatmul.f32.gmra.mxu0 %v1184
      %v1223 = vpop.f32.mrf.mxu0
      %v1224 = vadd.f32 0.0, %v1223
      %1225 = vdwg.mxu0
      %1226 = vmatpush.msra.mxu0 0.0
      %1227 = vmatpush.msra.mxu0 0.0
      %1228 = vmatpush.msra.mxu0 0.0
      %1229 = vmatpush.msra.mxu0 0.0
      %1230 = vmatpush.msra.mxu0 0.0
      %1231 = vmatpush.msra.mxu0 0.0
      %1232 = vmatpush.msra.mxu0 0.0
      %1233 = vmatpush.msra.mxu0 0.0
      %1234 = vmatpush.msra.mxu0 0.0
      %1235 = vmatpush.msra.mxu0 0.0
      %1236 = vmatpush.msra.mxu0 0.0
      %1237 = vmatpush.msra.mxu0 0.0
      %1238 = vmatpush.msra.mxu0 0.0
      %1239 = vmatpush.msra.mxu0 0.0
      %1240 = vmatpush.msra.mxu0 0.0
      %1241 = vmatpush.msra.mxu0 %v1177
      %1242 = vmatmul.f32.gmra.mxu0 %v1184
      %v1243 = vpop.f32.mrf.mxu0
      %v1244 = vadd.f32 0.0, %v1243
      %1245 = vdwg.mxu0
      %v1246 = vadd.f32 %v1167, %v1204
      %v1247 = vadd.f32 %v1168, %v1224
      %v1248 = vadd.f32 %v1169, %v1244
      %v1249 = vld [vmem:[%s5] sm:$0xff]
      %1251 = vset.pattern.permute.xlu0 0
      %1252 = vperm.xlu0 %1251, %v1249
      %v1253 = vpop.permute.xlu0 %1252
      %v1255 = vadd.f32 %v1246, %v1253
      %v1256 = vadd.f32 %v1247, %v1253
      %v1257 = vadd.f32 %v1248, %v1253
      %v1258 = vmax.f32 %v1255, 0.0
      %v1259 = vmax.f32 %v1256, 0.0
      %v1260 = vmax.f32 %v1257, 0.0
      %v1261 = vmul.f32 %v1258, %v521
      %v1262 = vmul.f32 %v1259, %v522
      %v1263 = vmul.f32 %v1260, %v523
      %1264 = vst [vmem:[%s248] sm:$0xff] %v1261
      %1265 = vst [vmem:[%s248 + $0x8] sm:$0xff] %v1262
      %vm1266 = vcmask 556032
      %1267 = vst.msk [vmem:[%s248 + $0x10] sm:$0xff] %vm1266, %v1263
      %p1268 = scmp.lt.s32.totalorder %s17, 1
      %s1269 = scalar_select %p1268, %s17, 1
      %s1270 = smul.addr %s1269, 3
      %s1271 = smul.addr %s1270, 8
      %s1272 = scalar_lea.vmem %s6, %s1271
      // Predicated region
      $region45: #{comb_net_forward.10} parent=43 // pred_check
        %p1273 = pneg %p166
      $region46: #{comb_net_forward.10} parent=43 // pred_check_branch
        %1275 = sbr.rel (%p1273) target = $region48
      $region47: #{comb_net_forward.10} parent=43 // pred_region
        _
      $region48: #{comb_net_forward.10} parent=43 // pred_fallthru
        _
    $region44: #{comb_net_forward.10} parent=5 // pred_fallthru
      _
    %p1276 = scmp.le.s32.totalorder 2, %s12
    // Predicated region
    $region49: #{comb_net_forward.10} parent=5 // pred_check
      %p1277 = pneg %p1276
    $region50: #{comb_net_forward.10} parent=5 // pred_check_branch
      %1279 = sbr.rel (%p1277) target = $region52
    $region51: #{comb_net_forward.10} parent=5 // pred_region
      %s1280 = ssub.s32 %s12, 2
      // Predicated region
      $region53: #{comb_net_forward.10} parent=51 // pred_check
        %p1281 = pneg %p172
      $region54: #{comb_net_forward.10} parent=51 // pred_check_branch
        %1283 = sbr.rel (%p1281) target = $region56
      $region55: #{comb_net_forward.10} parent=51 // pred_region
        %p1284 = scmp.lt.s32.totalorder %s18, 1
        %s1285 = scalar_select %p1284, %s18, 1
        %s1286 = smul.addr %s1285, 3
        %s1287 = smul.addr %s1286, 8
        %s1288 = scalar_lea.vmem %s6, %s1287
      $region56: #{comb_net_forward.10} parent=51 // pred_fallthru
        _
    $region52: #{comb_net_forward.10} parent=5 // pred_fallthru
      _
  $region6: #{comb_net_forward.10} parent=0 // loop_footer
    %s16 = sadd.s32 1, %s12
  $region7: #{comb_net_forward.10} parent=0 // loop_footer_branch
    %11 = sbr.rel target = $region3
  $region8: #{comb_net_forward.10} parent=0 // loop_exit
    _

// kernel: comb_net_forward.11
$region0: #{comb_net_forward.11}
  #allocation0 [shape = 'u32[]', space=smem, size = 0x4, offset = 0x4, fixed_abs, tag = 'smem constant byte address 0x4 - core index']
  #allocation1 [shape = 'u32[72,128]{1,0:T(1,128)}', space=vmem, size = 0x9000, scoped, tag = 'internal scratch']
  #allocation2 [shape = 'f32[16,122]{1,0:T(8,128)}', space=vmem, size = 0x2000, scoped, tag = 'scratch operand']
  %s0 = inlined_call_operand.vmem [shape: f32[1,100], index: 0, kind: input, shape index: {}]
  %s1 = inlined_call_operand.vmem [shape: f32[2,8,100], index: 1, kind: input, shape index: {}]
  %s2 = inlined_call_operand.vmem [shape: f32[9,16,8], index: 2, kind: input, shape index: {}]
  %s3 = inlined_call_operand.vmem [shape: f32[16,1], index: 3, kind: input, shape index: {}]
  %s4 = inlined_call_operand.vmem [shape: f32[9,16,16], index: 4, kind: input, shape index: {}]
  %s5 = inlined_call_operand.vmem [shape: f32[16,1], index: 5, kind: input, shape index: {}]
  %s6 = inlined_call_operand.vmem [shape: f32[2,16,100], index: 6, kind: output, shape index: {}]
  %s7 = sld [smem:[#allocation0]]
  $region57: #{comb_net_forward.11} parent=0
    _
  %s9 = ssub.s32 1, %s7
  %s10 = scalar_select 0, %s9, %s7
  loop: start=0, step=1, limit=4
  $region2: #{comb_net_forward.11} parent=0 // loop_pre_header
    _
  $region3: #{comb_net_forward.11} parent=0 // loop_header
    %s12 = sphi 0, %s16
    %p13 = scmp.ge.s32.totalorder %s12, 4
    %s20 = sphi 0, %s20
    %s22 = sphi 0, %s20
    %s23 = sphi 0, %s22
    %s37 = sphi 0, %s23
    %s43 = sphi 0, %s45
    %s46 = sphi 0, %s43
    %s47 = sphi 0, %s46
    %s63 = sphi 0, %s47
    %s67 = sphi 0, %s67
    %s69 = sphi 0, %s67
    %s70 = sphi 0, %s69
    %s84 = sphi 0, %s70
    %s88 = sphi 0, %s88
    %s90 = sphi 0, %s88
    %s91 = sphi 0, %s90
    %s105 = sphi 0, %s91
    %s109 = sphi 0, %s109
    %s111 = sphi 0, %s109
    %s112 = sphi 0, %s111
    %s126 = sphi 0, %s112
    %s130 = sphi 0, %s130
    %s132 = sphi 0, %s130
    %s133 = sphi 0, %s132
    %s147 = sphi 0, %s133
    %s153 = sphi 0, %s155
    %s156 = sphi 0, %s153
    %s157 = sphi 0, %s156
    %s173 = sphi 0, %s157
  $region4: #{comb_net_forward.11} parent=0 // loop_header_branch
    %15 = sbr.rel (%p13) target = $region8
  $region5: #{comb_net_forward.11} parent=0 // loop_body
    %s17 = ssub.s32 %s12, 1
    %s18 = ssub.s32 %s12, 2
    %s19 = sadd.s32 %s12, 1
    %s21 = sadd.s32 %s20, 1
    %p24 = scmp.eq.s32.totalorder %s12, 1
    %p25 = scmp.ne.s32.totalorder %s20, %s22
    %p26 = scmp.eq.s32.totalorder %s12, 0
    %p27 = por %p25, %p26
    %p28 = scmp.ne.s32.totalorder %s20, %s22
    %p29 = scmp.eq.s32.totalorder %s17, 1
    %p30 = por %p28, %p29
    %p31 = scmp.ne.s32.totalorder %s22, %s23
    %p32 = scmp.eq.s32.totalorder %s17, 0
    %p33 = por %p31, %p32
    %p34 = scmp.ne.s32.totalorder %s22, %s23
    %p35 = scmp.eq.s32.totalorder %s18, 1
    %p36 = por %p34, %p35
    %p38 = scmp.ne.s32.totalorder %s23, %s37
    %p39 = scmp.eq.s32.totalorder %s18, 0
    %p40 = por %p38, %p39
    %s41 = ssub.s32 %s12, %s19
    %p42 = scmp.eq.s32.totalorder %s41, 0
    %s44 = sadd.s32 %s43, 1
    %s45 = scalar_select %p42, %s43, %s44
    %p48 = pneg %p42
    %p49 = scmp.eq.s32.totalorder %s12, 1
    %p50 = por %p48, %p49
    %p51 = scmp.ne.s32.totalorder %s43, %s46
    %p52 = scmp.eq.s32.totalorder %s12, 0
    %p53 = por %p51, %p52
    %p54 = scmp.ne.s32.totalorder %s43, %s46
    %p55 = scmp.eq.s32.totalorder %s17, 1
    %p56 = por %p54, %p55
    %p57 = scmp.ne.s32.totalorder %s46, %s47
    %p58 = scmp.eq.s32.totalorder %s17, 0
    %p59 = por %p57, %p58
    %p60 = scmp.ne.s32.totalorder %s46, %s47
    %p61 = scmp.eq.s32.totalorder %s18, 1
    %p62 = por %p60, %p61
    %p64 = scmp.ne.s32.totalorder %s47, %s63
    %p65 = scmp.eq.s32.totalorder %s18, 0
    %p66 = por %p64, %p65
    %s68 = sadd.s32 %s67, 1
    %p71 = scmp.eq.s32.totalorder %s12, 1
    %p72 = scmp.ne.s32.totalorder %s67, %s69
    %p73 = scmp.eq.s32.totalorder %s12, 0
    %p74 = por %p72, %p73
    %p75 = scmp.ne.s32.totalorder %s67, %s69
    %p76 = scmp.eq.s32.totalorder %s17, 1
    %p77 = por %p75, %p76
    %p78 = scmp.ne.s32.totalorder %s69, %s70
    %p79 = scmp.eq.s32.totalorder %s17, 0
    %p80 = por %p78, %p79
    %p81 = scmp.ne.s32.totalorder %s69, %s70
    %p82 = scmp.eq.s32.totalorder %s18, 1
    %p83 = por %p81, %p82
    %p85 = scmp.ne.s32.totalorder %s70, %s84
    %p86 = scmp.eq.s32.totalorder %s18, 0
    %p87 = por %p85, %p86
    %s89 = sadd.s32 %s88, 1
    %p92 = scmp.eq.s32.totalorder %s12, 1
    %p93 = scmp.ne.s32.totalorder %s88, %s90
    %p94 = scmp.eq.s32.totalorder %s12, 0
    %p95 = por %p93, %p94
    %p96 = scmp.ne.s32.totalorder %s88, %s90
    %p97 = scmp.eq.s32.totalorder %s17, 1
    %p98 = por %p96, %p97
    %p99 = scmp.ne.s32.totalorder %s90, %s91
    %p100 = scmp.eq.s32.totalorder %s17, 0
    %p101 = por %p99, %p100
    %p102 = scmp.ne.s32.totalorder %s90, %s91
    %p103 = scmp.eq.s32.totalorder %s18, 1
    %p104 = por %p102, %p103
    %p106 = scmp.ne.s32.totalorder %s91, %s105
    %p107 = scmp.eq.s32.totalorder %s18, 0
    %p108 = por %p106, %p107
    %s110 = sadd.s32 %s109, 1
    %p113 = scmp.eq.s32.totalorder %s12, 1
    %p114 = scmp.ne.s32.totalorder %s109, %s111
    %p115 = scmp.eq.s32.totalorder %s12, 0
    %p116 = por %p114, %p115
    %p117 = scmp.ne.s32.totalorder %s109, %s111
    %p118 = scmp.eq.s32.totalorder %s17, 1
    %p119 = por %p117, %p118
    %p120 = scmp.ne.s32.totalorder %s111, %s112
    %p121 = scmp.eq.s32.totalorder %s17, 0
    %p122 = por %p120, %p121
    %p123 = scmp.ne.s32.totalorder %s111, %s112
    %p124 = scmp.eq.s32.totalorder %s18, 1
    %p125 = por %p123, %p124
    %p127 = scmp.ne.s32.totalorder %s112, %s126
    %p128 = scmp.eq.s32.totalorder %s18, 0
    %p129 = por %p127, %p128
    %s131 = sadd.s32 %s130, 1
    %p134 = scmp.eq.s32.totalorder %s12, 1
    %p135 = scmp.ne.s32.totalorder %s130, %s132
    %p136 = scmp.eq.s32.totalorder %s12, 0
    %p137 = por %p135, %p136
    %p138 = scmp.ne.s32.totalorder %s130, %s132
    %p139 = scmp.eq.s32.totalorder %s17, 1
    %p140 = por %p138, %p139
    %p141 = scmp.ne.s32.totalorder %s132, %s133
    %p142 = scmp.eq.s32.totalorder %s17, 0
    %p143 = por %p141, %p142
    %p144 = scmp.ne.s32.totalorder %s132, %s133
    %p145 = scmp.eq.s32.totalorder %s18, 1
    %p146 = por %p144, %p145
    %p148 = scmp.ne.s32.totalorder %s133, %s147
    %p149 = scmp.eq.s32.totalorder %s18, 0
    %p150 = por %p148, %p149
    %s151 = ssub.s32 %s12, %s19
    %p152 = scmp.eq.s32.totalorder %s151, 0
    %s154 = sadd.s32 %s153, 1
    %s155 = scalar_select %p152, %s153, %s154
    %p158 = pneg %p152
    %p159 = scmp.eq.s32.totalorder %s12, 1
    %p160 = por %p158, %p159
    %p161 = scmp.ne.s32.totalorder %s153, %s156
    %p162 = scmp.eq.s32.totalorder %s12, 0
    %p163 = por %p161, %p162
    %p164 = scmp.ne.s32.totalorder %s153, %s156
    %p165 = scmp.eq.s32.totalorder %s17, 1
    %p166 = por %p164, %p165
    %p167 = scmp.ne.s32.totalorder %s156, %s157
    %p168 = scmp.eq.s32.totalorder %s17, 0
    %p169 = por %p167, %p168
    %p170 = scmp.ne.s32.totalorder %s156, %s157
    %p171 = scmp.eq.s32.totalorder %s18, 1
    %p172 = por %p170, %p171
    %p174 = scmp.ne.s32.totalorder %s157, %s173
    %p175 = scmp.eq.s32.totalorder %s18, 0
    %p176 = por %p174, %p175
    %p177 = scmp.le.s32.totalorder 1, %s12
    %p178 = scmp.lt.s32.totalorder %s12, 3
    %p179 = pnand %p177, %p178
    %p180 = pneg %p179
    // Predicated region
    $region9: #{comb_net_forward.11} parent=5 // pred_check
      _
    $region10: #{comb_net_forward.11} parent=5 // pred_check_branch
      %182 = sbr.rel (%p179) target = $region12
    $region11: #{comb_net_forward.11} parent=5 // pred_region
      %s183 = ssub.s32 %s12, 1
      // Predicated region
      $region13: #{comb_net_forward.11} parent=11 // pred_check
        %p184 = pneg %p33
      $region14: #{comb_net_forward.11} parent=11 // pred_check_branch
        %186 = sbr.rel (%p184) target = $region16
      $region15: #{comb_net_forward.11} parent=11 // pred_region
        _
      $region16: #{comb_net_forward.11} parent=11 // pred_fallthru
        _
      // Predicated region
      $region17: #{comb_net_forward.11} parent=11 // pred_check
        %p187 = pneg %p80
      $region18: #{comb_net_forward.11} parent=11 // pred_check_branch
        %189 = sbr.rel (%p187) target = $region20
      $region19: #{comb_net_forward.11} parent=11 // pred_region
        _
      $region20: #{comb_net_forward.11} parent=11 // pred_fallthru
        _
      // Predicated region
      $region21: #{comb_net_forward.11} parent=11 // pred_check
        %p190 = pneg %p101
      $region22: #{comb_net_forward.11} parent=11 // pred_check_branch
        %192 = sbr.rel (%p190) target = $region24
      $region23: #{comb_net_forward.11} parent=11 // pred_region
        _
      $region24: #{comb_net_forward.11} parent=11 // pred_fallthru
        _
      // Predicated region
      $region25: #{comb_net_forward.11} parent=11 // pred_check
        %p193 = pneg %p122
      $region26: #{comb_net_forward.11} parent=11 // pred_check_branch
        %195 = sbr.rel (%p193) target = $region28
      $region27: #{comb_net_forward.11} parent=11 // pred_region
        _
      $region28: #{comb_net_forward.11} parent=11 // pred_fallthru
        _
      // Predicated region
      $region29: #{comb_net_forward.11} parent=11 // pred_check
        %p196 = pneg %p143
      $region30: #{comb_net_forward.11} parent=11 // pred_check_branch
        %198 = sbr.rel (%p196) target = $region32
      $region31: #{comb_net_forward.11} parent=11 // pred_region
        _
      $region32: #{comb_net_forward.11} parent=11 // pred_fallthru
        _
    $region12: #{comb_net_forward.11} parent=5 // pred_fallthru
      _
    %p199 = scmp.lt.s32.totalorder %s12, 2
    // Predicated region
    $region33: #{comb_net_forward.11} parent=5 // pred_check
      %p200 = pneg %p199
    $region34: #{comb_net_forward.11} parent=5 // pred_check_branch
      %202 = sbr.rel (%p200) target = $region36
    $region35: #{comb_net_forward.11} parent=5 // pred_region
      // Predicated region
      $region37: #{comb_net_forward.11} parent=35 // pred_check
        %p203 = pneg %p53
      $region38: #{comb_net_forward.11} parent=35 // pred_check_branch
        %205 = sbr.rel (%p203) target = $region40
      $region39: #{comb_net_forward.11} parent=35 // pred_region
        %p206 = scmp.lt.s32.totalorder %s12, 1
        %s207 = scalar_select %p206, %s12, 1
        %s208 = smul.addr %s207, 8
        %s209 = scalar_lea.vmem %s1, %s208
      $region40: #{comb_net_forward.11} parent=35 // pred_fallthru
        _
    $region36: #{comb_net_forward.11} parent=5 // pred_fallthru
      _
    %p210 = scmp.le.s32.totalorder 1, %s12
    %p211 = scmp.lt.s32.totalorder %s12, 3
    %p212 = pnand %p210, %p211
    %p213 = pneg %p212
    // Predicated region
    $region41: #{comb_net_forward.11} parent=5 // pred_check
      _
    $region42: #{comb_net_forward.11} parent=5 // pred_check_branch
      %215 = sbr.rel (%p212) target = $region44
    $region43: #{comb_net_forward.11} parent=5 // pred_region
      %s216 = ssub.s32 %s12, 1
      %p217 = pneg %p33
      %p218 = pneg %p30
      %p219 = scmp.lt.s32.totalorder %s17, 1
      %s220 = scalar_select %p219, %s17, 1
      %s221 = smul.addr %s220, 8
      %s222 = scalar_lea.vmem %s1, %s221
      %p223 = pneg %p59
      %p224 = pneg %p56
      %p225 = pneg %p80
      %p226 = pneg %p77
      %p227 = pneg %p101
      %p228 = pneg %p98
      %p229 = pneg %p122
      %p230 = pneg %p119
      %p231 = pneg %p143
      %p232 = pneg %p140
      %p233 = pneg %p169
      %p234 = pneg %p166
      %p235 = scmp.lt.s32.totalorder %s17, 1
      %s236 = scalar_select %p235, %s17, 1
      %s237 = smul.addr %s236, 2
      %s238 = smul.addr %s237, 8
      %s239 = scalar_lea.vmem %s6, %s238
      %p240 = scmp.lt.s32.totalorder %s17, 1
      %s241 = scalar_select %p240, %s17, 1
      %s242 = smul.addr %s241, 8
      %s243 = scalar_lea.vmem %s1, %s242
      %p244 = scmp.lt.s32.totalorder %s17, 1
      %s245 = scalar_select %p244, %s17, 1
      %s246 = smul.addr %s245, 2
      %s247 = smul.addr %s246, 8
      %s248 = scalar_lea.vmem %s6, %s247
      %vm249 = vcmask 89088
      %250 = vst.msk [vmem:[#allocation2] sm:$0xff] %vm249, 0.0
      %251 = vst.msk [vmem:[#allocation2 + $0x8] sm:$0xff] %vm249, 0.0
      %vm252 = vcmask 999288
      %253 = vst.msk [vmem:[#allocation2] sm:$0xff] %vm252, 0.0
      %254 = vst.msk [vmem:[#allocation2 + $0x8] sm:$0xff] %vm252, 0.0
      %v255 = vld [vmem:[%s243] sm:$0xff]
      %257 = vrot.lane.b32.xlu0 %v255, 11
      %v258 = vpop.permute.xlu0 %257
      %vm260 = vcmask 908376
      %261 = vst.msk [vmem:[#allocation2] sm:$0xff] %vm260, %v258
      %v262 = vld [vmem:[%s0] sm:$0x1]
      %v263 = vld [vmem:[#allocation2] sm:$0xff]
      %v264 = vld [vmem:[%s2] sm:$0xff]
      %v265 = vld [vmem:[%s2 + $0x8] sm:$0xff]
      %s266 = scalar_lea.vmem %s2, 16
      %v267 = vld [vmem:[%s266] sm:$0xff]
      %v268 = vld [vmem:[%s266 + $0x8] sm:$0xff]
      %270 = vrot.lane.b32.xlu0 %v263, 127
      %v271 = vpop.permute.xlu0 %270
      %vm273 = vcmask 64512
      %v275 = vsel %vm273, %v267, 0
      %v278 = vsel %vm273, %v268, 0
      %280 = vmatpush.msra.mxu0 0.0
      %281 = vmatpush.msra.mxu0 0.0
      %282 = vmatpush.msra.mxu0 0.0
      %283 = vmatpush.msra.mxu0 0.0
      %284 = vmatpush.msra.mxu0 0.0
      %285 = vmatpush.msra.mxu0 0.0
      %286 = vmatpush.msra.mxu0 0.0
      %287 = vmatpush.msra.mxu0 0.0
      %288 = vmatpush.msra.mxu0 0.0
      %289 = vmatpush.msra.mxu0 0.0
      %290 = vmatpush.msra.mxu0 0.0
      %291 = vmatpush.msra.mxu0 0.0
      %292 = vmatpush.msra.mxu0 0.0
      %293 = vmatpush.msra.mxu0 0.0
      %294 = vmatpush.msra.mxu0 0.0
      %295 = vmatpush.msra.mxu0 %v271
      %296 = vmatmul.f32.gmra.mxu0 %v275
      %v297 = vpop.f32.mrf.mxu0
      %v298 = vadd.f32 0.0, %v297
      %299 = vmatmul.f32.gmra.mxu0 %v278
      %v300 = vpop.f32.mrf.mxu0
      %v301 = vadd.f32 0.0, %v300
      %302 = vdwg.mxu0
      %v304 = vsel %vm273, %v264, 0
      %v307 = vsel %vm273, %v265, 0
      %309 = vmatpush.msra.mxu0 0.0
      %310 = vmatpush.msra.mxu0 0.0
      %311 = vmatpush.msra.mxu0 0.0
      %312 = vmatpush.msra.mxu0 0.0
      %313 = vmatpush.msra.mxu0 0.0
      %314 = vmatpush.msra.mxu0 0.0
      %315 = vmatpush.msra.mxu0 0.0
      %316 = vmatpush.msra.mxu0 0.0
      %317 = vmatpush.msra.mxu0 0.0
      %318 = vmatpush.msra.mxu0 0.0
      %319 = vmatpush.msra.mxu0 0.0
      %320 = vmatpush.msra.mxu0 0.0
      %321 = vmatpush.msra.mxu0 0.0
      %322 = vmatpush.msra.mxu0 0.0
      %323 = vmatpush.msra.mxu0 0.0
      %324 = vmatpush.msra.mxu0 %v263
      %325 = vmatmul.f32.gmra.mxu0 %v304
      %v326 = vpop.f32.mrf.mxu0
      %v327 = vadd.f32 %v298, %v326
      %328 = vmatmul.f32.gmra.mxu0 %v307
      %v329 = vpop.f32.mrf.mxu0
      %v330 = vadd.f32 %v301, %v329
      %331 = vdwg.mxu0
      %s332 = scalar_lea.vmem %s2, 32
      %v333 = vld [vmem:[%s332] sm:$0xff]
      %v334 = vld [vmem:[%s332 + $0x8] sm:$0xff]
      %335 = vrot.lane.b32.xlu0 %v263, 126
      %v336 = vpop.permute.xlu0 %335
      %v339 = vsel %vm273, %v333, 0
      %v342 = vsel %vm273, %v334, 0
      %344 = vmatpush.msra.mxu0 0.0
      %345 = vmatpush.msra.mxu0 0.0
      %346 = vmatpush.msra.mxu0 0.0
      %347 = vmatpush.msra.mxu0 0.0
      %348 = vmatpush.msra.mxu0 0.0
      %349 = vmatpush.msra.mxu0 0.0
      %350 = vmatpush.msra.mxu0 0.0
      %351 = vmatpush.msra.mxu0 0.0
      %352 = vmatpush.msra.mxu0 0.0
      %353 = vmatpush.msra.mxu0 0.0
      %354 = vmatpush.msra.mxu0 0.0
      %355 = vmatpush.msra.mxu0 0.0
      %356 = vmatpush.msra.mxu0 0.0
      %357 = vmatpush.msra.mxu0 0.0
      %358 = vmatpush.msra.mxu0 0.0
      %359 = vmatpush.msra.mxu0 %v336
      %360 = vmatmul.f32.gmra.mxu0 %v339
      %v361 = vpop.f32.mrf.mxu0
      %v362 = vadd.f32 0.0, %v361
      %363 = vmatmul.f32.gmra.mxu0 %v342
      %v364 = vpop.f32.mrf.mxu0
      %v365 = vadd.f32 0.0, %v364
      %366 = vdwg.mxu0
      %v367 = vadd.f32 %v327, %v362
      %v368 = vadd.f32 %v330, %v365
      %s369 = scalar_lea.vmem %s2, 48
      %v370 = vld [vmem:[%s369] sm:$0xff]
      %v371 = vld [vmem:[%s369 + $0x8] sm:$0xff]
      %372 = vrot.lane.b32.xlu0 %v263, 118
      %v373 = vpop.permute.xlu0 %372
      %v376 = vsel %vm273, %v370, 0
      %v379 = vsel %vm273, %v371, 0
      %381 = vmatpush.msra.mxu0 0.0
      %382 = vmatpush.msra.mxu0 0.0
      %383 = vmatpush.msra.mxu0 0.0
      %384 = vmatpush.msra.mxu0 0.0
      %385 = vmatpush.msra.mxu0 0.0
      %386 = vmatpush.msra.mxu0 0.0
      %387 = vmatpush.msra.mxu0 0.0
      %388 = vmatpush.msra.mxu0 0.0
      %389 = vmatpush.msra.mxu0 0.0
      %390 = vmatpush.msra.mxu0 0.0
      %391 = vmatpush.msra.mxu0 0.0
      %392 = vmatpush.msra.mxu0 0.0
      %393 = vmatpush.msra.mxu0 0.0
      %394 = vmatpush.msra.mxu0 0.0
      %395 = vmatpush.msra.mxu0 0.0
      %396 = vmatpush.msra.mxu0 %v373
      %397 = vmatmul.f32.gmra.mxu0 %v376
      %v398 = vpop.f32.mrf.mxu0
      %v399 = vadd.f32 0.0, %v398
      %400 = vmatmul.f32.gmra.mxu0 %v379
      %v401 = vpop.f32.mrf.mxu0
      %v402 = vadd.f32 0.0, %v401
      %403 = vdwg.mxu0
      %v404 = vadd.f32 %v367, %v399
      %v405 = vadd.f32 %v368, %v402
      %s406 = scalar_lea.vmem %s2, 64
      %v407 = vld [vmem:[%s406] sm:$0xff]
      %v408 = vld [vmem:[%s406 + $0x8] sm:$0xff]
      %409 = vrot.lane.b32.xlu0 %v263, 117
      %v410 = vpop.permute.xlu0 %409
      %v413 = vsel %vm273, %v407, 0
      %v416 = vsel %vm273, %v408, 0
      %418 = vmatpush.msra.mxu0 0.0
      %419 = vmatpush.msra.mxu0 0.0
      %420 = vmatpush.msra.mxu0 0.0
      %421 = vmatpush.msra.mxu0 0.0
      %422 = vmatpush.msra.mxu0 0.0
      %423 = vmatpush.msra.mxu0 0.0
      %424 = vmatpush.msra.mxu0 0.0
      %425 = vmatpush.msra.mxu0 0.0
      %426 = vmatpush.msra.mxu0 0.0
      %427 = vmatpush.msra.mxu0 0.0
      %428 = vmatpush.msra.mxu0 0.0
      %429 = vmatpush.msra.mxu0 0.0
      %430 = vmatpush.msra.mxu0 0.0
      %431 = vmatpush.msra.mxu0 0.0
      %432 = vmatpush.msra.mxu0 0.0
      %433 = vmatpush.msra.mxu0 %v410
      %434 = vmatmul.f32.gmra.mxu0 %v413
      %v435 = vpop.f32.mrf.mxu0
      %v436 = vadd.f32 0.0, %v435
      %437 = vmatmul.f32.gmra.mxu0 %v416
      %v438 = vpop.f32.mrf.mxu0
      %v439 = vadd.f32 0.0, %v438
      %440 = vdwg.mxu0
      %v441 = vadd.f32 %v404, %v436
      %v442 = vadd.f32 %v405, %v439
      %s443 = scalar_lea.vmem %s2, 80
      %v444 = vld [vmem:[%s443] sm:$0xff]
      %v445 = vld [vmem:[%s443 + $0x8] sm:$0xff]
      %446 = vrot.lane.b32.xlu0 %v263, 116
      %v447 = vpop.permute.xlu0 %446
      %v450 = vsel %vm273, %v444, 0
      %v453 = vsel %vm273, %v445, 0
      %455 = vmatpush.msra.mxu0 0.0
      %456 = vmatpush.msra.mxu0 0.0
      %457 = vmatpush.msra.mxu0 0.0
      %458 = vmatpush.msra.mxu0 0.0
      %459 = vmatpush.msra.mxu0 0.0
      %460 = vmatpush.msra.mxu0 0.0
      %461 = vmatpush.msra.mxu0 0.0
      %462 = vmatpush.msra.mxu0 0.0
      %463 = vmatpush.msra.mxu0 0.0
      %464 = vmatpush.msra.mxu0 0.0
      %465 = vmatpush.msra.mxu0 0.0
      %466 = vmatpush.msra.mxu0 0.0
      %467 = vmatpush.msra.mxu0 0.0
      %468 = vmatpush.msra.mxu0 0.0
      %469 = vmatpush.msra.mxu0 0.0
      %470 = vmatpush.msra.mxu0 %v447
      %471 = vmatmul.f32.gmra.mxu0 %v450
      %v472 = vpop.f32.mrf.mxu0
      %v473 = vadd.f32 0.0, %v472
      %474 = vmatmul.f32.gmra.mxu0 %v453
      %v475 = vpop.f32.mrf.mxu0
      %v476 = vadd.f32 0.0, %v475
      %477 = vdwg.mxu0
      %v478 = vadd.f32 %v441, %v473
      %v479 = vadd.f32 %v442, %v476
      %s480 = scalar_lea.vmem %s2, 96
      %v481 = vld [vmem:[%s480] sm:$0xff]
      %v482 = vld [vmem:[%s480 + $0x8] sm:$0xff]
      %483 = vrot.lane.b32.xlu0 %v263, 108
      %v484 = vpop.permute.xlu0 %483
      %v487 = vsel %vm273, %v481, 0
      %v490 = vsel %vm273, %v482, 0
      %492 = vmatpush.msra.mxu0 0.0
      %493 = vmatpush.msra.mxu0 0.0
      %494 = vmatpush.msra.mxu0 0.0
      %495 = vmatpush.msra.mxu0 0.0
      %496 = vmatpush.msra.mxu0 0.0
      %497 = vmatpush.msra.mxu0 0.0
      %498 = vmatpush.msra.mxu0 0.0
      %499 = vmatpush.msra.mxu0 0.0
      %500 = vmatpush.msra.mxu0 0.0
      %501 = vmatpush.msra.mxu0 0.0
      %502 = vmatpush.msra.mxu0 0.0
      %503 = vmatpush.msra.mxu0 0.0
      %504 = vmatpush.msra.mxu0 0.0
      %505 = vmatpush.msra.mxu0 0.0
      %506 = vmatpush.msra.mxu0 0.0
      %507 = vmatpush.msra.mxu0 %v484
      %508 = vmatmul.f32.gmra.mxu0 %v487
      %v509 = vpop.f32.mrf.mxu0
      %v510 = vadd.f32 0.0, %v509
      %511 = vmatmul.f32.gmra.mxu0 %v490
      %v512 = vpop.f32.mrf.mxu0
      %v513 = vadd.f32 0.0, %v512
      %514 = vdwg.mxu0
      %v515 = vadd.f32 %v478, %v510
      %v516 = vadd.f32 %v479, %v513
      %s517 = scalar_lea.vmem %s2, 112
      %v518 = vld [vmem:[%s517] sm:$0xff]
      %v519 = vld [vmem:[%s517 + $0x8] sm:$0xff]
      %520 = vrot.lane.b32.xlu0 %v263, 107
      %v521 = vpop.permute.xlu0 %520
      %v524 = vsel %vm273, %v518, 0
      %v527 = vsel %vm273, %v519, 0
      %529 = vmatpush.msra.mxu0 0.0
      %530 = vmatpush.msra.mxu0 0.0
      %531 = vmatpush.msra.mxu0 0.0
      %532 = vmatpush.msra.mxu0 0.0
      %533 = vmatpush.msra.mxu0 0.0
      %534 = vmatpush.msra.mxu0 0.0
      %535 = vmatpush.msra.mxu0 0.0
      %536 = vmatpush.msra.mxu0 0.0
      %537 = vmatpush.msra.mxu0 0.0
      %538 = vmatpush.msra.mxu0 0.0
      %539 = vmatpush.msra.mxu0 0.0
      %540 = vmatpush.msra.mxu0 0.0
      %541 = vmatpush.msra.mxu0 0.0
      %542 = vmatpush.msra.mxu0 0.0
      %543 = vmatpush.msra.mxu0 0.0
      %544 = vmatpush.msra.mxu0 %v521
      %545 = vmatmul.f32.gmra.mxu0 %v524
      %v546 = vpop.f32.mrf.mxu0
      %v547 = vadd.f32 0.0, %v546
      %548 = vmatmul.f32.gmra.mxu0 %v527
      %v549 = vpop.f32.mrf.mxu0
      %v550 = vadd.f32 0.0, %v549
      %551 = vdwg.mxu0
      %v552 = vadd.f32 %v515, %v547
      %v553 = vadd.f32 %v516, %v550
      %s554 = scalar_lea.vmem %s2, 128
      %v555 = vld [vmem:[%s554] sm:$0xff]
      %v556 = vld [vmem:[%s554 + $0x8] sm:$0xff]
      %557 = vrot.lane.b32.xlu0 %v263, 106
      %v558 = vpop.permute.xlu0 %557
      %v561 = vsel %vm273, %v555, 0
      %v564 = vsel %vm273, %v556, 0
      %566 = vmatpush.msra.mxu0 0.0
      %567 = vmatpush.msra.mxu0 0.0
      %568 = vmatpush.msra.mxu0 0.0
      %569 = vmatpush.msra.mxu0 0.0
      %570 = vmatpush.msra.mxu0 0.0
      %571 = vmatpush.msra.mxu0 0.0
      %572 = vmatpush.msra.mxu0 0.0
      %573 = vmatpush.msra.mxu0 0.0
      %574 = vmatpush.msra.mxu0 0.0
      %575 = vmatpush.msra.mxu0 0.0
      %576 = vmatpush.msra.mxu0 0.0
      %577 = vmatpush.msra.mxu0 0.0
      %578 = vmatpush.msra.mxu0 0.0
      %579 = vmatpush.msra.mxu0 0.0
      %580 = vmatpush.msra.mxu0 0.0
      %581 = vmatpush.msra.mxu0 %v558
      %582 = vmatmul.f32.gmra.mxu0 %v561
      %v583 = vpop.f32.mrf.mxu0
      %v584 = vadd.f32 0.0, %v583
      %585 = vmatmul.f32.gmra.mxu0 %v564
      %v586 = vpop.f32.mrf.mxu0
      %v587 = vadd.f32 0.0, %v586
      %588 = vdwg.mxu0
      %v589 = vadd.f32 %v552, %v584
      %v590 = vadd.f32 %v553, %v587
      %v591 = vld [vmem:[%s3] sm:$0xff]
      %v592 = vld [vmem:[%s3 + $0x8] sm:$0xff]
      %594 = vset.pattern.permute.xlu0 0
      %595 = vperm.xlu0 %594, %v591
      %v596 = vpop.permute.xlu0 %595
      %599 = vset.pattern.permute.xlu0 0
      %600 = vperm.xlu0 %599, %v592
      %v601 = vpop.permute.xlu0 %600
      %v603 = vadd.f32 %v589, %v596
      %v604 = vadd.f32 %v590, %v601
      %v605 = vmax.f32 %v603, 0.0
      %v606 = vmax.f32 %v604, 0.0
      %v608 = vperm.slane %v262, 0
      %v610 = vmul.f32 %v605, %v608
      %v611 = vmul.f32 %v606, %v608
      %614 = vrot.lane.b32.xlu0 %v610, 11
      %v615 = vpop.permute.xlu0 %614
      %616 = vrot.lane.b32.xlu0 %v611, 11
      %v617 = vpop.permute.xlu0 %616
      %620 = vst.msk [vmem:[#allocation2] sm:$0xff] %vm260, %v615
      %621 = vst.msk [vmem:[#allocation2 + $0x8] sm:$0xff] %vm260, %v617
      %v622 = vld [vmem:[#allocation2] sm:$0xff]
      %v623 = vld [vmem:[#allocation2 + $0x8] sm:$0xff]
      %v624 = vld [vmem:[%s4] sm:$0xff]
      %v625 = vld [vmem:[%s4 + $0x8] sm:$0xff]
      %s626 = scalar_lea.vmem %s4, 16
      %v627 = vld [vmem:[%s626] sm:$0xff]
      %v628 = vld [vmem:[%s626 + $0x8] sm:$0xff]
      %631 = vrot.lane.b32.xlu0 %v622, 127
      %v632 = vpop.permute.xlu0 %631
      %633 = vrot.lane.b32.xlu0 %v623, 127
      %v634 = vpop.permute.xlu0 %633
      %vm637 = vcmask 130048
      %v639 = vsel %vm637, %v627, 0
      %v642 = vsel %vm637, %v628, 0
      %644 = vmatpush.msra.mxu0 0.0
      %645 = vmatpush.msra.mxu0 0.0
      %646 = vmatpush.msra.mxu0 0.0
      %647 = vmatpush.msra.mxu0 0.0
      %648 = vmatpush.msra.mxu0 0.0
      %649 = vmatpush.msra.mxu0 0.0
      %650 = vmatpush.msra.mxu0 0.0
      %651 = vmatpush.msra.mxu0 0.0
      %652 = vmatpush.msra.mxu0 0.0
      %653 = vmatpush.msra.mxu0 0.0
      %654 = vmatpush.msra.mxu0 0.0
      %655 = vmatpush.msra.mxu0 0.0
      %656 = vmatpush.msra.mxu0 0.0
      %657 = vmatpush.msra.mxu0 0.0
      %658 = vmatpush.msra.mxu0 %v634
      %659 = vmatpush.msra.mxu0 %v632
      %660 = vmatmul.f32.gmra.mxu0 %v639
      %v661 = vpop.f32.mrf.mxu0
      %v662 = vadd.f32 0.0, %v661
      %663 = vmatmul.f32.gmra.mxu0 %v642
      %v664 = vpop.f32.mrf.mxu0
      %v665 = vadd.f32 0.0, %v664
      %666 = vdwg.mxu0
      %v668 = vsel %vm637, %v624, 0
      %v671 = vsel %vm637, %v625, 0
      %673 = vmatpush.msra.mxu0 0.0
      %674 = vmatpush.msra.mxu0 0.0
      %675 = vmatpush.msra.mxu0 0.0
      %676 = vmatpush.msra.mxu0 0.0
      %677 = vmatpush.msra.mxu0 0.0
      %678 = vmatpush.msra.mxu0 0.0
      %679 = vmatpush.msra.mxu0 0.0
      %680 = vmatpush.msra.mxu0 0.0
      %681 = vmatpush.msra.mxu0 0.0
      %682 = vmatpush.msra.mxu0 0.0
      %683 = vmatpush.msra.mxu0 0.0
      %684 = vmatpush.msra.mxu0 0.0
      %685 = vmatpush.msra.mxu0 0.0
      %686 = vmatpush.msra.mxu0 0.0
      %687 = vmatpush.msra.mxu0 %v623
      %688 = vmatpush.msra.mxu0 %v622
      %689 = vmatmul.f32.gmra.mxu0 %v668
      %v690 = vpop.f32.mrf.mxu0
      %v691 = vadd.f32 %v662, %v690
      %692 = vmatmul.f32.gmra.mxu0 %v671
      %v693 = vpop.f32.mrf.mxu0
      %v694 = vadd.f32 %v665, %v693
      %695 = vdwg.mxu0
      %s696 = scalar_lea.vmem %s4, 32
      %v697 = vld [vmem:[%s696] sm:$0xff]
      %v698 = vld [vmem:[%s696 + $0x8] sm:$0xff]
      %699 = vrot.lane.b32.xlu0 %v622, 126
      %v700 = vpop.permute.xlu0 %699
      %701 = vrot.lane.b32.xlu0 %v623, 126
      %v702 = vpop.permute.xlu0 %701
      %v706 = vsel %vm637, %v697, 0
      %v709 = vsel %vm637, %v698, 0
      %711 = vmatpush.msra.mxu0 0.0
      %712 = vmatpush.msra.mxu0 0.0
      %713 = vmatpush.msra.mxu0 0.0
      %714 = vmatpush.msra.mxu0 0.0
      %715 = vmatpush.msra.mxu0 0.0
      %716 = vmatpush.msra.mxu0 0.0
      %717 = vmatpush.msra.mxu0 0.0
      %718 = vmatpush.msra.mxu0 0.0
      %719 = vmatpush.msra.mxu0 0.0
      %720 = vmatpush.msra.mxu0 0.0
      %721 = vmatpush.msra.mxu0 0.0
      %722 = vmatpush.msra.mxu0 0.0
      %723 = vmatpush.msra.mxu0 0.0
      %724 = vmatpush.msra.mxu0 0.0
      %725 = vmatpush.msra.mxu0 %v702
      %726 = vmatpush.msra.mxu0 %v700
      %727 = vmatmul.f32.gmra.mxu0 %v706
      %v728 = vpop.f32.mrf.mxu0
      %v729 = vadd.f32 0.0, %v728
      %730 = vmatmul.f32.gmra.mxu0 %v709
      %v731 = vpop.f32.mrf.mxu0
      %v732 = vadd.f32 0.0, %v731
      %733 = vdwg.mxu0
      %v734 = vadd.f32 %v691, %v729
      %v735 = vadd.f32 %v694, %v732
      %s736 = scalar_lea.vmem %s4, 48
      %v737 = vld [vmem:[%s736] sm:$0xff]
      %v738 = vld [vmem:[%s736 + $0x8] sm:$0xff]
      %739 = vrot.lane.b32.xlu0 %v622, 118
      %v740 = vpop.permute.xlu0 %739
      %741 = vrot.lane.b32.xlu0 %v623, 118
      %v742 = vpop.permute.xlu0 %741
      %v746 = vsel %vm637, %v737, 0
      %v749 = vsel %vm637, %v738, 0
      %751 = vmatpush.msra.mxu0 0.0
      %752 = vmatpush.msra.mxu0 0.0
      %753 = vmatpush.msra.mxu0 0.0
      %754 = vmatpush.msra.mxu0 0.0
      %755 = vmatpush.msra.mxu0 0.0
      %756 = vmatpush.msra.mxu0 0.0
      %757 = vmatpush.msra.mxu0 0.0
      %758 = vmatpush.msra.mxu0 0.0
      %759 = vmatpush.msra.mxu0 0.0
      %760 = vmatpush.msra.mxu0 0.0
      %761 = vmatpush.msra.mxu0 0.0
      %762 = vmatpush.msra.mxu0 0.0
      %763 = vmatpush.msra.mxu0 0.0
      %764 = vmatpush.msra.mxu0 0.0
      %765 = vmatpush.msra.mxu0 %v742
      %766 = vmatpush.msra.mxu0 %v740
      %767 = vmatmul.f32.gmra.mxu0 %v746
      %v768 = vpop.f32.mrf.mxu0
      %v769 = vadd.f32 0.0, %v768
      %770 = vmatmul.f32.gmra.mxu0 %v749
      %v771 = vpop.f32.mrf.mxu0
      %v772 = vadd.f32 0.0, %v771
      %773 = vdwg.mxu0
      %v774 = vadd.f32 %v734, %v769
      %v775 = vadd.f32 %v735, %v772
      %s776 = scalar_lea.vmem %s4, 64
      %v777 = vld [vmem:[%s776] sm:$0xff]
      %v778 = vld [vmem:[%s776 + $0x8] sm:$0xff]
      %779 = vrot.lane.b32.xlu0 %v622, 117
      %v780 = vpop.permute.xlu0 %779
      %781 = vrot.lane.b32.xlu0 %v623, 117
      %v782 = vpop.permute.xlu0 %781
      %v786 = vsel %vm637, %v777, 0
      %v789 = vsel %vm637, %v778, 0
      %791 = vmatpush.msra.mxu0 0.0
      %792 = vmatpush.msra.mxu0 0.0
      %793 = vmatpush.msra.mxu0 0.0
      %794 = vmatpush.msra.mxu0 0.0
      %795 = vmatpush.msra.mxu0 0.0
      %796 = vmatpush.msra.mxu0 0.0
      %797 = vmatpush.msra.mxu0 0.0
      %798 = vmatpush.msra.mxu0 0.0
      %799 = vmatpush.msra.mxu0 0.0
      %800 = vmatpush.msra.mxu0 0.0
      %801 = vmatpush.msra.mxu0 0.0
      %802 = vmatpush.msra.mxu0 0.0
      %803 = vmatpush.msra.mxu0 0.0
      %804 = vmatpush.msra.mxu0 0.0
      %805 = vmatpush.msra.mxu0 %v782
      %806 = vmatpush.msra.mxu0 %v780
      %807 = vmatmul.f32.gmra.mxu0 %v786
      %v808 = vpop.f32.mrf.mxu0
      %v809 = vadd.f32 0.0, %v808
      %810 = vmatmul.f32.gmra.mxu0 %v789
      %v811 = vpop.f32.mrf.mxu0
      %v812 = vadd.f32 0.0, %v811
      %813 = vdwg.mxu0
      %v814 = vadd.f32 %v774, %v809
      %v815 = vadd.f32 %v775, %v812
      %s816 = scalar_lea.vmem %s4, 80
      %v817 = vld [vmem:[%s816] sm:$0xff]
      %v818 = vld [vmem:[%s816 + $0x8] sm:$0xff]
      %819 = vrot.lane.b32.xlu0 %v622, 116
      %v820 = vpop.permute.xlu0 %819
      %821 = vrot.lane.b32.xlu0 %v623, 116
      %v822 = vpop.permute.xlu0 %821
      %v826 = vsel %vm637, %v817, 0
      %v829 = vsel %vm637, %v818, 0
      %831 = vmatpush.msra.mxu0 0.0
      %832 = vmatpush.msra.mxu0 0.0
      %833 = vmatpush.msra.mxu0 0.0
      %834 = vmatpush.msra.mxu0 0.0
      %835 = vmatpush.msra.mxu0 0.0
      %836 = vmatpush.msra.mxu0 0.0
      %837 = vmatpush.msra.mxu0 0.0
      %838 = vmatpush.msra.mxu0 0.0
      %839 = vmatpush.msra.mxu0 0.0
      %840 = vmatpush.msra.mxu0 0.0
      %841 = vmatpush.msra.mxu0 0.0
      %842 = vmatpush.msra.mxu0 0.0
      %843 = vmatpush.msra.mxu0 0.0
      %844 = vmatpush.msra.mxu0 0.0
      %845 = vmatpush.msra.mxu0 %v822
      %846 = vmatpush.msra.mxu0 %v820
      %847 = vmatmul.f32.gmra.mxu0 %v826
      %v848 = vpop.f32.mrf.mxu0
      %v849 = vadd.f32 0.0, %v848
      %850 = vmatmul.f32.gmra.mxu0 %v829
      %v851 = vpop.f32.mrf.mxu0
      %v852 = vadd.f32 0.0, %v851
      %853 = vdwg.mxu0
      %v854 = vadd.f32 %v814, %v849
      %v855 = vadd.f32 %v815, %v852
      %s856 = scalar_lea.vmem %s4, 96
      %v857 = vld [vmem:[%s856] sm:$0xff]
      %v858 = vld [vmem:[%s856 + $0x8] sm:$0xff]
      %859 = vrot.lane.b32.xlu0 %v622, 108
      %v860 = vpop.permute.xlu0 %859
      %861 = vrot.lane.b32.xlu0 %v623, 108
      %v862 = vpop.permute.xlu0 %861
      %v866 = vsel %vm637, %v857, 0
      %v869 = vsel %vm637, %v858, 0
      %871 = vmatpush.msra.mxu0 0.0
      %872 = vmatpush.msra.mxu0 0.0
      %873 = vmatpush.msra.mxu0 0.0
      %874 = vmatpush.msra.mxu0 0.0
      %875 = vmatpush.msra.mxu0 0.0
      %876 = vmatpush.msra.mxu0 0.0
      %877 = vmatpush.msra.mxu0 0.0
      %878 = vmatpush.msra.mxu0 0.0
      %879 = vmatpush.msra.mxu0 0.0
      %880 = vmatpush.msra.mxu0 0.0
      %881 = vmatpush.msra.mxu0 0.0
      %882 = vmatpush.msra.mxu0 0.0
      %883 = vmatpush.msra.mxu0 0.0
      %884 = vmatpush.msra.mxu0 0.0
      %885 = vmatpush.msra.mxu0 %v862
      %886 = vmatpush.msra.mxu0 %v860
      %887 = vmatmul.f32.gmra.mxu0 %v866
      %v888 = vpop.f32.mrf.mxu0
      %v889 = vadd.f32 0.0, %v888
      %890 = vmatmul.f32.gmra.mxu0 %v869
      %v891 = vpop.f32.mrf.mxu0
      %v892 = vadd.f32 0.0, %v891
      %893 = vdwg.mxu0
      %v894 = vadd.f32 %v854, %v889
      %v895 = vadd.f32 %v855, %v892
      %s896 = scalar_lea.vmem %s4, 112
      %v897 = vld [vmem:[%s896] sm:$0xff]
      %v898 = vld [vmem:[%s896 + $0x8] sm:$0xff]
      %899 = vrot.lane.b32.xlu0 %v622, 107
      %v900 = vpop.permute.xlu0 %899
      %901 = vrot.lane.b32.xlu0 %v623, 107
      %v902 = vpop.permute.xlu0 %901
      %v906 = vsel %vm637, %v897, 0
      %v909 = vsel %vm637, %v898, 0
      %911 = vmatpush.msra.mxu0 0.0
      %912 = vmatpush.msra.mxu0 0.0
      %913 = vmatpush.msra.mxu0 0.0
      %914 = vmatpush.msra.mxu0 0.0
      %915 = vmatpush.msra.mxu0 0.0
      %916 = vmatpush.msra.mxu0 0.0
      %917 = vmatpush.msra.mxu0 0.0
      %918 = vmatpush.msra.mxu0 0.0
      %919 = vmatpush.msra.mxu0 0.0
      %920 = vmatpush.msra.mxu0 0.0
      %921 = vmatpush.msra.mxu0 0.0
      %922 = vmatpush.msra.mxu0 0.0
      %923 = vmatpush.msra.mxu0 0.0
      %924 = vmatpush.msra.mxu0 0.0
      %925 = vmatpush.msra.mxu0 %v902
      %926 = vmatpush.msra.mxu0 %v900
      %927 = vmatmul.f32.gmra.mxu0 %v906
      %v928 = vpop.f32.mrf.mxu0
      %v929 = vadd.f32 0.0, %v928
      %930 = vmatmul.f32.gmra.mxu0 %v909
      %v931 = vpop.f32.mrf.mxu0
      %v932 = vadd.f32 0.0, %v931
      %933 = vdwg.mxu0
      %v934 = vadd.f32 %v894, %v929
      %v935 = vadd.f32 %v895, %v932
      %s936 = scalar_lea.vmem %s4, 128
      %v937 = vld [vmem:[%s936] sm:$0xff]
      %v938 = vld [vmem:[%s936 + $0x8] sm:$0xff]
      %939 = vrot.lane.b32.xlu0 %v622, 106
      %v940 = vpop.permute.xlu0 %939
      %941 = vrot.lane.b32.xlu0 %v623, 106
      %v942 = vpop.permute.xlu0 %941
      %v946 = vsel %vm637, %v937, 0
      %v949 = vsel %vm637, %v938, 0
      %951 = vmatpush.msra.mxu0 0.0
      %952 = vmatpush.msra.mxu0 0.0
      %953 = vmatpush.msra.mxu0 0.0
      %954 = vmatpush.msra.mxu0 0.0
      %955 = vmatpush.msra.mxu0 0.0
      %956 = vmatpush.msra.mxu0 0.0
      %957 = vmatpush.msra.mxu0 0.0
      %958 = vmatpush.msra.mxu0 0.0
      %959 = vmatpush.msra.mxu0 0.0
      %960 = vmatpush.msra.mxu0 0.0
      %961 = vmatpush.msra.mxu0 0.0
      %962 = vmatpush.msra.mxu0 0.0
      %963 = vmatpush.msra.mxu0 0.0
      %964 = vmatpush.msra.mxu0 0.0
      %965 = vmatpush.msra.mxu0 %v942
      %966 = vmatpush.msra.mxu0 %v940
      %967 = vmatmul.f32.gmra.mxu0 %v946
      %v968 = vpop.f32.mrf.mxu0
      %v969 = vadd.f32 0.0, %v968
      %970 = vmatmul.f32.gmra.mxu0 %v949
      %v971 = vpop.f32.mrf.mxu0
      %v972 = vadd.f32 0.0, %v971
      %973 = vdwg.mxu0
      %v974 = vadd.f32 %v934, %v969
      %v975 = vadd.f32 %v935, %v972
      %v976 = vld [vmem:[%s5] sm:$0xff]
      %v977 = vld [vmem:[%s5 + $0x8] sm:$0xff]
      %979 = vset.pattern.permute.xlu0 0
      %980 = vperm.xlu0 %979, %v976
      %v981 = vpop.permute.xlu0 %980
      %984 = vset.pattern.permute.xlu0 0
      %985 = vperm.xlu0 %984, %v977
      %v986 = vpop.permute.xlu0 %985
      %v988 = vadd.f32 %v974, %v981
      %v989 = vadd.f32 %v975, %v986
      %v990 = vmax.f32 %v988, 0.0
      %v991 = vmax.f32 %v989, 0.0
      %v992 = vmul.f32 %v990, %v608
      %v993 = vmul.f32 %v991, %v608
      %vm994 = vcmask 818176
      %995 = vst.msk [vmem:[%s248] sm:$0xff] %vm994, %v992
      %996 = vst.msk [vmem:[%s248 + $0x8] sm:$0xff] %vm994, %v993
      %p997 = scmp.lt.s32.totalorder %s17, 1
      %s998 = scalar_select %p997, %s17, 1
      %s999 = smul.addr %s998, 2
      %s1000 = smul.addr %s999, 8
      %s1001 = scalar_lea.vmem %s6, %s1000
      // Predicated region
      $region45: #{comb_net_forward.11} parent=43 // pred_check
        %p1002 = pneg %p166
      $region46: #{comb_net_forward.11} parent=43 // pred_check_branch
        %1004 = sbr.rel (%p1002) target = $region48
      $region47: #{comb_net_forward.11} parent=43 // pred_region
        _
      $region48: #{comb_net_forward.11} parent=43 // pred_fallthru
        _
    $region44: #{comb_net_forward.11} parent=5 // pred_fallthru
      _
    %p1005 = scmp.le.s32.totalorder 2, %s12
    // Predicated region
    $region49: #{comb_net_forward.11} parent=5 // pred_check
      %p1006 = pneg %p1005
    $region50: #{comb_net_forward.11} parent=5 // pred_check_branch
      %1008 = sbr.rel (%p1006) target = $region52
    $region51: #{comb_net_forward.11} parent=5 // pred_region
      %s1009 = ssub.s32 %s12, 2
      // Predicated region
      $region53: #{comb_net_forward.11} parent=51 // pred_check
        %p1010 = pneg %p172
      $region54: #{comb_net_forward.11} parent=51 // pred_check_branch
        %1012 = sbr.rel (%p1010) target = $region56
      $region55: #{comb_net_forward.11} parent=51 // pred_region
        %p1013 = scmp.lt.s32.totalorder %s18, 1
        %s1014 = scalar_select %p1013, %s18, 1
        %s1015 = smul.addr %s1014, 2
        %s1016 = smul.addr %s1015, 8
        %s1017 = scalar_lea.vmem %s6, %s1016
      $region56: #{comb_net_forward.11} parent=51 // pred_fallthru
        _
    $region52: #{comb_net_forward.11} parent=5 // pred_fallthru
      _
  $region6: #{comb_net_forward.11} parent=0 // loop_footer
    %s16 = sadd.s32 1, %s12
  $region7: #{comb_net_forward.11} parent=0 // loop_footer_branch
    %11 = sbr.rel target = $region3
  $region8: #{comb_net_forward.11} parent=0 // loop_exit
    _

// kernel: comb_net_forward.15
$region0: #{comb_net_forward.15}
  #allocation0 [shape = 'u32[]', space=smem, size = 0x4, offset = 0x4, fixed_abs, tag = 'smem constant byte address 0x4 - core index']
  #allocation1 [shape = 'u32[72,128]{1,0:T(1,128)}', space=vmem, size = 0x9000, scoped, tag = 'internal scratch']
  #allocation2 [shape = 'f32[24,362]{1,0:T(8,128)}', space=vmem, size = 0x9000, scoped, tag = 'scratch operand']
  %s0 = inlined_call_operand.vmem [shape: f32[1,324], index: 0, kind: input, shape index: {}]
  %s1 = inlined_call_operand.vmem [shape: f32[2,16,324], index: 1, kind: input, shape index: {}]
  %s2 = inlined_call_operand.vmem [shape: f32[2,8,324], index: 2, kind: input, shape index: {}]
  %s3 = inlined_call_operand.vmem [shape: f32[9,8,24], index: 3, kind: input, shape index: {}]
  %s4 = inlined_call_operand.vmem [shape: f32[8,1], index: 4, kind: input, shape index: {}]
  %s5 = inlined_call_operand.vmem [shape: f32[9,8,8], index: 5, kind: input, shape index: {}]
  %s6 = inlined_call_operand.vmem [shape: f32[8,1], index: 6, kind: input, shape index: {}]
  %s7 = inlined_call_operand.vmem [shape: f32[1,4,8], index: 7, kind: input, shape index: {}]
  %s8 = inlined_call_operand.vmem [shape: f32[4,1], index: 8, kind: input, shape index: {}]
  %s9 = inlined_call_operand.vmem [shape: f32[2,4,324], index: 9, kind: output, shape index: {}]
  %s10 = sld [smem:[#allocation0]]
  $region69: #{comb_net_forward.15} parent=0
    _
  %s12 = ssub.s32 1, %s10
  %s13 = scalar_select 0, %s12, %s10
  loop: start=0, step=1, limit=4
  $region2: #{comb_net_forward.15} parent=0 // loop_pre_header
    _
  $region3: #{comb_net_forward.15} parent=0 // loop_header
    %s15 = sphi 0, %s19
    %p16 = scmp.ge.s32.totalorder %s15, 4
    %s23 = sphi 0, %s23
    %s25 = sphi 0, %s23
    %s26 = sphi 0, %s25
    %s40 = sphi 0, %s26
    %s46 = sphi 0, %s48
    %s49 = sphi 0, %s46
    %s50 = sphi 0, %s49
    %s66 = sphi 0, %s50
    %s72 = sphi 0, %s74
    %s75 = sphi 0, %s72
    %s76 = sphi 0, %s75
    %s92 = sphi 0, %s76
    %s96 = sphi 0, %s96
    %s98 = sphi 0, %s96
    %s99 = sphi 0, %s98
    %s113 = sphi 0, %s99
    %s117 = sphi 0, %s117
    %s119 = sphi 0, %s117
    %s120 = sphi 0, %s119
    %s134 = sphi 0, %s120
    %s138 = sphi 0, %s138
    %s140 = sphi 0, %s138
    %s141 = sphi 0, %s140
    %s155 = sphi 0, %s141
    %s159 = sphi 0, %s159
    %s161 = sphi 0, %s159
    %s162 = sphi 0, %s161
    %s176 = sphi 0, %s162
    %s180 = sphi 0, %s180
    %s182 = sphi 0, %s180
    %s183 = sphi 0, %s182
    %s197 = sphi 0, %s183
    %s201 = sphi 0, %s201
    %s203 = sphi 0, %s201
    %s204 = sphi 0, %s203
    %s218 = sphi 0, %s204
    %s224 = sphi 0, %s226
    %s227 = sphi 0, %s224
    %s228 = sphi 0, %s227
    %s244 = sphi 0, %s228
  $region4: #{comb_net_forward.15} parent=0 // loop_header_branch
    %18 = sbr.rel (%p16) target = $region8
  $region5: #{comb_net_forward.15} parent=0 // loop_body
    %s20 = ssub.s32 %s15, 1
    %s21 = ssub.s32 %s15, 2
    %s22 = sadd.s32 %s15, 1
    %s24 = sadd.s32 %s23, 1
    %p27 = scmp.eq.s32.totalorder %s15, 1
    %p28 = scmp.ne.s32.totalorder %s23, %s25
    %p29 = scmp.eq.s32.totalorder %s15, 0
    %p30 = por %p28, %p29
    %p31 = scmp.ne.s32.totalorder %s23, %s25
    %p32 = scmp.eq.s32.totalorder %s20, 1
    %p33 = por %p31, %p32
    %p34 = scmp.ne.s32.totalorder %s25, %s26
    %p35 = scmp.eq.s32.totalorder %s20, 0
    %p36 = por %p34, %p35
    %p37 = scmp.ne.s32.totalorder %s25, %s26
    %p38 = scmp.eq.s32.totalorder %s21, 1
    %p39 = por %p37, %p38
    %p41 = scmp.ne.s32.totalorder %s26, %s40
    %p42 = scmp.eq.s32.totalorder %s21, 0
    %p43 = por %p41, %p42
    %s44 = ssub.s32 %s15, %s22
    %p45 = scmp.eq.s32.totalorder %s44, 0
    %s47 = sadd.s32 %s46, 1
    %s48 = scalar_select %p45, %s46, %s47
    %p51 = pneg %p45
    %p52 = scmp.eq.s32.totalorder %s15, 1
    %p53 = por %p51, %p52
    %p54 = scmp.ne.s32.totalorder %s46, %s49
    %p55 = scmp.eq.s32.totalorder %s15, 0
    %p56 = por %p54, %p55
    %p57 = scmp.ne.s32.totalorder %s46, %s49
    %p58 = scmp.eq.s32.totalorder %s20, 1
    %p59 = por %p57, %p58
    %p60 = scmp.ne.s32.totalorder %s49, %s50
    %p61 = scmp.eq.s32.totalorder %s20, 0
    %p62 = por %p60, %p61
    %p63 = scmp.ne.s32.totalorder %s49, %s50
    %p64 = scmp.eq.s32.totalorder %s21, 1
    %p65 = por %p63, %p64
    %p67 = scmp.ne.s32.totalorder %s50, %s66
    %p68 = scmp.eq.s32.totalorder %s21, 0
    %p69 = por %p67, %p68
    %s70 = ssub.s32 %s15, %s22
    %p71 = scmp.eq.s32.totalorder %s70, 0
    %s73 = sadd.s32 %s72, 1
    %s74 = scalar_select %p71, %s72, %s73
    %p77 = pneg %p71
    %p78 = scmp.eq.s32.totalorder %s15, 1
    %p79 = por %p77, %p78
    %p80 = scmp.ne.s32.totalorder %s72, %s75
    %p81 = scmp.eq.s32.totalorder %s15, 0
    %p82 = por %p80, %p81
    %p83 = scmp.ne.s32.totalorder %s72, %s75
    %p84 = scmp.eq.s32.totalorder %s20, 1
    %p85 = por %p83, %p84
    %p86 = scmp.ne.s32.totalorder %s75, %s76
    %p87 = scmp.eq.s32.totalorder %s20, 0
    %p88 = por %p86, %p87
    %p89 = scmp.ne.s32.totalorder %s75, %s76
    %p90 = scmp.eq.s32.totalorder %s21, 1
    %p91 = por %p89, %p90
    %p93 = scmp.ne.s32.totalorder %s76, %s92
    %p94 = scmp.eq.s32.totalorder %s21, 0
    %p95 = por %p93, %p94
    %s97 = sadd.s32 %s96, 1
    %p100 = scmp.eq.s32.totalorder %s15, 1
    %p101 = scmp.ne.s32.totalorder %s96, %s98
    %p102 = scmp.eq.s32.totalorder %s15, 0
    %p103 = por %p101, %p102
    %p104 = scmp.ne.s32.totalorder %s96, %s98
    %p105 = scmp.eq.s32.totalorder %s20, 1
    %p106 = por %p104, %p105
    %p107 = scmp.ne.s32.totalorder %s98, %s99
    %p108 = scmp.eq.s32.totalorder %s20, 0
    %p109 = por %p107, %p108
    %p110 = scmp.ne.s32.totalorder %s98, %s99
    %p111 = scmp.eq.s32.totalorder %s21, 1
    %p112 = por %p110, %p111
    %p114 = scmp.ne.s32.totalorder %s99, %s113
    %p115 = scmp.eq.s32.totalorder %s21, 0
    %p116 = por %p114, %p115
    %s118 = sadd.s32 %s117, 1
    %p121 = scmp.eq.s32.totalorder %s15, 1
    %p122 = scmp.ne.s32.totalorder %s117, %s119
    %p123 = scmp.eq.s32.totalorder %s15, 0
    %p124 = por %p122, %p123
    %p125 = scmp.ne.s32.totalorder %s117, %s119
    %p126 = scmp.eq.s32.totalorder %s20, 1
    %p127 = por %p125, %p126
    %p128 = scmp.ne.s32.totalorder %s119, %s120
    %p129 = scmp.eq.s32.totalorder %s20, 0
    %p130 = por %p128, %p129
    %p131 = scmp.ne.s32.totalorder %s119, %s120
    %p132 = scmp.eq.s32.totalorder %s21, 1
    %p133 = por %p131, %p132
    %p135 = scmp.ne.s32.totalorder %s120, %s134
    %p136 = scmp.eq.s32.totalorder %s21, 0
    %p137 = por %p135, %p136
    %s139 = sadd.s32 %s138, 1
    %p142 = scmp.eq.s32.totalorder %s15, 1
    %p143 = scmp.ne.s32.totalorder %s138, %s140
    %p144 = scmp.eq.s32.totalorder %s15, 0
    %p145 = por %p143, %p144
    %p146 = scmp.ne.s32.totalorder %s138, %s140
    %p147 = scmp.eq.s32.totalorder %s20, 1
    %p148 = por %p146, %p147
    %p149 = scmp.ne.s32.totalorder %s140, %s141
    %p150 = scmp.eq.s32.totalorder %s20, 0
    %p151 = por %p149, %p150
    %p152 = scmp.ne.s32.totalorder %s140, %s141
    %p153 = scmp.eq.s32.totalorder %s21, 1
    %p154 = por %p152, %p153
    %p156 = scmp.ne.s32.totalorder %s141, %s155
    %p157 = scmp.eq.s32.totalorder %s21, 0
    %p158 = por %p156, %p157
    %s160 = sadd.s32 %s159, 1
    %p163 = scmp.eq.s32.totalorder %s15, 1
    %p164 = scmp.ne.s32.totalorder %s159, %s161
    %p165 = scmp.eq.s32.totalorder %s15, 0
    %p166 = por %p164, %p165
    %p167 = scmp.ne.s32.totalorder %s159, %s161
    %p168 = scmp.eq.s32.totalorder %s20, 1
    %p169 = por %p167, %p168
    %p170 = scmp.ne.s32.totalorder %s161, %s162
    %p171 = scmp.eq.s32.totalorder %s20, 0
    %p172 = por %p170, %p171
    %p173 = scmp.ne.s32.totalorder %s161, %s162
    %p174 = scmp.eq.s32.totalorder %s21, 1
    %p175 = por %p173, %p174
    %p177 = scmp.ne.s32.totalorder %s162, %s176
    %p178 = scmp.eq.s32.totalorder %s21, 0
    %p179 = por %p177, %p178
    %s181 = sadd.s32 %s180, 1
    %p184 = scmp.eq.s32.totalorder %s15, 1
    %p185 = scmp.ne.s32.totalorder %s180, %s182
    %p186 = scmp.eq.s32.totalorder %s15, 0
    %p187 = por %p185, %p186
    %p188 = scmp.ne.s32.totalorder %s180, %s182
    %p189 = scmp.eq.s32.totalorder %s20, 1
    %p190 = por %p188, %p189
    %p191 = scmp.ne.s32.totalorder %s182, %s183
    %p192 = scmp.eq.s32.totalorder %s20, 0
    %p193 = por %p191, %p192
    %p194 = scmp.ne.s32.totalorder %s182, %s183
    %p195 = scmp.eq.s32.totalorder %s21, 1
    %p196 = por %p194, %p195
    %p198 = scmp.ne.s32.totalorder %s183, %s197
    %p199 = scmp.eq.s32.totalorder %s21, 0
    %p200 = por %p198, %p199
    %s202 = sadd.s32 %s201, 1
    %p205 = scmp.eq.s32.totalorder %s15, 1
    %p206 = scmp.ne.s32.totalorder %s201, %s203
    %p207 = scmp.eq.s32.totalorder %s15, 0
    %p208 = por %p206, %p207
    %p209 = scmp.ne.s32.totalorder %s201, %s203
    %p210 = scmp.eq.s32.totalorder %s20, 1
    %p211 = por %p209, %p210
    %p212 = scmp.ne.s32.totalorder %s203, %s204
    %p213 = scmp.eq.s32.totalorder %s20, 0
    %p214 = por %p212, %p213
    %p215 = scmp.ne.s32.totalorder %s203, %s204
    %p216 = scmp.eq.s32.totalorder %s21, 1
    %p217 = por %p215, %p216
    %p219 = scmp.ne.s32.totalorder %s204, %s218
    %p220 = scmp.eq.s32.totalorder %s21, 0
    %p221 = por %p219, %p220
    %s222 = ssub.s32 %s15, %s22
    %p223 = scmp.eq.s32.totalorder %s222, 0
    %s225 = sadd.s32 %s224, 1
    %s226 = scalar_select %p223, %s224, %s225
    %p229 = pneg %p223
    %p230 = scmp.eq.s32.totalorder %s15, 1
    %p231 = por %p229, %p230
    %p232 = scmp.ne.s32.totalorder %s224, %s227
    %p233 = scmp.eq.s32.totalorder %s15, 0
    %p234 = por %p232, %p233
    %p235 = scmp.ne.s32.totalorder %s224, %s227
    %p236 = scmp.eq.s32.totalorder %s20, 1
    %p237 = por %p235, %p236
    %p238 = scmp.ne.s32.totalorder %s227, %s228
    %p239 = scmp.eq.s32.totalorder %s20, 0
    %p240 = por %p238, %p239
    %p241 = scmp.ne.s32.totalorder %s227, %s228
    %p242 = scmp.eq.s32.totalorder %s21, 1
    %p243 = por %p241, %p242
    %p245 = scmp.ne.s32.totalorder %s228, %s244
    %p246 = scmp.eq.s32.totalorder %s21, 0
    %p247 = por %p245, %p246
    %p248 = scmp.le.s32.totalorder 1, %s15
    %p249 = scmp.lt.s32.totalorder %s15, 3
    %p250 = pnand %p248, %p249
    %p251 = pneg %p250
    // Predicated region
    $region9: #{comb_net_forward.15} parent=5 // pred_check
      _
    $region10: #{comb_net_forward.15} parent=5 // pred_check_branch
      %253 = sbr.rel (%p250) target = $region12
    $region11: #{comb_net_forward.15} parent=5 // pred_region
      %s254 = ssub.s32 %s15, 1
      // Predicated region
      $region13: #{comb_net_forward.15} parent=11 // pred_check
        %p255 = pneg %p36
      $region14: #{comb_net_forward.15} parent=11 // pred_check_branch
        %257 = sbr.rel (%p255) target = $region16
      $region15: #{comb_net_forward.15} parent=11 // pred_region
        _
      $region16: #{comb_net_forward.15} parent=11 // pred_fallthru
        _
      // Predicated region
      $region17: #{comb_net_forward.15} parent=11 // pred_check
        %p258 = pneg %p109
      $region18: #{comb_net_forward.15} parent=11 // pred_check_branch
        %260 = sbr.rel (%p258) target = $region20
      $region19: #{comb_net_forward.15} parent=11 // pred_region
        _
      $region20: #{comb_net_forward.15} parent=11 // pred_fallthru
        _
      // Predicated region
      $region21: #{comb_net_forward.15} parent=11 // pred_check
        %p261 = pneg %p130
      $region22: #{comb_net_forward.15} parent=11 // pred_check_branch
        %263 = sbr.rel (%p261) target = $region24
      $region23: #{comb_net_forward.15} parent=11 // pred_region
        _
      $region24: #{comb_net_forward.15} parent=11 // pred_fallthru
        _
      // Predicated region
      $region25: #{comb_net_forward.15} parent=11 // pred_check
        %p264 = pneg %p151
      $region26: #{comb_net_forward.15} parent=11 // pred_check_branch
        %266 = sbr.rel (%p264) target = $region28
      $region27: #{comb_net_forward.15} parent=11 // pred_region
        _
      $region28: #{comb_net_forward.15} parent=11 // pred_fallthru
        _
      // Predicated region
      $region29: #{comb_net_forward.15} parent=11 // pred_check
        %p267 = pneg %p172
      $region30: #{comb_net_forward.15} parent=11 // pred_check_branch
        %269 = sbr.rel (%p267) target = $region32
      $region31: #{comb_net_forward.15} parent=11 // pred_region
        _
      $region32: #{comb_net_forward.15} parent=11 // pred_fallthru
        _
      // Predicated region
      $region33: #{comb_net_forward.15} parent=11 // pred_check
        %p270 = pneg %p193
      $region34: #{comb_net_forward.15} parent=11 // pred_check_branch
        %272 = sbr.rel (%p270) target = $region36
      $region35: #{comb_net_forward.15} parent=11 // pred_region
        _
      $region36: #{comb_net_forward.15} parent=11 // pred_fallthru
        _
      // Predicated region
      $region37: #{comb_net_forward.15} parent=11 // pred_check
        %p273 = pneg %p214
      $region38: #{comb_net_forward.15} parent=11 // pred_check_branch
        %275 = sbr.rel (%p273) target = $region40
      $region39: #{comb_net_forward.15} parent=11 // pred_region
        _
      $region40: #{comb_net_forward.15} parent=11 // pred_fallthru
        _
    $region12: #{comb_net_forward.15} parent=5 // pred_fallthru
      _
    %p276 = scmp.lt.s32.totalorder %s15, 2
    // Predicated region
    $region41: #{comb_net_forward.15} parent=5 // pred_check
      %p277 = pneg %p276
    $region42: #{comb_net_forward.15} parent=5 // pred_check_branch
      %279 = sbr.rel (%p277) target = $region44
    $region43: #{comb_net_forward.15} parent=5 // pred_region
      // Predicated region
      $region45: #{comb_net_forward.15} parent=43 // pred_check
        %p280 = pneg %p56
      $region46: #{comb_net_forward.15} parent=43 // pred_check_branch
        %282 = sbr.rel (%p280) target = $region48
      $region47: #{comb_net_forward.15} parent=43 // pred_region
        %p283 = scmp.lt.s32.totalorder %s15, 1
        %s284 = scalar_select %p283, %s15, 1
        %s285 = smul.addr %s284, 6
        %s286 = smul.addr %s285, 8
        %s287 = scalar_lea.vmem %s1, %s286
      $region48: #{comb_net_forward.15} parent=43 // pred_fallthru
        _
      // Predicated region
      $region49: #{comb_net_forward.15} parent=43 // pred_check
        %p288 = pneg %p82
      $region50: #{comb_net_forward.15} parent=43 // pred_check_branch
        %290 = sbr.rel (%p288) target = $region52
      $region51: #{comb_net_forward.15} parent=43 // pred_region
        %p291 = scmp.lt.s32.totalorder %s15, 1
        %s292 = scalar_select %p291, %s15, 1
        %s293 = smul.addr %s292, 3
        %s294 = smul.addr %s293, 8
        %s295 = scalar_lea.vmem %s2, %s294
      $region52: #{comb_net_forward.15} parent=43 // pred_fallthru
        _
    $region44: #{comb_net_forward.15} parent=5 // pred_fallthru
      _
    %p296 = scmp.le.s32.totalorder 1, %s15
    %p297 = scmp.lt.s32.totalorder %s15, 3
    %p298 = pnand %p296, %p297
    %p299 = pneg %p298
    // Predicated region
    $region53: #{comb_net_forward.15} parent=5 // pred_check
      _
    $region54: #{comb_net_forward.15} parent=5 // pred_check_branch
      %301 = sbr.rel (%p298) target = $region56
    $region55: #{comb_net_forward.15} parent=5 // pred_region
      %s302 = ssub.s32 %s15, 1
      %p303 = pneg %p36
      %p304 = pneg %p33
      %p305 = scmp.lt.s32.totalorder %s20, 1
      %s306 = scalar_select %p305, %s20, 1
      %s307 = smul.addr %s306, 6
      %s308 = smul.addr %s307, 8
      %s309 = scalar_lea.vmem %s1, %s308
      %p310 = pneg %p62
      %p311 = pneg %p59
      %p312 = scmp.lt.s32.totalorder %s20, 1
      %s313 = scalar_select %p312, %s20, 1
      %s314 = smul.addr %s313, 3
      %s315 = smul.addr %s314, 8
      %s316 = scalar_lea.vmem %s2, %s315
      %p317 = pneg %p88
      %p318 = pneg %p85
      %p319 = pneg %p109
      %p320 = pneg %p106
      %p321 = pneg %p130
      %p322 = pneg %p127
      %p323 = pneg %p151
      %p324 = pneg %p148
      %p325 = pneg %p172
      %p326 = pneg %p169
      %p327 = pneg %p193
      %p328 = pneg %p190
      %p329 = pneg %p214
      %p330 = pneg %p211
      %p331 = pneg %p240
      %p332 = pneg %p237
      %p333 = scmp.lt.s32.totalorder %s20, 1
      %s334 = scalar_select %p333, %s20, 1
      %s335 = smul.addr %s334, 3
      %s336 = smul.addr %s335, 4
      %s337 = scalar_lea.vmem %s9, %s336
      %p338 = scmp.lt.s32.totalorder %s20, 1
      %s339 = scalar_select %p338, %s20, 1
      %s340 = smul.addr %s339, 6
      %s341 = smul.addr %s340, 8
      %s342 = scalar_lea.vmem %s1, %s341
      %p343 = scmp.lt.s32.totalorder %s20, 1
      %s344 = scalar_select %p343, %s20, 1
      %s345 = smul.addr %s344, 3
      %s346 = smul.addr %s345, 8
      %s347 = scalar_lea.vmem %s2, %s346
      %p348 = scmp.lt.s32.totalorder %s20, 1
      %s349 = scalar_select %p348, %s20, 1
      %s350 = smul.addr %s349, 3
      %s351 = smul.addr %s350, 4
      %s352 = scalar_lea.vmem %s9, %s351
      %vm353 = vcmask 154624
      %354 = vst.msk [vmem:[#allocation2] sm:$0xff] %vm353, 0.0
      %355 = vst.msk [vmem:[#allocation2 + $0x18] sm:$0xff] %vm353, 0.0
      %356 = vst.msk [vmem:[#allocation2 + $0x30] sm:$0xff] %vm353, 0.0
      %vm357 = vcmask 868024
      %358 = vst.msk [vmem:[#allocation2 + $0x10] sm:$0xff] %vm357, 0.0
      %359 = vst.msk [vmem:[#allocation2 + $0x28] sm:$0xff] %vm357, 0.0
      %360 = vst.msk [vmem:[#allocation2 + $0x40] sm:$0xff] %vm357, 0.0
      %v361 = vld [vmem:[%s342] sm:$0xff]
      %v362 = vld [vmem:[%s342 + $0x8] sm:$0xff]
      %v363 = vld [vmem:[%s342 + $0x10] sm:$0xff]
      %v364 = vld [vmem:[%s342 + $0x18] sm:$0xff]
      %v365 = vld [vmem:[%s342 + $0x20] sm:$0xff]
      %v366 = vld [vmem:[%s342 + $0x28] sm:$0xff]
      %373 = vrot.lane.b32.xlu0 %v361, 19
      %v374 = vpop.permute.xlu0 %373
      %375 = vrot.lane.b32.xlu0 %v362, 19
      %v376 = vpop.permute.xlu0 %375
      %377 = vrot.lane.b32.xlu0 %v363, 19
      %v378 = vpop.permute.xlu0 %377
      %379 = vrot.lane.b32.xlu0 %v364, 19
      %v380 = vpop.permute.xlu0 %379
      %381 = vrot.lane.b32.xlu0 %v365, 19
      %v382 = vpop.permute.xlu0 %381
      %383 = vrot.lane.b32.xlu0 %v366, 19
      %v384 = vpop.permute.xlu0 %383
      %v385 = vsel %vm353, %v374, %v376
      %v386 = vsel %vm353, %v376, %v378
      %v387 = vsel %vm353, %v380, %v382
      %v388 = vsel %vm353, %v382, %v384
      %vm395 = vcmask 1047704
      %396 = vst.msk [vmem:[#allocation2] sm:$0xff] %vm395, %v374
      %397 = vst [vmem:[#allocation2 + $0x8] sm:$0xff] %v385
      %vm398 = vcmask 711680
      %399 = vst.msk [vmem:[#allocation2 + $0x10] sm:$0xff] %vm398, %v386
      %400 = vst.msk [vmem:[#allocation2 + $0x18] sm:$0xff] %vm395, %v380
      %401 = vst [vmem:[#allocation2 + $0x20] sm:$0xff] %v387
      %402 = vst.msk [vmem:[#allocation2 + $0x28] sm:$0xff] %vm398, %v388
      %v403 = vld [vmem:[%s347] sm:$0xff]
      %v404 = vld [vmem:[%s347 + $0x8] sm:$0xff]
      %v405 = vld [vmem:[%s347 + $0x10] sm:$0xff]
      %409 = vrot.lane.b32.xlu0 %v403, 19
      %v410 = vpop.permute.xlu0 %409
      %411 = vrot.lane.b32.xlu0 %v404, 19
      %v412 = vpop.permute.xlu0 %411
      %413 = vrot.lane.b32.xlu0 %v405, 19
      %v414 = vpop.permute.xlu0 %413
      %v415 = vsel %vm353, %v410, %v412
      %v416 = vsel %vm353, %v412, %v414
      %420 = vst.msk [vmem:[#allocation2 + $0x30] sm:$0xff] %vm395, %v410
      %421 = vst [vmem:[#allocation2 + $0x38] sm:$0xff] %v415
      %422 = vst.msk [vmem:[#allocation2 + $0x40] sm:$0xff] %vm398, %v416
      %v423 = vld [vmem:[%s0] sm:$0x7]
      %v424 = vld [vmem:[#allocation2] sm:$0xff]
      %v425 = vld [vmem:[#allocation2 + $0x8] sm:$0xff]
      %v426 = vld [vmem:[#allocation2 + $0x10] sm:$0xff]
      %v427 = vld [vmem:[#allocation2 + $0x18] sm:$0xff]
      %v428 = vld [vmem:[#allocation2 + $0x20] sm:$0xff]
      %v429 = vld [vmem:[#allocation2 + $0x28] sm:$0xff]
      %v430 = vld [vmem:[#allocation2 + $0x30] sm:$0xff]
      %v431 = vld [vmem:[#allocation2 + $0x38] sm:$0xff]
      %v432 = vld [vmem:[#allocation2 + $0x40] sm:$0xff]
      %v433 = vld [vmem:[%s3] sm:$0xff]
      %s434 = scalar_lea.vmem %s3, 8
      %v435 = vld [vmem:[%s434] sm:$0xff]
      %445 = vrot.lane.b32.xlu0 %v424, 127
      %v446 = vpop.permute.xlu0 %445
      %447 = vrot.lane.b32.xlu0 %v425, 127
      %v448 = vpop.permute.xlu0 %447
      %449 = vrot.lane.b32.xlu0 %v426, 127
      %v450 = vpop.permute.xlu0 %449
      %451 = vrot.lane.b32.xlu0 %v427, 127
      %v452 = vpop.permute.xlu0 %451
      %453 = vrot.lane.b32.xlu0 %v428, 127
      %v454 = vpop.permute.xlu0 %453
      %455 = vrot.lane.b32.xlu0 %v429, 127
      %v456 = vpop.permute.xlu0 %455
      %457 = vrot.lane.b32.xlu0 %v430, 127
      %v458 = vpop.permute.xlu0 %457
      %459 = vrot.lane.b32.xlu0 %v431, 127
      %v460 = vpop.permute.xlu0 %459
      %461 = vrot.lane.b32.xlu0 %v432, 127
      %v462 = vpop.permute.xlu0 %461
      %vm463 = vcmask 1039360
      %v464 = vsel %vm463, %v446, %v448
      %v465 = vsel %vm463, %v448, %v450
      %v466 = vsel %vm463, %v452, %v454
      %v467 = vsel %vm463, %v454, %v456
      %v468 = vsel %vm463, %v458, %v460
      %v469 = vsel %vm463, %v460, %v462
      %vm479 = vcmask 195584
      %v481 = vsel %vm479, %v435, 0
      %483 = vmatpush.msra.mxu0 0.0
      %484 = vmatpush.msra.mxu0 0.0
      %485 = vmatpush.msra.mxu0 0.0
      %486 = vmatpush.msra.mxu0 0.0
      %487 = vmatpush.msra.mxu0 0.0
      %488 = vmatpush.msra.mxu0 0.0
      %489 = vmatpush.msra.mxu0 0.0
      %490 = vmatpush.msra.mxu0 0.0
      %491 = vmatpush.msra.mxu0 0.0
      %492 = vmatpush.msra.mxu0 0.0
      %493 = vmatpush.msra.mxu0 0.0
      %494 = vmatpush.msra.mxu0 0.0
      %495 = vmatpush.msra.mxu0 0.0
      %496 = vmatpush.msra.mxu0 %v468
      %497 = vmatpush.msra.mxu0 %v466
      %498 = vmatpush.msra.mxu0 %v464
      %499 = vmatmul.f32.gmra.mxu0 %v481
      %v500 = vpop.f32.mrf.mxu0
      %v501 = vadd.f32 0.0, %v500
      %502 = vdwg.mxu0
      %503 = vmatpush.msra.mxu0 0.0
      %504 = vmatpush.msra.mxu0 0.0
      %505 = vmatpush.msra.mxu0 0.0
      %506 = vmatpush.msra.mxu0 0.0
      %507 = vmatpush.msra.mxu0 0.0
      %508 = vmatpush.msra.mxu0 0.0
      %509 = vmatpush.msra.mxu0 0.0
      %510 = vmatpush.msra.mxu0 0.0
      %511 = vmatpush.msra.mxu0 0.0
      %512 = vmatpush.msra.mxu0 0.0
      %513 = vmatpush.msra.mxu0 0.0
      %514 = vmatpush.msra.mxu0 0.0
      %515 = vmatpush.msra.mxu0 0.0
      %516 = vmatpush.msra.mxu0 %v469
      %517 = vmatpush.msra.mxu0 %v467
      %518 = vmatpush.msra.mxu0 %v465
      %519 = vmatmul.f32.gmra.mxu0 %v481
      %v520 = vpop.f32.mrf.mxu0
      %v521 = vadd.f32 0.0, %v520
      %522 = vdwg.mxu0
      %523 = vmatpush.msra.mxu0 0.0
      %524 = vmatpush.msra.mxu0 0.0
      %525 = vmatpush.msra.mxu0 0.0
      %526 = vmatpush.msra.mxu0 0.0
      %527 = vmatpush.msra.mxu0 0.0
      %528 = vmatpush.msra.mxu0 0.0
      %529 = vmatpush.msra.mxu0 0.0
      %530 = vmatpush.msra.mxu0 0.0
      %531 = vmatpush.msra.mxu0 0.0
      %532 = vmatpush.msra.mxu0 0.0
      %533 = vmatpush.msra.mxu0 0.0
      %534 = vmatpush.msra.mxu0 0.0
      %535 = vmatpush.msra.mxu0 0.0
      %536 = vmatpush.msra.mxu0 %v462
      %537 = vmatpush.msra.mxu0 %v456
      %538 = vmatpush.msra.mxu0 %v450
      %539 = vmatmul.f32.gmra.mxu0 %v481
      %v540 = vpop.f32.mrf.mxu0
      %v541 = vadd.f32 0.0, %v540
      %542 = vdwg.mxu0
      %v544 = vsel %vm479, %v433, 0
      %546 = vmatpush.msra.mxu0 0.0
      %547 = vmatpush.msra.mxu0 0.0
      %548 = vmatpush.msra.mxu0 0.0
      %549 = vmatpush.msra.mxu0 0.0
      %550 = vmatpush.msra.mxu0 0.0
      %551 = vmatpush.msra.mxu0 0.0
      %552 = vmatpush.msra.mxu0 0.0
      %553 = vmatpush.msra.mxu0 0.0
      %554 = vmatpush.msra.mxu0 0.0
      %555 = vmatpush.msra.mxu0 0.0
      %556 = vmatpush.msra.mxu0 0.0
      %557 = vmatpush.msra.mxu0 0.0
      %558 = vmatpush.msra.mxu0 0.0
      %559 = vmatpush.msra.mxu0 %v430
      %560 = vmatpush.msra.mxu0 %v427
      %561 = vmatpush.msra.mxu0 %v424
      %562 = vmatmul.f32.gmra.mxu0 %v544
      %v563 = vpop.f32.mrf.mxu0
      %v564 = vadd.f32 %v501, %v563
      %565 = vdwg.mxu0
      %566 = vmatpush.msra.mxu0 0.0
      %567 = vmatpush.msra.mxu0 0.0
      %568 = vmatpush.msra.mxu0 0.0
      %569 = vmatpush.msra.mxu0 0.0
      %570 = vmatpush.msra.mxu0 0.0
      %571 = vmatpush.msra.mxu0 0.0
      %572 = vmatpush.msra.mxu0 0.0
      %573 = vmatpush.msra.mxu0 0.0
      %574 = vmatpush.msra.mxu0 0.0
      %575 = vmatpush.msra.mxu0 0.0
      %576 = vmatpush.msra.mxu0 0.0
      %577 = vmatpush.msra.mxu0 0.0
      %578 = vmatpush.msra.mxu0 0.0
      %579 = vmatpush.msra.mxu0 %v431
      %580 = vmatpush.msra.mxu0 %v428
      %581 = vmatpush.msra.mxu0 %v425
      %582 = vmatmul.f32.gmra.mxu0 %v544
      %v583 = vpop.f32.mrf.mxu0
      %v584 = vadd.f32 %v521, %v583
      %585 = vdwg.mxu0
      %586 = vmatpush.msra.mxu0 0.0
      %587 = vmatpush.msra.mxu0 0.0
      %588 = vmatpush.msra.mxu0 0.0
      %589 = vmatpush.msra.mxu0 0.0
      %590 = vmatpush.msra.mxu0 0.0
      %591 = vmatpush.msra.mxu0 0.0
      %592 = vmatpush.msra.mxu0 0.0
      %593 = vmatpush.msra.mxu0 0.0
      %594 = vmatpush.msra.mxu0 0.0
      %595 = vmatpush.msra.mxu0 0.0
      %596 = vmatpush.msra.mxu0 0.0
      %597 = vmatpush.msra.mxu0 0.0
      %598 = vmatpush.msra.mxu0 0.0
      %599 = vmatpush.msra.mxu0 %v432
      %600 = vmatpush.msra.mxu0 %v429
      %601 = vmatpush.msra.mxu0 %v426
      %602 = vmatmul.f32.gmra.mxu0 %v544
      %v603 = vpop.f32.mrf.mxu0
      %v604 = vadd.f32 %v541, %v603
      %605 = vdwg.mxu0
      %s606 = scalar_lea.vmem %s3, 16
      %v607 = vld [vmem:[%s606] sm:$0xff]
      %608 = vrot.lane.b32.xlu0 %v424, 126
      %v609 = vpop.permute.xlu0 %608
      %610 = vrot.lane.b32.xlu0 %v425, 126
      %v611 = vpop.permute.xlu0 %610
      %612 = vrot.lane.b32.xlu0 %v426, 126
      %v613 = vpop.permute.xlu0 %612
      %614 = vrot.lane.b32.xlu0 %v427, 126
      %v615 = vpop.permute.xlu0 %614
      %616 = vrot.lane.b32.xlu0 %v428, 126
      %v617 = vpop.permute.xlu0 %616
      %618 = vrot.lane.b32.xlu0 %v429, 126
      %v619 = vpop.permute.xlu0 %618
      %620 = vrot.lane.b32.xlu0 %v430, 126
      %v621 = vpop.permute.xlu0 %620
      %622 = vrot.lane.b32.xlu0 %v431, 126
      %v623 = vpop.permute.xlu0 %622
      %624 = vrot.lane.b32.xlu0 %v432, 126
      %v625 = vpop.permute.xlu0 %624
      %vm626 = vcmask 1031168
      %v627 = vsel %vm626, %v609, %v611
      %v628 = vsel %vm626, %v611, %v613
      %v629 = vsel %vm626, %v615, %v617
      %v630 = vsel %vm626, %v617, %v619
      %v631 = vsel %vm626, %v621, %v623
      %v632 = vsel %vm626, %v623, %v625
      %v643 = vsel %vm479, %v607, 0
      %645 = vmatpush.msra.mxu0 0.0
      %646 = vmatpush.msra.mxu0 0.0
      %647 = vmatpush.msra.mxu0 0.0
      %648 = vmatpush.msra.mxu0 0.0
      %649 = vmatpush.msra.mxu0 0.0
      %650 = vmatpush.msra.mxu0 0.0
      %651 = vmatpush.msra.mxu0 0.0
      %652 = vmatpush.msra.mxu0 0.0
      %653 = vmatpush.msra.mxu0 0.0
      %654 = vmatpush.msra.mxu0 0.0
      %655 = vmatpush.msra.mxu0 0.0
      %656 = vmatpush.msra.mxu0 0.0
      %657 = vmatpush.msra.mxu0 0.0
      %658 = vmatpush.msra.mxu0 %v631
      %659 = vmatpush.msra.mxu0 %v629
      %660 = vmatpush.msra.mxu0 %v627
      %661 = vmatmul.f32.gmra.mxu0 %v643
      %v662 = vpop.f32.mrf.mxu0
      %v663 = vadd.f32 0.0, %v662
      %664 = vdwg.mxu0
      %665 = vmatpush.msra.mxu0 0.0
      %666 = vmatpush.msra.mxu0 0.0
      %667 = vmatpush.msra.mxu0 0.0
      %668 = vmatpush.msra.mxu0 0.0
      %669 = vmatpush.msra.mxu0 0.0
      %670 = vmatpush.msra.mxu0 0.0
      %671 = vmatpush.msra.mxu0 0.0
      %672 = vmatpush.msra.mxu0 0.0
      %673 = vmatpush.msra.mxu0 0.0
      %674 = vmatpush.msra.mxu0 0.0
      %675 = vmatpush.msra.mxu0 0.0
      %676 = vmatpush.msra.mxu0 0.0
      %677 = vmatpush.msra.mxu0 0.0
      %678 = vmatpush.msra.mxu0 %v632
      %679 = vmatpush.msra.mxu0 %v630
      %680 = vmatpush.msra.mxu0 %v628
      %681 = vmatmul.f32.gmra.mxu0 %v643
      %v682 = vpop.f32.mrf.mxu0
      %v683 = vadd.f32 0.0, %v682
      %684 = vdwg.mxu0
      %685 = vmatpush.msra.mxu0 0.0
      %686 = vmatpush.msra.mxu0 0.0
      %687 = vmatpush.msra.mxu0 0.0
      %688 = vmatpush.msra.mxu0 0.0
      %689 = vmatpush.msra.mxu0 0.0
      %690 = vmatpush.msra.mxu0 0.0
      %691 = vmatpush.msra.mxu0 0.0
      %692 = vmatpush.msra.mxu0 0.0
      %693 = vmatpush.msra.mxu0 0.0
      %694 = vmatpush.msra.mxu0 0.0
      %695 = vmatpush.msra.mxu0 0.0
      %696 = vmatpush.msra.mxu0 0.0
      %697 = vmatpush.msra.mxu0 0.0
      %698 = vmatpush.msra.mxu0 %v625
      %699 = vmatpush.msra.mxu0 %v619
      %700 = vmatpush.msra.mxu0 %v613
      %701 = vmatmul.f32.gmra.mxu0 %v643
      %v702 = vpop.f32.mrf.mxu0
      %v703 = vadd.f32 0.0, %v702
      %704 = vdwg.mxu0
      %v705 = vadd.f32 %v564, %v663
      %v706 = vadd.f32 %v584, %v683
      %v707 = vadd.f32 %v604, %v703
      %s708 = scalar_lea.vmem %s3, 24
      %v709 = vld [vmem:[%s708] sm:$0xff]
      %710 = vrot.lane.b32.xlu0 %v424, 110
      %v711 = vpop.permute.xlu0 %710
      %712 = vrot.lane.b32.xlu0 %v425, 110
      %v713 = vpop.permute.xlu0 %712
      %714 = vrot.lane.b32.xlu0 %v426, 110
      %v715 = vpop.permute.xlu0 %714
      %716 = vrot.lane.b32.xlu0 %v427, 110
      %v717 = vpop.permute.xlu0 %716
      %718 = vrot.lane.b32.xlu0 %v428, 110
      %v719 = vpop.permute.xlu0 %718
      %720 = vrot.lane.b32.xlu0 %v429, 110
      %v721 = vpop.permute.xlu0 %720
      %722 = vrot.lane.b32.xlu0 %v430, 110
      %v723 = vpop.permute.xlu0 %722
      %724 = vrot.lane.b32.xlu0 %v431, 110
      %v725 = vpop.permute.xlu0 %724
      %726 = vrot.lane.b32.xlu0 %v432, 110
      %v727 = vpop.permute.xlu0 %726
      %vm728 = vcmask 900096
      %v729 = vsel %vm728, %v711, %v713
      %v730 = vsel %vm728, %v713, %v715
      %v731 = vsel %vm728, %v717, %v719
      %v732 = vsel %vm728, %v719, %v721
      %v733 = vsel %vm728, %v723, %v725
      %v734 = vsel %vm728, %v725, %v727
      %v745 = vsel %vm479, %v709, 0
      %747 = vmatpush.msra.mxu0 0.0
      %748 = vmatpush.msra.mxu0 0.0
      %749 = vmatpush.msra.mxu0 0.0
      %750 = vmatpush.msra.mxu0 0.0
      %751 = vmatpush.msra.mxu0 0.0
      %752 = vmatpush.msra.mxu0 0.0
      %753 = vmatpush.msra.mxu0 0.0
      %754 = vmatpush.msra.mxu0 0.0
      %755 = vmatpush.msra.mxu0 0.0
      %756 = vmatpush.msra.mxu0 0.0
      %757 = vmatpush.msra.mxu0 0.0
      %758 = vmatpush.msra.mxu0 0.0
      %759 = vmatpush.msra.mxu0 0.0
      %760 = vmatpush.msra.mxu0 %v733
      %761 = vmatpush.msra.mxu0 %v731
      %762 = vmatpush.msra.mxu0 %v729
      %763 = vmatmul.f32.gmra.mxu0 %v745
      %v764 = vpop.f32.mrf.mxu0
      %v765 = vadd.f32 0.0, %v764
      %766 = vdwg.mxu0
      %767 = vmatpush.msra.mxu0 0.0
      %768 = vmatpush.msra.mxu0 0.0
      %769 = vmatpush.msra.mxu0 0.0
      %770 = vmatpush.msra.mxu0 0.0
      %771 = vmatpush.msra.mxu0 0.0
      %772 = vmatpush.msra.mxu0 0.0
      %773 = vmatpush.msra.mxu0 0.0
      %774 = vmatpush.msra.mxu0 0.0
      %775 = vmatpush.msra.mxu0 0.0
      %776 = vmatpush.msra.mxu0 0.0
      %777 = vmatpush.msra.mxu0 0.0
      %778 = vmatpush.msra.mxu0 0.0
      %779 = vmatpush.msra.mxu0 0.0
      %780 = vmatpush.msra.mxu0 %v734
      %781 = vmatpush.msra.mxu0 %v732
      %782 = vmatpush.msra.mxu0 %v730
      %783 = vmatmul.f32.gmra.mxu0 %v745
      %v784 = vpop.f32.mrf.mxu0
      %v785 = vadd.f32 0.0, %v784
      %786 = vdwg.mxu0
      %787 = vmatpush.msra.mxu0 0.0
      %788 = vmatpush.msra.mxu0 0.0
      %789 = vmatpush.msra.mxu0 0.0
      %790 = vmatpush.msra.mxu0 0.0
      %791 = vmatpush.msra.mxu0 0.0
      %792 = vmatpush.msra.mxu0 0.0
      %793 = vmatpush.msra.mxu0 0.0
      %794 = vmatpush.msra.mxu0 0.0
      %795 = vmatpush.msra.mxu0 0.0
      %796 = vmatpush.msra.mxu0 0.0
      %797 = vmatpush.msra.mxu0 0.0
      %798 = vmatpush.msra.mxu0 0.0
      %799 = vmatpush.msra.mxu0 0.0
      %800 = vmatpush.msra.mxu0 %v727
      %801 = vmatpush.msra.mxu0 %v721
      %802 = vmatpush.msra.mxu0 %v715
      %803 = vmatmul.f32.gmra.mxu0 %v745
      %v804 = vpop.f32.mrf.mxu0
      %v805 = vadd.f32 0.0, %v804
      %806 = vdwg.mxu0
      %v807 = vadd.f32 %v705, %v765
      %v808 = vadd.f32 %v706, %v785
      %v809 = vadd.f32 %v707, %v805
      %s810 = scalar_lea.vmem %s3, 32
      %v811 = vld [vmem:[%s810] sm:$0xff]
      %812 = vrot.lane.b32.xlu0 %v424, 109
      %v813 = vpop.permute.xlu0 %812
      %814 = vrot.lane.b32.xlu0 %v425, 109
      %v815 = vpop.permute.xlu0 %814
      %816 = vrot.lane.b32.xlu0 %v426, 109
      %v817 = vpop.permute.xlu0 %816
      %818 = vrot.lane.b32.xlu0 %v427, 109
      %v819 = vpop.permute.xlu0 %818
      %820 = vrot.lane.b32.xlu0 %v428, 109
      %v821 = vpop.permute.xlu0 %820
      %822 = vrot.lane.b32.xlu0 %v429, 109
      %v823 = vpop.permute.xlu0 %822
      %824 = vrot.lane.b32.xlu0 %v430, 109
      %v825 = vpop.permute.xlu0 %824
      %826 = vrot.lane.b32.xlu0 %v431, 109
      %v827 = vpop.permute.xlu0 %826
      %828 = vrot.lane.b32.xlu0 %v432, 109
      %v829 = vpop.permute.xlu0 %828
      %vm830 = vcmask 891904
      %v831 = vsel %vm830, %v813, %v815
      %v832 = vsel %vm830, %v815, %v817
      %v833 = vsel %vm830, %v819, %v821
      %v834 = vsel %vm830, %v821, %v823
      %v835 = vsel %vm830, %v825, %v827
      %v836 = vsel %vm830, %v827, %v829
      %v847 = vsel %vm479, %v811, 0
      %849 = vmatpush.msra.mxu0 0.0
      %850 = vmatpush.msra.mxu0 0.0
      %851 = vmatpush.msra.mxu0 0.0
      %852 = vmatpush.msra.mxu0 0.0
      %853 = vmatpush.msra.mxu0 0.0
      %854 = vmatpush.msra.mxu0 0.0
      %855 = vmatpush.msra.mxu0 0.0
      %856 = vmatpush.msra.mxu0 0.0
      %857 = vmatpush.msra.mxu0 0.0
      %858 = vmatpush.msra.mxu0 0.0
      %859 = vmatpush.msra.mxu0 0.0
      %860 = vmatpush.msra.mxu0 0.0
      %861 = vmatpush.msra.mxu0 0.0
      %862 = vmatpush.msra.mxu0 %v835
      %863 = vmatpush.msra.mxu0 %v833
      %864 = vmatpush.msra.mxu0 %v831
      %865 = vmatmul.f32.gmra.mxu0 %v847
      %v866 = vpop.f32.mrf.mxu0
      %v867 = vadd.f32 0.0, %v866
      %868 = vdwg.mxu0
      %869 = vmatpush.msra.mxu0 0.0
      %870 = vmatpush.msra.mxu0 0.0
      %871 = vmatpush.msra.mxu0 0.0
      %872 = vmatpush.msra.mxu0 0.0
      %873 = vmatpush.msra.mxu0 0.0
      %874 = vmatpush.msra.mxu0 0.0
      %875 = vmatpush.msra.mxu0 0.0
      %876 = vmatpush.msra.mxu0 0.0
      %877 = vmatpush.msra.mxu0 0.0
      %878 = vmatpush.msra.mxu0 0.0
      %879 = vmatpush.msra.mxu0 0.0
      %880 = vmatpush.msra.mxu0 0.0
      %881 = vmatpush.msra.mxu0 0.0
      %882 = vmatpush.msra.mxu0 %v836
      %883 = vmatpush.msra.mxu0 %v834
      %884 = vmatpush.msra.mxu0 %v832
      %885 = vmatmul.f32.gmra.mxu0 %v847
      %v886 = vpop.f32.mrf.mxu0
      %v887 = vadd.f32 0.0, %v886
      %888 = vdwg.mxu0
      %889 = vmatpush.msra.mxu0 0.0
      %890 = vmatpush.msra.mxu0 0.0
      %891 = vmatpush.msra.mxu0 0.0
      %892 = vmatpush.msra.mxu0 0.0
      %893 = vmatpush.msra.mxu0 0.0
      %894 = vmatpush.msra.mxu0 0.0
      %895 = vmatpush.msra.mxu0 0.0
      %896 = vmatpush.msra.mxu0 0.0
      %897 = vmatpush.msra.mxu0 0.0
      %898 = vmatpush.msra.mxu0 0.0
      %899 = vmatpush.msra.mxu0 0.0
      %900 = vmatpush.msra.mxu0 0.0
      %901 = vmatpush.msra.mxu0 0.0
      %902 = vmatpush.msra.mxu0 %v829
      %903 = vmatpush.msra.mxu0 %v823
      %904 = vmatpush.msra.mxu0 %v817
      %905 = vmatmul.f32.gmra.mxu0 %v847
      %v906 = vpop.f32.mrf.mxu0
      %v907 = vadd.f32 0.0, %v906
      %908 = vdwg.mxu0
      %v909 = vadd.f32 %v807, %v867
      %v910 = vadd.f32 %v808, %v887
      %v911 = vadd.f32 %v809, %v907
      %s912 = scalar_lea.vmem %s3, 40
      %v913 = vld [vmem:[%s912] sm:$0xff]
      %914 = vrot.lane.b32.xlu0 %v424, 108
      %v915 = vpop.permute.xlu0 %914
      %916 = vrot.lane.b32.xlu0 %v425, 108
      %v917 = vpop.permute.xlu0 %916
      %918 = vrot.lane.b32.xlu0 %v426, 108
      %v919 = vpop.permute.xlu0 %918
      %920 = vrot.lane.b32.xlu0 %v427, 108
      %v921 = vpop.permute.xlu0 %920
      %922 = vrot.lane.b32.xlu0 %v428, 108
      %v923 = vpop.permute.xlu0 %922
      %924 = vrot.lane.b32.xlu0 %v429, 108
      %v925 = vpop.permute.xlu0 %924
      %926 = vrot.lane.b32.xlu0 %v430, 108
      %v927 = vpop.permute.xlu0 %926
      %928 = vrot.lane.b32.xlu0 %v431, 108
      %v929 = vpop.permute.xlu0 %928
      %930 = vrot.lane.b32.xlu0 %v432, 108
      %v931 = vpop.permute.xlu0 %930
      %vm932 = vcmask 883712
      %v933 = vsel %vm932, %v915, %v917
      %v934 = vsel %vm932, %v917, %v919
      %v935 = vsel %vm932, %v921, %v923
      %v936 = vsel %vm932, %v923, %v925
      %v937 = vsel %vm932, %v927, %v929
      %v938 = vsel %vm932, %v929, %v931
      %v949 = vsel %vm479, %v913, 0
      %951 = vmatpush.msra.mxu0 0.0
      %952 = vmatpush.msra.mxu0 0.0
      %953 = vmatpush.msra.mxu0 0.0
      %954 = vmatpush.msra.mxu0 0.0
      %955 = vmatpush.msra.mxu0 0.0
      %956 = vmatpush.msra.mxu0 0.0
      %957 = vmatpush.msra.mxu0 0.0
      %958 = vmatpush.msra.mxu0 0.0
      %959 = vmatpush.msra.mxu0 0.0
      %960 = vmatpush.msra.mxu0 0.0
      %961 = vmatpush.msra.mxu0 0.0
      %962 = vmatpush.msra.mxu0 0.0
      %963 = vmatpush.msra.mxu0 0.0
      %964 = vmatpush.msra.mxu0 %v937
      %965 = vmatpush.msra.mxu0 %v935
      %966 = vmatpush.msra.mxu0 %v933
      %967 = vmatmul.f32.gmra.mxu0 %v949
      %v968 = vpop.f32.mrf.mxu0
      %v969 = vadd.f32 0.0, %v968
      %970 = vdwg.mxu0
      %971 = vmatpush.msra.mxu0 0.0
      %972 = vmatpush.msra.mxu0 0.0
      %973 = vmatpush.msra.mxu0 0.0
      %974 = vmatpush.msra.mxu0 0.0
      %975 = vmatpush.msra.mxu0 0.0
      %976 = vmatpush.msra.mxu0 0.0
      %977 = vmatpush.msra.mxu0 0.0
      %978 = vmatpush.msra.mxu0 0.0
      %979 = vmatpush.msra.mxu0 0.0
      %980 = vmatpush.msra.mxu0 0.0
      %981 = vmatpush.msra.mxu0 0.0
      %982 = vmatpush.msra.mxu0 0.0
      %983 = vmatpush.msra.mxu0 0.0
      %984 = vmatpush.msra.mxu0 %v938
      %985 = vmatpush.msra.mxu0 %v936
      %986 = vmatpush.msra.mxu0 %v934
      %987 = vmatmul.f32.gmra.mxu0 %v949
      %v988 = vpop.f32.mrf.mxu0
      %v989 = vadd.f32 0.0, %v988
      %990 = vdwg.mxu0
      %991 = vmatpush.msra.mxu0 0.0
      %992 = vmatpush.msra.mxu0 0.0
      %993 = vmatpush.msra.mxu0 0.0
      %994 = vmatpush.msra.mxu0 0.0
      %995 = vmatpush.msra.mxu0 0.0
      %996 = vmatpush.msra.mxu0 0.0
      %997 = vmatpush.msra.mxu0 0.0
      %998 = vmatpush.msra.mxu0 0.0
      %999 = vmatpush.msra.mxu0 0.0
      %1000 = vmatpush.msra.mxu0 0.0
      %1001 = vmatpush.msra.mxu0 0.0
      %1002 = vmatpush.msra.mxu0 0.0
      %1003 = vmatpush.msra.mxu0 0.0
      %1004 = vmatpush.msra.mxu0 %v931
      %1005 = vmatpush.msra.mxu0 %v925
      %1006 = vmatpush.msra.mxu0 %v919
      %1007 = vmatmul.f32.gmra.mxu0 %v949
      %v1008 = vpop.f32.mrf.mxu0
      %v1009 = vadd.f32 0.0, %v1008
      %1010 = vdwg.mxu0
      %v1011 = vadd.f32 %v909, %v969
      %v1012 = vadd.f32 %v910, %v989
      %v1013 = vadd.f32 %v911, %v1009
      %s1014 = scalar_lea.vmem %s3, 48
      %v1015 = vld [vmem:[%s1014] sm:$0xff]
      %1016 = vrot.lane.b32.xlu0 %v424, 92
      %v1017 = vpop.permute.xlu0 %1016
      %1018 = vrot.lane.b32.xlu0 %v425, 92
      %v1019 = vpop.permute.xlu0 %1018
      %1020 = vrot.lane.b32.xlu0 %v426, 92
      %v1021 = vpop.permute.xlu0 %1020
      %1022 = vrot.lane.b32.xlu0 %v427, 92
      %v1023 = vpop.permute.xlu0 %1022
      %1024 = vrot.lane.b32.xlu0 %v428, 92
      %v1025 = vpop.permute.xlu0 %1024
      %1026 = vrot.lane.b32.xlu0 %v429, 92
      %v1027 = vpop.permute.xlu0 %1026
      %1028 = vrot.lane.b32.xlu0 %v430, 92
      %v1029 = vpop.permute.xlu0 %1028
      %1030 = vrot.lane.b32.xlu0 %v431, 92
      %v1031 = vpop.permute.xlu0 %1030
      %1032 = vrot.lane.b32.xlu0 %v432, 92
      %v1033 = vpop.permute.xlu0 %1032
      %vm1034 = vcmask 752640
      %v1035 = vsel %vm1034, %v1017, %v1019
      %v1036 = vsel %vm1034, %v1019, %v1021
      %v1037 = vsel %vm1034, %v1023, %v1025
      %v1038 = vsel %vm1034, %v1025, %v1027
      %v1039 = vsel %vm1034, %v1029, %v1031
      %v1040 = vsel %vm1034, %v1031, %v1033
      %v1051 = vsel %vm479, %v1015, 0
      %1053 = vmatpush.msra.mxu0 0.0
      %1054 = vmatpush.msra.mxu0 0.0
      %1055 = vmatpush.msra.mxu0 0.0
      %1056 = vmatpush.msra.mxu0 0.0
      %1057 = vmatpush.msra.mxu0 0.0
      %1058 = vmatpush.msra.mxu0 0.0
      %1059 = vmatpush.msra.mxu0 0.0
      %1060 = vmatpush.msra.mxu0 0.0
      %1061 = vmatpush.msra.mxu0 0.0
      %1062 = vmatpush.msra.mxu0 0.0
      %1063 = vmatpush.msra.mxu0 0.0
      %1064 = vmatpush.msra.mxu0 0.0
      %1065 = vmatpush.msra.mxu0 0.0
      %1066 = vmatpush.msra.mxu0 %v1039
      %1067 = vmatpush.msra.mxu0 %v1037
      %1068 = vmatpush.msra.mxu0 %v1035
      %1069 = vmatmul.f32.gmra.mxu0 %v1051
      %v1070 = vpop.f32.mrf.mxu0
      %v1071 = vadd.f32 0.0, %v1070
      %1072 = vdwg.mxu0
      %1073 = vmatpush.msra.mxu0 0.0
      %1074 = vmatpush.msra.mxu0 0.0
      %1075 = vmatpush.msra.mxu0 0.0
      %1076 = vmatpush.msra.mxu0 0.0
      %1077 = vmatpush.msra.mxu0 0.0
      %1078 = vmatpush.msra.mxu0 0.0
      %1079 = vmatpush.msra.mxu0 0.0
      %1080 = vmatpush.msra.mxu0 0.0
      %1081 = vmatpush.msra.mxu0 0.0
      %1082 = vmatpush.msra.mxu0 0.0
      %1083 = vmatpush.msra.mxu0 0.0
      %1084 = vmatpush.msra.mxu0 0.0
      %1085 = vmatpush.msra.mxu0 0.0
      %1086 = vmatpush.msra.mxu0 %v1040
      %1087 = vmatpush.msra.mxu0 %v1038
      %1088 = vmatpush.msra.mxu0 %v1036
      %1089 = vmatmul.f32.gmra.mxu0 %v1051
      %v1090 = vpop.f32.mrf.mxu0
      %v1091 = vadd.f32 0.0, %v1090
      %1092 = vdwg.mxu0
      %1093 = vmatpush.msra.mxu0 0.0
      %1094 = vmatpush.msra.mxu0 0.0
      %1095 = vmatpush.msra.mxu0 0.0
      %1096 = vmatpush.msra.mxu0 0.0
      %1097 = vmatpush.msra.mxu0 0.0
      %1098 = vmatpush.msra.mxu0 0.0
      %1099 = vmatpush.msra.mxu0 0.0
      %1100 = vmatpush.msra.mxu0 0.0
      %1101 = vmatpush.msra.mxu0 0.0
      %1102 = vmatpush.msra.mxu0 0.0
      %1103 = vmatpush.msra.mxu0 0.0
      %1104 = vmatpush.msra.mxu0 0.0
      %1105 = vmatpush.msra.mxu0 0.0
      %1106 = vmatpush.msra.mxu0 %v1033
      %1107 = vmatpush.msra.mxu0 %v1027
      %1108 = vmatpush.msra.mxu0 %v1021
      %1109 = vmatmul.f32.gmra.mxu0 %v1051
      %v1110 = vpop.f32.mrf.mxu0
      %v1111 = vadd.f32 0.0, %v1110
      %1112 = vdwg.mxu0
      %v1113 = vadd.f32 %v1011, %v1071
      %v1114 = vadd.f32 %v1012, %v1091
      %v1115 = vadd.f32 %v1013, %v1111
      %s1116 = scalar_lea.vmem %s3, 56
      %v1117 = vld [vmem:[%s1116] sm:$0xff]
      %1118 = vrot.lane.b32.xlu0 %v424, 91
      %v1119 = vpop.permute.xlu0 %1118
      %1120 = vrot.lane.b32.xlu0 %v425, 91
      %v1121 = vpop.permute.xlu0 %1120
      %1122 = vrot.lane.b32.xlu0 %v426, 91
      %v1123 = vpop.permute.xlu0 %1122
      %1124 = vrot.lane.b32.xlu0 %v427, 91
      %v1125 = vpop.permute.xlu0 %1124
      %1126 = vrot.lane.b32.xlu0 %v428, 91
      %v1127 = vpop.permute.xlu0 %1126
      %1128 = vrot.lane.b32.xlu0 %v429, 91
      %v1129 = vpop.permute.xlu0 %1128
      %1130 = vrot.lane.b32.xlu0 %v430, 91
      %v1131 = vpop.permute.xlu0 %1130
      %1132 = vrot.lane.b32.xlu0 %v431, 91
      %v1133 = vpop.permute.xlu0 %1132
      %1134 = vrot.lane.b32.xlu0 %v432, 91
      %v1135 = vpop.permute.xlu0 %1134
      %vm1136 = vcmask 744448
      %v1137 = vsel %vm1136, %v1119, %v1121
      %v1138 = vsel %vm1136, %v1121, %v1123
      %v1139 = vsel %vm1136, %v1125, %v1127
      %v1140 = vsel %vm1136, %v1127, %v1129
      %v1141 = vsel %vm1136, %v1131, %v1133
      %v1142 = vsel %vm1136, %v1133, %v1135
      %v1153 = vsel %vm479, %v1117, 0
      %1155 = vmatpush.msra.mxu0 0.0
      %1156 = vmatpush.msra.mxu0 0.0
      %1157 = vmatpush.msra.mxu0 0.0
      %1158 = vmatpush.msra.mxu0 0.0
      %1159 = vmatpush.msra.mxu0 0.0
      %1160 = vmatpush.msra.mxu0 0.0
      %1161 = vmatpush.msra.mxu0 0.0
      %1162 = vmatpush.msra.mxu0 0.0
      %1163 = vmatpush.msra.mxu0 0.0
      %1164 = vmatpush.msra.mxu0 0.0
      %1165 = vmatpush.msra.mxu0 0.0
      %1166 = vmatpush.msra.mxu0 0.0
      %1167 = vmatpush.msra.mxu0 0.0
      %1168 = vmatpush.msra.mxu0 %v1141
      %1169 = vmatpush.msra.mxu0 %v1139
      %1170 = vmatpush.msra.mxu0 %v1137
      %1171 = vmatmul.f32.gmra.mxu0 %v1153
      %v1172 = vpop.f32.mrf.mxu0
      %v1173 = vadd.f32 0.0, %v1172
      %1174 = vdwg.mxu0
      %1175 = vmatpush.msra.mxu0 0.0
      %1176 = vmatpush.msra.mxu0 0.0
      %1177 = vmatpush.msra.mxu0 0.0
      %1178 = vmatpush.msra.mxu0 0.0
      %1179 = vmatpush.msra.mxu0 0.0
      %1180 = vmatpush.msra.mxu0 0.0
      %1181 = vmatpush.msra.mxu0 0.0
      %1182 = vmatpush.msra.mxu0 0.0
      %1183 = vmatpush.msra.mxu0 0.0
      %1184 = vmatpush.msra.mxu0 0.0
      %1185 = vmatpush.msra.mxu0 0.0
      %1186 = vmatpush.msra.mxu0 0.0
      %1187 = vmatpush.msra.mxu0 0.0
      %1188 = vmatpush.msra.mxu0 %v1142
      %1189 = vmatpush.msra.mxu0 %v1140
      %1190 = vmatpush.msra.mxu0 %v1138
      %1191 = vmatmul.f32.gmra.mxu0 %v1153
      %v1192 = vpop.f32.mrf.mxu0
      %v1193 = vadd.f32 0.0, %v1192
      %1194 = vdwg.mxu0
      %1195 = vmatpush.msra.mxu0 0.0
      %1196 = vmatpush.msra.mxu0 0.0
      %1197 = vmatpush.msra.mxu0 0.0
      %1198 = vmatpush.msra.mxu0 0.0
      %1199 = vmatpush.msra.mxu0 0.0
      %1200 = vmatpush.msra.mxu0 0.0
      %1201 = vmatpush.msra.mxu0 0.0
      %1202 = vmatpush.msra.mxu0 0.0
      %1203 = vmatpush.msra.mxu0 0.0
      %1204 = vmatpush.msra.mxu0 0.0
      %1205 = vmatpush.msra.mxu0 0.0
      %1206 = vmatpush.msra.mxu0 0.0
      %1207 = vmatpush.msra.mxu0 0.0
      %1208 = vmatpush.msra.mxu0 %v1135
      %1209 = vmatpush.msra.mxu0 %v1129
      %1210 = vmatpush.msra.mxu0 %v1123
      %1211 = vmatmul.f32.gmra.mxu0 %v1153
      %v1212 = vpop.f32.mrf.mxu0
      %v1213 = vadd.f32 0.0, %v1212
      %1214 = vdwg.mxu0
      %v1215 = vadd.f32 %v1113, %v1173
      %v1216 = vadd.f32 %v1114, %v1193
      %v1217 = vadd.f32 %v1115, %v1213
      %s1218 = scalar_lea.vmem %s3, 64
      %v1219 = vld [vmem:[%s1218] sm:$0xff]
      %1220 = vrot.lane.b32.xlu0 %v424, 90
      %v1221 = vpop.permute.xlu0 %1220
      %1222 = vrot.lane.b32.xlu0 %v425, 90
      %v1223 = vpop.permute.xlu0 %1222
      %1224 = vrot.lane.b32.xlu0 %v426, 90
      %v1225 = vpop.permute.xlu0 %1224
      %1226 = vrot.lane.b32.xlu0 %v427, 90
      %v1227 = vpop.permute.xlu0 %1226
      %1228 = vrot.lane.b32.xlu0 %v428, 90
      %v1229 = vpop.permute.xlu0 %1228
      %1230 = vrot.lane.b32.xlu0 %v429, 90
      %v1231 = vpop.permute.xlu0 %1230
      %1232 = vrot.lane.b32.xlu0 %v430, 90
      %v1233 = vpop.permute.xlu0 %1232
      %1234 = vrot.lane.b32.xlu0 %v431, 90
      %v1235 = vpop.permute.xlu0 %1234
      %1236 = vrot.lane.b32.xlu0 %v432, 90
      %v1237 = vpop.permute.xlu0 %1236
      %vm1238 = vcmask 736256
      %v1239 = vsel %vm1238, %v1221, %v1223
      %v1240 = vsel %vm1238, %v1223, %v1225
      %v1241 = vsel %vm1238, %v1227, %v1229
      %v1242 = vsel %vm1238, %v1229, %v1231
      %v1243 = vsel %vm1238, %v1233, %v1235
      %v1244 = vsel %vm1238, %v1235, %v1237
      %v1255 = vsel %vm479, %v1219, 0
      %1257 = vmatpush.msra.mxu0 0.0
      %1258 = vmatpush.msra.mxu0 0.0
      %1259 = vmatpush.msra.mxu0 0.0
      %1260 = vmatpush.msra.mxu0 0.0
      %1261 = vmatpush.msra.mxu0 0.0
      %1262 = vmatpush.msra.mxu0 0.0
      %1263 = vmatpush.msra.mxu0 0.0
      %1264 = vmatpush.msra.mxu0 0.0
      %1265 = vmatpush.msra.mxu0 0.0
      %1266 = vmatpush.msra.mxu0 0.0
      %1267 = vmatpush.msra.mxu0 0.0
      %1268 = vmatpush.msra.mxu0 0.0
      %1269 = vmatpush.msra.mxu0 0.0
      %1270 = vmatpush.msra.mxu0 %v1243
      %1271 = vmatpush.msra.mxu0 %v1241
      %1272 = vmatpush.msra.mxu0 %v1239
      %1273 = vmatmul.f32.gmra.mxu0 %v1255
      %v1274 = vpop.f32.mrf.mxu0
      %v1275 = vadd.f32 0.0, %v1274
      %1276 = vdwg.mxu0
      %1277 = vmatpush.msra.mxu0 0.0
      %1278 = vmatpush.msra.mxu0 0.0
      %1279 = vmatpush.msra.mxu0 0.0
      %1280 = vmatpush.msra.mxu0 0.0
      %1281 = vmatpush.msra.mxu0 0.0
      %1282 = vmatpush.msra.mxu0 0.0
      %1283 = vmatpush.msra.mxu0 0.0
      %1284 = vmatpush.msra.mxu0 0.0
      %1285 = vmatpush.msra.mxu0 0.0
      %1286 = vmatpush.msra.mxu0 0.0
      %1287 = vmatpush.msra.mxu0 0.0
      %1288 = vmatpush.msra.mxu0 0.0
      %1289 = vmatpush.msra.mxu0 0.0
      %1290 = vmatpush.msra.mxu0 %v1244
      %1291 = vmatpush.msra.mxu0 %v1242
      %1292 = vmatpush.msra.mxu0 %v1240
      %1293 = vmatmul.f32.gmra.mxu0 %v1255
      %v1294 = vpop.f32.mrf.mxu0
      %v1295 = vadd.f32 0.0, %v1294
      %1296 = vdwg.mxu0
      %1297 = vmatpush.msra.mxu0 0.0
      %1298 = vmatpush.msra.mxu0 0.0
      %1299 = vmatpush.msra.mxu0 0.0
      %1300 = vmatpush.msra.mxu0 0.0
      %1301 = vmatpush.msra.mxu0 0.0
      %1302 = vmatpush.msra.mxu0 0.0
      %1303 = vmatpush.msra.mxu0 0.0
      %1304 = vmatpush.msra.mxu0 0.0
      %1305 = vmatpush.msra.mxu0 0.0
      %1306 = vmatpush.msra.mxu0 0.0
      %1307 = vmatpush.msra.mxu0 0.0
      %1308 = vmatpush.msra.mxu0 0.0
      %1309 = vmatpush.msra.mxu0 0.0
      %1310 = vmatpush.msra.mxu0 %v1237
      %1311 = vmatpush.msra.mxu0 %v1231
      %1312 = vmatpush.msra.mxu0 %v1225
      %1313 = vmatmul.f32.gmra.mxu0 %v1255
      %v1314 = vpop.f32.mrf.mxu0
      %v1315 = vadd.f32 0.0, %v1314
      %1316 = vdwg.mxu0
      %v1317 = vadd.f32 %v1215, %v1275
      %v1318 = vadd.f32 %v1216, %v1295
      %v1319 = vadd.f32 %v1217, %v1315
      %v1320 = vld [vmem:[%s4] sm:$0xff]
      %1322 = vset.pattern.permute.xlu0 0
      %1323 = vperm.xlu0 %1322, %v1320
      %v1324 = vpop.permute.xlu0 %1323
      %v1326 = vadd.f32 %v1317, %v1324
      %v1327 = vadd.f32 %v1318, %v1324
      %v1328 = vadd.f32 %v1319, %v1324
      %v1329 = vmax.f32 %v1326, 0.0
      %v1330 = vmax.f32 %v1327, 0.0
      %v1331 = vmax.f32 %v1328, 0.0
      %v1333 = vperm.slane %v423, 0
      %v1334 = vperm.slane %v423, 1
      %v1335 = vperm.slane %v423, 2
      %v1339 = vmul.f32 %v1329, %v1333
      %v1340 = vmul.f32 %v1330, %v1334
      %v1341 = vmul.f32 %v1331, %v1335
      %1345 = vrot.lane.b32.xlu0 %v1339, 19
      %v1346 = vpop.permute.xlu0 %1345
      %1347 = vrot.lane.b32.xlu0 %v1340, 19
      %v1348 = vpop.permute.xlu0 %1347
      %1349 = vrot.lane.b32.xlu0 %v1341, 19
      %v1350 = vpop.permute.xlu0 %1349
      %v1351 = vsel %vm353, %v1346, %v1348
      %v1352 = vsel %vm353, %v1348, %v1350
      %1356 = vst.msk [vmem:[#allocation2] sm:$0xff] %vm395, %v1346
      %1357 = vst [vmem:[#allocation2 + $0x8] sm:$0xff] %v1351
      %1358 = vst.msk [vmem:[#allocation2 + $0x10] sm:$0xff] %vm398, %v1352
      %v1359 = vld [vmem:[#allocation2] sm:$0xff]
      %v1360 = vld [vmem:[#allocation2 + $0x8] sm:$0xff]
      %v1361 = vld [vmem:[#allocation2 + $0x10] sm:$0xff]
      %v1362 = vld [vmem:[%s5] sm:$0xff]
      %s1363 = scalar_lea.vmem %s5, 8
      %v1364 = vld [vmem:[%s1363] sm:$0xff]
      %1368 = vrot.lane.b32.xlu0 %v1359, 127
      %v1369 = vpop.permute.xlu0 %1368
      %1370 = vrot.lane.b32.xlu0 %v1360, 127
      %v1371 = vpop.permute.xlu0 %1370
      %1372 = vrot.lane.b32.xlu0 %v1361, 127
      %v1373 = vpop.permute.xlu0 %1372
      %v1374 = vsel %vm463, %v1369, %v1371
      %v1375 = vsel %vm463, %v1371, %v1373
      %vm1379 = vcmask 64512
      %v1381 = vsel %vm1379, %v1364, 0
      %1383 = vmatpush.msra.mxu0 0.0
      %1384 = vmatpush.msra.mxu0 0.0
      %1385 = vmatpush.msra.mxu0 0.0
      %1386 = vmatpush.msra.mxu0 0.0
      %1387 = vmatpush.msra.mxu0 0.0
      %1388 = vmatpush.msra.mxu0 0.0
      %1389 = vmatpush.msra.mxu0 0.0
      %1390 = vmatpush.msra.mxu0 0.0
      %1391 = vmatpush.msra.mxu0 0.0
      %1392 = vmatpush.msra.mxu0 0.0
      %1393 = vmatpush.msra.mxu0 0.0
      %1394 = vmatpush.msra.mxu0 0.0
      %1395 = vmatpush.msra.mxu0 0.0
      %1396 = vmatpush.msra.mxu0 0.0
      %1397 = vmatpush.msra.mxu0 0.0
      %1398 = vmatpush.msra.mxu0 %v1374
      %1399 = vmatmul.f32.gmra.mxu0 %v1381
      %v1400 = vpop.f32.mrf.mxu0
      %v1401 = vadd.f32 0.0, %v1400
      %1402 = vdwg.mxu0
      %1403 = vmatpush.msra.mxu0 0.0
      %1404 = vmatpush.msra.mxu0 0.0
      %1405 = vmatpush.msra.mxu0 0.0
      %1406 = vmatpush.msra.mxu0 0.0
      %1407 = vmatpush.msra.mxu0 0.0
      %1408 = vmatpush.msra.mxu0 0.0
      %1409 = vmatpush.msra.mxu0 0.0
      %1410 = vmatpush.msra.mxu0 0.0
      %1411 = vmatpush.msra.mxu0 0.0
      %1412 = vmatpush.msra.mxu0 0.0
      %1413 = vmatpush.msra.mxu0 0.0
      %1414 = vmatpush.msra.mxu0 0.0
      %1415 = vmatpush.msra.mxu0 0.0
      %1416 = vmatpush.msra.mxu0 0.0
      %1417 = vmatpush.msra.mxu0 0.0
      %1418 = vmatpush.msra.mxu0 %v1375
      %1419 = vmatmul.f32.gmra.mxu0 %v1381
      %v1420 = vpop.f32.mrf.mxu0
      %v1421 = vadd.f32 0.0, %v1420
      %1422 = vdwg.mxu0
      %1423 = vmatpush.msra.mxu0 0.0
      %1424 = vmatpush.msra.mxu0 0.0
      %1425 = vmatpush.msra.mxu0 0.0
      %1426 = vmatpush.msra.mxu0 0.0
      %1427 = vmatpush.msra.mxu0 0.0
      %1428 = vmatpush.msra.mxu0 0.0
      %1429 = vmatpush.msra.mxu0 0.0
      %1430 = vmatpush.msra.mxu0 0.0
      %1431 = vmatpush.msra.mxu0 0.0
      %1432 = vmatpush.msra.mxu0 0.0
      %1433 = vmatpush.msra.mxu0 0.0
      %1434 = vmatpush.msra.mxu0 0.0
      %1435 = vmatpush.msra.mxu0 0.0
      %1436 = vmatpush.msra.mxu0 0.0
      %1437 = vmatpush.msra.mxu0 0.0
      %1438 = vmatpush.msra.mxu0 %v1373
      %1439 = vmatmul.f32.gmra.mxu0 %v1381
      %v1440 = vpop.f32.mrf.mxu0
      %v1441 = vadd.f32 0.0, %v1440
      %1442 = vdwg.mxu0
      %v1444 = vsel %vm1379, %v1362, 0
      %1446 = vmatpush.msra.mxu0 0.0
      %1447 = vmatpush.msra.mxu0 0.0
      %1448 = vmatpush.msra.mxu0 0.0
      %1449 = vmatpush.msra.mxu0 0.0
      %1450 = vmatpush.msra.mxu0 0.0
      %1451 = vmatpush.msra.mxu0 0.0
      %1452 = vmatpush.msra.mxu0 0.0
      %1453 = vmatpush.msra.mxu0 0.0
      %1454 = vmatpush.msra.mxu0 0.0
      %1455 = vmatpush.msra.mxu0 0.0
      %1456 = vmatpush.msra.mxu0 0.0
      %1457 = vmatpush.msra.mxu0 0.0
      %1458 = vmatpush.msra.mxu0 0.0
      %1459 = vmatpush.msra.mxu0 0.0
      %1460 = vmatpush.msra.mxu0 0.0
      %1461 = vmatpush.msra.mxu0 %v1359
      %1462 = vmatmul.f32.gmra.mxu0 %v1444
      %v1463 = vpop.f32.mrf.mxu0
      %v1464 = vadd.f32 %v1401, %v1463
      %1465 = vdwg.mxu0
      %1466 = vmatpush.msra.mxu0 0.0
      %1467 = vmatpush.msra.mxu0 0.0
      %1468 = vmatpush.msra.mxu0 0.0
      %1469 = vmatpush.msra.mxu0 0.0
      %1470 = vmatpush.msra.mxu0 0.0
      %1471 = vmatpush.msra.mxu0 0.0
      %1472 = vmatpush.msra.mxu0 0.0
      %1473 = vmatpush.msra.mxu0 0.0
      %1474 = vmatpush.msra.mxu0 0.0
      %1475 = vmatpush.msra.mxu0 0.0
      %1476 = vmatpush.msra.mxu0 0.0
      %1477 = vmatpush.msra.mxu0 0.0
      %1478 = vmatpush.msra.mxu0 0.0
      %1479 = vmatpush.msra.mxu0 0.0
      %1480 = vmatpush.msra.mxu0 0.0
      %1481 = vmatpush.msra.mxu0 %v1360
      %1482 = vmatmul.f32.gmra.mxu0 %v1444
      %v1483 = vpop.f32.mrf.mxu0
      %v1484 = vadd.f32 %v1421, %v1483
      %1485 = vdwg.mxu0
      %1486 = vmatpush.msra.mxu0 0.0
      %1487 = vmatpush.msra.mxu0 0.0
      %1488 = vmatpush.msra.mxu0 0.0
      %1489 = vmatpush.msra.mxu0 0.0
      %1490 = vmatpush.msra.mxu0 0.0
      %1491 = vmatpush.msra.mxu0 0.0
      %1492 = vmatpush.msra.mxu0 0.0
      %1493 = vmatpush.msra.mxu0 0.0
      %1494 = vmatpush.msra.mxu0 0.0
      %1495 = vmatpush.msra.mxu0 0.0
      %1496 = vmatpush.msra.mxu0 0.0
      %1497 = vmatpush.msra.mxu0 0.0
      %1498 = vmatpush.msra.mxu0 0.0
      %1499 = vmatpush.msra.mxu0 0.0
      %1500 = vmatpush.msra.mxu0 0.0
      %1501 = vmatpush.msra.mxu0 %v1361
      %1502 = vmatmul.f32.gmra.mxu0 %v1444
      %v1503 = vpop.f32.mrf.mxu0
      %v1504 = vadd.f32 %v1441, %v1503
      %1505 = vdwg.mxu0
      %s1506 = scalar_lea.vmem %s5, 16
      %v1507 = vld [vmem:[%s1506] sm:$0xff]
      %1508 = vrot.lane.b32.xlu0 %v1359, 126
      %v1509 = vpop.permute.xlu0 %1508
      %1510 = vrot.lane.b32.xlu0 %v1360, 126
      %v1511 = vpop.permute.xlu0 %1510
      %1512 = vrot.lane.b32.xlu0 %v1361, 126
      %v1513 = vpop.permute.xlu0 %1512
      %v1514 = vsel %vm626, %v1509, %v1511
      %v1515 = vsel %vm626, %v1511, %v1513
      %v1520 = vsel %vm1379, %v1507, 0
      %1522 = vmatpush.msra.mxu0 0.0
      %1523 = vmatpush.msra.mxu0 0.0
      %1524 = vmatpush.msra.mxu0 0.0
      %1525 = vmatpush.msra.mxu0 0.0
      %1526 = vmatpush.msra.mxu0 0.0
      %1527 = vmatpush.msra.mxu0 0.0
      %1528 = vmatpush.msra.mxu0 0.0
      %1529 = vmatpush.msra.mxu0 0.0
      %1530 = vmatpush.msra.mxu0 0.0
      %1531 = vmatpush.msra.mxu0 0.0
      %1532 = vmatpush.msra.mxu0 0.0
      %1533 = vmatpush.msra.mxu0 0.0
      %1534 = vmatpush.msra.mxu0 0.0
      %1535 = vmatpush.msra.mxu0 0.0
      %1536 = vmatpush.msra.mxu0 0.0
      %1537 = vmatpush.msra.mxu0 %v1514
      %1538 = vmatmul.f32.gmra.mxu0 %v1520
      %v1539 = vpop.f32.mrf.mxu0
      %v1540 = vadd.f32 0.0, %v1539
      %1541 = vdwg.mxu0
      %1542 = vmatpush.msra.mxu0 0.0
      %1543 = vmatpush.msra.mxu0 0.0
      %1544 = vmatpush.msra.mxu0 0.0
      %1545 = vmatpush.msra.mxu0 0.0
      %1546 = vmatpush.msra.mxu0 0.0
      %1547 = vmatpush.msra.mxu0 0.0
      %1548 = vmatpush.msra.mxu0 0.0
      %1549 = vmatpush.msra.mxu0 0.0
      %1550 = vmatpush.msra.mxu0 0.0
      %1551 = vmatpush.msra.mxu0 0.0
      %1552 = vmatpush.msra.mxu0 0.0
      %1553 = vmatpush.msra.mxu0 0.0
      %1554 = vmatpush.msra.mxu0 0.0
      %1555 = vmatpush.msra.mxu0 0.0
      %1556 = vmatpush.msra.mxu0 0.0
      %1557 = vmatpush.msra.mxu0 %v1515
      %1558 = vmatmul.f32.gmra.mxu0 %v1520
      %v1559 = vpop.f32.mrf.mxu0
      %v1560 = vadd.f32 0.0, %v1559
      %1561 = vdwg.mxu0
      %1562 = vmatpush.msra.mxu0 0.0
      %1563 = vmatpush.msra.mxu0 0.0
      %1564 = vmatpush.msra.mxu0 0.0
      %1565 = vmatpush.msra.mxu0 0.0
      %1566 = vmatpush.msra.mxu0 0.0
      %1567 = vmatpush.msra.mxu0 0.0
      %1568 = vmatpush.msra.mxu0 0.0
      %1569 = vmatpush.msra.mxu0 0.0
      %1570 = vmatpush.msra.mxu0 0.0
      %1571 = vmatpush.msra.mxu0 0.0
      %1572 = vmatpush.msra.mxu0 0.0
      %1573 = vmatpush.msra.mxu0 0.0
      %1574 = vmatpush.msra.mxu0 0.0
      %1575 = vmatpush.msra.mxu0 0.0
      %1576 = vmatpush.msra.mxu0 0.0
      %1577 = vmatpush.msra.mxu0 %v1513
      %1578 = vmatmul.f32.gmra.mxu0 %v1520
      %v1579 = vpop.f32.mrf.mxu0
      %v1580 = vadd.f32 0.0, %v1579
      %1581 = vdwg.mxu0
      %v1582 = vadd.f32 %v1464, %v1540
      %v1583 = vadd.f32 %v1484, %v1560
      %v1584 = vadd.f32 %v1504, %v1580
      %s1585 = scalar_lea.vmem %s5, 24
      %v1586 = vld [vmem:[%s1585] sm:$0xff]
      %1587 = vrot.lane.b32.xlu0 %v1359, 110
      %v1588 = vpop.permute.xlu0 %1587
      %1589 = vrot.lane.b32.xlu0 %v1360, 110
      %v1590 = vpop.permute.xlu0 %1589
      %1591 = vrot.lane.b32.xlu0 %v1361, 110
      %v1592 = vpop.permute.xlu0 %1591
      %v1593 = vsel %vm728, %v1588, %v1590
      %v1594 = vsel %vm728, %v1590, %v1592
      %v1599 = vsel %vm1379, %v1586, 0
      %1601 = vmatpush.msra.mxu0 0.0
      %1602 = vmatpush.msra.mxu0 0.0
      %1603 = vmatpush.msra.mxu0 0.0
      %1604 = vmatpush.msra.mxu0 0.0
      %1605 = vmatpush.msra.mxu0 0.0
      %1606 = vmatpush.msra.mxu0 0.0
      %1607 = vmatpush.msra.mxu0 0.0
      %1608 = vmatpush.msra.mxu0 0.0
      %1609 = vmatpush.msra.mxu0 0.0
      %1610 = vmatpush.msra.mxu0 0.0
      %1611 = vmatpush.msra.mxu0 0.0
      %1612 = vmatpush.msra.mxu0 0.0
      %1613 = vmatpush.msra.mxu0 0.0
      %1614 = vmatpush.msra.mxu0 0.0
      %1615 = vmatpush.msra.mxu0 0.0
      %1616 = vmatpush.msra.mxu0 %v1593
      %1617 = vmatmul.f32.gmra.mxu0 %v1599
      %v1618 = vpop.f32.mrf.mxu0
      %v1619 = vadd.f32 0.0, %v1618
      %1620 = vdwg.mxu0
      %1621 = vmatpush.msra.mxu0 0.0
      %1622 = vmatpush.msra.mxu0 0.0
      %1623 = vmatpush.msra.mxu0 0.0
      %1624 = vmatpush.msra.mxu0 0.0
      %1625 = vmatpush.msra.mxu0 0.0
      %1626 = vmatpush.msra.mxu0 0.0
      %1627 = vmatpush.msra.mxu0 0.0
      %1628 = vmatpush.msra.mxu0 0.0
      %1629 = vmatpush.msra.mxu0 0.0
      %1630 = vmatpush.msra.mxu0 0.0
      %1631 = vmatpush.msra.mxu0 0.0
      %1632 = vmatpush.msra.mxu0 0.0
      %1633 = vmatpush.msra.mxu0 0.0
      %1634 = vmatpush.msra.mxu0 0.0
      %1635 = vmatpush.msra.mxu0 0.0
      %1636 = vmatpush.msra.mxu0 %v1594
      %1637 = vmatmul.f32.gmra.mxu0 %v1599
      %v1638 = vpop.f32.mrf.mxu0
      %v1639 = vadd.f32 0.0, %v1638
      %1640 = vdwg.mxu0
      %1641 = vmatpush.msra.mxu0 0.0
      %1642 = vmatpush.msra.mxu0 0.0
      %1643 = vmatpush.msra.mxu0 0.0
      %1644 = vmatpush.msra.mxu0 0.0
      %1645 = vmatpush.msra.mxu0 0.0
      %1646 = vmatpush.msra.mxu0 0.0
      %1647 = vmatpush.msra.mxu0 0.0
      %1648 = vmatpush.msra.mxu0 0.0
      %1649 = vmatpush.msra.mxu0 0.0
      %1650 = vmatpush.msra.mxu0 0.0
      %1651 = vmatpush.msra.mxu0 0.0
      %1652 = vmatpush.msra.mxu0 0.0
      %1653 = vmatpush.msra.mxu0 0.0
      %1654 = vmatpush.msra.mxu0 0.0
      %1655 = vmatpush.msra.mxu0 0.0
      %1656 = vmatpush.msra.mxu0 %v1592
      %1657 = vmatmul.f32.gmra.mxu0 %v1599
      %v1658 = vpop.f32.mrf.mxu0
      %v1659 = vadd.f32 0.0, %v1658
      %1660 = vdwg.mxu0
      %v1661 = vadd.f32 %v1582, %v1619
      %v1662 = vadd.f32 %v1583, %v1639
      %v1663 = vadd.f32 %v1584, %v1659
      %s1664 = scalar_lea.vmem %s5, 32
      %v1665 = vld [vmem:[%s1664] sm:$0xff]
      %1666 = vrot.lane.b32.xlu0 %v1359, 109
      %v1667 = vpop.permute.xlu0 %1666
      %1668 = vrot.lane.b32.xlu0 %v1360, 109
      %v1669 = vpop.permute.xlu0 %1668
      %1670 = vrot.lane.b32.xlu0 %v1361, 109
      %v1671 = vpop.permute.xlu0 %1670
      %v1672 = vsel %vm830, %v1667, %v1669
      %v1673 = vsel %vm830, %v1669, %v1671
      %v1678 = vsel %vm1379, %v1665, 0
      %1680 = vmatpush.msra.mxu0 0.0
      %1681 = vmatpush.msra.mxu0 0.0
      %1682 = vmatpush.msra.mxu0 0.0
      %1683 = vmatpush.msra.mxu0 0.0
      %1684 = vmatpush.msra.mxu0 0.0
      %1685 = vmatpush.msra.mxu0 0.0
      %1686 = vmatpush.msra.mxu0 0.0
      %1687 = vmatpush.msra.mxu0 0.0
      %1688 = vmatpush.msra.mxu0 0.0
      %1689 = vmatpush.msra.mxu0 0.0
      %1690 = vmatpush.msra.mxu0 0.0
      %1691 = vmatpush.msra.mxu0 0.0
      %1692 = vmatpush.msra.mxu0 0.0
      %1693 = vmatpush.msra.mxu0 0.0
      %1694 = vmatpush.msra.mxu0 0.0
      %1695 = vmatpush.msra.mxu0 %v1672
      %1696 = vmatmul.f32.gmra.mxu0 %v1678
      %v1697 = vpop.f32.mrf.mxu0
      %v1698 = vadd.f32 0.0, %v1697
      %1699 = vdwg.mxu0
      %1700 = vmatpush.msra.mxu0 0.0
      %1701 = vmatpush.msra.mxu0 0.0
      %1702 = vmatpush.msra.mxu0 0.0
      %1703 = vmatpush.msra.mxu0 0.0
      %1704 = vmatpush.msra.mxu0 0.0
      %1705 = vmatpush.msra.mxu0 0.0
      %1706 = vmatpush.msra.mxu0 0.0
      %1707 = vmatpush.msra.mxu0 0.0
      %1708 = vmatpush.msra.mxu0 0.0
      %1709 = vmatpush.msra.mxu0 0.0
      %1710 = vmatpush.msra.mxu0 0.0
      %1711 = vmatpush.msra.mxu0 0.0
      %1712 = vmatpush.msra.mxu0 0.0
      %1713 = vmatpush.msra.mxu0 0.0
      %1714 = vmatpush.msra.mxu0 0.0
      %1715 = vmatpush.msra.mxu0 %v1673
      %1716 = vmatmul.f32.gmra.mxu0 %v1678
      %v1717 = vpop.f32.mrf.mxu0
      %v1718 = vadd.f32 0.0, %v1717
      %1719 = vdwg.mxu0
      %1720 = vmatpush.msra.mxu0 0.0
      %1721 = vmatpush.msra.mxu0 0.0
      %1722 = vmatpush.msra.mxu0 0.0
      %1723 = vmatpush.msra.mxu0 0.0
      %1724 = vmatpush.msra.mxu0 0.0
      %1725 = vmatpush.msra.mxu0 0.0
      %1726 = vmatpush.msra.mxu0 0.0
      %1727 = vmatpush.msra.mxu0 0.0
      %1728 = vmatpush.msra.mxu0 0.0
      %1729 = vmatpush.msra.mxu0 0.0
      %1730 = vmatpush.msra.mxu0 0.0
      %1731 = vmatpush.msra.mxu0 0.0
      %1732 = vmatpush.msra.mxu0 0.0
      %1733 = vmatpush.msra.mxu0 0.0
      %1734 = vmatpush.msra.mxu0 0.0
      %1735 = vmatpush.msra.mxu0 %v1671
      %1736 = vmatmul.f32.gmra.mxu0 %v1678
      %v1737 = vpop.f32.mrf.mxu0
      %v1738 = vadd.f32 0.0, %v1737
      %1739 = vdwg.mxu0
      %v1740 = vadd.f32 %v1661, %v1698
      %v1741 = vadd.f32 %v1662, %v1718
      %v1742 = vadd.f32 %v1663, %v1738
      %s1743 = scalar_lea.vmem %s5, 40
      %v1744 = vld [vmem:[%s1743] sm:$0xff]
      %1745 = vrot.lane.b32.xlu0 %v1359, 108
      %v1746 = vpop.permute.xlu0 %1745
      %1747 = vrot.lane.b32.xlu0 %v1360, 108
      %v1748 = vpop.permute.xlu0 %1747
      %1749 = vrot.lane.b32.xlu0 %v1361, 108
      %v1750 = vpop.permute.xlu0 %1749
      %v1751 = vsel %vm932, %v1746, %v1748
      %v1752 = vsel %vm932, %v1748, %v1750
      %v1757 = vsel %vm1379, %v1744, 0
      %1759 = vmatpush.msra.mxu0 0.0
      %1760 = vmatpush.msra.mxu0 0.0
      %1761 = vmatpush.msra.mxu0 0.0
      %1762 = vmatpush.msra.mxu0 0.0
      %1763 = vmatpush.msra.mxu0 0.0
      %1764 = vmatpush.msra.mxu0 0.0
      %1765 = vmatpush.msra.mxu0 0.0
      %1766 = vmatpush.msra.mxu0 0.0
      %1767 = vmatpush.msra.mxu0 0.0
      %1768 = vmatpush.msra.mxu0 0.0
      %1769 = vmatpush.msra.mxu0 0.0
      %1770 = vmatpush.msra.mxu0 0.0
      %1771 = vmatpush.msra.mxu0 0.0
      %1772 = vmatpush.msra.mxu0 0.0
      %1773 = vmatpush.msra.mxu0 0.0
      %1774 = vmatpush.msra.mxu0 %v1751
      %1775 = vmatmul.f32.gmra.mxu0 %v1757
      %v1776 = vpop.f32.mrf.mxu0
      %v1777 = vadd.f32 0.0, %v1776
      %1778 = vdwg.mxu0
      %1779 = vmatpush.msra.mxu0 0.0
      %1780 = vmatpush.msra.mxu0 0.0
      %1781 = vmatpush.msra.mxu0 0.0
      %1782 = vmatpush.msra.mxu0 0.0
      %1783 = vmatpush.msra.mxu0 0.0
      %1784 = vmatpush.msra.mxu0 0.0
      %1785 = vmatpush.msra.mxu0 0.0
      %1786 = vmatpush.msra.mxu0 0.0
      %1787 = vmatpush.msra.mxu0 0.0
      %1788 = vmatpush.msra.mxu0 0.0
      %1789 = vmatpush.msra.mxu0 0.0
      %1790 = vmatpush.msra.mxu0 0.0
      %1791 = vmatpush.msra.mxu0 0.0
      %1792 = vmatpush.msra.mxu0 0.0
      %1793 = vmatpush.msra.mxu0 0.0
      %1794 = vmatpush.msra.mxu0 %v1752
      %1795 = vmatmul.f32.gmra.mxu0 %v1757
      %v1796 = vpop.f32.mrf.mxu0
      %v1797 = vadd.f32 0.0, %v1796
      %1798 = vdwg.mxu0
      %1799 = vmatpush.msra.mxu0 0.0
      %1800 = vmatpush.msra.mxu0 0.0
      %1801 = vmatpush.msra.mxu0 0.0
      %1802 = vmatpush.msra.mxu0 0.0
      %1803 = vmatpush.msra.mxu0 0.0
      %1804 = vmatpush.msra.mxu0 0.0
      %1805 = vmatpush.msra.mxu0 0.0
      %1806 = vmatpush.msra.mxu0 0.0
      %1807 = vmatpush.msra.mxu0 0.0
      %1808 = vmatpush.msra.mxu0 0.0
      %1809 = vmatpush.msra.mxu0 0.0
      %1810 = vmatpush.msra.mxu0 0.0
      %1811 = vmatpush.msra.mxu0 0.0
      %1812 = vmatpush.msra.mxu0 0.0
      %1813 = vmatpush.msra.mxu0 0.0
      %1814 = vmatpush.msra.mxu0 %v1750
      %1815 = vmatmul.f32.gmra.mxu0 %v1757
      %v1816 = vpop.f32.mrf.mxu0
      %v1817 = vadd.f32 0.0, %v1816
      %1818 = vdwg.mxu0
      %v1819 = vadd.f32 %v1740, %v1777
      %v1820 = vadd.f32 %v1741, %v1797
      %v1821 = vadd.f32 %v1742, %v1817
      %s1822 = scalar_lea.vmem %s5, 48
      %v1823 = vld [vmem:[%s1822] sm:$0xff]
      %1824 = vrot.lane.b32.xlu0 %v1359, 92
      %v1825 = vpop.permute.xlu0 %1824
      %1826 = vrot.lane.b32.xlu0 %v1360, 92
      %v1827 = vpop.permute.xlu0 %1826
      %1828 = vrot.lane.b32.xlu0 %v1361, 92
      %v1829 = vpop.permute.xlu0 %1828
      %v1830 = vsel %vm1034, %v1825, %v1827
      %v1831 = vsel %vm1034, %v1827, %v1829
      %v1836 = vsel %vm1379, %v1823, 0
      %1838 = vmatpush.msra.mxu0 0.0
      %1839 = vmatpush.msra.mxu0 0.0
      %1840 = vmatpush.msra.mxu0 0.0
      %1841 = vmatpush.msra.mxu0 0.0
      %1842 = vmatpush.msra.mxu0 0.0
      %1843 = vmatpush.msra.mxu0 0.0
      %1844 = vmatpush.msra.mxu0 0.0
      %1845 = vmatpush.msra.mxu0 0.0
      %1846 = vmatpush.msra.mxu0 0.0
      %1847 = vmatpush.msra.mxu0 0.0
      %1848 = vmatpush.msra.mxu0 0.0
      %1849 = vmatpush.msra.mxu0 0.0
      %1850 = vmatpush.msra.mxu0 0.0
      %1851 = vmatpush.msra.mxu0 0.0
      %1852 = vmatpush.msra.mxu0 0.0
      %1853 = vmatpush.msra.mxu0 %v1830
      %1854 = vmatmul.f32.gmra.mxu0 %v1836
      %v1855 = vpop.f32.mrf.mxu0
      %v1856 = vadd.f32 0.0, %v1855
      %1857 = vdwg.mxu0
      %1858 = vmatpush.msra.mxu0 0.0
      %1859 = vmatpush.msra.mxu0 0.0
      %1860 = vmatpush.msra.mxu0 0.0
      %1861 = vmatpush.msra.mxu0 0.0
      %1862 = vmatpush.msra.mxu0 0.0
      %1863 = vmatpush.msra.mxu0 0.0
      %1864 = vmatpush.msra.mxu0 0.0
      %1865 = vmatpush.msra.mxu0 0.0
      %1866 = vmatpush.msra.mxu0 0.0
      %1867 = vmatpush.msra.mxu0 0.0
      %1868 = vmatpush.msra.mxu0 0.0
      %1869 = vmatpush.msra.mxu0 0.0
      %1870 = vmatpush.msra.mxu0 0.0
      %1871 = vmatpush.msra.mxu0 0.0
      %1872 = vmatpush.msra.mxu0 0.0
      %1873 = vmatpush.msra.mxu0 %v1831
      %1874 = vmatmul.f32.gmra.mxu0 %v1836
      %v1875 = vpop.f32.mrf.mxu0
      %v1876 = vadd.f32 0.0, %v1875
      %1877 = vdwg.mxu0
      %1878 = vmatpush.msra.mxu0 0.0
      %1879 = vmatpush.msra.mxu0 0.0
      %1880 = vmatpush.msra.mxu0 0.0
      %1881 = vmatpush.msra.mxu0 0.0
      %1882 = vmatpush.msra.mxu0 0.0
      %1883 = vmatpush.msra.mxu0 0.0
      %1884 = vmatpush.msra.mxu0 0.0
      %1885 = vmatpush.msra.mxu0 0.0
      %1886 = vmatpush.msra.mxu0 0.0
      %1887 = vmatpush.msra.mxu0 0.0
      %1888 = vmatpush.msra.mxu0 0.0
      %1889 = vmatpush.msra.mxu0 0.0
      %1890 = vmatpush.msra.mxu0 0.0
      %1891 = vmatpush.msra.mxu0 0.0
      %1892 = vmatpush.msra.mxu0 0.0
      %1893 = vmatpush.msra.mxu0 %v1829
      %1894 = vmatmul.f32.gmra.mxu0 %v1836
      %v1895 = vpop.f32.mrf.mxu0
      %v1896 = vadd.f32 0.0, %v1895
      %1897 = vdwg.mxu0
      %v1898 = vadd.f32 %v1819, %v1856
      %v1899 = vadd.f32 %v1820, %v1876
      %v1900 = vadd.f32 %v1821, %v1896
      %s1901 = scalar_lea.vmem %s5, 56
      %v1902 = vld [vmem:[%s1901] sm:$0xff]
      %1903 = vrot.lane.b32.xlu0 %v1359, 91
      %v1904 = vpop.permute.xlu0 %1903
      %1905 = vrot.lane.b32.xlu0 %v1360, 91
      %v1906 = vpop.permute.xlu0 %1905
      %1907 = vrot.lane.b32.xlu0 %v1361, 91
      %v1908 = vpop.permute.xlu0 %1907
      %v1909 = vsel %vm1136, %v1904, %v1906
      %v1910 = vsel %vm1136, %v1906, %v1908
      %v1915 = vsel %vm1379, %v1902, 0
      %1917 = vmatpush.msra.mxu0 0.0
      %1918 = vmatpush.msra.mxu0 0.0
      %1919 = vmatpush.msra.mxu0 0.0
      %1920 = vmatpush.msra.mxu0 0.0
      %1921 = vmatpush.msra.mxu0 0.0
      %1922 = vmatpush.msra.mxu0 0.0
      %1923 = vmatpush.msra.mxu0 0.0
      %1924 = vmatpush.msra.mxu0 0.0
      %1925 = vmatpush.msra.mxu0 0.0
      %1926 = vmatpush.msra.mxu0 0.0
      %1927 = vmatpush.msra.mxu0 0.0
      %1928 = vmatpush.msra.mxu0 0.0
      %1929 = vmatpush.msra.mxu0 0.0
      %1930 = vmatpush.msra.mxu0 0.0
      %1931 = vmatpush.msra.mxu0 0.0
      %1932 = vmatpush.msra.mxu0 %v1909
      %1933 = vmatmul.f32.gmra.mxu0 %v1915
      %v1934 = vpop.f32.mrf.mxu0
      %v1935 = vadd.f32 0.0, %v1934
      %1936 = vdwg.mxu0
      %1937 = vmatpush.msra.mxu0 0.0
      %1938 = vmatpush.msra.mxu0 0.0
      %1939 = vmatpush.msra.mxu0 0.0
      %1940 = vmatpush.msra.mxu0 0.0
      %1941 = vmatpush.msra.mxu0 0.0
      %1942 = vmatpush.msra.mxu0 0.0
      %1943 = vmatpush.msra.mxu0 0.0
      %1944 = vmatpush.msra.mxu0 0.0
      %1945 = vmatpush.msra.mxu0 0.0
      %1946 = vmatpush.msra.mxu0 0.0
      %1947 = vmatpush.msra.mxu0 0.0
      %1948 = vmatpush.msra.mxu0 0.0
      %1949 = vmatpush.msra.mxu0 0.0
      %1950 = vmatpush.msra.mxu0 0.0
      %1951 = vmatpush.msra.mxu0 0.0
      %1952 = vmatpush.msra.mxu0 %v1910
      %1953 = vmatmul.f32.gmra.mxu0 %v1915
      %v1954 = vpop.f32.mrf.mxu0
      %v1955 = vadd.f32 0.0, %v1954
      %1956 = vdwg.mxu0
      %1957 = vmatpush.msra.mxu0 0.0
      %1958 = vmatpush.msra.mxu0 0.0
      %1959 = vmatpush.msra.mxu0 0.0
      %1960 = vmatpush.msra.mxu0 0.0
      %1961 = vmatpush.msra.mxu0 0.0
      %1962 = vmatpush.msra.mxu0 0.0
      %1963 = vmatpush.msra.mxu0 0.0
      %1964 = vmatpush.msra.mxu0 0.0
      %1965 = vmatpush.msra.mxu0 0.0
      %1966 = vmatpush.msra.mxu0 0.0
      %1967 = vmatpush.msra.mxu0 0.0
      %1968 = vmatpush.msra.mxu0 0.0
      %1969 = vmatpush.msra.mxu0 0.0
      %1970 = vmatpush.msra.mxu0 0.0
      %1971 = vmatpush.msra.mxu0 0.0
      %1972 = vmatpush.msra.mxu0 %v1908
      %1973 = vmatmul.f32.gmra.mxu0 %v1915
      %v1974 = vpop.f32.mrf.mxu0
      %v1975 = vadd.f32 0.0, %v1974
      %1976 = vdwg.mxu0
      %v1977 = vadd.f32 %v1898, %v1935
      %v1978 = vadd.f32 %v1899, %v1955
      %v1979 = vadd.f32 %v1900, %v1975
      %s1980 = scalar_lea.vmem %s5, 64
      %v1981 = vld [vmem:[%s1980] sm:$0xff]
      %1982 = vrot.lane.b32.xlu0 %v1359, 90
      %v1983 = vpop.permute.xlu0 %1982
      %1984 = vrot.lane.b32.xlu0 %v1360, 90
      %v1985 = vpop.permute.xlu0 %1984
      %1986 = vrot.lane.b32.xlu0 %v1361, 90
      %v1987 = vpop.permute.xlu0 %1986
      %v1988 = vsel %vm1238, %v1983, %v1985
      %v1989 = vsel %vm1238, %v1985, %v1987
      %v1994 = vsel %vm1379, %v1981, 0
      %1996 = vmatpush.msra.mxu0 0.0
      %1997 = vmatpush.msra.mxu0 0.0
      %1998 = vmatpush.msra.mxu0 0.0
      %1999 = vmatpush.msra.mxu0 0.0
      %2000 = vmatpush.msra.mxu0 0.0
      %2001 = vmatpush.msra.mxu0 0.0
      %2002 = vmatpush.msra.mxu0 0.0
      %2003 = vmatpush.msra.mxu0 0.0
      %2004 = vmatpush.msra.mxu0 0.0
      %2005 = vmatpush.msra.mxu0 0.0
      %2006 = vmatpush.msra.mxu0 0.0
      %2007 = vmatpush.msra.mxu0 0.0
      %2008 = vmatpush.msra.mxu0 0.0
      %2009 = vmatpush.msra.mxu0 0.0
      %2010 = vmatpush.msra.mxu0 0.0
      %2011 = vmatpush.msra.mxu0 %v1988
      %2012 = vmatmul.f32.gmra.mxu0 %v1994
      %v2013 = vpop.f32.mrf.mxu0
      %v2014 = vadd.f32 0.0, %v2013
      %2015 = vdwg.mxu0
      %2016 = vmatpush.msra.mxu0 0.0
      %2017 = vmatpush.msra.mxu0 0.0
      %2018 = vmatpush.msra.mxu0 0.0
      %2019 = vmatpush.msra.mxu0 0.0
      %2020 = vmatpush.msra.mxu0 0.0
      %2021 = vmatpush.msra.mxu0 0.0
      %2022 = vmatpush.msra.mxu0 0.0
      %2023 = vmatpush.msra.mxu0 0.0
      %2024 = vmatpush.msra.mxu0 0.0
      %2025 = vmatpush.msra.mxu0 0.0
      %2026 = vmatpush.msra.mxu0 0.0
      %2027 = vmatpush.msra.mxu0 0.0
      %2028 = vmatpush.msra.mxu0 0.0
      %2029 = vmatpush.msra.mxu0 0.0
      %2030 = vmatpush.msra.mxu0 0.0
      %2031 = vmatpush.msra.mxu0 %v1989
      %2032 = vmatmul.f32.gmra.mxu0 %v1994
      %v2033 = vpop.f32.mrf.mxu0
      %v2034 = vadd.f32 0.0, %v2033
      %2035 = vdwg.mxu0
      %2036 = vmatpush.msra.mxu0 0.0
      %2037 = vmatpush.msra.mxu0 0.0
      %2038 = vmatpush.msra.mxu0 0.0
      %2039 = vmatpush.msra.mxu0 0.0
      %2040 = vmatpush.msra.mxu0 0.0
      %2041 = vmatpush.msra.mxu0 0.0
      %2042 = vmatpush.msra.mxu0 0.0
      %2043 = vmatpush.msra.mxu0 0.0
      %2044 = vmatpush.msra.mxu0 0.0
      %2045 = vmatpush.msra.mxu0 0.0
      %2046 = vmatpush.msra.mxu0 0.0
      %2047 = vmatpush.msra.mxu0 0.0
      %2048 = vmatpush.msra.mxu0 0.0
      %2049 = vmatpush.msra.mxu0 0.0
      %2050 = vmatpush.msra.mxu0 0.0
      %2051 = vmatpush.msra.mxu0 %v1987
      %2052 = vmatmul.f32.gmra.mxu0 %v1994
      %v2053 = vpop.f32.mrf.mxu0
      %v2054 = vadd.f32 0.0, %v2053
      %2055 = vdwg.mxu0
      %v2056 = vadd.f32 %v1977, %v2014
      %v2057 = vadd.f32 %v1978, %v2034
      %v2058 = vadd.f32 %v1979, %v2054
      %v2059 = vld [vmem:[%s6] sm:$0xff]
      %2061 = vset.pattern.permute.xlu0 0
      %2062 = vperm.xlu0 %2061, %v2059
      %v2063 = vpop.permute.xlu0 %2062
      %v2065 = vadd.f32 %v2056, %v2063
      %v2066 = vadd.f32 %v2057, %v2063
      %v2067 = vadd.f32 %v2058, %v2063
      %v2068 = vmax.f32 %v2065, 0.0
      %v2069 = vmax.f32 %v2066, 0.0
      %v2070 = vmax.f32 %v2067, 0.0
      %v2071 = vmul.f32 %v2068, %v1333
      %v2072 = vmul.f32 %v2069, %v1334
      %v2073 = vmul.f32 %v2070, %v1335
      %2077 = vrot.lane.b32.xlu0 %v2071, 19
      %v2078 = vpop.permute.xlu0 %2077
      %2079 = vrot.lane.b32.xlu0 %v2072, 19
      %v2080 = vpop.permute.xlu0 %2079
      %2081 = vrot.lane.b32.xlu0 %v2073, 19
      %v2082 = vpop.permute.xlu0 %2081
      %v2083 = vsel %vm353, %v2078, %v2080
      %v2084 = vsel %vm353, %v2080, %v2082
      %2088 = vst.msk [vmem:[#allocation2] sm:$0xff] %vm395, %v2078
      %2089 = vst [vmem:[#allocation2 + $0x8] sm:$0xff] %v2083
      %2090 = vst.msk [vmem:[#allocation2 + $0x10] sm:$0xff] %vm398, %v2084
      %v2091 = vld [vmem:[#allocation2] sm:$0xff]
      %v2092 = vld [vmem:[#allocation2 + $0x8] sm:$0xff]
      %v2093 = vld [vmem:[#allocation2 + $0x10] sm:$0xff]
      %v2094 = vld [vmem:[%s7] sm:$0xf]
      %v2095 = vld [vmem:[%s8] sm:$0xf]
      %2097 = vset.pattern.permute.xlu0 0
      %2098 = vperm.xlu0 %2097, %v2095
      %v2099 = vpop.permute.xlu0 %2098
      %2104 = vrot.lane.b32.xlu0 %v2091, 109
      %v2105 = vpop.permute.xlu0 %2104
      %2106 = vrot.lane.b32.xlu0 %v2092, 109
      %v2107 = vpop.permute.xlu0 %2106
      %2108 = vrot.lane.b32.xlu0 %v2093, 109
      %v2109 = vpop.permute.xlu0 %2108
      %v2110 = vsel %vm830, %v2105, %v2107
      %v2111 = vsel %vm830, %v2107, %v2109
      %v2116 = vsel %vm1379, %v2094, 0
      %2118 = vmatpush.msra.mxu0 0.0
      %2119 = vmatpush.msra.mxu0 0.0
      %2120 = vmatpush.msra.mxu0 0.0
      %2121 = vmatpush.msra.mxu0 0.0
      %2122 = vmatpush.msra.mxu0 0.0
      %2123 = vmatpush.msra.mxu0 0.0
      %2124 = vmatpush.msra.mxu0 0.0
      %2125 = vmatpush.msra.mxu0 0.0
      %2126 = vmatpush.msra.mxu0 0.0
      %2127 = vmatpush.msra.mxu0 0.0
      %2128 = vmatpush.msra.mxu0 0.0
      %2129 = vmatpush.msra.mxu0 0.0
      %2130 = vmatpush.msra.mxu0 0.0
      %2131 = vmatpush.msra.mxu0 0.0
      %2132 = vmatpush.msra.mxu0 0.0
      %2133 = vmatpush.msra.mxu0 %v2110
      %2134 = vmatmul.f32.gmra.mxu0 %v2116
      %v2135 = vpop.f32.mrf.mxu0
      %v2136 = vadd.f32 %v2099, %v2135
      %2137 = vdwg.mxu0
      %2138 = vmatpush.msra.mxu0 0.0
      %2139 = vmatpush.msra.mxu0 0.0
      %2140 = vmatpush.msra.mxu0 0.0
      %2141 = vmatpush.msra.mxu0 0.0
      %2142 = vmatpush.msra.mxu0 0.0
      %2143 = vmatpush.msra.mxu0 0.0
      %2144 = vmatpush.msra.mxu0 0.0
      %2145 = vmatpush.msra.mxu0 0.0
      %2146 = vmatpush.msra.mxu0 0.0
      %2147 = vmatpush.msra.mxu0 0.0
      %2148 = vmatpush.msra.mxu0 0.0
      %2149 = vmatpush.msra.mxu0 0.0
      %2150 = vmatpush.msra.mxu0 0.0
      %2151 = vmatpush.msra.mxu0 0.0
      %2152 = vmatpush.msra.mxu0 0.0
      %2153 = vmatpush.msra.mxu0 %v2111
      %2154 = vmatmul.f32.gmra.mxu0 %v2116
      %v2155 = vpop.f32.mrf.mxu0
      %v2156 = vadd.f32 %v2099, %v2155
      %2157 = vdwg.mxu0
      %2158 = vmatpush.msra.mxu0 0.0
      %2159 = vmatpush.msra.mxu0 0.0
      %2160 = vmatpush.msra.mxu0 0.0
      %2161 = vmatpush.msra.mxu0 0.0
      %2162 = vmatpush.msra.mxu0 0.0
      %2163 = vmatpush.msra.mxu0 0.0
      %2164 = vmatpush.msra.mxu0 0.0
      %2165 = vmatpush.msra.mxu0 0.0
      %2166 = vmatpush.msra.mxu0 0.0
      %2167 = vmatpush.msra.mxu0 0.0
      %2168 = vmatpush.msra.mxu0 0.0
      %2169 = vmatpush.msra.mxu0 0.0
      %2170 = vmatpush.msra.mxu0 0.0
      %2171 = vmatpush.msra.mxu0 0.0
      %2172 = vmatpush.msra.mxu0 0.0
      %2173 = vmatpush.msra.mxu0 %v2109
      %2174 = vmatmul.f32.gmra.mxu0 %v2116
      %v2175 = vpop.f32.mrf.mxu0
      %v2176 = vadd.f32 %v2099, %v2175
      %2177 = vdwg.mxu0
      %v2178 = vmul.f32 %v2136, %v1333
      %v2179 = vmul.f32 %v2156, %v1334
      %v2180 = vmul.f32 %v2176, %v1335
      %v2183 = vrot.slane %v2179, 4
      %vm2184 = vcmask 1043456
      %v2185 = vsel %vm2184, %v2178, %v2183
      %2187 = vst [vmem:[%s352] sm:$0xff] %v2185
      %vm2188 = vcmask 551936
      %2189 = vst.msk [vmem:[%s352 + $0x8] sm:$0xf] %vm2188, %v2180
      %p2190 = scmp.lt.s32.totalorder %s20, 1
      %s2191 = scalar_select %p2190, %s20, 1
      %s2192 = smul.addr %s2191, 3
      %s2193 = smul.addr %s2192, 4
      %s2194 = scalar_lea.vmem %s9, %s2193
      // Predicated region
      $region57: #{comb_net_forward.15} parent=55 // pred_check
        %p2195 = pneg %p237
      $region58: #{comb_net_forward.15} parent=55 // pred_check_branch
        %2197 = sbr.rel (%p2195) target = $region60
      $region59: #{comb_net_forward.15} parent=55 // pred_region
        _
      $region60: #{comb_net_forward.15} parent=55 // pred_fallthru
        _
    $region56: #{comb_net_forward.15} parent=5 // pred_fallthru
      _
    %p2198 = scmp.le.s32.totalorder 2, %s15
    // Predicated region
    $region61: #{comb_net_forward.15} parent=5 // pred_check
      %p2199 = pneg %p2198
    $region62: #{comb_net_forward.15} parent=5 // pred_check_branch
      %2201 = sbr.rel (%p2199) target = $region64
    $region63: #{comb_net_forward.15} parent=5 // pred_region
      %s2202 = ssub.s32 %s15, 2
      // Predicated region
      $region65: #{comb_net_forward.15} parent=63 // pred_check
        %p2203 = pneg %p243
      $region66: #{comb_net_forward.15} parent=63 // pred_check_branch
        %2205 = sbr.rel (%p2203) target = $region68
      $region67: #{comb_net_forward.15} parent=63 // pred_region
        %p2206 = scmp.lt.s32.totalorder %s21, 1
        %s2207 = scalar_select %p2206, %s21, 1
        %s2208 = smul.addr %s2207, 3
        %s2209 = smul.addr %s2208, 4
        %s2210 = scalar_lea.vmem %s9, %s2209
      $region68: #{comb_net_forward.15} parent=63 // pred_fallthru
        _
    $region64: #{comb_net_forward.15} parent=5 // pred_fallthru
      _
  $region6: #{comb_net_forward.15} parent=0 // loop_footer
    %s19 = sadd.s32 1, %s15
  $region7: #{comb_net_forward.15} parent=0 // loop_footer_branch
    %14 = sbr.rel target = $region3
  $region8: #{comb_net_forward.15} parent=0 // loop_exit
    _

// kernel: comb_net_forward.12
$region0: #{comb_net_forward.12}
  #allocation0 [shape = 'u32[]', space=smem, size = 0x4, offset = 0x4, fixed_abs, tag = 'smem constant byte address 0x4 - core index']
  #allocation1 [shape = 'u32[72,128]{1,0:T(1,128)}', space=vmem, size = 0x9000, scoped, tag = 'internal scratch']
  #allocation2 [shape = 'f32[24,362]{1,0:T(8,128)}', space=vmem, size = 0x9000, scoped, tag = 'scratch operand']
  #allocation3 [shape = 'f32[1,1]{1,0:T(1,128)S(1)}', space=vmem, size = 0x200, scoped, tag = 'scoped memory for comb_net_forward.12']
  %s0 = inlined_call_operand.vmem [shape: f32[1,324], index: 0, kind: input, shape index: {}]
  %s1 = inlined_call_operand.vmem [shape: f32[2,16,324], index: 1, kind: input, shape index: {}]
  %s2 = inlined_call_operand.vmem [shape: f32[2,8,324], index: 2, kind: input, shape index: {}]
  %s3 = inlined_call_operand.vmem [shape: f32[9,8,24], index: 3, kind: input, shape index: {}]
  %s4 = inlined_call_operand.vmem [shape: f32[8,1], index: 4, kind: input, shape index: {}]
  %s5 = inlined_call_operand.vmem [shape: f32[9,8,8], index: 5, kind: input, shape index: {}]
  %s6 = inlined_call_operand.vmem [shape: f32[8,1], index: 6, kind: input, shape index: {}]
  %s7 = inlined_call_operand.vmem [shape: f32[1,1,8], index: 7, kind: input, shape index: {}]
  %s8 = inlined_call_operand.<no memory space> [shape: f32[1,1], index: 8, kind: input, shape index: {}]
  %s9 = inlined_call_operand.vmem [shape: f32[2,1,324], index: 9, kind: output, shape index: {}]
  %s10 = sld [smem:[#allocation0]]
  $region69: #{comb_net_forward.12} parent=0
    _
  %s12 = ssub.s32 1, %s10
  %s13 = scalar_select 0, %s12, %s10
  %v14 = vstv %s8
  %15 = vst [vmem:[#allocation3] sm:$0x1] %v14
  loop: start=0, step=1, limit=4
  $region2: #{comb_net_forward.12} parent=0 // loop_pre_header
    _
  $region3: #{comb_net_forward.12} parent=0 // loop_header
    %s17 = sphi 0, %s21
    %p18 = scmp.ge.s32.totalorder %s17, 4
    %s25 = sphi 0, %s25
    %s27 = sphi 0, %s25
    %s28 = sphi 0, %s27
    %s42 = sphi 0, %s28
    %s48 = sphi 0, %s50
    %s51 = sphi 0, %s48
    %s52 = sphi 0, %s51
    %s68 = sphi 0, %s52
    %s74 = sphi 0, %s76
    %s77 = sphi 0, %s74
    %s78 = sphi 0, %s77
    %s94 = sphi 0, %s78
    %s98 = sphi 0, %s98
    %s100 = sphi 0, %s98
    %s101 = sphi 0, %s100
    %s115 = sphi 0, %s101
    %s119 = sphi 0, %s119
    %s121 = sphi 0, %s119
    %s122 = sphi 0, %s121
    %s136 = sphi 0, %s122
    %s140 = sphi 0, %s140
    %s142 = sphi 0, %s140
    %s143 = sphi 0, %s142
    %s157 = sphi 0, %s143
    %s161 = sphi 0, %s161
    %s163 = sphi 0, %s161
    %s164 = sphi 0, %s163
    %s178 = sphi 0, %s164
    %s182 = sphi 0, %s182
    %s184 = sphi 0, %s182
    %s185 = sphi 0, %s184
    %s199 = sphi 0, %s185
    %s203 = sphi 0, %s203
    %s205 = sphi 0, %s203
    %s206 = sphi 0, %s205
    %s220 = sphi 0, %s206
    %s226 = sphi 0, %s228
    %s229 = sphi 0, %s226
    %s230 = sphi 0, %s229
    %s246 = sphi 0, %s230
  $region4: #{comb_net_forward.12} parent=0 // loop_header_branch
    %20 = sbr.rel (%p18) target = $region8
  $region5: #{comb_net_forward.12} parent=0 // loop_body
    %s22 = ssub.s32 %s17, 1
    %s23 = ssub.s32 %s17, 2
    %s24 = sadd.s32 %s17, 1
    %s26 = sadd.s32 %s25, 1
    %p29 = scmp.eq.s32.totalorder %s17, 1
    %p30 = scmp.ne.s32.totalorder %s25, %s27
    %p31 = scmp.eq.s32.totalorder %s17, 0
    %p32 = por %p30, %p31
    %p33 = scmp.ne.s32.totalorder %s25, %s27
    %p34 = scmp.eq.s32.totalorder %s22, 1
    %p35 = por %p33, %p34
    %p36 = scmp.ne.s32.totalorder %s27, %s28
    %p37 = scmp.eq.s32.totalorder %s22, 0
    %p38 = por %p36, %p37
    %p39 = scmp.ne.s32.totalorder %s27, %s28
    %p40 = scmp.eq.s32.totalorder %s23, 1
    %p41 = por %p39, %p40
    %p43 = scmp.ne.s32.totalorder %s28, %s42
    %p44 = scmp.eq.s32.totalorder %s23, 0
    %p45 = por %p43, %p44
    %s46 = ssub.s32 %s17, %s24
    %p47 = scmp.eq.s32.totalorder %s46, 0
    %s49 = sadd.s32 %s48, 1
    %s50 = scalar_select %p47, %s48, %s49
    %p53 = pneg %p47
    %p54 = scmp.eq.s32.totalorder %s17, 1
    %p55 = por %p53, %p54
    %p56 = scmp.ne.s32.totalorder %s48, %s51
    %p57 = scmp.eq.s32.totalorder %s17, 0
    %p58 = por %p56, %p57
    %p59 = scmp.ne.s32.totalorder %s48, %s51
    %p60 = scmp.eq.s32.totalorder %s22, 1
    %p61 = por %p59, %p60
    %p62 = scmp.ne.s32.totalorder %s51, %s52
    %p63 = scmp.eq.s32.totalorder %s22, 0
    %p64 = por %p62, %p63
    %p65 = scmp.ne.s32.totalorder %s51, %s52
    %p66 = scmp.eq.s32.totalorder %s23, 1
    %p67 = por %p65, %p66
    %p69 = scmp.ne.s32.totalorder %s52, %s68
    %p70 = scmp.eq.s32.totalorder %s23, 0
    %p71 = por %p69, %p70
    %s72 = ssub.s32 %s17, %s24
    %p73 = scmp.eq.s32.totalorder %s72, 0
    %s75 = sadd.s32 %s74, 1
    %s76 = scalar_select %p73, %s74, %s75
    %p79 = pneg %p73
    %p80 = scmp.eq.s32.totalorder %s17, 1
    %p81 = por %p79, %p80
    %p82 = scmp.ne.s32.totalorder %s74, %s77
    %p83 = scmp.eq.s32.totalorder %s17, 0
    %p84 = por %p82, %p83
    %p85 = scmp.ne.s32.totalorder %s74, %s77
    %p86 = scmp.eq.s32.totalorder %s22, 1
    %p87 = por %p85, %p86
    %p88 = scmp.ne.s32.totalorder %s77, %s78
    %p89 = scmp.eq.s32.totalorder %s22, 0
    %p90 = por %p88, %p89
    %p91 = scmp.ne.s32.totalorder %s77, %s78
    %p92 = scmp.eq.s32.totalorder %s23, 1
    %p93 = por %p91, %p92
    %p95 = scmp.ne.s32.totalorder %s78, %s94
    %p96 = scmp.eq.s32.totalorder %s23, 0
    %p97 = por %p95, %p96
    %s99 = sadd.s32 %s98, 1
    %p102 = scmp.eq.s32.totalorder %s17, 1
    %p103 = scmp.ne.s32.totalorder %s98, %s100
    %p104 = scmp.eq.s32.totalorder %s17, 0
    %p105 = por %p103, %p104
    %p106 = scmp.ne.s32.totalorder %s98, %s100
    %p107 = scmp.eq.s32.totalorder %s22, 1
    %p108 = por %p106, %p107
    %p109 = scmp.ne.s32.totalorder %s100, %s101
    %p110 = scmp.eq.s32.totalorder %s22, 0
    %p111 = por %p109, %p110
    %p112 = scmp.ne.s32.totalorder %s100, %s101
    %p113 = scmp.eq.s32.totalorder %s23, 1
    %p114 = por %p112, %p113
    %p116 = scmp.ne.s32.totalorder %s101, %s115
    %p117 = scmp.eq.s32.totalorder %s23, 0
    %p118 = por %p116, %p117
    %s120 = sadd.s32 %s119, 1
    %p123 = scmp.eq.s32.totalorder %s17, 1
    %p124 = scmp.ne.s32.totalorder %s119, %s121
    %p125 = scmp.eq.s32.totalorder %s17, 0
    %p126 = por %p124, %p125
    %p127 = scmp.ne.s32.totalorder %s119, %s121
    %p128 = scmp.eq.s32.totalorder %s22, 1
    %p129 = por %p127, %p128
    %p130 = scmp.ne.s32.totalorder %s121, %s122
    %p131 = scmp.eq.s32.totalorder %s22, 0
    %p132 = por %p130, %p131
    %p133 = scmp.ne.s32.totalorder %s121, %s122
    %p134 = scmp.eq.s32.totalorder %s23, 1
    %p135 = por %p133, %p134
    %p137 = scmp.ne.s32.totalorder %s122, %s136
    %p138 = scmp.eq.s32.totalorder %s23, 0
    %p139 = por %p137, %p138
    %s141 = sadd.s32 %s140, 1
    %p144 = scmp.eq.s32.totalorder %s17, 1
    %p145 = scmp.ne.s32.totalorder %s140, %s142
    %p146 = scmp.eq.s32.totalorder %s17, 0
    %p147 = por %p145, %p146
    %p148 = scmp.ne.s32.totalorder %s140, %s142
    %p149 = scmp.eq.s32.totalorder %s22, 1
    %p150 = por %p148, %p149
    %p151 = scmp.ne.s32.totalorder %s142, %s143
    %p152 = scmp.eq.s32.totalorder %s22, 0
    %p153 = por %p151, %p152
    %p154 = scmp.ne.s32.totalorder %s142, %s143
    %p155 = scmp.eq.s32.totalorder %s23, 1
    %p156 = por %p154, %p155
    %p158 = scmp.ne.s32.totalorder %s143, %s157
    %p159 = scmp.eq.s32.totalorder %s23, 0
    %p160 = por %p158, %p159
    %s162 = sadd.s32 %s161, 1
    %p165 = scmp.eq.s32.totalorder %s17, 1
    %p166 = scmp.ne.s32.totalorder %s161, %s163
    %p167 = scmp.eq.s32.totalorder %s17, 0
    %p168 = por %p166, %p167
    %p169 = scmp.ne.s32.totalorder %s161, %s163
    %p170 = scmp.eq.s32.totalorder %s22, 1
    %p171 = por %p169, %p170
    %p172 = scmp.ne.s32.totalorder %s163, %s164
    %p173 = scmp.eq.s32.totalorder %s22, 0
    %p174 = por %p172, %p173
    %p175 = scmp.ne.s32.totalorder %s163, %s164
    %p176 = scmp.eq.s32.totalorder %s23, 1
    %p177 = por %p175, %p176
    %p179 = scmp.ne.s32.totalorder %s164, %s178
    %p180 = scmp.eq.s32.totalorder %s23, 0
    %p181 = por %p179, %p180
    %s183 = sadd.s32 %s182, 1
    %p186 = scmp.eq.s32.totalorder %s17, 1
    %p187 = scmp.ne.s32.totalorder %s182, %s184
    %p188 = scmp.eq.s32.totalorder %s17, 0
    %p189 = por %p187, %p188
    %p190 = scmp.ne.s32.totalorder %s182, %s184
    %p191 = scmp.eq.s32.totalorder %s22, 1
    %p192 = por %p190, %p191
    %p193 = scmp.ne.s32.totalorder %s184, %s185
    %p194 = scmp.eq.s32.totalorder %s22, 0
    %p195 = por %p193, %p194
    %p196 = scmp.ne.s32.totalorder %s184, %s185
    %p197 = scmp.eq.s32.totalorder %s23, 1
    %p198 = por %p196, %p197
    %p200 = scmp.ne.s32.totalorder %s185, %s199
    %p201 = scmp.eq.s32.totalorder %s23, 0
    %p202 = por %p200, %p201
    %s204 = sadd.s32 %s203, 1
    %p207 = scmp.eq.s32.totalorder %s17, 1
    %p208 = scmp.ne.s32.totalorder %s203, %s205
    %p209 = scmp.eq.s32.totalorder %s17, 0
    %p210 = por %p208, %p209
    %p211 = scmp.ne.s32.totalorder %s203, %s205
    %p212 = scmp.eq.s32.totalorder %s22, 1
    %p213 = por %p211, %p212
    %p214 = scmp.ne.s32.totalorder %s205, %s206
    %p215 = scmp.eq.s32.totalorder %s22, 0
    %p216 = por %p214, %p215
    %p217 = scmp.ne.s32.totalorder %s205, %s206
    %p218 = scmp.eq.s32.totalorder %s23, 1
    %p219 = por %p217, %p218
    %p221 = scmp.ne.s32.totalorder %s206, %s220
    %p222 = scmp.eq.s32.totalorder %s23, 0
    %p223 = por %p221, %p222
    %s224 = ssub.s32 %s17, %s24
    %p225 = scmp.eq.s32.totalorder %s224, 0
    %s227 = sadd.s32 %s226, 1
    %s228 = scalar_select %p225, %s226, %s227
    %p231 = pneg %p225
    %p232 = scmp.eq.s32.totalorder %s17, 1
    %p233 = por %p231, %p232
    %p234 = scmp.ne.s32.totalorder %s226, %s229
    %p235 = scmp.eq.s32.totalorder %s17, 0
    %p236 = por %p234, %p235
    %p237 = scmp.ne.s32.totalorder %s226, %s229
    %p238 = scmp.eq.s32.totalorder %s22, 1
    %p239 = por %p237, %p238
    %p240 = scmp.ne.s32.totalorder %s229, %s230
    %p241 = scmp.eq.s32.totalorder %s22, 0
    %p242 = por %p240, %p241
    %p243 = scmp.ne.s32.totalorder %s229, %s230
    %p244 = scmp.eq.s32.totalorder %s23, 1
    %p245 = por %p243, %p244
    %p247 = scmp.ne.s32.totalorder %s230, %s246
    %p248 = scmp.eq.s32.totalorder %s23, 0
    %p249 = por %p247, %p248
    %p250 = scmp.le.s32.totalorder 1, %s17
    %p251 = scmp.lt.s32.totalorder %s17, 3
    %p252 = pnand %p250, %p251
    %p253 = pneg %p252
    // Predicated region
    $region9: #{comb_net_forward.12} parent=5 // pred_check
      _
    $region10: #{comb_net_forward.12} parent=5 // pred_check_branch
      %255 = sbr.rel (%p252) target = $region12
    $region11: #{comb_net_forward.12} parent=5 // pred_region
      %s256 = ssub.s32 %s17, 1
      // Predicated region
      $region13: #{comb_net_forward.12} parent=11 // pred_check
        %p257 = pneg %p38
      $region14: #{comb_net_forward.12} parent=11 // pred_check_branch
        %259 = sbr.rel (%p257) target = $region16
      $region15: #{comb_net_forward.12} parent=11 // pred_region
        _
      $region16: #{comb_net_forward.12} parent=11 // pred_fallthru
        _
      // Predicated region
      $region17: #{comb_net_forward.12} parent=11 // pred_check
        %p260 = pneg %p111
      $region18: #{comb_net_forward.12} parent=11 // pred_check_branch
        %262 = sbr.rel (%p260) target = $region20
      $region19: #{comb_net_forward.12} parent=11 // pred_region
        _
      $region20: #{comb_net_forward.12} parent=11 // pred_fallthru
        _
      // Predicated region
      $region21: #{comb_net_forward.12} parent=11 // pred_check
        %p263 = pneg %p132
      $region22: #{comb_net_forward.12} parent=11 // pred_check_branch
        %265 = sbr.rel (%p263) target = $region24
      $region23: #{comb_net_forward.12} parent=11 // pred_region
        _
      $region24: #{comb_net_forward.12} parent=11 // pred_fallthru
        _
      // Predicated region
      $region25: #{comb_net_forward.12} parent=11 // pred_check
        %p266 = pneg %p153
      $region26: #{comb_net_forward.12} parent=11 // pred_check_branch
        %268 = sbr.rel (%p266) target = $region28
      $region27: #{comb_net_forward.12} parent=11 // pred_region
        _
      $region28: #{comb_net_forward.12} parent=11 // pred_fallthru
        _
      // Predicated region
      $region29: #{comb_net_forward.12} parent=11 // pred_check
        %p269 = pneg %p174
      $region30: #{comb_net_forward.12} parent=11 // pred_check_branch
        %271 = sbr.rel (%p269) target = $region32
      $region31: #{comb_net_forward.12} parent=11 // pred_region
        _
      $region32: #{comb_net_forward.12} parent=11 // pred_fallthru
        _
      // Predicated region
      $region33: #{comb_net_forward.12} parent=11 // pred_check
        %p272 = pneg %p195
      $region34: #{comb_net_forward.12} parent=11 // pred_check_branch
        %274 = sbr.rel (%p272) target = $region36
      $region35: #{comb_net_forward.12} parent=11 // pred_region
        _
      $region36: #{comb_net_forward.12} parent=11 // pred_fallthru
        _
      // Predicated region
      $region37: #{comb_net_forward.12} parent=11 // pred_check
        %p275 = pneg %p216
      $region38: #{comb_net_forward.12} parent=11 // pred_check_branch
        %277 = sbr.rel (%p275) target = $region40
      $region39: #{comb_net_forward.12} parent=11 // pred_region
        _
      $region40: #{comb_net_forward.12} parent=11 // pred_fallthru
        _
    $region12: #{comb_net_forward.12} parent=5 // pred_fallthru
      _
    %p278 = scmp.lt.s32.totalorder %s17, 2
    // Predicated region
    $region41: #{comb_net_forward.12} parent=5 // pred_check
      %p279 = pneg %p278
    $region42: #{comb_net_forward.12} parent=5 // pred_check_branch
      %281 = sbr.rel (%p279) target = $region44
    $region43: #{comb_net_forward.12} parent=5 // pred_region
      // Predicated region
      $region45: #{comb_net_forward.12} parent=43 // pred_check
        %p282 = pneg %p58
      $region46: #{comb_net_forward.12} parent=43 // pred_check_branch
        %284 = sbr.rel (%p282) target = $region48
      $region47: #{comb_net_forward.12} parent=43 // pred_region
        %p285 = scmp.lt.s32.totalorder %s17, 1
        %s286 = scalar_select %p285, %s17, 1
        %s287 = smul.addr %s286, 6
        %s288 = smul.addr %s287, 8
        %s289 = scalar_lea.vmem %s1, %s288
      $region48: #{comb_net_forward.12} parent=43 // pred_fallthru
        _
      // Predicated region
      $region49: #{comb_net_forward.12} parent=43 // pred_check
        %p290 = pneg %p84
      $region50: #{comb_net_forward.12} parent=43 // pred_check_branch
        %292 = sbr.rel (%p290) target = $region52
      $region51: #{comb_net_forward.12} parent=43 // pred_region
        %p293 = scmp.lt.s32.totalorder %s17, 1
        %s294 = scalar_select %p293, %s17, 1
        %s295 = smul.addr %s294, 3
        %s296 = smul.addr %s295, 8
        %s297 = scalar_lea.vmem %s2, %s296
      $region52: #{comb_net_forward.12} parent=43 // pred_fallthru
        _
    $region44: #{comb_net_forward.12} parent=5 // pred_fallthru
      _
    %p298 = scmp.le.s32.totalorder 1, %s17
    %p299 = scmp.lt.s32.totalorder %s17, 3
    %p300 = pnand %p298, %p299
    %p301 = pneg %p300
    // Predicated region
    $region53: #{comb_net_forward.12} parent=5 // pred_check
      _
    $region54: #{comb_net_forward.12} parent=5 // pred_check_branch
      %303 = sbr.rel (%p300) target = $region56
    $region55: #{comb_net_forward.12} parent=5 // pred_region
      %s304 = ssub.s32 %s17, 1
      %p305 = pneg %p38
      %p306 = pneg %p35
      %p307 = scmp.lt.s32.totalorder %s22, 1
      %s308 = scalar_select %p307, %s22, 1
      %s309 = smul.addr %s308, 6
      %s310 = smul.addr %s309, 8
      %s311 = scalar_lea.vmem %s1, %s310
      %p312 = pneg %p64
      %p313 = pneg %p61
      %p314 = scmp.lt.s32.totalorder %s22, 1
      %s315 = scalar_select %p314, %s22, 1
      %s316 = smul.addr %s315, 3
      %s317 = smul.addr %s316, 8
      %s318 = scalar_lea.vmem %s2, %s317
      %p319 = pneg %p90
      %p320 = pneg %p87
      %p321 = pneg %p111
      %p322 = pneg %p108
      %p323 = pneg %p132
      %p324 = pneg %p129
      %p325 = pneg %p153
      %p326 = pneg %p150
      %p327 = pneg %p174
      %p328 = pneg %p171
      %p329 = pneg %p195
      %p330 = pneg %p192
      %p331 = pneg %p216
      %p332 = pneg %p213
      %p333 = pneg %p242
      %p334 = pneg %p239
      %p335 = scmp.lt.s32.totalorder %s22, 1
      %s336 = scalar_select %p335, %s22, 1
      %s337 = smul.addr %s336, 3
      %s338 = scalar_lea.vmem %s9, %s337
      %p339 = scmp.lt.s32.totalorder %s22, 1
      %s340 = scalar_select %p339, %s22, 1
      %s341 = smul.addr %s340, 6
      %s342 = smul.addr %s341, 8
      %s343 = scalar_lea.vmem %s1, %s342
      %p344 = scmp.lt.s32.totalorder %s22, 1
      %s345 = scalar_select %p344, %s22, 1
      %s346 = smul.addr %s345, 3
      %s347 = smul.addr %s346, 8
      %s348 = scalar_lea.vmem %s2, %s347
      %p349 = scmp.lt.s32.totalorder %s22, 1
      %s350 = scalar_select %p349, %s22, 1
      %s351 = smul.addr %s350, 3
      %s352 = scalar_lea.vmem %s9, %s351
      %vm353 = vcmask 154624
      %354 = vst.msk [vmem:[#allocation2] sm:$0xff] %vm353, 0.0
      %355 = vst.msk [vmem:[#allocation2 + $0x18] sm:$0xff] %vm353, 0.0
      %356 = vst.msk [vmem:[#allocation2 + $0x30] sm:$0xff] %vm353, 0.0
      %vm357 = vcmask 868024
      %358 = vst.msk [vmem:[#allocation2 + $0x10] sm:$0xff] %vm357, 0.0
      %359 = vst.msk [vmem:[#allocation2 + $0x28] sm:$0xff] %vm357, 0.0
      %360 = vst.msk [vmem:[#allocation2 + $0x40] sm:$0xff] %vm357, 0.0
      %v361 = vld [vmem:[%s343] sm:$0xff]
      %v362 = vld [vmem:[%s343 + $0x8] sm:$0xff]
      %v363 = vld [vmem:[%s343 + $0x10] sm:$0xff]
      %v364 = vld [vmem:[%s343 + $0x18] sm:$0xff]
      %v365 = vld [vmem:[%s343 + $0x20] sm:$0xff]
      %v366 = vld [vmem:[%s343 + $0x28] sm:$0xff]
      %373 = vrot.lane.b32.xlu0 %v361, 19
      %v374 = vpop.permute.xlu0 %373
      %375 = vrot.lane.b32.xlu0 %v362, 19
      %v376 = vpop.permute.xlu0 %375
      %377 = vrot.lane.b32.xlu0 %v363, 19
      %v378 = vpop.permute.xlu0 %377
      %379 = vrot.lane.b32.xlu0 %v364, 19
      %v380 = vpop.permute.xlu0 %379
      %381 = vrot.lane.b32.xlu0 %v365, 19
      %v382 = vpop.permute.xlu0 %381
      %383 = vrot.lane.b32.xlu0 %v366, 19
      %v384 = vpop.permute.xlu0 %383
      %v385 = vsel %vm353, %v374, %v376
      %v386 = vsel %vm353, %v376, %v378
      %v387 = vsel %vm353, %v380, %v382
      %v388 = vsel %vm353, %v382, %v384
      %vm395 = vcmask 1047704
      %396 = vst.msk [vmem:[#allocation2] sm:$0xff] %vm395, %v374
      %397 = vst [vmem:[#allocation2 + $0x8] sm:$0xff] %v385
      %vm398 = vcmask 711680
      %399 = vst.msk [vmem:[#allocation2 + $0x10] sm:$0xff] %vm398, %v386
      %400 = vst.msk [vmem:[#allocation2 + $0x18] sm:$0xff] %vm395, %v380
      %401 = vst [vmem:[#allocation2 + $0x20] sm:$0xff] %v387
      %402 = vst.msk [vmem:[#allocation2 + $0x28] sm:$0xff] %vm398, %v388
      %v403 = vld [vmem:[%s348] sm:$0xff]
      %v404 = vld [vmem:[%s348 + $0x8] sm:$0xff]
      %v405 = vld [vmem:[%s348 + $0x10] sm:$0xff]
      %409 = vrot.lane.b32.xlu0 %v403, 19
      %v410 = vpop.permute.xlu0 %409
      %411 = vrot.lane.b32.xlu0 %v404, 19
      %v412 = vpop.permute.xlu0 %411
      %413 = vrot.lane.b32.xlu0 %v405, 19
      %v414 = vpop.permute.xlu0 %413
      %v415 = vsel %vm353, %v410, %v412
      %v416 = vsel %vm353, %v412, %v414
      %420 = vst.msk [vmem:[#allocation2 + $0x30] sm:$0xff] %vm395, %v410
      %421 = vst [vmem:[#allocation2 + $0x38] sm:$0xff] %v415
      %422 = vst.msk [vmem:[#allocation2 + $0x40] sm:$0xff] %vm398, %v416
      %v423 = vld [vmem:[%s0] sm:$0x7]
      %v424 = vld [vmem:[#allocation2] sm:$0xff]
      %v425 = vld [vmem:[#allocation2 + $0x8] sm:$0xff]
      %v426 = vld [vmem:[#allocation2 + $0x10] sm:$0xff]
      %v427 = vld [vmem:[#allocation2 + $0x18] sm:$0xff]
      %v428 = vld [vmem:[#allocation2 + $0x20] sm:$0xff]
      %v429 = vld [vmem:[#allocation2 + $0x28] sm:$0xff]
      %v430 = vld [vmem:[#allocation2 + $0x30] sm:$0xff]
      %v431 = vld [vmem:[#allocation2 + $0x38] sm:$0xff]
      %v432 = vld [vmem:[#allocation2 + $0x40] sm:$0xff]
      %v433 = vld [vmem:[%s3] sm:$0xff]
      %s434 = scalar_lea.vmem %s3, 8
      %v435 = vld [vmem:[%s434] sm:$0xff]
      %445 = vrot.lane.b32.xlu0 %v424, 127
      %v446 = vpop.permute.xlu0 %445
      %447 = vrot.lane.b32.xlu0 %v425, 127
      %v448 = vpop.permute.xlu0 %447
      %449 = vrot.lane.b32.xlu0 %v426, 127
      %v450 = vpop.permute.xlu0 %449
      %451 = vrot.lane.b32.xlu0 %v427, 127
      %v452 = vpop.permute.xlu0 %451
      %453 = vrot.lane.b32.xlu0 %v428, 127
      %v454 = vpop.permute.xlu0 %453
      %455 = vrot.lane.b32.xlu0 %v429, 127
      %v456 = vpop.permute.xlu0 %455
      %457 = vrot.lane.b32.xlu0 %v430, 127
      %v458 = vpop.permute.xlu0 %457
      %459 = vrot.lane.b32.xlu0 %v431, 127
      %v460 = vpop.permute.xlu0 %459
      %461 = vrot.lane.b32.xlu0 %v432, 127
      %v462 = vpop.permute.xlu0 %461
      %vm463 = vcmask 1039360
      %v464 = vsel %vm463, %v446, %v448
      %v465 = vsel %vm463, %v448, %v450
      %v466 = vsel %vm463, %v452, %v454
      %v467 = vsel %vm463, %v454, %v456
      %v468 = vsel %vm463, %v458, %v460
      %v469 = vsel %vm463, %v460, %v462
      %vm479 = vcmask 195584
      %v481 = vsel %vm479, %v435, 0
      %483 = vmatpush.msra.mxu0 0.0
      %484 = vmatpush.msra.mxu0 0.0
      %485 = vmatpush.msra.mxu0 0.0
      %486 = vmatpush.msra.mxu0 0.0
      %487 = vmatpush.msra.mxu0 0.0
      %488 = vmatpush.msra.mxu0 0.0
      %489 = vmatpush.msra.mxu0 0.0
      %490 = vmatpush.msra.mxu0 0.0
      %491 = vmatpush.msra.mxu0 0.0
      %492 = vmatpush.msra.mxu0 0.0
      %493 = vmatpush.msra.mxu0 0.0
      %494 = vmatpush.msra.mxu0 0.0
      %495 = vmatpush.msra.mxu0 0.0
      %496 = vmatpush.msra.mxu0 %v468
      %497 = vmatpush.msra.mxu0 %v466
      %498 = vmatpush.msra.mxu0 %v464
      %499 = vmatmul.f32.gmra.mxu0 %v481
      %v500 = vpop.f32.mrf.mxu0
      %v501 = vadd.f32 0.0, %v500
      %502 = vdwg.mxu0
      %503 = vmatpush.msra.mxu0 0.0
      %504 = vmatpush.msra.mxu0 0.0
      %505 = vmatpush.msra.mxu0 0.0
      %506 = vmatpush.msra.mxu0 0.0
      %507 = vmatpush.msra.mxu0 0.0
      %508 = vmatpush.msra.mxu0 0.0
      %509 = vmatpush.msra.mxu0 0.0
      %510 = vmatpush.msra.mxu0 0.0
      %511 = vmatpush.msra.mxu0 0.0
      %512 = vmatpush.msra.mxu0 0.0
      %513 = vmatpush.msra.mxu0 0.0
      %514 = vmatpush.msra.mxu0 0.0
      %515 = vmatpush.msra.mxu0 0.0
      %516 = vmatpush.msra.mxu0 %v469
      %517 = vmatpush.msra.mxu0 %v467
      %518 = vmatpush.msra.mxu0 %v465
      %519 = vmatmul.f32.gmra.mxu0 %v481
      %v520 = vpop.f32.mrf.mxu0
      %v521 = vadd.f32 0.0, %v520
      %522 = vdwg.mxu0
      %523 = vmatpush.msra.mxu0 0.0
      %524 = vmatpush.msra.mxu0 0.0
      %525 = vmatpush.msra.mxu0 0.0
      %526 = vmatpush.msra.mxu0 0.0
      %527 = vmatpush.msra.mxu0 0.0
      %528 = vmatpush.msra.mxu0 0.0
      %529 = vmatpush.msra.mxu0 0.0
      %530 = vmatpush.msra.mxu0 0.0
      %531 = vmatpush.msra.mxu0 0.0
      %532 = vmatpush.msra.mxu0 0.0
      %533 = vmatpush.msra.mxu0 0.0
      %534 = vmatpush.msra.mxu0 0.0
      %535 = vmatpush.msra.mxu0 0.0
      %536 = vmatpush.msra.mxu0 %v462
      %537 = vmatpush.msra.mxu0 %v456
      %538 = vmatpush.msra.mxu0 %v450
      %539 = vmatmul.f32.gmra.mxu0 %v481
      %v540 = vpop.f32.mrf.mxu0
      %v541 = vadd.f32 0.0, %v540
      %542 = vdwg.mxu0
      %v544 = vsel %vm479, %v433, 0
      %546 = vmatpush.msra.mxu0 0.0
      %547 = vmatpush.msra.mxu0 0.0
      %548 = vmatpush.msra.mxu0 0.0
      %549 = vmatpush.msra.mxu0 0.0
      %550 = vmatpush.msra.mxu0 0.0
      %551 = vmatpush.msra.mxu0 0.0
      %552 = vmatpush.msra.mxu0 0.0
      %553 = vmatpush.msra.mxu0 0.0
      %554 = vmatpush.msra.mxu0 0.0
      %555 = vmatpush.msra.mxu0 0.0
      %556 = vmatpush.msra.mxu0 0.0
      %557 = vmatpush.msra.mxu0 0.0
      %558 = vmatpush.msra.mxu0 0.0
      %559 = vmatpush.msra.mxu0 %v430
      %560 = vmatpush.msra.mxu0 %v427
      %561 = vmatpush.msra.mxu0 %v424
      %562 = vmatmul.f32.gmra.mxu0 %v544
      %v563 = vpop.f32.mrf.mxu0
      %v564 = vadd.f32 %v501, %v563
      %565 = vdwg.mxu0
      %566 = vmatpush.msra.mxu0 0.0
      %567 = vmatpush.msra.mxu0 0.0
      %568 = vmatpush.msra.mxu0 0.0
      %569 = vmatpush.msra.mxu0 0.0
      %570 = vmatpush.msra.mxu0 0.0
      %571 = vmatpush.msra.mxu0 0.0
      %572 = vmatpush.msra.mxu0 0.0
      %573 = vmatpush.msra.mxu0 0.0
      %574 = vmatpush.msra.mxu0 0.0
      %575 = vmatpush.msra.mxu0 0.0
      %576 = vmatpush.msra.mxu0 0.0
      %577 = vmatpush.msra.mxu0 0.0
      %578 = vmatpush.msra.mxu0 0.0
      %579 = vmatpush.msra.mxu0 %v431
      %580 = vmatpush.msra.mxu0 %v428
      %581 = vmatpush.msra.mxu0 %v425
      %582 = vmatmul.f32.gmra.mxu0 %v544
      %v583 = vpop.f32.mrf.mxu0
      %v584 = vadd.f32 %v521, %v583
      %585 = vdwg.mxu0
      %586 = vmatpush.msra.mxu0 0.0
      %587 = vmatpush.msra.mxu0 0.0
      %588 = vmatpush.msra.mxu0 0.0
      %589 = vmatpush.msra.mxu0 0.0
      %590 = vmatpush.msra.mxu0 0.0
      %591 = vmatpush.msra.mxu0 0.0
      %592 = vmatpush.msra.mxu0 0.0
      %593 = vmatpush.msra.mxu0 0.0
      %594 = vmatpush.msra.mxu0 0.0
      %595 = vmatpush.msra.mxu0 0.0
      %596 = vmatpush.msra.mxu0 0.0
      %597 = vmatpush.msra.mxu0 0.0
      %598 = vmatpush.msra.mxu0 0.0
      %599 = vmatpush.msra.mxu0 %v432
      %600 = vmatpush.msra.mxu0 %v429
      %601 = vmatpush.msra.mxu0 %v426
      %602 = vmatmul.f32.gmra.mxu0 %v544
      %v603 = vpop.f32.mrf.mxu0
      %v604 = vadd.f32 %v541, %v603
      %605 = vdwg.mxu0
      %s606 = scalar_lea.vmem %s3, 16
      %v607 = vld [vmem:[%s606] sm:$0xff]
      %608 = vrot.lane.b32.xlu0 %v424, 126
      %v609 = vpop.permute.xlu0 %608
      %610 = vrot.lane.b32.xlu0 %v425, 126
      %v611 = vpop.permute.xlu0 %610
      %612 = vrot.lane.b32.xlu0 %v426, 126
      %v613 = vpop.permute.xlu0 %612
      %614 = vrot.lane.b32.xlu0 %v427, 126
      %v615 = vpop.permute.xlu0 %614
      %616 = vrot.lane.b32.xlu0 %v428, 126
      %v617 = vpop.permute.xlu0 %616
      %618 = vrot.lane.b32.xlu0 %v429, 126
      %v619 = vpop.permute.xlu0 %618
      %620 = vrot.lane.b32.xlu0 %v430, 126
      %v621 = vpop.permute.xlu0 %620
      %622 = vrot.lane.b32.xlu0 %v431, 126
      %v623 = vpop.permute.xlu0 %622
      %624 = vrot.lane.b32.xlu0 %v432, 126
      %v625 = vpop.permute.xlu0 %624
      %vm626 = vcmask 1031168
      %v627 = vsel %vm626, %v609, %v611
      %v628 = vsel %vm626, %v611, %v613
      %v629 = vsel %vm626, %v615, %v617
      %v630 = vsel %vm626, %v617, %v619
      %v631 = vsel %vm626, %v621, %v623
      %v632 = vsel %vm626, %v623, %v625
      %v643 = vsel %vm479, %v607, 0
      %645 = vmatpush.msra.mxu0 0.0
      %646 = vmatpush.msra.mxu0 0.0
      %647 = vmatpush.msra.mxu0 0.0
      %648 = vmatpush.msra.mxu0 0.0
      %649 = vmatpush.msra.mxu0 0.0
      %650 = vmatpush.msra.mxu0 0.0
      %651 = vmatpush.msra.mxu0 0.0
      %652 = vmatpush.msra.mxu0 0.0
      %653 = vmatpush.msra.mxu0 0.0
      %654 = vmatpush.msra.mxu0 0.0
      %655 = vmatpush.msra.mxu0 0.0
      %656 = vmatpush.msra.mxu0 0.0
      %657 = vmatpush.msra.mxu0 0.0
      %658 = vmatpush.msra.mxu0 %v631
      %659 = vmatpush.msra.mxu0 %v629
      %660 = vmatpush.msra.mxu0 %v627
      %661 = vmatmul.f32.gmra.mxu0 %v643
      %v662 = vpop.f32.mrf.mxu0
      %v663 = vadd.f32 0.0, %v662
      %664 = vdwg.mxu0
      %665 = vmatpush.msra.mxu0 0.0
      %666 = vmatpush.msra.mxu0 0.0
      %667 = vmatpush.msra.mxu0 0.0
      %668 = vmatpush.msra.mxu0 0.0
      %669 = vmatpush.msra.mxu0 0.0
      %670 = vmatpush.msra.mxu0 0.0
      %671 = vmatpush.msra.mxu0 0.0
      %672 = vmatpush.msra.mxu0 0.0
      %673 = vmatpush.msra.mxu0 0.0
      %674 = vmatpush.msra.mxu0 0.0
      %675 = vmatpush.msra.mxu0 0.0
      %676 = vmatpush.msra.mxu0 0.0
      %677 = vmatpush.msra.mxu0 0.0
      %678 = vmatpush.msra.mxu0 %v632
      %679 = vmatpush.msra.mxu0 %v630
      %680 = vmatpush.msra.mxu0 %v628
      %681 = vmatmul.f32.gmra.mxu0 %v643
      %v682 = vpop.f32.mrf.mxu0
      %v683 = vadd.f32 0.0, %v682
      %684 = vdwg.mxu0
      %685 = vmatpush.msra.mxu0 0.0
      %686 = vmatpush.msra.mxu0 0.0
      %687 = vmatpush.msra.mxu0 0.0
      %688 = vmatpush.msra.mxu0 0.0
      %689 = vmatpush.msra.mxu0 0.0
      %690 = vmatpush.msra.mxu0 0.0
      %691 = vmatpush.msra.mxu0 0.0
      %692 = vmatpush.msra.mxu0 0.0
      %693 = vmatpush.msra.mxu0 0.0
      %694 = vmatpush.msra.mxu0 0.0
      %695 = vmatpush.msra.mxu0 0.0
      %696 = vmatpush.msra.mxu0 0.0
      %697 = vmatpush.msra.mxu0 0.0
      %698 = vmatpush.msra.mxu0 %v625
      %699 = vmatpush.msra.mxu0 %v619
      %700 = vmatpush.msra.mxu0 %v613
      %701 = vmatmul.f32.gmra.mxu0 %v643
      %v702 = vpop.f32.mrf.mxu0
      %v703 = vadd.f32 0.0, %v702
      %704 = vdwg.mxu0
      %v705 = vadd.f32 %v564, %v663
      %v706 = vadd.f32 %v584, %v683
      %v707 = vadd.f32 %v604, %v703
      %s708 = scalar_lea.vmem %s3, 24
      %v709 = vld [vmem:[%s708] sm:$0xff]
      %710 = vrot.lane.b32.xlu0 %v424, 110
      %v711 = vpop.permute.xlu0 %710
      %712 = vrot.lane.b32.xlu0 %v425, 110
      %v713 = vpop.permute.xlu0 %712
      %714 = vrot.lane.b32.xlu0 %v426, 110
      %v715 = vpop.permute.xlu0 %714
      %716 = vrot.lane.b32.xlu0 %v427, 110
      %v717 = vpop.permute.xlu0 %716
      %718 = vrot.lane.b32.xlu0 %v428, 110
      %v719 = vpop.permute.xlu0 %718
      %720 = vrot.lane.b32.xlu0 %v429, 110
      %v721 = vpop.permute.xlu0 %720
      %722 = vrot.lane.b32.xlu0 %v430, 110
      %v723 = vpop.permute.xlu0 %722
      %724 = vrot.lane.b32.xlu0 %v431, 110
      %v725 = vpop.permute.xlu0 %724
      %726 = vrot.lane.b32.xlu0 %v432, 110
      %v727 = vpop.permute.xlu0 %726
      %vm728 = vcmask 900096
      %v729 = vsel %vm728, %v711, %v713
      %v730 = vsel %vm728, %v713, %v715
      %v731 = vsel %vm728, %v717, %v719
      %v732 = vsel %vm728, %v719, %v721
      %v733 = vsel %vm728, %v723, %v725
      %v734 = vsel %vm728, %v725, %v727
      %v745 = vsel %vm479, %v709, 0
      %747 = vmatpush.msra.mxu0 0.0
      %748 = vmatpush.msra.mxu0 0.0
      %749 = vmatpush.msra.mxu0 0.0
      %750 = vmatpush.msra.mxu0 0.0
      %751 = vmatpush.msra.mxu0 0.0
      %752 = vmatpush.msra.mxu0 0.0
      %753 = vmatpush.msra.mxu0 0.0
      %754 = vmatpush.msra.mxu0 0.0
      %755 = vmatpush.msra.mxu0 0.0
      %756 = vmatpush.msra.mxu0 0.0
      %757 = vmatpush.msra.mxu0 0.0
      %758 = vmatpush.msra.mxu0 0.0
      %759 = vmatpush.msra.mxu0 0.0
      %760 = vmatpush.msra.mxu0 %v733
      %761 = vmatpush.msra.mxu0 %v731
      %762 = vmatpush.msra.mxu0 %v729
      %763 = vmatmul.f32.gmra.mxu0 %v745
      %v764 = vpop.f32.mrf.mxu0
      %v765 = vadd.f32 0.0, %v764
      %766 = vdwg.mxu0
      %767 = vmatpush.msra.mxu0 0.0
      %768 = vmatpush.msra.mxu0 0.0
      %769 = vmatpush.msra.mxu0 0.0
      %770 = vmatpush.msra.mxu0 0.0
      %771 = vmatpush.msra.mxu0 0.0
      %772 = vmatpush.msra.mxu0 0.0
      %773 = vmatpush.msra.mxu0 0.0
      %774 = vmatpush.msra.mxu0 0.0
      %775 = vmatpush.msra.mxu0 0.0
      %776 = vmatpush.msra.mxu0 0.0
      %777 = vmatpush.msra.mxu0 0.0
      %778 = vmatpush.msra.mxu0 0.0
      %779 = vmatpush.msra.mxu0 0.0
      %780 = vmatpush.msra.mxu0 %v734
      %781 = vmatpush.msra.mxu0 %v732
      %782 = vmatpush.msra.mxu0 %v730
      %783 = vmatmul.f32.gmra.mxu0 %v745
      %v784 = vpop.f32.mrf.mxu0
      %v785 = vadd.f32 0.0, %v784
      %786 = vdwg.mxu0
      %787 = vmatpush.msra.mxu0 0.0
      %788 = vmatpush.msra.mxu0 0.0
      %789 = vmatpush.msra.mxu0 0.0
      %790 = vmatpush.msra.mxu0 0.0
      %791 = vmatpush.msra.mxu0 0.0
      %792 = vmatpush.msra.mxu0 0.0
      %793 = vmatpush.msra.mxu0 0.0
      %794 = vmatpush.msra.mxu0 0.0
      %795 = vmatpush.msra.mxu0 0.0
      %796 = vmatpush.msra.mxu0 0.0
      %797 = vmatpush.msra.mxu0 0.0
      %798 = vmatpush.msra.mxu0 0.0
      %799 = vmatpush.msra.mxu0 0.0
      %800 = vmatpush.msra.mxu0 %v727
      %801 = vmatpush.msra.mxu0 %v721
      %802 = vmatpush.msra.mxu0 %v715
      %803 = vmatmul.f32.gmra.mxu0 %v745
      %v804 = vpop.f32.mrf.mxu0
      %v805 = vadd.f32 0.0, %v804
      %806 = vdwg.mxu0
      %v807 = vadd.f32 %v705, %v765
      %v808 = vadd.f32 %v706, %v785
      %v809 = vadd.f32 %v707, %v805
      %s810 = scalar_lea.vmem %s3, 32
      %v811 = vld [vmem:[%s810] sm:$0xff]
      %812 = vrot.lane.b32.xlu0 %v424, 109
      %v813 = vpop.permute.xlu0 %812
      %814 = vrot.lane.b32.xlu0 %v425, 109
      %v815 = vpop.permute.xlu0 %814
      %816 = vrot.lane.b32.xlu0 %v426, 109
      %v817 = vpop.permute.xlu0 %816
      %818 = vrot.lane.b32.xlu0 %v427, 109
      %v819 = vpop.permute.xlu0 %818
      %820 = vrot.lane.b32.xlu0 %v428, 109
      %v821 = vpop.permute.xlu0 %820
      %822 = vrot.lane.b32.xlu0 %v429, 109
      %v823 = vpop.permute.xlu0 %822
      %824 = vrot.lane.b32.xlu0 %v430, 109
      %v825 = vpop.permute.xlu0 %824
      %826 = vrot.lane.b32.xlu0 %v431, 109
      %v827 = vpop.permute.xlu0 %826
      %828 = vrot.lane.b32.xlu0 %v432, 109
      %v829 = vpop.permute.xlu0 %828
      %vm830 = vcmask 891904
      %v831 = vsel %vm830, %v813, %v815
      %v832 = vsel %vm830, %v815, %v817
      %v833 = vsel %vm830, %v819, %v821
      %v834 = vsel %vm830, %v821, %v823
      %v835 = vsel %vm830, %v825, %v827
      %v836 = vsel %vm830, %v827, %v829
      %v847 = vsel %vm479, %v811, 0
      %849 = vmatpush.msra.mxu0 0.0
      %850 = vmatpush.msra.mxu0 0.0
      %851 = vmatpush.msra.mxu0 0.0
      %852 = vmatpush.msra.mxu0 0.0
      %853 = vmatpush.msra.mxu0 0.0
      %854 = vmatpush.msra.mxu0 0.0
      %855 = vmatpush.msra.mxu0 0.0
      %856 = vmatpush.msra.mxu0 0.0
      %857 = vmatpush.msra.mxu0 0.0
      %858 = vmatpush.msra.mxu0 0.0
      %859 = vmatpush.msra.mxu0 0.0
      %860 = vmatpush.msra.mxu0 0.0
      %861 = vmatpush.msra.mxu0 0.0
      %862 = vmatpush.msra.mxu0 %v835
      %863 = vmatpush.msra.mxu0 %v833
      %864 = vmatpush.msra.mxu0 %v831
      %865 = vmatmul.f32.gmra.mxu0 %v847
      %v866 = vpop.f32.mrf.mxu0
      %v867 = vadd.f32 0.0, %v866
      %868 = vdwg.mxu0
      %869 = vmatpush.msra.mxu0 0.0
      %870 = vmatpush.msra.mxu0 0.0
      %871 = vmatpush.msra.mxu0 0.0
      %872 = vmatpush.msra.mxu0 0.0
      %873 = vmatpush.msra.mxu0 0.0
      %874 = vmatpush.msra.mxu0 0.0
      %875 = vmatpush.msra.mxu0 0.0
      %876 = vmatpush.msra.mxu0 0.0
      %877 = vmatpush.msra.mxu0 0.0
      %878 = vmatpush.msra.mxu0 0.0
      %879 = vmatpush.msra.mxu0 0.0
      %880 = vmatpush.msra.mxu0 0.0
      %881 = vmatpush.msra.mxu0 0.0
      %882 = vmatpush.msra.mxu0 %v836
      %883 = vmatpush.msra.mxu0 %v834
      %884 = vmatpush.msra.mxu0 %v832
      %885 = vmatmul.f32.gmra.mxu0 %v847
      %v886 = vpop.f32.mrf.mxu0
      %v887 = vadd.f32 0.0, %v886
      %888 = vdwg.mxu0
      %889 = vmatpush.msra.mxu0 0.0
      %890 = vmatpush.msra.mxu0 0.0
      %891 = vmatpush.msra.mxu0 0.0
      %892 = vmatpush.msra.mxu0 0.0
      %893 = vmatpush.msra.mxu0 0.0
      %894 = vmatpush.msra.mxu0 0.0
      %895 = vmatpush.msra.mxu0 0.0
      %896 = vmatpush.msra.mxu0 0.0
      %897 = vmatpush.msra.mxu0 0.0
      %898 = vmatpush.msra.mxu0 0.0
      %899 = vmatpush.msra.mxu0 0.0
      %900 = vmatpush.msra.mxu0 0.0
      %901 = vmatpush.msra.mxu0 0.0
      %902 = vmatpush.msra.mxu0 %v829
      %903 = vmatpush.msra.mxu0 %v823
      %904 = vmatpush.msra.mxu0 %v817
      %905 = vmatmul.f32.gmra.mxu0 %v847
      %v906 = vpop.f32.mrf.mxu0
      %v907 = vadd.f32 0.0, %v906
      %908 = vdwg.mxu0
      %v909 = vadd.f32 %v807, %v867
      %v910 = vadd.f32 %v808, %v887
      %v911 = vadd.f32 %v809, %v907
      %s912 = scalar_lea.vmem %s3, 40
      %v913 = vld [vmem:[%s912] sm:$0xff]
      %914 = vrot.lane.b32.xlu0 %v424, 108
      %v915 = vpop.permute.xlu0 %914
      %916 = vrot.lane.b32.xlu0 %v425, 108
      %v917 = vpop.permute.xlu0 %916
      %918 = vrot.lane.b32.xlu0 %v426, 108
      %v919 = vpop.permute.xlu0 %918
      %920 = vrot.lane.b32.xlu0 %v427, 108
      %v921 = vpop.permute.xlu0 %920
      %922 = vrot.lane.b32.xlu0 %v428, 108
      %v923 = vpop.permute.xlu0 %922
      %924 = vrot.lane.b32.xlu0 %v429, 108
      %v925 = vpop.permute.xlu0 %924
      %926 = vrot.lane.b32.xlu0 %v430, 108
      %v927 = vpop.permute.xlu0 %926
      %928 = vrot.lane.b32.xlu0 %v431, 108
      %v929 = vpop.permute.xlu0 %928
      %930 = vrot.lane.b32.xlu0 %v432, 108
      %v931 = vpop.permute.xlu0 %930
      %vm932 = vcmask 883712
      %v933 = vsel %vm932, %v915, %v917
      %v934 = vsel %vm932, %v917, %v919
      %v935 = vsel %vm932, %v921, %v923
      %v936 = vsel %vm932, %v923, %v925
      %v937 = vsel %vm932, %v927, %v929
      %v938 = vsel %vm932, %v929, %v931
      %v949 = vsel %vm479, %v913, 0
      %951 = vmatpush.msra.mxu0 0.0
      %952 = vmatpush.msra.mxu0 0.0
      %953 = vmatpush.msra.mxu0 0.0
      %954 = vmatpush.msra.mxu0 0.0
      %955 = vmatpush.msra.mxu0 0.0
      %956 = vmatpush.msra.mxu0 0.0
      %957 = vmatpush.msra.mxu0 0.0
      %958 = vmatpush.msra.mxu0 0.0
      %959 = vmatpush.msra.mxu0 0.0
      %960 = vmatpush.msra.mxu0 0.0
      %961 = vmatpush.msra.mxu0 0.0
      %962 = vmatpush.msra.mxu0 0.0
      %963 = vmatpush.msra.mxu0 0.0
      %964 = vmatpush.msra.mxu0 %v937
      %965 = vmatpush.msra.mxu0 %v935
      %966 = vmatpush.msra.mxu0 %v933
      %967 = vmatmul.f32.gmra.mxu0 %v949
      %v968 = vpop.f32.mrf.mxu0
      %v969 = vadd.f32 0.0, %v968
      %970 = vdwg.mxu0
      %971 = vmatpush.msra.mxu0 0.0
      %972 = vmatpush.msra.mxu0 0.0
      %973 = vmatpush.msra.mxu0 0.0
      %974 = vmatpush.msra.mxu0 0.0
      %975 = vmatpush.msra.mxu0 0.0
      %976 = vmatpush.msra.mxu0 0.0
      %977 = vmatpush.msra.mxu0 0.0
      %978 = vmatpush.msra.mxu0 0.0
      %979 = vmatpush.msra.mxu0 0.0
      %980 = vmatpush.msra.mxu0 0.0
      %981 = vmatpush.msra.mxu0 0.0
      %982 = vmatpush.msra.mxu0 0.0
      %983 = vmatpush.msra.mxu0 0.0
      %984 = vmatpush.msra.mxu0 %v938
      %985 = vmatpush.msra.mxu0 %v936
      %986 = vmatpush.msra.mxu0 %v934
      %987 = vmatmul.f32.gmra.mxu0 %v949
      %v988 = vpop.f32.mrf.mxu0
      %v989 = vadd.f32 0.0, %v988
      %990 = vdwg.mxu0
      %991 = vmatpush.msra.mxu0 0.0
      %992 = vmatpush.msra.mxu0 0.0
      %993 = vmatpush.msra.mxu0 0.0
      %994 = vmatpush.msra.mxu0 0.0
      %995 = vmatpush.msra.mxu0 0.0
      %996 = vmatpush.msra.mxu0 0.0
      %997 = vmatpush.msra.mxu0 0.0
      %998 = vmatpush.msra.mxu0 0.0
      %999 = vmatpush.msra.mxu0 0.0
      %1000 = vmatpush.msra.mxu0 0.0
      %1001 = vmatpush.msra.mxu0 0.0
      %1002 = vmatpush.msra.mxu0 0.0
      %1003 = vmatpush.msra.mxu0 0.0
      %1004 = vmatpush.msra.mxu0 %v931
      %1005 = vmatpush.msra.mxu0 %v925
      %1006 = vmatpush.msra.mxu0 %v919
      %1007 = vmatmul.f32.gmra.mxu0 %v949
      %v1008 = vpop.f32.mrf.mxu0
      %v1009 = vadd.f32 0.0, %v1008
      %1010 = vdwg.mxu0
      %v1011 = vadd.f32 %v909, %v969
      %v1012 = vadd.f32 %v910, %v989
      %v1013 = vadd.f32 %v911, %v1009
      %s1014 = scalar_lea.vmem %s3, 48
      %v1015 = vld [vmem:[%s1014] sm:$0xff]
      %1016 = vrot.lane.b32.xlu0 %v424, 92
      %v1017 = vpop.permute.xlu0 %1016
      %1018 = vrot.lane.b32.xlu0 %v425, 92
      %v1019 = vpop.permute.xlu0 %1018
      %1020 = vrot.lane.b32.xlu0 %v426, 92
      %v1021 = vpop.permute.xlu0 %1020
      %1022 = vrot.lane.b32.xlu0 %v427, 92
      %v1023 = vpop.permute.xlu0 %1022
      %1024 = vrot.lane.b32.xlu0 %v428, 92
      %v1025 = vpop.permute.xlu0 %1024
      %1026 = vrot.lane.b32.xlu0 %v429, 92
      %v1027 = vpop.permute.xlu0 %1026
      %1028 = vrot.lane.b32.xlu0 %v430, 92
      %v1029 = vpop.permute.xlu0 %1028
      %1030 = vrot.lane.b32.xlu0 %v431, 92
      %v1031 = vpop.permute.xlu0 %1030
      %1032 = vrot.lane.b32.xlu0 %v432, 92
      %v1033 = vpop.permute.xlu0 %1032
      %vm1034 = vcmask 752640
      %v1035 = vsel %vm1034, %v1017, %v1019
      %v1036 = vsel %vm1034, %v1019, %v1021
      %v1037 = vsel %vm1034, %v1023, %v1025
      %v1038 = vsel %vm1034, %v1025, %v1027
      %v1039 = vsel %vm1034, %v1029, %v1031
      %v1040 = vsel %vm1034, %v1031, %v1033
      %v1051 = vsel %vm479, %v1015, 0
      %1053 = vmatpush.msra.mxu0 0.0
      %1054 = vmatpush.msra.mxu0 0.0
      %1055 = vmatpush.msra.mxu0 0.0
      %1056 = vmatpush.msra.mxu0 0.0
      %1057 = vmatpush.msra.mxu0 0.0
      %1058 = vmatpush.msra.mxu0 0.0
      %1059 = vmatpush.msra.mxu0 0.0
      %1060 = vmatpush.msra.mxu0 0.0
      %1061 = vmatpush.msra.mxu0 0.0
      %1062 = vmatpush.msra.mxu0 0.0
      %1063 = vmatpush.msra.mxu0 0.0
      %1064 = vmatpush.msra.mxu0 0.0
      %1065 = vmatpush.msra.mxu0 0.0
      %1066 = vmatpush.msra.mxu0 %v1039
      %1067 = vmatpush.msra.mxu0 %v1037
      %1068 = vmatpush.msra.mxu0 %v1035
      %1069 = vmatmul.f32.gmra.mxu0 %v1051
      %v1070 = vpop.f32.mrf.mxu0
      %v1071 = vadd.f32 0.0, %v1070
      %1072 = vdwg.mxu0
      %1073 = vmatpush.msra.mxu0 0.0
      %1074 = vmatpush.msra.mxu0 0.0
      %1075 = vmatpush.msra.mxu0 0.0
      %1076 = vmatpush.msra.mxu0 0.0
      %1077 = vmatpush.msra.mxu0 0.0
      %1078 = vmatpush.msra.mxu0 0.0
      %1079 = vmatpush.msra.mxu0 0.0
      %1080 = vmatpush.msra.mxu0 0.0
      %1081 = vmatpush.msra.mxu0 0.0
      %1082 = vmatpush.msra.mxu0 0.0
      %1083 = vmatpush.msra.mxu0 0.0
      %1084 = vmatpush.msra.mxu0 0.0
      %1085 = vmatpush.msra.mxu0 0.0
      %1086 = vmatpush.msra.mxu0 %v1040
      %1087 = vmatpush.msra.mxu0 %v1038
      %1088 = vmatpush.msra.mxu0 %v1036
      %1089 = vmatmul.f32.gmra.mxu0 %v1051
      %v1090 = vpop.f32.mrf.mxu0
      %v1091 = vadd.f32 0.0, %v1090
      %1092 = vdwg.mxu0
      %1093 = vmatpush.msra.mxu0 0.0
      %1094 = vmatpush.msra.mxu0 0.0
      %1095 = vmatpush.msra.mxu0 0.0
      %1096 = vmatpush.msra.mxu0 0.0
      %1097 = vmatpush.msra.mxu0 0.0
      %1098 = vmatpush.msra.mxu0 0.0
      %1099 = vmatpush.msra.mxu0 0.0
      %1100 = vmatpush.msra.mxu0 0.0
      %1101 = vmatpush.msra.mxu0 0.0
      %1102 = vmatpush.msra.mxu0 0.0
      %1103 = vmatpush.msra.mxu0 0.0
      %1104 = vmatpush.msra.mxu0 0.0
      %1105 = vmatpush.msra.mxu0 0.0
      %1106 = vmatpush.msra.mxu0 %v1033
      %1107 = vmatpush.msra.mxu0 %v1027
      %1108 = vmatpush.msra.mxu0 %v1021
      %1109 = vmatmul.f32.gmra.mxu0 %v1051
      %v1110 = vpop.f32.mrf.mxu0
      %v1111 = vadd.f32 0.0, %v1110
      %1112 = vdwg.mxu0
      %v1113 = vadd.f32 %v1011, %v1071
      %v1114 = vadd.f32 %v1012, %v1091
      %v1115 = vadd.f32 %v1013, %v1111
      %s1116 = scalar_lea.vmem %s3, 56
      %v1117 = vld [vmem:[%s1116] sm:$0xff]
      %1118 = vrot.lane.b32.xlu0 %v424, 91
      %v1119 = vpop.permute.xlu0 %1118
      %1120 = vrot.lane.b32.xlu0 %v425, 91
      %v1121 = vpop.permute.xlu0 %1120
      %1122 = vrot.lane.b32.xlu0 %v426, 91
      %v1123 = vpop.permute.xlu0 %1122
      %1124 = vrot.lane.b32.xlu0 %v427, 91
      %v1125 = vpop.permute.xlu0 %1124
      %1126 = vrot.lane.b32.xlu0 %v428, 91
      %v1127 = vpop.permute.xlu0 %1126
      %1128 = vrot.lane.b32.xlu0 %v429, 91
      %v1129 = vpop.permute.xlu0 %1128
      %1130 = vrot.lane.b32.xlu0 %v430, 91
      %v1131 = vpop.permute.xlu0 %1130
      %1132 = vrot.lane.b32.xlu0 %v431, 91
      %v1133 = vpop.permute.xlu0 %1132
      %1134 = vrot.lane.b32.xlu0 %v432, 91
      %v1135 = vpop.permute.xlu0 %1134
      %vm1136 = vcmask 744448
      %v1137 = vsel %vm1136, %v1119, %v1121
      %v1138 = vsel %vm1136, %v1121, %v1123
      %v1139 = vsel %vm1136, %v1125, %v1127
      %v1140 = vsel %vm1136, %v1127, %v1129
      %v1141 = vsel %vm1136, %v1131, %v1133
      %v1142 = vsel %vm1136, %v1133, %v1135
      %v1153 = vsel %vm479, %v1117, 0
      %1155 = vmatpush.msra.mxu0 0.0
      %1156 = vmatpush.msra.mxu0 0.0
      %1157 = vmatpush.msra.mxu0 0.0
      %1158 = vmatpush.msra.mxu0 0.0
      %1159 = vmatpush.msra.mxu0 0.0
      %1160 = vmatpush.msra.mxu0 0.0
      %1161 = vmatpush.msra.mxu0 0.0
      %1162 = vmatpush.msra.mxu0 0.0
      %1163 = vmatpush.msra.mxu0 0.0
      %1164 = vmatpush.msra.mxu0 0.0
      %1165 = vmatpush.msra.mxu0 0.0
      %1166 = vmatpush.msra.mxu0 0.0
      %1167 = vmatpush.msra.mxu0 0.0
      %1168 = vmatpush.msra.mxu0 %v1141
      %1169 = vmatpush.msra.mxu0 %v1139
      %1170 = vmatpush.msra.mxu0 %v1137
      %1171 = vmatmul.f32.gmra.mxu0 %v1153
      %v1172 = vpop.f32.mrf.mxu0
      %v1173 = vadd.f32 0.0, %v1172
      %1174 = vdwg.mxu0
      %1175 = vmatpush.msra.mxu0 0.0
      %1176 = vmatpush.msra.mxu0 0.0
      %1177 = vmatpush.msra.mxu0 0.0
      %1178 = vmatpush.msra.mxu0 0.0
      %1179 = vmatpush.msra.mxu0 0.0
      %1180 = vmatpush.msra.mxu0 0.0
      %1181 = vmatpush.msra.mxu0 0.0
      %1182 = vmatpush.msra.mxu0 0.0
      %1183 = vmatpush.msra.mxu0 0.0
      %1184 = vmatpush.msra.mxu0 0.0
      %1185 = vmatpush.msra.mxu0 0.0
      %1186 = vmatpush.msra.mxu0 0.0
      %1187 = vmatpush.msra.mxu0 0.0
      %1188 = vmatpush.msra.mxu0 %v1142
      %1189 = vmatpush.msra.mxu0 %v1140
      %1190 = vmatpush.msra.mxu0 %v1138
      %1191 = vmatmul.f32.gmra.mxu0 %v1153
      %v1192 = vpop.f32.mrf.mxu0
      %v1193 = vadd.f32 0.0, %v1192
      %1194 = vdwg.mxu0
      %1195 = vmatpush.msra.mxu0 0.0
      %1196 = vmatpush.msra.mxu0 0.0
      %1197 = vmatpush.msra.mxu0 0.0
      %1198 = vmatpush.msra.mxu0 0.0
      %1199 = vmatpush.msra.mxu0 0.0
      %1200 = vmatpush.msra.mxu0 0.0
      %1201 = vmatpush.msra.mxu0 0.0
      %1202 = vmatpush.msra.mxu0 0.0
      %1203 = vmatpush.msra.mxu0 0.0
      %1204 = vmatpush.msra.mxu0 0.0
      %1205 = vmatpush.msra.mxu0 0.0
      %1206 = vmatpush.msra.mxu0 0.0
      %1207 = vmatpush.msra.mxu0 0.0
      %1208 = vmatpush.msra.mxu0 %v1135
      %1209 = vmatpush.msra.mxu0 %v1129
      %1210 = vmatpush.msra.mxu0 %v1123
      %1211 = vmatmul.f32.gmra.mxu0 %v1153
      %v1212 = vpop.f32.mrf.mxu0
      %v1213 = vadd.f32 0.0, %v1212
      %1214 = vdwg.mxu0
      %v1215 = vadd.f32 %v1113, %v1173
      %v1216 = vadd.f32 %v1114, %v1193
      %v1217 = vadd.f32 %v1115, %v1213
      %s1218 = scalar_lea.vmem %s3, 64
      %v1219 = vld [vmem:[%s1218] sm:$0xff]
      %1220 = vrot.lane.b32.xlu0 %v424, 90
      %v1221 = vpop.permute.xlu0 %1220
      %1222 = vrot.lane.b32.xlu0 %v425, 90
      %v1223 = vpop.permute.xlu0 %1222
      %1224 = vrot.lane.b32.xlu0 %v426, 90
      %v1225 = vpop.permute.xlu0 %1224
      %1226 = vrot.lane.b32.xlu0 %v427, 90
      %v1227 = vpop.permute.xlu0 %1226
      %1228 = vrot.lane.b32.xlu0 %v428, 90
      %v1229 = vpop.permute.xlu0 %1228
      %1230 = vrot.lane.b32.xlu0 %v429, 90
      %v1231 = vpop.permute.xlu0 %1230
      %1232 = vrot.lane.b32.xlu0 %v430, 90
      %v1233 = vpop.permute.xlu0 %1232
      %1234 = vrot.lane.b32.xlu0 %v431, 90
      %v1235 = vpop.permute.xlu0 %1234
      %1236 = vrot.lane.b32.xlu0 %v432, 90
      %v1237 = vpop.permute.xlu0 %1236
      %vm1238 = vcmask 736256
      %v1239 = vsel %vm1238, %v1221, %v1223
      %v1240 = vsel %vm1238, %v1223, %v1225
      %v1241 = vsel %vm1238, %v1227, %v1229
      %v1242 = vsel %vm1238, %v1229, %v1231
      %v1243 = vsel %vm1238, %v1233, %v1235
      %v1244 = vsel %vm1238, %v1235, %v1237
      %v1255 = vsel %vm479, %v1219, 0
      %1257 = vmatpush.msra.mxu0 0.0
      %1258 = vmatpush.msra.mxu0 0.0
      %1259 = vmatpush.msra.mxu0 0.0
      %1260 = vmatpush.msra.mxu0 0.0
      %1261 = vmatpush.msra.mxu0 0.0
      %1262 = vmatpush.msra.mxu0 0.0
      %1263 = vmatpush.msra.mxu0 0.0
      %1264 = vmatpush.msra.mxu0 0.0
      %1265 = vmatpush.msra.mxu0 0.0
      %1266 = vmatpush.msra.mxu0 0.0
      %1267 = vmatpush.msra.mxu0 0.0
      %1268 = vmatpush.msra.mxu0 0.0
      %1269 = vmatpush.msra.mxu0 0.0
      %1270 = vmatpush.msra.mxu0 %v1243
      %1271 = vmatpush.msra.mxu0 %v1241
      %1272 = vmatpush.msra.mxu0 %v1239
      %1273 = vmatmul.f32.gmra.mxu0 %v1255
      %v1274 = vpop.f32.mrf.mxu0
      %v1275 = vadd.f32 0.0, %v1274
      %1276 = vdwg.mxu0
      %1277 = vmatpush.msra.mxu0 0.0
      %1278 = vmatpush.msra.mxu0 0.0
      %1279 = vmatpush.msra.mxu0 0.0
      %1280 = vmatpush.msra.mxu0 0.0
      %1281 = vmatpush.msra.mxu0 0.0
      %1282 = vmatpush.msra.mxu0 0.0
      %1283 = vmatpush.msra.mxu0 0.0
      %1284 = vmatpush.msra.mxu0 0.0
      %1285 = vmatpush.msra.mxu0 0.0
      %1286 = vmatpush.msra.mxu0 0.0
      %1287 = vmatpush.msra.mxu0 0.0
      %1288 = vmatpush.msra.mxu0 0.0
      %1289 = vmatpush.msra.mxu0 0.0
      %1290 = vmatpush.msra.mxu0 %v1244
      %1291 = vmatpush.msra.mxu0 %v1242
      %1292 = vmatpush.msra.mxu0 %v1240
      %1293 = vmatmul.f32.gmra.mxu0 %v1255
      %v1294 = vpop.f32.mrf.mxu0
      %v1295 = vadd.f32 0.0, %v1294
      %1296 = vdwg.mxu0
      %1297 = vmatpush.msra.mxu0 0.0
      %1298 = vmatpush.msra.mxu0 0.0
      %1299 = vmatpush.msra.mxu0 0.0
      %1300 = vmatpush.msra.mxu0 0.0
      %1301 = vmatpush.msra.mxu0 0.0
      %1302 = vmatpush.msra.mxu0 0.0
      %1303 = vmatpush.msra.mxu0 0.0
      %1304 = vmatpush.msra.mxu0 0.0
      %1305 = vmatpush.msra.mxu0 0.0
      %1306 = vmatpush.msra.mxu0 0.0
      %1307 = vmatpush.msra.mxu0 0.0
      %1308 = vmatpush.msra.mxu0 0.0
      %1309 = vmatpush.msra.mxu0 0.0
      %1310 = vmatpush.msra.mxu0 %v1237
      %1311 = vmatpush.msra.mxu0 %v1231
      %1312 = vmatpush.msra.mxu0 %v1225
      %1313 = vmatmul.f32.gmra.mxu0 %v1255
      %v1314 = vpop.f32.mrf.mxu0
      %v1315 = vadd.f32 0.0, %v1314
      %1316 = vdwg.mxu0
      %v1317 = vadd.f32 %v1215, %v1275
      %v1318 = vadd.f32 %v1216, %v1295
      %v1319 = vadd.f32 %v1217, %v1315
      %v1320 = vld [vmem:[%s4] sm:$0xff]
      %1322 = vset.pattern.permute.xlu0 0
      %1323 = vperm.xlu0 %1322, %v1320
      %v1324 = vpop.permute.xlu0 %1323
      %v1326 = vadd.f32 %v1317, %v1324
      %v1327 = vadd.f32 %v1318, %v1324
      %v1328 = vadd.f32 %v1319, %v1324
      %v1329 = vmax.f32 %v1326, 0.0
      %v1330 = vmax.f32 %v1327, 0.0
      %v1331 = vmax.f32 %v1328, 0.0
      %v1333 = vperm.slane %v423, 0
      %v1334 = vperm.slane %v423, 1
      %v1335 = vperm.slane %v423, 2
      %v1339 = vmul.f32 %v1329, %v1333
      %v1340 = vmul.f32 %v1330, %v1334
      %v1341 = vmul.f32 %v1331, %v1335
      %1345 = vrot.lane.b32.xlu0 %v1339, 19
      %v1346 = vpop.permute.xlu0 %1345
      %1347 = vrot.lane.b32.xlu0 %v1340, 19
      %v1348 = vpop.permute.xlu0 %1347
      %1349 = vrot.lane.b32.xlu0 %v1341, 19
      %v1350 = vpop.permute.xlu0 %1349
      %v1351 = vsel %vm353, %v1346, %v1348
      %v1352 = vsel %vm353, %v1348, %v1350
      %1356 = vst.msk [vmem:[#allocation2] sm:$0xff] %vm395, %v1346
      %1357 = vst [vmem:[#allocation2 + $0x8] sm:$0xff] %v1351
      %1358 = vst.msk [vmem:[#allocation2 + $0x10] sm:$0xff] %vm398, %v1352
      %v1359 = vld [vmem:[#allocation2] sm:$0xff]
      %v1360 = vld [vmem:[#allocation2 + $0x8] sm:$0xff]
      %v1361 = vld [vmem:[#allocation2 + $0x10] sm:$0xff]
      %v1362 = vld [vmem:[%s5] sm:$0xff]
      %s1363 = scalar_lea.vmem %s5, 8
      %v1364 = vld [vmem:[%s1363] sm:$0xff]
      %1368 = vrot.lane.b32.xlu0 %v1359, 127
      %v1369 = vpop.permute.xlu0 %1368
      %1370 = vrot.lane.b32.xlu0 %v1360, 127
      %v1371 = vpop.permute.xlu0 %1370
      %1372 = vrot.lane.b32.xlu0 %v1361, 127
      %v1373 = vpop.permute.xlu0 %1372
      %v1374 = vsel %vm463, %v1369, %v1371
      %v1375 = vsel %vm463, %v1371, %v1373
      %vm1379 = vcmask 64512
      %v1381 = vsel %vm1379, %v1364, 0
      %1383 = vmatpush.msra.mxu0 0.0
      %1384 = vmatpush.msra.mxu0 0.0
      %1385 = vmatpush.msra.mxu0 0.0
      %1386 = vmatpush.msra.mxu0 0.0
      %1387 = vmatpush.msra.mxu0 0.0
      %1388 = vmatpush.msra.mxu0 0.0
      %1389 = vmatpush.msra.mxu0 0.0
      %1390 = vmatpush.msra.mxu0 0.0
      %1391 = vmatpush.msra.mxu0 0.0
      %1392 = vmatpush.msra.mxu0 0.0
      %1393 = vmatpush.msra.mxu0 0.0
      %1394 = vmatpush.msra.mxu0 0.0
      %1395 = vmatpush.msra.mxu0 0.0
      %1396 = vmatpush.msra.mxu0 0.0
      %1397 = vmatpush.msra.mxu0 0.0
      %1398 = vmatpush.msra.mxu0 %v1374
      %1399 = vmatmul.f32.gmra.mxu0 %v1381
      %v1400 = vpop.f32.mrf.mxu0
      %v1401 = vadd.f32 0.0, %v1400
      %1402 = vdwg.mxu0
      %1403 = vmatpush.msra.mxu0 0.0
      %1404 = vmatpush.msra.mxu0 0.0
      %1405 = vmatpush.msra.mxu0 0.0
      %1406 = vmatpush.msra.mxu0 0.0
      %1407 = vmatpush.msra.mxu0 0.0
      %1408 = vmatpush.msra.mxu0 0.0
      %1409 = vmatpush.msra.mxu0 0.0
      %1410 = vmatpush.msra.mxu0 0.0
      %1411 = vmatpush.msra.mxu0 0.0
      %1412 = vmatpush.msra.mxu0 0.0
      %1413 = vmatpush.msra.mxu0 0.0
      %1414 = vmatpush.msra.mxu0 0.0
      %1415 = vmatpush.msra.mxu0 0.0
      %1416 = vmatpush.msra.mxu0 0.0
      %1417 = vmatpush.msra.mxu0 0.0
      %1418 = vmatpush.msra.mxu0 %v1375
      %1419 = vmatmul.f32.gmra.mxu0 %v1381
      %v1420 = vpop.f32.mrf.mxu0
      %v1421 = vadd.f32 0.0, %v1420
      %1422 = vdwg.mxu0
      %1423 = vmatpush.msra.mxu0 0.0
      %1424 = vmatpush.msra.mxu0 0.0
      %1425 = vmatpush.msra.mxu0 0.0
      %1426 = vmatpush.msra.mxu0 0.0
      %1427 = vmatpush.msra.mxu0 0.0
      %1428 = vmatpush.msra.mxu0 0.0
      %1429 = vmatpush.msra.mxu0 0.0
      %1430 = vmatpush.msra.mxu0 0.0
      %1431 = vmatpush.msra.mxu0 0.0
      %1432 = vmatpush.msra.mxu0 0.0
      %1433 = vmatpush.msra.mxu0 0.0
      %1434 = vmatpush.msra.mxu0 0.0
      %1435 = vmatpush.msra.mxu0 0.0
      %1436 = vmatpush.msra.mxu0 0.0
      %1437 = vmatpush.msra.mxu0 0.0
      %1438 = vmatpush.msra.mxu0 %v1373
      %1439 = vmatmul.f32.gmra.mxu0 %v1381
      %v1440 = vpop.f32.mrf.mxu0
      %v1441 = vadd.f32 0.0, %v1440
      %1442 = vdwg.mxu0
      %v1444 = vsel %vm1379, %v1362, 0
      %1446 = vmatpush.msra.mxu0 0.0
      %1447 = vmatpush.msra.mxu0 0.0
      %1448 = vmatpush.msra.mxu0 0.0
      %1449 = vmatpush.msra.mxu0 0.0
      %1450 = vmatpush.msra.mxu0 0.0
      %1451 = vmatpush.msra.mxu0 0.0
      %1452 = vmatpush.msra.mxu0 0.0
      %1453 = vmatpush.msra.mxu0 0.0
      %1454 = vmatpush.msra.mxu0 0.0
      %1455 = vmatpush.msra.mxu0 0.0
      %1456 = vmatpush.msra.mxu0 0.0
      %1457 = vmatpush.msra.mxu0 0.0
      %1458 = vmatpush.msra.mxu0 0.0
      %1459 = vmatpush.msra.mxu0 0.0
      %1460 = vmatpush.msra.mxu0 0.0
      %1461 = vmatpush.msra.mxu0 %v1359
      %1462 = vmatmul.f32.gmra.mxu0 %v1444
      %v1463 = vpop.f32.mrf.mxu0
      %v1464 = vadd.f32 %v1401, %v1463
      %1465 = vdwg.mxu0
      %1466 = vmatpush.msra.mxu0 0.0
      %1467 = vmatpush.msra.mxu0 0.0
      %1468 = vmatpush.msra.mxu0 0.0
      %1469 = vmatpush.msra.mxu0 0.0
      %1470 = vmatpush.msra.mxu0 0.0
      %1471 = vmatpush.msra.mxu0 0.0
      %1472 = vmatpush.msra.mxu0 0.0
      %1473 = vmatpush.msra.mxu0 0.0
      %1474 = vmatpush.msra.mxu0 0.0
      %1475 = vmatpush.msra.mxu0 0.0
      %1476 = vmatpush.msra.mxu0 0.0
      %1477 = vmatpush.msra.mxu0 0.0
      %1478 = vmatpush.msra.mxu0 0.0
      %1479 = vmatpush.msra.mxu0 0.0
      %1480 = vmatpush.msra.mxu0 0.0
      %1481 = vmatpush.msra.mxu0 %v1360
      %1482 = vmatmul.f32.gmra.mxu0 %v1444
      %v1483 = vpop.f32.mrf.mxu0
      %v1484 = vadd.f32 %v1421, %v1483
      %1485 = vdwg.mxu0
      %1486 = vmatpush.msra.mxu0 0.0
      %1487 = vmatpush.msra.mxu0 0.0
      %1488 = vmatpush.msra.mxu0 0.0
      %1489 = vmatpush.msra.mxu0 0.0
      %1490 = vmatpush.msra.mxu0 0.0
      %1491 = vmatpush.msra.mxu0 0.0
      %1492 = vmatpush.msra.mxu0 0.0
      %1493 = vmatpush.msra.mxu0 0.0
      %1494 = vmatpush.msra.mxu0 0.0
      %1495 = vmatpush.msra.mxu0 0.0
      %1496 = vmatpush.msra.mxu0 0.0
      %1497 = vmatpush.msra.mxu0 0.0
      %1498 = vmatpush.msra.mxu0 0.0
      %1499 = vmatpush.msra.mxu0 0.0
      %1500 = vmatpush.msra.mxu0 0.0
      %1501 = vmatpush.msra.mxu0 %v1361
      %1502 = vmatmul.f32.gmra.mxu0 %v1444
      %v1503 = vpop.f32.mrf.mxu0
      %v1504 = vadd.f32 %v1441, %v1503
      %1505 = vdwg.mxu0
      %s1506 = scalar_lea.vmem %s5, 16
      %v1507 = vld [vmem:[%s1506] sm:$0xff]
      %1508 = vrot.lane.b32.xlu0 %v1359, 126
      %v1509 = vpop.permute.xlu0 %1508
      %1510 = vrot.lane.b32.xlu0 %v1360, 126
      %v1511 = vpop.permute.xlu0 %1510
      %1512 = vrot.lane.b32.xlu0 %v1361, 126
      %v1513 = vpop.permute.xlu0 %1512
      %v1514 = vsel %vm626, %v1509, %v1511
      %v1515 = vsel %vm626, %v1511, %v1513
      %v1520 = vsel %vm1379, %v1507, 0
      %1522 = vmatpush.msra.mxu0 0.0
      %1523 = vmatpush.msra.mxu0 0.0
      %1524 = vmatpush.msra.mxu0 0.0
      %1525 = vmatpush.msra.mxu0 0.0
      %1526 = vmatpush.msra.mxu0 0.0
      %1527 = vmatpush.msra.mxu0 0.0
      %1528 = vmatpush.msra.mxu0 0.0
      %1529 = vmatpush.msra.mxu0 0.0
      %1530 = vmatpush.msra.mxu0 0.0
      %1531 = vmatpush.msra.mxu0 0.0
      %1532 = vmatpush.msra.mxu0 0.0
      %1533 = vmatpush.msra.mxu0 0.0
      %1534 = vmatpush.msra.mxu0 0.0
      %1535 = vmatpush.msra.mxu0 0.0
      %1536 = vmatpush.msra.mxu0 0.0
      %1537 = vmatpush.msra.mxu0 %v1514
      %1538 = vmatmul.f32.gmra.mxu0 %v1520
      %v1539 = vpop.f32.mrf.mxu0
      %v1540 = vadd.f32 0.0, %v1539
      %1541 = vdwg.mxu0
      %1542 = vmatpush.msra.mxu0 0.0
      %1543 = vmatpush.msra.mxu0 0.0
      %1544 = vmatpush.msra.mxu0 0.0
      %1545 = vmatpush.msra.mxu0 0.0
      %1546 = vmatpush.msra.mxu0 0.0
      %1547 = vmatpush.msra.mxu0 0.0
      %1548 = vmatpush.msra.mxu0 0.0
      %1549 = vmatpush.msra.mxu0 0.0
      %1550 = vmatpush.msra.mxu0 0.0
      %1551 = vmatpush.msra.mxu0 0.0
      %1552 = vmatpush.msra.mxu0 0.0
      %1553 = vmatpush.msra.mxu0 0.0
      %1554 = vmatpush.msra.mxu0 0.0
      %1555 = vmatpush.msra.mxu0 0.0
      %1556 = vmatpush.msra.mxu0 0.0
      %1557 = vmatpush.msra.mxu0 %v1515
      %1558 = vmatmul.f32.gmra.mxu0 %v1520
      %v1559 = vpop.f32.mrf.mxu0
      %v1560 = vadd.f32 0.0, %v1559
      %1561 = vdwg.mxu0
      %1562 = vmatpush.msra.mxu0 0.0
      %1563 = vmatpush.msra.mxu0 0.0
      %1564 = vmatpush.msra.mxu0 0.0
      %1565 = vmatpush.msra.mxu0 0.0
      %1566 = vmatpush.msra.mxu0 0.0
      %1567 = vmatpush.msra.mxu0 0.0
      %1568 = vmatpush.msra.mxu0 0.0
      %1569 = vmatpush.msra.mxu0 0.0
      %1570 = vmatpush.msra.mxu0 0.0
      %1571 = vmatpush.msra.mxu0 0.0
      %1572 = vmatpush.msra.mxu0 0.0
      %1573 = vmatpush.msra.mxu0 0.0
      %1574 = vmatpush.msra.mxu0 0.0
      %1575 = vmatpush.msra.mxu0 0.0
      %1576 = vmatpush.msra.mxu0 0.0
      %1577 = vmatpush.msra.mxu0 %v1513
      %1578 = vmatmul.f32.gmra.mxu0 %v1520
      %v1579 = vpop.f32.mrf.mxu0
      %v1580 = vadd.f32 0.0, %v1579
      %1581 = vdwg.mxu0
      %v1582 = vadd.f32 %v1464, %v1540
      %v1583 = vadd.f32 %v1484, %v1560
      %v1584 = vadd.f32 %v1504, %v1580
      %s1585 = scalar_lea.vmem %s5, 24
      %v1586 = vld [vmem:[%s1585] sm:$0xff]
      %1587 = vrot.lane.b32.xlu0 %v1359, 110
      %v1588 = vpop.permute.xlu0 %1587
      %1589 = vrot.lane.b32.xlu0 %v1360, 110
      %v1590 = vpop.permute.xlu0 %1589
      %1591 = vrot.lane.b32.xlu0 %v1361, 110
      %v1592 = vpop.permute.xlu0 %1591
      %v1593 = vsel %vm728, %v1588, %v1590
      %v1594 = vsel %vm728, %v1590, %v1592
      %v1599 = vsel %vm1379, %v1586, 0
      %1601 = vmatpush.msra.mxu0 0.0
      %1602 = vmatpush.msra.mxu0 0.0
      %1603 = vmatpush.msra.mxu0 0.0
      %1604 = vmatpush.msra.mxu0 0.0
      %1605 = vmatpush.msra.mxu0 0.0
      %1606 = vmatpush.msra.mxu0 0.0
      %1607 = vmatpush.msra.mxu0 0.0
      %1608 = vmatpush.msra.mxu0 0.0
      %1609 = vmatpush.msra.mxu0 0.0
      %1610 = vmatpush.msra.mxu0 0.0
      %1611 = vmatpush.msra.mxu0 0.0
      %1612 = vmatpush.msra.mxu0 0.0
      %1613 = vmatpush.msra.mxu0 0.0
      %1614 = vmatpush.msra.mxu0 0.0
      %1615 = vmatpush.msra.mxu0 0.0
      %1616 = vmatpush.msra.mxu0 %v1593
      %1617 = vmatmul.f32.gmra.mxu0 %v1599
      %v1618 = vpop.f32.mrf.mxu0
      %v1619 = vadd.f32 0.0, %v1618
      %1620 = vdwg.mxu0
      %1621 = vmatpush.msra.mxu0 0.0
      %1622 = vmatpush.msra.mxu0 0.0
      %1623 = vmatpush.msra.mxu0 0.0
      %1624 = vmatpush.msra.mxu0 0.0
      %1625 = vmatpush.msra.mxu0 0.0
      %1626 = vmatpush.msra.mxu0 0.0
      %1627 = vmatpush.msra.mxu0 0.0
      %1628 = vmatpush.msra.mxu0 0.0
      %1629 = vmatpush.msra.mxu0 0.0
      %1630 = vmatpush.msra.mxu0 0.0
      %1631 = vmatpush.msra.mxu0 0.0
      %1632 = vmatpush.msra.mxu0 0.0
      %1633 = vmatpush.msra.mxu0 0.0
      %1634 = vmatpush.msra.mxu0 0.0
      %1635 = vmatpush.msra.mxu0 0.0
      %1636 = vmatpush.msra.mxu0 %v1594
      %1637 = vmatmul.f32.gmra.mxu0 %v1599
      %v1638 = vpop.f32.mrf.mxu0
      %v1639 = vadd.f32 0.0, %v1638
      %1640 = vdwg.mxu0
      %1641 = vmatpush.msra.mxu0 0.0
      %1642 = vmatpush.msra.mxu0 0.0
      %1643 = vmatpush.msra.mxu0 0.0
      %1644 = vmatpush.msra.mxu0 0.0
      %1645 = vmatpush.msra.mxu0 0.0
      %1646 = vmatpush.msra.mxu0 0.0
      %1647 = vmatpush.msra.mxu0 0.0
      %1648 = vmatpush.msra.mxu0 0.0
      %1649 = vmatpush.msra.mxu0 0.0
      %1650 = vmatpush.msra.mxu0 0.0
      %1651 = vmatpush.msra.mxu0 0.0
      %1652 = vmatpush.msra.mxu0 0.0
      %1653 = vmatpush.msra.mxu0 0.0
      %1654 = vmatpush.msra.mxu0 0.0
      %1655 = vmatpush.msra.mxu0 0.0
      %1656 = vmatpush.msra.mxu0 %v1592
      %1657 = vmatmul.f32.gmra.mxu0 %v1599
      %v1658 = vpop.f32.mrf.mxu0
      %v1659 = vadd.f32 0.0, %v1658
      %1660 = vdwg.mxu0
      %v1661 = vadd.f32 %v1582, %v1619
      %v1662 = vadd.f32 %v1583, %v1639
      %v1663 = vadd.f32 %v1584, %v1659
      %s1664 = scalar_lea.vmem %s5, 32
      %v1665 = vld [vmem:[%s1664] sm:$0xff]
      %1666 = vrot.lane.b32.xlu0 %v1359, 109
      %v1667 = vpop.permute.xlu0 %1666
      %1668 = vrot.lane.b32.xlu0 %v1360, 109
      %v1669 = vpop.permute.xlu0 %1668
      %1670 = vrot.lane.b32.xlu0 %v1361, 109
      %v1671 = vpop.permute.xlu0 %1670
      %v1672 = vsel %vm830, %v1667, %v1669
      %v1673 = vsel %vm830, %v1669, %v1671
      %v1678 = vsel %vm1379, %v1665, 0
      %1680 = vmatpush.msra.mxu0 0.0
      %1681 = vmatpush.msra.mxu0 0.0
      %1682 = vmatpush.msra.mxu0 0.0
      %1683 = vmatpush.msra.mxu0 0.0
      %1684 = vmatpush.msra.mxu0 0.0
      %1685 = vmatpush.msra.mxu0 0.0
      %1686 = vmatpush.msra.mxu0 0.0
      %1687 = vmatpush.msra.mxu0 0.0
      %1688 = vmatpush.msra.mxu0 0.0
      %1689 = vmatpush.msra.mxu0 0.0
      %1690 = vmatpush.msra.mxu0 0.0
      %1691 = vmatpush.msra.mxu0 0.0
      %1692 = vmatpush.msra.mxu0 0.0
      %1693 = vmatpush.msra.mxu0 0.0
      %1694 = vmatpush.msra.mxu0 0.0
      %1695 = vmatpush.msra.mxu0 %v1672
      %1696 = vmatmul.f32.gmra.mxu0 %v1678
      %v1697 = vpop.f32.mrf.mxu0
      %v1698 = vadd.f32 0.0, %v1697
      %1699 = vdwg.mxu0
      %1700 = vmatpush.msra.mxu0 0.0
      %1701 = vmatpush.msra.mxu0 0.0
      %1702 = vmatpush.msra.mxu0 0.0
      %1703 = vmatpush.msra.mxu0 0.0
      %1704 = vmatpush.msra.mxu0 0.0
      %1705 = vmatpush.msra.mxu0 0.0
      %1706 = vmatpush.msra.mxu0 0.0
      %1707 = vmatpush.msra.mxu0 0.0
      %1708 = vmatpush.msra.mxu0 0.0
      %1709 = vmatpush.msra.mxu0 0.0
      %1710 = vmatpush.msra.mxu0 0.0
      %1711 = vmatpush.msra.mxu0 0.0
      %1712 = vmatpush.msra.mxu0 0.0
      %1713 = vmatpush.msra.mxu0 0.0
      %1714 = vmatpush.msra.mxu0 0.0
      %1715 = vmatpush.msra.mxu0 %v1673
      %1716 = vmatmul.f32.gmra.mxu0 %v1678
      %v1717 = vpop.f32.mrf.mxu0
      %v1718 = vadd.f32 0.0, %v1717
      %1719 = vdwg.mxu0
      %1720 = vmatpush.msra.mxu0 0.0
      %1721 = vmatpush.msra.mxu0 0.0
      %1722 = vmatpush.msra.mxu0 0.0
      %1723 = vmatpush.msra.mxu0 0.0
      %1724 = vmatpush.msra.mxu0 0.0
      %1725 = vmatpush.msra.mxu0 0.0
      %1726 = vmatpush.msra.mxu0 0.0
      %1727 = vmatpush.msra.mxu0 0.0
      %1728 = vmatpush.msra.mxu0 0.0
      %1729 = vmatpush.msra.mxu0 0.0
      %1730 = vmatpush.msra.mxu0 0.0
      %1731 = vmatpush.msra.mxu0 0.0
      %1732 = vmatpush.msra.mxu0 0.0
      %1733 = vmatpush.msra.mxu0 0.0
      %1734 = vmatpush.msra.mxu0 0.0
      %1735 = vmatpush.msra.mxu0 %v1671
      %1736 = vmatmul.f32.gmra.mxu0 %v1678
      %v1737 = vpop.f32.mrf.mxu0
      %v1738 = vadd.f32 0.0, %v1737
      %1739 = vdwg.mxu0
      %v1740 = vadd.f32 %v1661, %v1698
      %v1741 = vadd.f32 %v1662, %v1718
      %v1742 = vadd.f32 %v1663, %v1738
      %s1743 = scalar_lea.vmem %s5, 40
      %v1744 = vld [vmem:[%s1743] sm:$0xff]
      %1745 = vrot.lane.b32.xlu0 %v1359, 108
      %v1746 = vpop.permute.xlu0 %1745
      %1747 = vrot.lane.b32.xlu0 %v1360, 108
      %v1748 = vpop.permute.xlu0 %1747
      %1749 = vrot.lane.b32.xlu0 %v1361, 108
      %v1750 = vpop.permute.xlu0 %1749
      %v1751 = vsel %vm932, %v1746, %v1748
      %v1752 = vsel %vm932, %v1748, %v1750
      %v1757 = vsel %vm1379, %v1744, 0
      %1759 = vmatpush.msra.mxu0 0.0
      %1760 = vmatpush.msra.mxu0 0.0
      %1761 = vmatpush.msra.mxu0 0.0
      %1762 = vmatpush.msra.mxu0 0.0
      %1763 = vmatpush.msra.mxu0 0.0
      %1764 = vmatpush.msra.mxu0 0.0
      %1765 = vmatpush.msra.mxu0 0.0
      %1766 = vmatpush.msra.mxu0 0.0
      %1767 = vmatpush.msra.mxu0 0.0
      %1768 = vmatpush.msra.mxu0 0.0
      %1769 = vmatpush.msra.mxu0 0.0
      %1770 = vmatpush.msra.mxu0 0.0
      %1771 = vmatpush.msra.mxu0 0.0
      %1772 = vmatpush.msra.mxu0 0.0
      %1773 = vmatpush.msra.mxu0 0.0
      %1774 = vmatpush.msra.mxu0 %v1751
      %1775 = vmatmul.f32.gmra.mxu0 %v1757
      %v1776 = vpop.f32.mrf.mxu0
      %v1777 = vadd.f32 0.0, %v1776
      %1778 = vdwg.mxu0
      %1779 = vmatpush.msra.mxu0 0.0
      %1780 = vmatpush.msra.mxu0 0.0
      %1781 = vmatpush.msra.mxu0 0.0
      %1782 = vmatpush.msra.mxu0 0.0
      %1783 = vmatpush.msra.mxu0 0.0
      %1784 = vmatpush.msra.mxu0 0.0
      %1785 = vmatpush.msra.mxu0 0.0
      %1786 = vmatpush.msra.mxu0 0.0
      %1787 = vmatpush.msra.mxu0 0.0
      %1788 = vmatpush.msra.mxu0 0.0
      %1789 = vmatpush.msra.mxu0 0.0
      %1790 = vmatpush.msra.mxu0 0.0
      %1791 = vmatpush.msra.mxu0 0.0
      %1792 = vmatpush.msra.mxu0 0.0
      %1793 = vmatpush.msra.mxu0 0.0
      %1794 = vmatpush.msra.mxu0 %v1752
      %1795 = vmatmul.f32.gmra.mxu0 %v1757
      %v1796 = vpop.f32.mrf.mxu0
      %v1797 = vadd.f32 0.0, %v1796
      %1798 = vdwg.mxu0
      %1799 = vmatpush.msra.mxu0 0.0
      %1800 = vmatpush.msra.mxu0 0.0
      %1801 = vmatpush.msra.mxu0 0.0
      %1802 = vmatpush.msra.mxu0 0.0
      %1803 = vmatpush.msra.mxu0 0.0
      %1804 = vmatpush.msra.mxu0 0.0
      %1805 = vmatpush.msra.mxu0 0.0
      %1806 = vmatpush.msra.mxu0 0.0
      %1807 = vmatpush.msra.mxu0 0.0
      %1808 = vmatpush.msra.mxu0 0.0
      %1809 = vmatpush.msra.mxu0 0.0
      %1810 = vmatpush.msra.mxu0 0.0
      %1811 = vmatpush.msra.mxu0 0.0
      %1812 = vmatpush.msra.mxu0 0.0
      %1813 = vmatpush.msra.mxu0 0.0
      %1814 = vmatpush.msra.mxu0 %v1750
      %1815 = vmatmul.f32.gmra.mxu0 %v1757
      %v1816 = vpop.f32.mrf.mxu0
      %v1817 = vadd.f32 0.0, %v1816
      %1818 = vdwg.mxu0
      %v1819 = vadd.f32 %v1740, %v1777
      %v1820 = vadd.f32 %v1741, %v1797
      %v1821 = vadd.f32 %v1742, %v1817
      %s1822 = scalar_lea.vmem %s5, 48
      %v1823 = vld [vmem:[%s1822] sm:$0xff]
      %1824 = vrot.lane.b32.xlu0 %v1359, 92
      %v1825 = vpop.permute.xlu0 %1824
      %1826 = vrot.lane.b32.xlu0 %v1360, 92
      %v1827 = vpop.permute.xlu0 %1826
      %1828 = vrot.lane.b32.xlu0 %v1361, 92
      %v1829 = vpop.permute.xlu0 %1828
      %v1830 = vsel %vm1034, %v1825, %v1827
      %v1831 = vsel %vm1034, %v1827, %v1829
      %v1836 = vsel %vm1379, %v1823, 0
      %1838 = vmatpush.msra.mxu0 0.0
      %1839 = vmatpush.msra.mxu0 0.0
      %1840 = vmatpush.msra.mxu0 0.0
      %1841 = vmatpush.msra.mxu0 0.0
      %1842 = vmatpush.msra.mxu0 0.0
      %1843 = vmatpush.msra.mxu0 0.0
      %1844 = vmatpush.msra.mxu0 0.0
      %1845 = vmatpush.msra.mxu0 0.0
      %1846 = vmatpush.msra.mxu0 0.0
      %1847 = vmatpush.msra.mxu0 0.0
      %1848 = vmatpush.msra.mxu0 0.0
      %1849 = vmatpush.msra.mxu0 0.0
      %1850 = vmatpush.msra.mxu0 0.0
      %1851 = vmatpush.msra.mxu0 0.0
      %1852 = vmatpush.msra.mxu0 0.0
      %1853 = vmatpush.msra.mxu0 %v1830
      %1854 = vmatmul.f32.gmra.mxu0 %v1836
      %v1855 = vpop.f32.mrf.mxu0
      %v1856 = vadd.f32 0.0, %v1855
      %1857 = vdwg.mxu0
      %1858 = vmatpush.msra.mxu0 0.0
      %1859 = vmatpush.msra.mxu0 0.0
      %1860 = vmatpush.msra.mxu0 0.0
      %1861 = vmatpush.msra.mxu0 0.0
      %1862 = vmatpush.msra.mxu0 0.0
      %1863 = vmatpush.msra.mxu0 0.0
      %1864 = vmatpush.msra.mxu0 0.0
      %1865 = vmatpush.msra.mxu0 0.0
      %1866 = vmatpush.msra.mxu0 0.0
      %1867 = vmatpush.msra.mxu0 0.0
      %1868 = vmatpush.msra.mxu0 0.0
      %1869 = vmatpush.msra.mxu0 0.0
      %1870 = vmatpush.msra.mxu0 0.0
      %1871 = vmatpush.msra.mxu0 0.0
      %1872 = vmatpush.msra.mxu0 0.0
      %1873 = vmatpush.msra.mxu0 %v1831
      %1874 = vmatmul.f32.gmra.mxu0 %v1836
      %v1875 = vpop.f32.mrf.mxu0
      %v1876 = vadd.f32 0.0, %v1875
      %1877 = vdwg.mxu0
      %1878 = vmatpush.msra.mxu0 0.0
      %1879 = vmatpush.msra.mxu0 0.0
      %1880 = vmatpush.msra.mxu0 0.0
      %1881 = vmatpush.msra.mxu0 0.0
      %1882 = vmatpush.msra.mxu0 0.0
      %1883 = vmatpush.msra.mxu0 0.0
      %1884 = vmatpush.msra.mxu0 0.0
      %1885 = vmatpush.msra.mxu0 0.0
      %1886 = vmatpush.msra.mxu0 0.0
      %1887 = vmatpush.msra.mxu0 0.0
      %1888 = vmatpush.msra.mxu0 0.0
      %1889 = vmatpush.msra.mxu0 0.0
      %1890 = vmatpush.msra.mxu0 0.0
      %1891 = vmatpush.msra.mxu0 0.0
      %1892 = vmatpush.msra.mxu0 0.0
      %1893 = vmatpush.msra.mxu0 %v1829
      %1894 = vmatmul.f32.gmra.mxu0 %v1836
      %v1895 = vpop.f32.mrf.mxu0
      %v1896 = vadd.f32 0.0, %v1895
      %1897 = vdwg.mxu0
      %v1898 = vadd.f32 %v1819, %v1856
      %v1899 = vadd.f32 %v1820, %v1876
      %v1900 = vadd.f32 %v1821, %v1896
      %s1901 = scalar_lea.vmem %s5, 56
      %v1902 = vld [vmem:[%s1901] sm:$0xff]
      %1903 = vrot.lane.b32.xlu0 %v1359, 91
      %v1904 = vpop.permute.xlu0 %1903
      %1905 = vrot.lane.b32.xlu0 %v1360, 91
      %v1906 = vpop.permute.xlu0 %1905
      %1907 = vrot.lane.b32.xlu0 %v1361, 91
      %v1908 = vpop.permute.xlu0 %1907
      %v1909 = vsel %vm1136, %v1904, %v1906
      %v1910 = vsel %vm1136, %v1906, %v1908
      %v1915 = vsel %vm1379, %v1902, 0
      %1917 = vmatpush.msra.mxu0 0.0
      %1918 = vmatpush.msra.mxu0 0.0
      %1919 = vmatpush.msra.mxu0 0.0
      %1920 = vmatpush.msra.mxu0 0.0
      %1921 = vmatpush.msra.mxu0 0.0
      %1922 = vmatpush.msra.mxu0 0.0
      %1923 = vmatpush.msra.mxu0 0.0
      %1924 = vmatpush.msra.mxu0 0.0
      %1925 = vmatpush.msra.mxu0 0.0
      %1926 = vmatpush.msra.mxu0 0.0
      %1927 = vmatpush.msra.mxu0 0.0
      %1928 = vmatpush.msra.mxu0 0.0
      %1929 = vmatpush.msra.mxu0 0.0
      %1930 = vmatpush.msra.mxu0 0.0
      %1931 = vmatpush.msra.mxu0 0.0
      %1932 = vmatpush.msra.mxu0 %v1909
      %1933 = vmatmul.f32.gmra.mxu0 %v1915
      %v1934 = vpop.f32.mrf.mxu0
      %v1935 = vadd.f32 0.0, %v1934
      %1936 = vdwg.mxu0
      %1937 = vmatpush.msra.mxu0 0.0
      %1938 = vmatpush.msra.mxu0 0.0
      %1939 = vmatpush.msra.mxu0 0.0
      %1940 = vmatpush.msra.mxu0 0.0
      %1941 = vmatpush.msra.mxu0 0.0
      %1942 = vmatpush.msra.mxu0 0.0
      %1943 = vmatpush.msra.mxu0 0.0
      %1944 = vmatpush.msra.mxu0 0.0
      %1945 = vmatpush.msra.mxu0 0.0
      %1946 = vmatpush.msra.mxu0 0.0
      %1947 = vmatpush.msra.mxu0 0.0
      %1948 = vmatpush.msra.mxu0 0.0
      %1949 = vmatpush.msra.mxu0 0.0
      %1950 = vmatpush.msra.mxu0 0.0
      %1951 = vmatpush.msra.mxu0 0.0
      %1952 = vmatpush.msra.mxu0 %v1910
      %1953 = vmatmul.f32.gmra.mxu0 %v1915
      %v1954 = vpop.f32.mrf.mxu0
      %v1955 = vadd.f32 0.0, %v1954
      %1956 = vdwg.mxu0
      %1957 = vmatpush.msra.mxu0 0.0
      %1958 = vmatpush.msra.mxu0 0.0
      %1959 = vmatpush.msra.mxu0 0.0
      %1960 = vmatpush.msra.mxu0 0.0
      %1961 = vmatpush.msra.mxu0 0.0
      %1962 = vmatpush.msra.mxu0 0.0
      %1963 = vmatpush.msra.mxu0 0.0
      %1964 = vmatpush.msra.mxu0 0.0
      %1965 = vmatpush.msra.mxu0 0.0
      %1966 = vmatpush.msra.mxu0 0.0
      %1967 = vmatpush.msra.mxu0 0.0
      %1968 = vmatpush.msra.mxu0 0.0
      %1969 = vmatpush.msra.mxu0 0.0
      %1970 = vmatpush.msra.mxu0 0.0
      %1971 = vmatpush.msra.mxu0 0.0
      %1972 = vmatpush.msra.mxu0 %v1908
      %1973 = vmatmul.f32.gmra.mxu0 %v1915
      %v1974 = vpop.f32.mrf.mxu0
      %v1975 = vadd.f32 0.0, %v1974
      %1976 = vdwg.mxu0
      %v1977 = vadd.f32 %v1898, %v1935
      %v1978 = vadd.f32 %v1899, %v1955
      %v1979 = vadd.f32 %v1900, %v1975
      %s1980 = scalar_lea.vmem %s5, 64
      %v1981 = vld [vmem:[%s1980] sm:$0xff]
      %1982 = vrot.lane.b32.xlu0 %v1359, 90
      %v1983 = vpop.permute.xlu0 %1982
      %1984 = vrot.lane.b32.xlu0 %v1360, 90
      %v1985 = vpop.permute.xlu0 %1984
      %1986 = vrot.lane.b32.xlu0 %v1361, 90
      %v1987 = vpop.permute.xlu0 %1986
      %v1988 = vsel %vm1238, %v1983, %v1985
      %v1989 = vsel %vm1238, %v1985, %v1987
      %v1994 = vsel %vm1379, %v1981, 0
      %1996 = vmatpush.msra.mxu0 0.0
      %1997 = vmatpush.msra.mxu0 0.0
      %1998 = vmatpush.msra.mxu0 0.0
      %1999 = vmatpush.msra.mxu0 0.0
      %2000 = vmatpush.msra.mxu0 0.0
      %2001 = vmatpush.msra.mxu0 0.0
      %2002 = vmatpush.msra.mxu0 0.0
      %2003 = vmatpush.msra.mxu0 0.0
      %2004 = vmatpush.msra.mxu0 0.0
      %2005 = vmatpush.msra.mxu0 0.0
      %2006 = vmatpush.msra.mxu0 0.0
      %2007 = vmatpush.msra.mxu0 0.0
      %2008 = vmatpush.msra.mxu0 0.0
      %2009 = vmatpush.msra.mxu0 0.0
      %2010 = vmatpush.msra.mxu0 0.0
      %2011 = vmatpush.msra.mxu0 %v1988
      %2012 = vmatmul.f32.gmra.mxu0 %v1994
      %v2013 = vpop.f32.mrf.mxu0
      %v2014 = vadd.f32 0.0, %v2013
      %2015 = vdwg.mxu0
      %2016 = vmatpush.msra.mxu0 0.0
      %2017 = vmatpush.msra.mxu0 0.0
      %2018 = vmatpush.msra.mxu0 0.0
      %2019 = vmatpush.msra.mxu0 0.0
      %2020 = vmatpush.msra.mxu0 0.0
      %2021 = vmatpush.msra.mxu0 0.0
      %2022 = vmatpush.msra.mxu0 0.0
      %2023 = vmatpush.msra.mxu0 0.0
      %2024 = vmatpush.msra.mxu0 0.0
      %2025 = vmatpush.msra.mxu0 0.0
      %2026 = vmatpush.msra.mxu0 0.0
      %2027 = vmatpush.msra.mxu0 0.0
      %2028 = vmatpush.msra.mxu0 0.0
      %2029 = vmatpush.msra.mxu0 0.0
      %2030 = vmatpush.msra.mxu0 0.0
      %2031 = vmatpush.msra.mxu0 %v1989
      %2032 = vmatmul.f32.gmra.mxu0 %v1994
      %v2033 = vpop.f32.mrf.mxu0
      %v2034 = vadd.f32 0.0, %v2033
      %2035 = vdwg.mxu0
      %2036 = vmatpush.msra.mxu0 0.0
      %2037 = vmatpush.msra.mxu0 0.0
      %2038 = vmatpush.msra.mxu0 0.0
      %2039 = vmatpush.msra.mxu0 0.0
      %2040 = vmatpush.msra.mxu0 0.0
      %2041 = vmatpush.msra.mxu0 0.0
      %2042 = vmatpush.msra.mxu0 0.0
      %2043 = vmatpush.msra.mxu0 0.0
      %2044 = vmatpush.msra.mxu0 0.0
      %2045 = vmatpush.msra.mxu0 0.0
      %2046 = vmatpush.msra.mxu0 0.0
      %2047 = vmatpush.msra.mxu0 0.0
      %2048 = vmatpush.msra.mxu0 0.0
      %2049 = vmatpush.msra.mxu0 0.0
      %2050 = vmatpush.msra.mxu0 0.0
      %2051 = vmatpush.msra.mxu0 %v1987
      %2052 = vmatmul.f32.gmra.mxu0 %v1994
      %v2053 = vpop.f32.mrf.mxu0
      %v2054 = vadd.f32 0.0, %v2053
      %2055 = vdwg.mxu0
      %v2056 = vadd.f32 %v1977, %v2014
      %v2057 = vadd.f32 %v1978, %v2034
      %v2058 = vadd.f32 %v1979, %v2054
      %v2059 = vld [vmem:[%s6] sm:$0xff]
      %2061 = vset.pattern.permute.xlu0 0
      %2062 = vperm.xlu0 %2061, %v2059
      %v2063 = vpop.permute.xlu0 %2062
      %v2065 = vadd.f32 %v2056, %v2063
      %v2066 = vadd.f32 %v2057, %v2063
      %v2067 = vadd.f32 %v2058, %v2063
      %v2068 = vmax.f32 %v2065, 0.0
      %v2069 = vmax.f32 %v2066, 0.0
      %v2070 = vmax.f32 %v2067, 0.0
      %v2071 = vmul.f32 %v2068, %v1333
      %v2072 = vmul.f32 %v2069, %v1334
      %v2073 = vmul.f32 %v2070, %v1335
      %2077 = vrot.lane.b32.xlu0 %v2071, 19
      %v2078 = vpop.permute.xlu0 %2077
      %2079 = vrot.lane.b32.xlu0 %v2072, 19
      %v2080 = vpop.permute.xlu0 %2079
      %2081 = vrot.lane.b32.xlu0 %v2073, 19
      %v2082 = vpop.permute.xlu0 %2081
      %v2083 = vsel %vm353, %v2078, %v2080
      %v2084 = vsel %vm353, %v2080, %v2082
      %2088 = vst.msk [vmem:[#allocation2] sm:$0xff] %vm395, %v2078
      %2089 = vst [vmem:[#allocation2 + $0x8] sm:$0xff] %v2083
      %2090 = vst.msk [vmem:[#allocation2 + $0x10] sm:$0xff] %vm398, %v2084
      %v2091 = vld [vmem:[#allocation2] sm:$0xff]
      %v2092 = vld [vmem:[#allocation2 + $0x8] sm:$0xff]
      %v2093 = vld [vmem:[#allocation2 + $0x10] sm:$0xff]
      %v2094 = vld [vmem:[%s7] sm:$0x1]
      %v2095 = vld [vmem:[#allocation3] sm:$0x1]
      %2097 = vset.pattern.permute.xlu0 0
      %2098 = vperm.xlu0 %2097, %v2095
      %v2099 = vpop.permute.xlu0 %2098
      %v2101 = vperm.slane %v2099, 0
      %2105 = vrot.lane.b32.xlu0 %v2091, 109
      %v2106 = vpop.permute.xlu0 %2105
      %2107 = vrot.lane.b32.xlu0 %v2092, 109
      %v2108 = vpop.permute.xlu0 %2107
      %2109 = vrot.lane.b32.xlu0 %v2093, 109
      %v2110 = vpop.permute.xlu0 %2109
      %v2111 = vsel %vm830, %v2106, %v2108
      %v2112 = vsel %vm830, %v2108, %v2110
      %v2117 = vsel %vm1379, %v2094, 0
      %2119 = vmatpush.msra.mxu0 0.0
      %2120 = vmatpush.msra.mxu0 0.0
      %2121 = vmatpush.msra.mxu0 0.0
      %2122 = vmatpush.msra.mxu0 0.0
      %2123 = vmatpush.msra.mxu0 0.0
      %2124 = vmatpush.msra.mxu0 0.0
      %2125 = vmatpush.msra.mxu0 0.0
      %2126 = vmatpush.msra.mxu0 0.0
      %2127 = vmatpush.msra.mxu0 0.0
      %2128 = vmatpush.msra.mxu0 0.0
      %2129 = vmatpush.msra.mxu0 0.0
      %2130 = vmatpush.msra.mxu0 0.0
      %2131 = vmatpush.msra.mxu0 0.0
      %2132 = vmatpush.msra.mxu0 0.0
      %2133 = vmatpush.msra.mxu0 0.0
      %2134 = vmatpush.msra.mxu0 %v2111
      %2135 = vmatmul.f32.gmra.mxu0 %v2117
      %v2136 = vpop.f32.mrf.mxu0
      %v2137 = vadd.f32 %v2101, %v2136
      %2138 = vdwg.mxu0
      %2139 = vmatpush.msra.mxu0 0.0
      %2140 = vmatpush.msra.mxu0 0.0
      %2141 = vmatpush.msra.mxu0 0.0
      %2142 = vmatpush.msra.mxu0 0.0
      %2143 = vmatpush.msra.mxu0 0.0
      %2144 = vmatpush.msra.mxu0 0.0
      %2145 = vmatpush.msra.mxu0 0.0
      %2146 = vmatpush.msra.mxu0 0.0
      %2147 = vmatpush.msra.mxu0 0.0
      %2148 = vmatpush.msra.mxu0 0.0
      %2149 = vmatpush.msra.mxu0 0.0
      %2150 = vmatpush.msra.mxu0 0.0
      %2151 = vmatpush.msra.mxu0 0.0
      %2152 = vmatpush.msra.mxu0 0.0
      %2153 = vmatpush.msra.mxu0 0.0
      %2154 = vmatpush.msra.mxu0 %v2112
      %2155 = vmatmul.f32.gmra.mxu0 %v2117
      %v2156 = vpop.f32.mrf.mxu0
      %v2157 = vadd.f32 %v2101, %v2156
      %2158 = vdwg.mxu0
      %2159 = vmatpush.msra.mxu0 0.0
      %2160 = vmatpush.msra.mxu0 0.0
      %2161 = vmatpush.msra.mxu0 0.0
      %2162 = vmatpush.msra.mxu0 0.0
      %2163 = vmatpush.msra.mxu0 0.0
      %2164 = vmatpush.msra.mxu0 0.0
      %2165 = vmatpush.msra.mxu0 0.0
      %2166 = vmatpush.msra.mxu0 0.0
      %2167 = vmatpush.msra.mxu0 0.0
      %2168 = vmatpush.msra.mxu0 0.0
      %2169 = vmatpush.msra.mxu0 0.0
      %2170 = vmatpush.msra.mxu0 0.0
      %2171 = vmatpush.msra.mxu0 0.0
      %2172 = vmatpush.msra.mxu0 0.0
      %2173 = vmatpush.msra.mxu0 0.0
      %2174 = vmatpush.msra.mxu0 %v2110
      %2175 = vmatmul.f32.gmra.mxu0 %v2117
      %v2176 = vpop.f32.mrf.mxu0
      %v2177 = vadd.f32 %v2101, %v2176
      %2178 = vdwg.mxu0
      %v2179 = vmul.f32 %v2137, %v1333
      %v2180 = vmul.f32 %v2157, %v1334
      %v2181 = vmul.f32 %v2177, %v1335
      %v2185 = vrot.slane %v2180, 7
      %v2186 = vrot.slane %v2181, 6
      %vm2187 = vcmask 1040384
      %v2188 = vsel %vm2187, %v2179, %v2185
      %vm2189 = vcmask 1041408
      %v2190 = vsel %vm2189, %v2188, %v2186
      %v2192 = vlaneseq
      %vm2193 = vcmp.ge.s32.totalorder %v2192, 0
      %vm2194 = vcmp.lt.s32.totalorder %v2192, 324
      %vm2195 = vmand %vm2193, %vm2194
      %2196 = vst.msk [vmem:[%s352] sm:$0x7] %vm2195, %v2190
      %p2197 = scmp.lt.s32.totalorder %s22, 1
      %s2198 = scalar_select %p2197, %s22, 1
      %s2199 = smul.addr %s2198, 3
      %s2200 = scalar_lea.vmem %s9, %s2199
      // Predicated region
      $region57: #{comb_net_forward.12} parent=55 // pred_check
        %p2201 = pneg %p239
      $region58: #{comb_net_forward.12} parent=55 // pred_check_branch
        %2203 = sbr.rel (%p2201) target = $region60
      $region59: #{comb_net_forward.12} parent=55 // pred_region
        _
      $region60: #{comb_net_forward.12} parent=55 // pred_fallthru
        _
    $region56: #{comb_net_forward.12} parent=5 // pred_fallthru
      _
    %p2204 = scmp.le.s32.totalorder 2, %s17
    // Predicated region
    $region61: #{comb_net_forward.12} parent=5 // pred_check
      %p2205 = pneg %p2204
    $region62: #{comb_net_forward.12} parent=5 // pred_check_branch
      %2207 = sbr.rel (%p2205) target = $region64
    $region63: #{comb_net_forward.12} parent=5 // pred_region
      %s2208 = ssub.s32 %s17, 2
      // Predicated region
      $region65: #{comb_net_forward.12} parent=63 // pred_check
        %p2209 = pneg %p245
      $region66: #{comb_net_forward.12} parent=63 // pred_check_branch
        %2211 = sbr.rel (%p2209) target = $region68
      $region67: #{comb_net_forward.12} parent=63 // pred_region
        %p2212 = scmp.lt.s32.totalorder %s23, 1
        %s2213 = scalar_select %p2212, %s23, 1
        %s2214 = smul.addr %s2213, 3
        %s2215 = scalar_lea.vmem %s9, %s2214
      $region68: #{comb_net_forward.12} parent=63 // pred_fallthru
        _
    $region64: #{comb_net_forward.12} parent=5 // pred_fallthru
      _
  $region6: #{comb_net_forward.12} parent=0 // loop_footer
    %s21 = sadd.s32 1, %s17
  $region7: #{comb_net_forward.12} parent=0 // loop_footer_branch
    %16 = sbr.rel target = $region3
  $region8: #{comb_net_forward.12} parent=0 // loop_exit
    _

</llo_original>
